<compile_context>
chip_gen: v5e
topology: v5e:2x2
jax: 0.10.0
libtpu: 0.0.40
codegen_flags: <defaults>
</compile_context>

<pallas_src>
import jax
import jax.numpy as jnp
from jax.experimental import pallas as pl
from jax.experimental.pallas import tpu as pltpu

D_IN, D_H0, D_H1, D_H2, D_OUT = 100, 256, 512, 1024, 784
D_IN_PAD = 128    # latent 100 -> 128   (lane-aligned K for the first matmul)
D_OUT_PAD = 896   # output 784 -> 896 = 7*128 (lane-dense output stores)


def _round_up(n, m):
    return (n + m - 1) // m * m


def _leaky_relu(x, slope=0.2):
    return jnp.where(x > 0, x, slope * x)


def generator_kernel(x_ref,
                     w0_ref, b0_ref,
                     w1_ref, b1_ref,
                     w2_ref, b2_ref,
                     w3_ref, b3_ref,
                     o_ref):
    # bf16 x bf16 MXU matmuls with f32 accumulation; all elementwise math in f32.
    h = jnp.dot(x_ref[...], w0_ref[...], preferred_element_type=jnp.float32)
    h = _leaky_relu(h + b0_ref[...]).astype(jnp.bfloat16)

    h = jnp.dot(h, w1_ref[...], preferred_element_type=jnp.float32)
    h = _leaky_relu(h + b1_ref[...]).astype(jnp.bfloat16)

    h = jnp.dot(h, w2_ref[...], preferred_element_type=jnp.float32)
    h = _leaky_relu(h + b2_ref[...]).astype(jnp.bfloat16)

    h = jnp.dot(h, w3_ref[...], preferred_element_type=jnp.float32)
    o_ref[...] = jnp.tanh(h + b3_ref[...])


def generator_forward(x, params, *, batch_tile=256):
    """x: (B, 100) f32.  params: list of (W, b) with W (in, out) f32, b (1, out) f32."""
    B, n_in = x.shape
    assert n_in == D_IN
    (w0, b0), (w1, b1), (w2, b2), (w3, b3) = params

    # Batch tiling: one grid step for small batches (weight-DMA-bound regime),
    # batch_tile-row tiles otherwise (>= 2 parallel steps -> both v7x TCs).
    if B <= batch_tile:
        bt = _round_up(max(B, 16), 16)   # multiple of 16: bf16 sublane packing
    else:
        bt = batch_tile
    B_pad = _round_up(B, bt)

    # Lane-aligned zero padding + bf16 casts (biases stay f32).
    x_p = jnp.zeros((B_pad, D_IN_PAD), jnp.bfloat16)
    x_p = x_p.at[:B, :D_IN].set(x.astype(jnp.bfloat16))
    w0_p = jnp.zeros((D_IN_PAD, D_H0), jnp.bfloat16).at[:D_IN, :].set(
        w0.astype(jnp.bfloat16))
    w1_c = w1.astype(jnp.bfloat16)
    w2_c = w2.astype(jnp.bfloat16)
    w3_p = jnp.zeros((D_H2, D_OUT_PAD), jnp.bfloat16).at[:, :D_OUT].set(
        w3.astype(jnp.bfloat16))
    b3_p = jnp.zeros((1, D_OUT_PAD), jnp.float32).at[:, :D_OUT].set(b3)

    grid = (B_pad // bt,)

    def build(single_buffer_weights):
        spec_kwargs = (
            dict(pipeline_mode=pl.Buffered(1)) if single_buffer_weights else {}
        )

        def const_spec(arr):
            # Constant across the batch grid -> single resident copy in VMEM.
            return pl.BlockSpec(arr.shape, lambda i: (0, 0), **spec_kwargs)

        in_specs = [
            pl.BlockSpec((bt, D_IN_PAD), lambda i: (i, 0)),
            const_spec(w0_p), const_spec(b0),
            const_spec(w1_c), const_spec(b1),
            const_spec(w2_c), const_spec(b2),
            const_spec(w3_p), const_spec(b3_p),
        ]
        out_spec = pl.BlockSpec((bt, D_OUT_PAD), lambda i: (i, 0))

        return pl.pallas_call(
            generator_kernel,
            out_shape=jax.ShapeDtypeStruct((B_pad, D_OUT_PAD), jnp.float32),
            grid_spec=pltpu.PrefetchScalarGridSpec(
                num_scalar_prefetch=0,
                grid=grid,
                in_specs=in_specs,
                out_specs=out_spec,
            ),
            compiler_params=pltpu.CompilerParams(
                dimension_semantics=("parallel",),
                # Headroom under v7x's 64 MiB physical VMEM per TensorCore.
                vmem_limit_bytes=48 << 20,
            ),
        )

    args = (x_p, w0_p, b0, w1_c, b1, w2_c, b2, w3_p, b3_p)
    try:
        out = build(True)(*args)
    except Exception:
        # pl.Buffered(1) rejected on this stack -> default double-buffering.
        out = build(False)(*args)

    return out[:B, :D_OUT]


def init_params(key):
    """Deterministic init matching PyTorch nn.Linear default (U[-1/sqrt(in), 1/sqrt(in)])."""
    sizes = [(D_IN, D_H0), (D_H0, D_H1), (D_H1, D_H2), (D_H2, D_OUT)]
    params = []
    for (fan_in, fan_out) in sizes:
        key, kw, kb = jax.random.split(key, 3)
        bound = 1.0 / jnp.sqrt(jnp.float32(fan_in))
        # Stored as (in, out) so the kernel computes x @ W + b.
        w = jax.random.uniform(kw, (fan_in, fan_out), jnp.float32, -bound, bound)
        b = jax.random.uniform(kb, (1, fan_out), jnp.float32, -bound, bound)
        params.append((w, b))
    return params


def reference_forward_bf16(x, params):
    """Pure-JAX reference that mimics the kernel's mixed precision exactly."""
    h = x.astype(jnp.bfloat16)
    for i, (w, b) in enumerate(params):
        h = jnp.dot(h, w.astype(jnp.bfloat16),
                    preferred_element_type=jnp.float32) + b
        if i < 3:
            h = jnp.where(h > 0, h, 0.2 * h).astype(jnp.bfloat16)
        else:
            h = jnp.tanh(h)
    return h


def reference_forward_f32(x, params):
    """Full-f32 reference matching the original PyTorch module."""
    h = x
    for i, (w, b) in enumerate(params):
        h = h @ w + b
        h = jnp.where(h > 0, h, 0.2 * h) if i < 3 else jnp.tanh(h)
    return h


if __name__ == "__main__":
    key = jax.random.PRNGKey(0)
    k_params, k_small, k_big = jax.random.split(key, 3)
    params = init_params(k_params)

    # Small-batch case: single grid step (weight-DMA-bound regime).
    x_small = jax.random.normal(k_small, (16, D_IN), jnp.float32)
    out_small = jax.block_until_ready(generator_forward(x_small, params))

    # Larger batch exercising the tiled path: grid=(2,) with 256-row tiles
    # (shards across both TensorCores on v7x).
    x_big = jax.random.normal(k_big, (512, D_IN), jnp.float32)
    out_big = jax.block_until_ready(generator_forward(x_big, params))

    for x, out in ((x_small, out_small), (x_big, out_big)):
        assert out.shape == (x.shape[0], D_OUT), out.shape
        ref_mimic = reference_forward_bf16(x, params)   # same mixed precision
        ref_f32 = reference_forward_f32(x, params)      # module semantics, f32
        err_mimic = float(jnp.max(jnp.abs(out - ref_mimic)))
        err_f32 = float(jnp.max(jnp.abs(out - ref_f32)))
        assert jnp.allclose(out, ref_mimic, atol=2e-3, rtol=2e-3), err_mimic
        assert jnp.allclose(out, ref_f32, atol=1e-1), err_f32

    print("KERNEL_OK")
</pallas_src>

<mosaic_0001>
module attributes {stable_mosaic.version = 11 : i64} {
  func.func @generator_kernel(%arg0: i32, %arg1: memref<16x128xbf16, #tpu.memory_space<vmem>>, %arg2: memref<128x256xbf16, #tpu.memory_space<vmem>>, %arg3: memref<1x256xf32, #tpu.memory_space<vmem>>, %arg4: memref<256x512xbf16, #tpu.memory_space<vmem>>, %arg5: memref<1x512xf32, #tpu.memory_space<vmem>>, %arg6: memref<512x1024xbf16, #tpu.memory_space<vmem>>, %arg7: memref<1x1024xf32, #tpu.memory_space<vmem>>, %arg8: memref<1024x896xbf16, #tpu.memory_space<vmem>>, %arg9: memref<1x896xf32, #tpu.memory_space<vmem>>, %arg10: memref<16x896xf32, #tpu.memory_space<vmem>>) attributes {dimension_semantics = [#tpu.dimension_semantics<parallel>], iteration_bounds = array<i64: 1>, scalar_prefetch = 0 : i64, scratch_operands = 0 : i64, tpu.core_type = #tpu.core_type<tc>, window_params = [{transform_indices = @transform_0, window_bounds = array<i64: 16, 128>}, {pipeline_mode = #tpu.pipeline_mode<synchronous>, transform_indices = @transform_1, window_bounds = array<i64: 128, 256>}, {pipeline_mode = #tpu.pipeline_mode<synchronous>, transform_indices = @transform_2, window_bounds = array<i64: 1, 256>}, {pipeline_mode = #tpu.pipeline_mode<synchronous>, transform_indices = @transform_3, window_bounds = array<i64: 256, 512>}, {pipeline_mode = #tpu.pipeline_mode<synchronous>, transform_indices = @transform_4, window_bounds = array<i64: 1, 512>}, {pipeline_mode = #tpu.pipeline_mode<synchronous>, transform_indices = @transform_5, window_bounds = array<i64: 512, 1024>}, {pipeline_mode = #tpu.pipeline_mode<synchronous>, transform_indices = @transform_6, window_bounds = array<i64: 1, 1024>}, {pipeline_mode = #tpu.pipeline_mode<synchronous>, transform_indices = @transform_7, window_bounds = array<i64: 1024, 896>}, {pipeline_mode = #tpu.pipeline_mode<synchronous>, transform_indices = @transform_8, window_bounds = array<i64: 1, 896>}, {transform_indices = @transform_9, window_bounds = array<i64: 16, 896>}]} {
    %c0 = arith.constant 0 : index
    %c0_0 = arith.constant 0 : index
    %0 = vector.load %arg1[%c0, %c0_0] : memref<16x128xbf16, #tpu.memory_space<vmem>>, vector<16x128xbf16>
    %c0_1 = arith.constant 0 : index
    %c0_2 = arith.constant 0 : index
    %1 = vector.load %arg2[%c0_1, %c0_2] : memref<128x256xbf16, #tpu.memory_space<vmem>>, vector<128x256xbf16>
    %cst = arith.constant dense<0.000000e+00> : vector<16x256xf32>
    %2 = tpu.matmul %0, %1, %cst {dimension_numbers = #tpu.dot_dimension_numbers<[1], [0], [0], [1], [0, 0, 1, 1], [], []>} : vector<16x128xbf16>, vector<128x256xbf16>, vector<16x256xf32> -> vector<16x256xf32>
    %c0_3 = arith.constant 0 : index
    %c0_4 = arith.constant 0 : index
    %3 = vector.load %arg3[%c0_3, %c0_4] : memref<1x256xf32, #tpu.memory_space<vmem>>, vector<1x256xf32>
    %4 = vector.broadcast %3 : vector<1x256xf32> to vector<16x256xf32>
    %5 = arith.addf %2, %4 : vector<16x256xf32>
    %cst_5 = arith.constant 0.000000e+00 : f32
    %6 = vector.broadcast %cst_5 : f32 to vector<16x256xf32>
    %7 = arith.cmpf ogt, %5, %6 : vector<16x256xf32>
    %cst_6 = arith.constant 2.000000e-01 : f32
    %8 = vector.broadcast %cst_6 : f32 to vector<16x256xf32>
    %9 = arith.mulf %8, %5 : vector<16x256xf32>
    %10 = arith.select %7, %5, %9 : vector<16x256xi1>, vector<16x256xf32>
    %11 = arith.truncf %10 : vector<16x256xf32> to vector<16x256xbf16>
    %c0_7 = arith.constant 0 : index
    %c0_8 = arith.constant 0 : index
    %12 = vector.load %arg4[%c0_7, %c0_8] : memref<256x512xbf16, #tpu.memory_space<vmem>>, vector<256x512xbf16>
    %cst_9 = arith.constant dense<0.000000e+00> : vector<16x512xf32>
    %13 = tpu.matmul %11, %12, %cst_9 {dimension_numbers = #tpu.dot_dimension_numbers<[1], [0], [0], [1], [0, 0, 1, 1], [], []>} : vector<16x256xbf16>, vector<256x512xbf16>, vector<16x512xf32> -> vector<16x512xf32>
    %c0_10 = arith.constant 0 : index
    %c0_11 = arith.constant 0 : index
    %14 = vector.load %arg5[%c0_10, %c0_11] : memref<1x512xf32, #tpu.memory_space<vmem>>, vector<1x512xf32>
    %15 = vector.broadcast %14 : vector<1x512xf32> to vector<16x512xf32>
    %16 = arith.addf %13, %15 : vector<16x512xf32>
    %cst_12 = arith.constant 0.000000e+00 : f32
    %17 = vector.broadcast %cst_12 : f32 to vector<16x512xf32>
    %18 = arith.cmpf ogt, %16, %17 : vector<16x512xf32>
    %cst_13 = arith.constant 2.000000e-01 : f32
    %19 = vector.broadcast %cst_13 : f32 to vector<16x512xf32>
    %20 = arith.mulf %19, %16 : vector<16x512xf32>
    %21 = arith.select %18, %16, %20 : vector<16x512xi1>, vector<16x512xf32>
    %22 = arith.truncf %21 : vector<16x512xf32> to vector<16x512xbf16>
    %c0_14 = arith.constant 0 : index
    %c0_15 = arith.constant 0 : index
    %23 = vector.load %arg6[%c0_14, %c0_15] : memref<512x1024xbf16, #tpu.memory_space<vmem>>, vector<512x1024xbf16>
    %cst_16 = arith.constant dense<0.000000e+00> : vector<16x1024xf32>
    %24 = tpu.matmul %22, %23, %cst_16 {dimension_numbers = #tpu.dot_dimension_numbers<[1], [0], [0], [1], [0, 0, 1, 1], [], []>} : vector<16x512xbf16>, vector<512x1024xbf16>, vector<16x1024xf32> -> vector<16x1024xf32>
    %c0_17 = arith.constant 0 : index
    %c0_18 = arith.constant 0 : index
    %25 = vector.load %arg7[%c0_17, %c0_18] : memref<1x1024xf32, #tpu.memory_space<vmem>>, vector<1x1024xf32>
    %26 = vector.broadcast %25 : vector<1x1024xf32> to vector<16x1024xf32>
    %27 = arith.addf %24, %26 : vector<16x1024xf32>
    %cst_19 = arith.constant 0.000000e+00 : f32
    %28 = vector.broadcast %cst_19 : f32 to vector<16x1024xf32>
    %29 = arith.cmpf ogt, %27, %28 : vector<16x1024xf32>
    %cst_20 = arith.constant 2.000000e-01 : f32
    %30 = vector.broadcast %cst_20 : f32 to vector<16x1024xf32>
    %31 = arith.mulf %30, %27 : vector<16x1024xf32>
    %32 = arith.select %29, %27, %31 : vector<16x1024xi1>, vector<16x1024xf32>
    %33 = arith.truncf %32 : vector<16x1024xf32> to vector<16x1024xbf16>
    %c0_21 = arith.constant 0 : index
    %c0_22 = arith.constant 0 : index
    %34 = vector.load %arg8[%c0_21, %c0_22] : memref<1024x896xbf16, #tpu.memory_space<vmem>>, vector<1024x896xbf16>
    %cst_23 = arith.constant dense<0.000000e+00> : vector<16x896xf32>
    %35 = tpu.matmul %33, %34, %cst_23 {dimension_numbers = #tpu.dot_dimension_numbers<[1], [0], [0], [1], [0, 0, 1, 1], [], []>} : vector<16x1024xbf16>, vector<1024x896xbf16>, vector<16x896xf32> -> vector<16x896xf32>
    %c0_24 = arith.constant 0 : index
    %c0_25 = arith.constant 0 : index
    %36 = vector.load %arg9[%c0_24, %c0_25] : memref<1x896xf32, #tpu.memory_space<vmem>>, vector<1x896xf32>
    %37 = vector.broadcast %36 : vector<1x896xf32> to vector<16x896xf32>
    %38 = arith.addf %35, %37 : vector<16x896xf32>
    %39 = math.tanh %38 : vector<16x896xf32>
    %c0_26 = arith.constant 0 : index
    %c0_27 = arith.constant 0 : index
    %40 = vector.load %arg10[%c0_26, %c0_27] : memref<16x896xf32, #tpu.memory_space<vmem>>, vector<16x896xf32>
    tpu.vector_store %arg10[%c0_26, %c0_27], %39 {strides = array<i32>} : memref<16x896xf32, #tpu.memory_space<vmem>>, vector<16x896xf32>,
    return
  }
  func.func @transform_0(%arg0: i32) -> (i32, i32) {
    %c0_i32 = arith.constant 0 : i32
    %c0_i32_0 = arith.constant 0 : i32
    return %arg0, %c0_i32 : i32, i32
  }
  func.func @transform_1(%arg0: i32) -> (i32, i32) {
    %c0_i32 = arith.constant 0 : i32
    %c0_i32_0 = arith.constant 0 : i32
    %c0_i32_1 = arith.constant 0 : i32
    return %c0_i32, %c0_i32_0 : i32, i32
  }
  func.func @transform_2(%arg0: i32) -> (i32, i32) {
    %c0_i32 = arith.constant 0 : i32
    %c0_i32_0 = arith.constant 0 : i32
    %c0_i32_1 = arith.constant 0 : i32
    return %c0_i32, %c0_i32_0 : i32, i32
  }
  func.func @transform_3(%arg0: i32) -> (i32, i32) {
    %c0_i32 = arith.constant 0 : i32
    %c0_i32_0 = arith.constant 0 : i32
    %c0_i32_1 = arith.constant 0 : i32
    return %c0_i32, %c0_i32_0 : i32, i32
  }
  func.func @transform_4(%arg0: i32) -> (i32, i32) {
    %c0_i32 = arith.constant 0 : i32
    %c0_i32_0 = arith.constant 0 : i32
    %c0_i32_1 = arith.constant 0 : i32
    return %c0_i32, %c0_i32_0 : i32, i32
  }
  func.func @transform_5(%arg0: i32) -> (i32, i32) {
    %c0_i32 = arith.constant 0 : i32
    %c0_i32_0 = arith.constant 0 : i32
    %c0_i32_1 = arith.constant 0 : i32
    return %c0_i32, %c0_i32_0 : i32, i32
  }
  func.func @transform_6(%arg0: i32) -> (i32, i32) {
    %c0_i32 = arith.constant 0 : i32
    %c0_i32_0 = arith.constant 0 : i32
    %c0_i32_1 = arith.constant 0 : i32
    return %c0_i32, %c0_i32_0 : i32, i32
  }
  func.func @transform_7(%arg0: i32) -> (i32, i32) {
    %c0_i32 = arith.constant 0 : i32
    %c0_i32_0 = arith.constant 0 : i32
    %c0_i32_1 = arith.constant 0 : i32
    return %c0_i32, %c0_i32_0 : i32, i32
  }
  func.func @transform_8(%arg0: i32) -> (i32, i32) {
    %c0_i32 = arith.constant 0 : i32
    %c0_i32_0 = arith.constant 0 : i32
    %c0_i32_1 = arith.constant 0 : i32
    return %c0_i32, %c0_i32_0 : i32, i32
  }
  func.func @transform_9(%arg0: i32) -> (i32, i32) {
    %c0_i32 = arith.constant 0 : i32
    %c0_i32_0 = arith.constant 0 : i32
    return %arg0, %c0_i32 : i32, i32
  }
}

module attributes {stable_mosaic.version = 11 : i64} {
  func.func @generator_kernel(%arg0: i32, %arg1: memref<16x128xbf16, #tpu.memory_space<vmem>>, %arg2: memref<128x256xbf16, #tpu.memory_space<vmem>>, %arg3: memref<1x256xf32, #tpu.memory_space<vmem>>, %arg4: memref<256x512xbf16, #tpu.memory_space<vmem>>, %arg5: memref<1x512xf32, #tpu.memory_space<vmem>>, %arg6: memref<512x1024xbf16, #tpu.memory_space<vmem>>, %arg7: memref<1x1024xf32, #tpu.memory_space<vmem>>, %arg8: memref<1024x896xbf16, #tpu.memory_space<vmem>>, %arg9: memref<1x896xf32, #tpu.memory_space<vmem>>, %arg10: memref<16x896xf32, #tpu.memory_space<vmem>>) attributes {dimension_semantics = [#tpu.dimension_semantics<parallel>], iteration_bounds = array<i64: 1>, scalar_prefetch = 0 : i64, scratch_operands = 0 : i64, tpu.core_type = #tpu.core_type<tc>, window_params = [{transform_indices = @transform_0, window_bounds = array<i64: 16, 128>}, {pipeline_mode = #tpu.pipeline_mode<synchronous>, transform_indices = @transform_1, window_bounds = array<i64: 128, 256>}, {pipeline_mode = #tpu.pipeline_mode<synchronous>, transform_indices = @transform_2, window_bounds = array<i64: 1, 256>}, {pipeline_mode = #tpu.pipeline_mode<synchronous>, transform_indices = @transform_3, window_bounds = array<i64: 256, 512>}, {pipeline_mode = #tpu.pipeline_mode<synchronous>, transform_indices = @transform_4, window_bounds = array<i64: 1, 512>}, {pipeline_mode = #tpu.pipeline_mode<synchronous>, transform_indices = @transform_5, window_bounds = array<i64: 512, 1024>}, {pipeline_mode = #tpu.pipeline_mode<synchronous>, transform_indices = @transform_6, window_bounds = array<i64: 1, 1024>}, {pipeline_mode = #tpu.pipeline_mode<synchronous>, transform_indices = @transform_7, window_bounds = array<i64: 1024, 896>}, {pipeline_mode = #tpu.pipeline_mode<synchronous>, transform_indices = @transform_8, window_bounds = array<i64: 1, 896>}, {transform_indices = @transform_9, window_bounds = array<i64: 16, 896>}]} {
    %c0 = arith.constant 0 : index
    %c0_0 = arith.constant 0 : index
    %0 = vector.load %arg1[%c0, %c0_0] : memref<16x128xbf16, #tpu.memory_space<vmem>>, vector<16x128xbf16>
    %c0_1 = arith.constant 0 : index
    %c0_2 = arith.constant 0 : index
    %1 = vector.load %arg2[%c0_1, %c0_2] : memref<128x256xbf16, #tpu.memory_space<vmem>>, vector<128x256xbf16>
    %cst = arith.constant dense<0.000000e+00> : vector<16x256xf32>
    %2 = tpu.matmul %0, %1, %cst {dimension_numbers = #tpu.dot_dimension_numbers<[1], [0], [0], [1], [0, 0, 1, 1], [], []>} : vector<16x128xbf16>, vector<128x256xbf16>, vector<16x256xf32> -> vector<16x256xf32>
    %c0_3 = arith.constant 0 : index
    %c0_4 = arith.constant 0 : index
    %3 = vector.load %arg3[%c0_3, %c0_4] : memref<1x256xf32, #tpu.memory_space<vmem>>, vector<1x256xf32>
    %4 = vector.broadcast %3 : vector<1x256xf32> to vector<16x256xf32>
    %5 = arith.addf %2, %4 : vector<16x256xf32>
    %cst_5 = arith.constant 0.000000e+00 : f32
    %6 = vector.broadcast %cst_5 : f32 to vector<16x256xf32>
    %7 = arith.cmpf ogt, %5, %6 : vector<16x256xf32>
    %cst_6 = arith.constant 2.000000e-01 : f32
    %8 = vector.broadcast %cst_6 : f32 to vector<16x256xf32>
    %9 = arith.mulf %8, %5 : vector<16x256xf32>
    %10 = arith.select %7, %5, %9 : vector<16x256xi1>, vector<16x256xf32>
    %11 = arith.truncf %10 : vector<16x256xf32> to vector<16x256xbf16>
    %c0_7 = arith.constant 0 : index
    %c0_8 = arith.constant 0 : index
    %12 = vector.load %arg4[%c0_7, %c0_8] : memref<256x512xbf16, #tpu.memory_space<vmem>>, vector<256x512xbf16>
    %cst_9 = arith.constant dense<0.000000e+00> : vector<16x512xf32>
    %13 = tpu.matmul %11, %12, %cst_9 {dimension_numbers = #tpu.dot_dimension_numbers<[1], [0], [0], [1], [0, 0, 1, 1], [], []>} : vector<16x256xbf16>, vector<256x512xbf16>, vector<16x512xf32> -> vector<16x512xf32>
    %c0_10 = arith.constant 0 : index
    %c0_11 = arith.constant 0 : index
    %14 = vector.load %arg5[%c0_10, %c0_11] : memref<1x512xf32, #tpu.memory_space<vmem>>, vector<1x512xf32>
    %15 = vector.broadcast %14 : vector<1x512xf32> to vector<16x512xf32>
    %16 = arith.addf %13, %15 : vector<16x512xf32>
    %cst_12 = arith.constant 0.000000e+00 : f32
    %17 = vector.broadcast %cst_12 : f32 to vector<16x512xf32>
    %18 = arith.cmpf ogt, %16, %17 : vector<16x512xf32>
    %cst_13 = arith.constant 2.000000e-01 : f32
    %19 = vector.broadcast %cst_13 : f32 to vector<16x512xf32>
    %20 = arith.mulf %19, %16 : vector<16x512xf32>
    %21 = arith.select %18, %16, %20 : vector<16x512xi1>, vector<16x512xf32>
    %22 = arith.truncf %21 : vector<16x512xf32> to vector<16x512xbf16>
    %c0_14 = arith.constant 0 : index
    %c0_15 = arith.constant 0 : index
    %23 = vector.load %arg6[%c0_14, %c0_15] : memref<512x1024xbf16, #tpu.memory_space<vmem>>, vector<512x1024xbf16>
    %cst_16 = arith.constant dense<0.000000e+00> : vector<16x1024xf32>
    %24 = tpu.matmul %22, %23, %cst_16 {dimension_numbers = #tpu.dot_dimension_numbers<[1], [0], [0], [1], [0, 0, 1, 1], [], []>} : vector<16x512xbf16>, vector<512x1024xbf16>, vector<16x1024xf32> -> vector<16x1024xf32>
    %c0_17 = arith.constant 0 : index
    %c0_18 = arith.constant 0 : index
    %25 = vector.load %arg7[%c0_17, %c0_18] : memref<1x1024xf32, #tpu.memory_space<vmem>>, vector<1x1024xf32>
    %26 = vector.broadcast %25 : vector<1x1024xf32> to vector<16x1024xf32>
    %27 = arith.addf %24, %26 : vector<16x1024xf32>
    %cst_19 = arith.constant 0.000000e+00 : f32
    %28 = vector.broadcast %cst_19 : f32 to vector<16x1024xf32>
    %29 = arith.cmpf ogt, %27, %28 : vector<16x1024xf32>
    %cst_20 = arith.constant 2.000000e-01 : f32
    %30 = vector.broadcast %cst_20 : f32 to vector<16x1024xf32>
    %31 = arith.mulf %30, %27 : vector<16x1024xf32>
    %32 = arith.select %29, %27, %31 : vector<16x1024xi1>, vector<16x1024xf32>
    %33 = arith.truncf %32 : vector<16x1024xf32> to vector<16x1024xbf16>
    %c0_21 = arith.constant 0 : index
    %c0_22 = arith.constant 0 : index
    %34 = vector.load %arg8[%c0_21, %c0_22] : memref<1024x896xbf16, #tpu.memory_space<vmem>>, vector<1024x896xbf16>
    %cst_23 = arith.constant dense<0.000000e+00> : vector<16x896xf32>
    %35 = tpu.matmul %33, %34, %cst_23 {dimension_numbers = #tpu.dot_dimension_numbers<[1], [0], [0], [1], [0, 0, 1, 1], [], []>} : vector<16x1024xbf16>, vector<1024x896xbf16>, vector<16x896xf32> -> vector<16x896xf32>
    %c0_24 = arith.constant 0 : index
    %c0_25 = arith.constant 0 : index
    %36 = vector.load %arg9[%c0_24, %c0_25] : memref<1x896xf32, #tpu.memory_space<vmem>>, vector<1x896xf32>
    %37 = vector.broadcast %36 : vector<1x896xf32> to vector<16x896xf32>
    %38 = arith.addf %35, %37 : vector<16x896xf32>
    %39 = math.tanh %38 : vector<16x896xf32>
    %c0_26 = arith.constant 0 : index
    %c0_27 = arith.constant 0 : index
    %40 = vector.load %arg10[%c0_26, %c0_27] : memref<16x896xf32, #tpu.memory_space<vmem>>, vector<16x896xf32>
    tpu.vector_store %arg10[%c0_26, %c0_27], %39 {strides = array<i32>} : memref<16x896xf32, #tpu.memory_space<vmem>>, vector<16x896xf32>,
    return
  }
  func.func @transform_0(%arg0: i32) -> (i32, i32) {
    %c0_i32 = arith.constant 0 : i32
    %c0_i32_0 = arith.constant 0 : i32
    return %arg0, %c0_i32 : i32, i32
  }
  func.func @transform_1(%arg0: i32) -> (i32, i32) {
    %c0_i32 = arith.constant 0 : i32
    %c0_i32_0 = arith.constant 0 : i32
    %c0_i32_1 = arith.constant 0 : i32
    return %c0_i32, %c0_i32_0 : i32, i32
  }
  func.func @transform_2(%arg0: i32) -> (i32, i32) {
    %c0_i32 = arith.constant 0 : i32
    %c0_i32_0 = arith.constant 0 : i32
    %c0_i32_1 = arith.constant 0 : i32
    return %c0_i32, %c0_i32_0 : i32, i32
  }
  func.func @transform_3(%arg0: i32) -> (i32, i32) {
    %c0_i32 = arith.constant 0 : i32
    %c0_i32_0 = arith.constant 0 : i32
    %c0_i32_1 = arith.constant 0 : i32
    return %c0_i32, %c0_i32_0 : i32, i32
  }
  func.func @transform_4(%arg0: i32) -> (i32, i32) {
    %c0_i32 = arith.constant 0 : i32
    %c0_i32_0 = arith.constant 0 : i32
    %c0_i32_1 = arith.constant 0 : i32
    return %c0_i32, %c0_i32_0 : i32, i32
  }
  func.func @transform_5(%arg0: i32) -> (i32, i32) {
    %c0_i32 = arith.constant 0 : i32
    %c0_i32_0 = arith.constant 0 : i32
    %c0_i32_1 = arith.constant 0 : i32
    return %c0_i32, %c0_i32_0 : i32, i32
  }
  func.func @transform_6(%arg0: i32) -> (i32, i32) {
    %c0_i32 = arith.constant 0 : i32
    %c0_i32_0 = arith.constant 0 : i32
    %c0_i32_1 = arith.constant 0 : i32
    return %c0_i32, %c0_i32_0 : i32, i32
  }
  func.func @transform_7(%arg0: i32) -> (i32, i32) {
    %c0_i32 = arith.constant 0 : i32
    %c0_i32_0 = arith.constant 0 : i32
    %c0_i32_1 = arith.constant 0 : i32
    return %c0_i32, %c0_i32_0 : i32, i32
  }
  func.func @transform_8(%arg0: i32) -> (i32, i32) {
    %c0_i32 = arith.constant 0 : i32
    %c0_i32_0 = arith.constant 0 : i32
    %c0_i32_1 = arith.constant 0 : i32
    return %c0_i32, %c0_i32_0 : i32, i32
  }
  func.func @transform_9(%arg0: i32) -> (i32, i32) {
    %c0_i32 = arith.constant 0 : i32
    %c0_i32_0 = arith.constant 0 : i32
    return %arg0, %c0_i32 : i32, i32
  }
}

</mosaic_0001>

<llo_original>
// kernel: tpu_custom_call.1
$region0: #{tpu_custom_call.1}
  #allocation0 [shape = 'u32[]', space=smem, size = 0x4, offset = 0x4, fixed_abs, tag = 'smem constant byte address 0x4 - core index']
  #allocation1 [shape = 'u32[72,128]{1,0:T(1,128)}', space=vmem, size = 0x9000, scoped, tag = 'internal scratch']
  %s0 = inlined_call_operand.hbm [shape: bf16[16,128], index: 0, kind: input, shape index: {}]
  %s1 = inlined_call_operand.hbm [shape: bf16[128,256], index: 1, kind: input, shape index: {}]
  %s2 = inlined_call_operand.hbm [shape: f32[1,256], index: 2, kind: input, shape index: {}]
  %s3 = inlined_call_operand.hbm [shape: bf16[256,512], index: 3, kind: input, shape index: {}]
  %s4 = inlined_call_operand.hbm [shape: f32[1,512], index: 4, kind: input, shape index: {}]
  %s5 = inlined_call_operand.hbm [shape: bf16[512,1024], index: 5, kind: input, shape index: {}]
  %s6 = inlined_call_operand.hbm [shape: f32[1,1024], index: 6, kind: input, shape index: {}]
  %s7 = inlined_call_operand.hbm [shape: bf16[1024,896], index: 7, kind: input, shape index: {}]
  %s8 = inlined_call_operand.hbm [shape: f32[1,896], index: 8, kind: input, shape index: {}]
  %s9 = inlined_call_operand.hbm [shape: f32[16,896], index: 9, kind: output, shape index: {}]
  %s10 = sld [smem:[#allocation0]]
  $region82: #{tpu_custom_call.1} parent=0
    _
  %s12 = ssub.s32 1, %s10
  %s13 = scalar_select 0, %s12, %s10
  $region1: #{tpu_custom_call.1} parent=0
    #allocation2 [shape = 'u8[4096]{0}', space=vmem, size = 0x1000, scoped, tag = 'input window, operand 0, single buffered']
    #allocation3 [shape = 's32[1]{0}', space=sflag, size = 0x4, scoped, tag = 'scoped memory for tpu_custom_call.1']
    #allocation4 [shape = 's32[1]{0}', space=sflag, size = 0x4, scoped, tag = 'scoped memory for tpu_custom_call.1']
    #allocation5 [shape = 'u8[65536]{0}', space=vmem, size = 0x10000, scoped, tag = 'input window, operand 1, single buffered']
    #allocation6 [shape = 's32[1]{0}', space=sflag, size = 0x4, scoped, tag = 'scoped memory for tpu_custom_call.1']
    #allocation7 [shape = 'u8[1024]{0}', space=vmem, size = 0x400, scoped, tag = 'input window, operand 2, single buffered']
    #allocation8 [shape = 'u8[262144]{0}', space=vmem, size = 0x40000, scoped, tag = 'input window, operand 3, single buffered']
    #allocation9 [shape = 's32[1]{0}', space=sflag, size = 0x4, scoped, tag = 'scoped memory for tpu_custom_call.1']
    #allocation10 [shape = 'u8[2048]{0}', space=vmem, size = 0x800, scoped, tag = 'input window, operand 4, single buffered']
    #allocation11 [shape = 'u8[1048576]{0}', space=vmem, size = 0x100000, scoped, tag = 'input window, operand 5, single buffered']
    #allocation12 [shape = 's32[1]{0}', space=sflag, size = 0x4, scoped, tag = 'scoped memory for tpu_custom_call.1']
    #allocation13 [shape = 'u8[4096]{0}', space=vmem, size = 0x1000, scoped, tag = 'input window, operand 6, single buffered']
    #allocation14 [shape = 'u8[1835008]{0}', space=vmem, size = 0x1c0000, scoped, tag = 'input window, operand 7, single buffered']
    #allocation15 [shape = 's32[1]{0}', space=sflag, size = 0x4, scoped, tag = 'scoped memory for tpu_custom_call.1']
    #allocation16 [shape = 'u8[3584]{0}', space=vmem, size = 0x1000, scoped, tag = 'input window, operand 8, single buffered']
    #allocation17 [shape = 'u8[57344]{0}', space=vmem, size = 0xe000, scoped, tag = 'output window, operand 0, single buffered']
    %14 = vsyncpa [#allocation3], 0
    %15 = vsyncpa [#allocation6], 0
    %16 = vsyncpa [#allocation9], 0
    %17 = vsyncpa [#allocation12], 0
    %18 = vsyncpa [#allocation15], 0
    %19 = vsyncpa [#allocation4], 0
    // Predicated region
    $region2: #{tpu_custom_call.1} parent=1 // pred_check
      _
    $region3: #{tpu_custom_call.1} parent=1 // pred_check_branch
      %21 = sbr.rel (0) target = $region5
    $region4: #{tpu_custom_call.1} parent=1 // pred_region
      %23 = vsyncadd [#allocation3], 0
      %s24 = sshll.u32 %s0, 4
      %s25 = int_to_ptr.hbm [resolvable:$true] %s24
      %s26 = sshll.u32 [#allocation2], 4
      %s27 = int_to_ptr.vmem [resolvable:$true] %s26
      %32 = dma.hbm_to_vmem [thread:$0]  %s25, 128, %s27, [#allocation3], 64, 64, 4
    $region5: #{tpu_custom_call.1} parent=1 // pred_fallthru
      _
    // Predicated region
    $region6: #{tpu_custom_call.1} parent=1 // pred_check
      _
    $region7: #{tpu_custom_call.1} parent=1 // pred_check_branch
      %34 = sbr.rel (0) target = $region9
    $region8: #{tpu_custom_call.1} parent=1 // pred_region
      %36 = vsyncadd [#allocation6], 0
      %s37 = sshll.u32 %s1, 4
      %s38 = int_to_ptr.hbm [resolvable:$true] %s37
      %s39 = sshll.u32 [#allocation5], 4
      %s40 = int_to_ptr.vmem [resolvable:$true] %s39
      %45 = dma.hbm_to_vmem [thread:$0]  %s38, 2048, %s40, [#allocation6], 128, 128, 8
    $region9: #{tpu_custom_call.1} parent=1 // pred_fallthru
      _
    // Predicated region
    $region10: #{tpu_custom_call.1} parent=1 // pred_check
      _
    $region11: #{tpu_custom_call.1} parent=1 // pred_check_branch
      %47 = sbr.rel (0) target = $region13
    $region12: #{tpu_custom_call.1} parent=1 // pred_region
      %49 = vsyncadd [#allocation6], 0
      %s51 = sshll.u32 %s2, 4
      %s52 = int_to_ptr.hbm [resolvable:$true] %s51
      %s53 = sshll.u32 [#allocation7], 4
      %s54 = int_to_ptr.vmem [resolvable:$true] %s53
      %56 = dma.hbm_to_vmem [thread:$0]  %s52, 32, %s54, [#allocation6]
    $region13: #{tpu_custom_call.1} parent=1 // pred_fallthru
      _
    // Predicated region
    $region14: #{tpu_custom_call.1} parent=1 // pred_check
      _
    $region15: #{tpu_custom_call.1} parent=1 // pred_check_branch
      %58 = sbr.rel (0) target = $region17
    $region16: #{tpu_custom_call.1} parent=1 // pred_region
      %60 = vsyncadd [#allocation9], 0
      %s61 = sshll.u32 %s3, 4
      %s62 = int_to_ptr.hbm [resolvable:$true] %s61
      %s63 = sshll.u32 [#allocation8], 4
      %s64 = int_to_ptr.vmem [resolvable:$true] %s63
      %69 = dma.hbm_to_vmem [thread:$0]  %s62, 8192, %s64, [#allocation9], 256, 256, 16
    $region17: #{tpu_custom_call.1} parent=1 // pred_fallthru
      _
    // Predicated region
    $region18: #{tpu_custom_call.1} parent=1 // pred_check
      _
    $region19: #{tpu_custom_call.1} parent=1 // pred_check_branch
      %71 = sbr.rel (0) target = $region21
    $region20: #{tpu_custom_call.1} parent=1 // pred_region
      %73 = vsyncadd [#allocation9], 0
      %s75 = sshll.u32 %s4, 4
      %s76 = int_to_ptr.hbm [resolvable:$true] %s75
      %s77 = sshll.u32 [#allocation10], 4
      %s78 = int_to_ptr.vmem [resolvable:$true] %s77
      %80 = dma.hbm_to_vmem [thread:$0]  %s76, 64, %s78, [#allocation9]
    $region21: #{tpu_custom_call.1} parent=1 // pred_fallthru
      _
    // Predicated region
    $region22: #{tpu_custom_call.1} parent=1 // pred_check
      _
    $region23: #{tpu_custom_call.1} parent=1 // pred_check_branch
      %82 = sbr.rel (0) target = $region25
    $region24: #{tpu_custom_call.1} parent=1 // pred_region
      %84 = vsyncadd [#allocation12], 0
      %s85 = sshll.u32 %s5, 4
      %s86 = int_to_ptr.hbm [resolvable:$true] %s85
      %s87 = sshll.u32 [#allocation11], 4
      %s88 = int_to_ptr.vmem [resolvable:$true] %s87
      %93 = dma.hbm_to_vmem [thread:$0]  %s86, 32768, %s88, [#allocation12], 512, 512, 32
    $region25: #{tpu_custom_call.1} parent=1 // pred_fallthru
      _
    // Predicated region
    $region26: #{tpu_custom_call.1} parent=1 // pred_check
      _
    $region27: #{tpu_custom_call.1} parent=1 // pred_check_branch
      %95 = sbr.rel (0) target = $region29
    $region28: #{tpu_custom_call.1} parent=1 // pred_region
      %97 = vsyncadd [#allocation12], 0
      %s99 = sshll.u32 %s6, 4
      %s100 = int_to_ptr.hbm [resolvable:$true] %s99
      %s101 = sshll.u32 [#allocation13], 4
      %s102 = int_to_ptr.vmem [resolvable:$true] %s101
      %104 = dma.hbm_to_vmem [thread:$0]  %s100, 128, %s102, [#allocation12]
    $region29: #{tpu_custom_call.1} parent=1 // pred_fallthru
      _
    // Predicated region
    $region30: #{tpu_custom_call.1} parent=1 // pred_check
      _
    $region31: #{tpu_custom_call.1} parent=1 // pred_check_branch
      %106 = sbr.rel (0) target = $region33
    $region32: #{tpu_custom_call.1} parent=1 // pred_region
      %108 = vsyncadd [#allocation15], 0
      %s109 = sshll.u32 %s7, 4
      %s110 = int_to_ptr.hbm [resolvable:$true] %s109
      %s111 = sshll.u32 [#allocation14], 4
      %s112 = int_to_ptr.vmem [resolvable:$true] %s111
      %117 = dma.hbm_to_vmem [thread:$0]  %s110, 57344, %s112, [#allocation15], 448, 448, 28
    $region33: #{tpu_custom_call.1} parent=1 // pred_fallthru
      _
    // Predicated region
    $region34: #{tpu_custom_call.1} parent=1 // pred_check
      _
    $region35: #{tpu_custom_call.1} parent=1 // pred_check_branch
      %119 = sbr.rel (0) target = $region37
    $region36: #{tpu_custom_call.1} parent=1 // pred_region
      %121 = vsyncadd [#allocation15], 0
      %s123 = sshll.u32 %s8, 4
      %s124 = int_to_ptr.hbm [resolvable:$true] %s123
      %s125 = sshll.u32 [#allocation16], 4
      %s126 = int_to_ptr.vmem [resolvable:$true] %s125
      %128 = dma.hbm_to_vmem [thread:$0]  %s124, 112, %s126, [#allocation15]
    $region37: #{tpu_custom_call.1} parent=1 // pred_fallthru
      _
    // Predicated region
    $region38: #{tpu_custom_call.1} parent=1 // pred_check
      _
    $region39: #{tpu_custom_call.1} parent=1 // pred_check_branch
      %130 = sbr.rel (0) target = $region41
    $region40: #{tpu_custom_call.1} parent=1 // pred_region
      %132 = dma.done [#allocation3], 128
    $region41: #{tpu_custom_call.1} parent=1 // pred_fallthru
      _
    // Predicated region
    $region42: #{tpu_custom_call.1} parent=1 // pred_check
      _
    $region43: #{tpu_custom_call.1} parent=1 // pred_check_branch
      %134 = sbr.rel (0) target = $region45
    $region44: #{tpu_custom_call.1} parent=1 // pred_region
      %136 = dma.done [#allocation6], 2048
    $region45: #{tpu_custom_call.1} parent=1 // pred_fallthru
      _
    // Predicated region
    $region46: #{tpu_custom_call.1} parent=1 // pred_check
      _
    $region47: #{tpu_custom_call.1} parent=1 // pred_check_branch
      %138 = sbr.rel (0) target = $region49
    $region48: #{tpu_custom_call.1} parent=1 // pred_region
      %140 = dma.done [#allocation6], 32
    $region49: #{tpu_custom_call.1} parent=1 // pred_fallthru
      _
    // Predicated region
    $region50: #{tpu_custom_call.1} parent=1 // pred_check
      _
    $region51: #{tpu_custom_call.1} parent=1 // pred_check_branch
      %142 = sbr.rel (0) target = $region53
    $region52: #{tpu_custom_call.1} parent=1 // pred_region
      %144 = dma.done [#allocation9], 8192
    $region53: #{tpu_custom_call.1} parent=1 // pred_fallthru
      _
    // Predicated region
    $region54: #{tpu_custom_call.1} parent=1 // pred_check
      _
    $region55: #{tpu_custom_call.1} parent=1 // pred_check_branch
      %146 = sbr.rel (0) target = $region57
    $region56: #{tpu_custom_call.1} parent=1 // pred_region
      %148 = dma.done [#allocation9], 64
    $region57: #{tpu_custom_call.1} parent=1 // pred_fallthru
      _
    // Predicated region
    $region58: #{tpu_custom_call.1} parent=1 // pred_check
      _
    $region59: #{tpu_custom_call.1} parent=1 // pred_check_branch
      %150 = sbr.rel (0) target = $region61
    $region60: #{tpu_custom_call.1} parent=1 // pred_region
      %152 = dma.done [#allocation12], 32768
    $region61: #{tpu_custom_call.1} parent=1 // pred_fallthru
      _
    // Predicated region
    $region62: #{tpu_custom_call.1} parent=1 // pred_check
      _
    $region63: #{tpu_custom_call.1} parent=1 // pred_check_branch
      %154 = sbr.rel (0) target = $region65
    $region64: #{tpu_custom_call.1} parent=1 // pred_region
      %156 = dma.done [#allocation12], 128
    $region65: #{tpu_custom_call.1} parent=1 // pred_fallthru
      _
    // Predicated region
    $region66: #{tpu_custom_call.1} parent=1 // pred_check
      _
    $region67: #{tpu_custom_call.1} parent=1 // pred_check_branch
      %158 = sbr.rel (0) target = $region69
    $region68: #{tpu_custom_call.1} parent=1 // pred_region
      %160 = dma.done [#allocation15], 57344
    $region69: #{tpu_custom_call.1} parent=1 // pred_fallthru
      _
    // Predicated region
    $region70: #{tpu_custom_call.1} parent=1 // pred_check
      _
    $region71: #{tpu_custom_call.1} parent=1 // pred_check_branch
      %162 = sbr.rel (0) target = $region73
    $region72: #{tpu_custom_call.1} parent=1 // pred_region
      %164 = dma.done [#allocation15], 112
    $region73: #{tpu_custom_call.1} parent=1 // pred_fallthru
      _
    %v165 = vld [vmem:[#allocation2] sm:$0xf]
    %v166 = vld [vmem:[#allocation2 + $0x4] sm:$0xf]
    %v167 = vld [vmem:[#allocation5] sm:$0xff]
    %v168 = vld [vmem:[#allocation5 + $0x8] sm:$0xff]
    %v169 = vld [vmem:[#allocation5 + $0x10] sm:$0xff]
    %v170 = vld [vmem:[#allocation5 + $0x18] sm:$0xff]
    %v171 = vld [vmem:[#allocation5 + $0x20] sm:$0xff]
    %v172 = vld [vmem:[#allocation5 + $0x28] sm:$0xff]
    %v173 = vld [vmem:[#allocation5 + $0x30] sm:$0xff]
    %v174 = vld [vmem:[#allocation5 + $0x38] sm:$0xff]
    %v175 = vld [vmem:[#allocation5 + $0x40] sm:$0xff]
    %v176 = vld [vmem:[#allocation5 + $0x48] sm:$0xff]
    %v177 = vld [vmem:[#allocation5 + $0x50] sm:$0xff]
    %v178 = vld [vmem:[#allocation5 + $0x58] sm:$0xff]
    %v179 = vld [vmem:[#allocation5 + $0x60] sm:$0xff]
    %v180 = vld [vmem:[#allocation5 + $0x68] sm:$0xff]
    %v181 = vld [vmem:[#allocation5 + $0x70] sm:$0xff]
    %v182 = vld [vmem:[#allocation5 + $0x78] sm:$0xff]
    %v183 = vld [vmem:[#allocation7] sm:$0x3]
    %v185 = vperm.slane %v183, 0
    %v186 = vperm.slane %v183, 1
    %v191 = vunpack.c.l.b16 %v165
    %v192 = vunpack.c.l.b16 %v166
    %v193 = vpack.c.b16 %v192, %v191
    %v211 = vunpack.c.l.b16 %v167
    %v212 = vunpack.c.h.b16 %v167
    %v213 = vunpack.c.l.b16 %v168
    %v214 = vunpack.c.h.b16 %v168
    %v215 = vunpack.c.l.b16 %v169
    %v216 = vunpack.c.h.b16 %v169
    %v217 = vunpack.c.l.b16 %v170
    %v218 = vunpack.c.h.b16 %v170
    %v219 = vunpack.c.l.b16 %v171
    %v220 = vunpack.c.h.b16 %v171
    %v221 = vunpack.c.l.b16 %v172
    %v222 = vunpack.c.h.b16 %v172
    %v223 = vunpack.c.l.b16 %v173
    %v224 = vunpack.c.h.b16 %v173
    %v225 = vunpack.c.l.b16 %v174
    %v226 = vunpack.c.h.b16 %v174
    %v227 = vunpack.c.l.b16 %v175
    %v228 = vunpack.c.h.b16 %v175
    %v229 = vunpack.c.l.b16 %v176
    %v230 = vunpack.c.h.b16 %v176
    %v231 = vunpack.c.l.b16 %v177
    %v232 = vunpack.c.h.b16 %v177
    %v233 = vunpack.c.l.b16 %v178
    %v234 = vunpack.c.h.b16 %v178
    %v235 = vunpack.c.l.b16 %v179
    %v236 = vunpack.c.h.b16 %v179
    %v237 = vunpack.c.l.b16 %v180
    %v238 = vunpack.c.h.b16 %v180
    %v239 = vunpack.c.l.b16 %v181
    %v240 = vunpack.c.h.b16 %v181
    %v241 = vunpack.c.l.b16 %v182
    %v242 = vunpack.c.h.b16 %v182
    %v243 = vpack.c.b16 %v213, %v211
    %v244 = vpack.c.b16 %v214, %v212
    %v245 = vpack.c.b16 %v217, %v215
    %v246 = vpack.c.b16 %v218, %v216
    %v247 = vpack.c.b16 %v221, %v219
    %v248 = vpack.c.b16 %v222, %v220
    %v249 = vpack.c.b16 %v225, %v223
    %v250 = vpack.c.b16 %v226, %v224
    %v251 = vpack.c.b16 %v229, %v227
    %v252 = vpack.c.b16 %v230, %v228
    %v253 = vpack.c.b16 %v233, %v231
    %v254 = vpack.c.b16 %v234, %v232
    %v255 = vpack.c.b16 %v237, %v235
    %v256 = vpack.c.b16 %v238, %v236
    %v257 = vpack.c.b16 %v241, %v239
    %v258 = vpack.c.b16 %v242, %v240
    %275 = vmatpush.bf16.msra.mxu0 %v257
    %276 = vmatpush.bf16.msra.mxu0 %v255
    %277 = vmatpush.bf16.msra.mxu0 %v253
    %278 = vmatpush.bf16.msra.mxu0 %v251
    %279 = vmatpush.bf16.msra.mxu0 %v249
    %280 = vmatpush.bf16.msra.mxu0 %v247
    %281 = vmatpush.bf16.msra.mxu0 %v245
    %282 = vmatpush.bf16.msra.mxu0 %v243
    %283 = vmatmul.bf16.gmra.mxu0 %v193
    %v284 = vpop.f32.mrf.mxu0
    %v285 = vadd.f32 %v185, %v284
    %v286 = vpop.f32.mrf.mxu0
    %v287 = vadd.f32 %v185, %v286
    %288 = vdwg.mxu0
    %289 = vmatpush.bf16.msra.mxu0 %v258
    %290 = vmatpush.bf16.msra.mxu0 %v256
    %291 = vmatpush.bf16.msra.mxu0 %v254
    %292 = vmatpush.bf16.msra.mxu0 %v252
    %293 = vmatpush.bf16.msra.mxu0 %v250
    %294 = vmatpush.bf16.msra.mxu0 %v248
    %295 = vmatpush.bf16.msra.mxu0 %v246
    %296 = vmatpush.bf16.msra.mxu0 %v244
    %297 = vmatmul.bf16.gmra.mxu0 %v193
    %v298 = vpop.f32.mrf.mxu0
    %v299 = vadd.f32 %v186, %v298
    %v300 = vpop.f32.mrf.mxu0
    %v301 = vadd.f32 %v186, %v300
    %302 = vdwg.mxu0
    %vm303 = vcmp.gt.f32.partialorder %v285, 0.0
    %vm304 = vcmp.gt.f32.partialorder %v299, 0.0
    %vm305 = vcmp.gt.f32.partialorder %v287, 0.0
    %vm306 = vcmp.gt.f32.partialorder %v301, 0.0
    %v307 = vmul.f32 %v285, 0.2
    %v308 = vmul.f32 %v299, 0.2
    %v309 = vmul.f32 %v287, 0.2
    %v310 = vmul.f32 %v301, 0.2
    %v311 = vsel %vm303, %v285, %v307
    %v312 = vsel %vm304, %v299, %v308
    %v313 = vsel %vm305, %v287, %v309
    %v314 = vsel %vm306, %v301, %v310
    %v315 = vpack.c.bf16 %v313, %v311
    %v316 = vpack.c.bf16 %v314, %v312
    %v317 = vld [vmem:[#allocation8] sm:$0xff]
    %v318 = vld [vmem:[#allocation8 + $0x8] sm:$0xff]
    %v319 = vld [vmem:[#allocation8 + $0x10] sm:$0xff]
    %v320 = vld [vmem:[#allocation8 + $0x18] sm:$0xff]
    %v321 = vld [vmem:[#allocation8 + $0x20] sm:$0xff]
    %v322 = vld [vmem:[#allocation8 + $0x28] sm:$0xff]
    %v323 = vld [vmem:[#allocation8 + $0x30] sm:$0xff]
    %v324 = vld [vmem:[#allocation8 + $0x38] sm:$0xff]
    %v325 = vld [vmem:[#allocation8 + $0x40] sm:$0xff]
    %v326 = vld [vmem:[#allocation8 + $0x48] sm:$0xff]
    %v327 = vld [vmem:[#allocation8 + $0x50] sm:$0xff]
    %v328 = vld [vmem:[#allocation8 + $0x58] sm:$0xff]
    %v329 = vld [vmem:[#allocation8 + $0x60] sm:$0xff]
    %v330 = vld [vmem:[#allocation8 + $0x68] sm:$0xff]
    %v331 = vld [vmem:[#allocation8 + $0x70] sm:$0xff]
    %v332 = vld [vmem:[#allocation8 + $0x78] sm:$0xff]
    %v333 = vld [vmem:[#allocation8 + $0x80] sm:$0xff]
    %v334 = vld [vmem:[#allocation8 + $0x88] sm:$0xff]
    %v335 = vld [vmem:[#allocation8 + $0x90] sm:$0xff]
    %v336 = vld [vmem:[#allocation8 + $0x98] sm:$0xff]
    %v337 = vld [vmem:[#allocation8 + $0xa0] sm:$0xff]
    %v338 = vld [vmem:[#allocation8 + $0xa8] sm:$0xff]
    %v339 = vld [vmem:[#allocation8 + $0xb0] sm:$0xff]
    %v340 = vld [vmem:[#allocation8 + $0xb8] sm:$0xff]
    %v341 = vld [vmem:[#allocation8 + $0xc0] sm:$0xff]
    %v342 = vld [vmem:[#allocation8 + $0xc8] sm:$0xff]
    %v343 = vld [vmem:[#allocation8 + $0xd0] sm:$0xff]
    %v344 = vld [vmem:[#allocation8 + $0xd8] sm:$0xff]
    %v345 = vld [vmem:[#allocation8 + $0xe0] sm:$0xff]
    %v346 = vld [vmem:[#allocation8 + $0xe8] sm:$0xff]
    %v347 = vld [vmem:[#allocation8 + $0xf0] sm:$0xff]
    %v348 = vld [vmem:[#allocation8 + $0xf8] sm:$0xff]
    %v349 = vld [vmem:[#allocation8 + $0x100] sm:$0xff]
    %v350 = vld [vmem:[#allocation8 + $0x108] sm:$0xff]
    %v351 = vld [vmem:[#allocation8 + $0x110] sm:$0xff]
    %v352 = vld [vmem:[#allocation8 + $0x118] sm:$0xff]
    %v353 = vld [vmem:[#allocation8 + $0x120] sm:$0xff]
    %v354 = vld [vmem:[#allocation8 + $0x128] sm:$0xff]
    %v355 = vld [vmem:[#allocation8 + $0x130] sm:$0xff]
    %v356 = vld [vmem:[#allocation8 + $0x138] sm:$0xff]
    %v357 = vld [vmem:[#allocation8 + $0x140] sm:$0xff]
    %v358 = vld [vmem:[#allocation8 + $0x148] sm:$0xff]
    %v359 = vld [vmem:[#allocation8 + $0x150] sm:$0xff]
    %v360 = vld [vmem:[#allocation8 + $0x158] sm:$0xff]
    %v361 = vld [vmem:[#allocation8 + $0x160] sm:$0xff]
    %v362 = vld [vmem:[#allocation8 + $0x168] sm:$0xff]
    %v363 = vld [vmem:[#allocation8 + $0x170] sm:$0xff]
    %v364 = vld [vmem:[#allocation8 + $0x178] sm:$0xff]
    %v365 = vld [vmem:[#allocation8 + $0x180] sm:$0xff]
    %v366 = vld [vmem:[#allocation8 + $0x188] sm:$0xff]
    %v367 = vld [vmem:[#allocation8 + $0x190] sm:$0xff]
    %v368 = vld [vmem:[#allocation8 + $0x198] sm:$0xff]
    %v369 = vld [vmem:[#allocation8 + $0x1a0] sm:$0xff]
    %v370 = vld [vmem:[#allocation8 + $0x1a8] sm:$0xff]
    %v371 = vld [vmem:[#allocation8 + $0x1b0] sm:$0xff]
    %v372 = vld [vmem:[#allocation8 + $0x1b8] sm:$0xff]
    %v373 = vld [vmem:[#allocation8 + $0x1c0] sm:$0xff]
    %v374 = vld [vmem:[#allocation8 + $0x1c8] sm:$0xff]
    %v375 = vld [vmem:[#allocation8 + $0x1d0] sm:$0xff]
    %v376 = vld [vmem:[#allocation8 + $0x1d8] sm:$0xff]
    %v377 = vld [vmem:[#allocation8 + $0x1e0] sm:$0xff]
    %v378 = vld [vmem:[#allocation8 + $0x1e8] sm:$0xff]
    %v379 = vld [vmem:[#allocation8 + $0x1f0] sm:$0xff]
    %v380 = vld [vmem:[#allocation8 + $0x1f8] sm:$0xff]
    %v381 = vld [vmem:[#allocation10] sm:$0xf]
    %v383 = vperm.slane %v381, 0
    %v384 = vperm.slane %v381, 1
    %v385 = vperm.slane %v381, 2
    %v386 = vperm.slane %v381, 3
    %v455 = vunpack.c.l.b16 %v317
    %v456 = vunpack.c.h.b16 %v317
    %v457 = vunpack.c.l.b16 %v318
    %v458 = vunpack.c.h.b16 %v318
    %v459 = vunpack.c.l.b16 %v319
    %v460 = vunpack.c.h.b16 %v319
    %v461 = vunpack.c.l.b16 %v320
    %v462 = vunpack.c.h.b16 %v320
    %v463 = vunpack.c.l.b16 %v321
    %v464 = vunpack.c.h.b16 %v321
    %v465 = vunpack.c.l.b16 %v322
    %v466 = vunpack.c.h.b16 %v322
    %v467 = vunpack.c.l.b16 %v323
    %v468 = vunpack.c.h.b16 %v323
    %v469 = vunpack.c.l.b16 %v324
    %v470 = vunpack.c.h.b16 %v324
    %v471 = vunpack.c.l.b16 %v325
    %v472 = vunpack.c.h.b16 %v325
    %v473 = vunpack.c.l.b16 %v326
    %v474 = vunpack.c.h.b16 %v326
    %v475 = vunpack.c.l.b16 %v327
    %v476 = vunpack.c.h.b16 %v327
    %v477 = vunpack.c.l.b16 %v328
    %v478 = vunpack.c.h.b16 %v328
    %v479 = vunpack.c.l.b16 %v329
    %v480 = vunpack.c.h.b16 %v329
    %v481 = vunpack.c.l.b16 %v330
    %v482 = vunpack.c.h.b16 %v330
    %v483 = vunpack.c.l.b16 %v331
    %v484 = vunpack.c.h.b16 %v331
    %v485 = vunpack.c.l.b16 %v332
    %v486 = vunpack.c.h.b16 %v332
    %v487 = vunpack.c.l.b16 %v333
    %v488 = vunpack.c.h.b16 %v333
    %v489 = vunpack.c.l.b16 %v334
    %v490 = vunpack.c.h.b16 %v334
    %v491 = vunpack.c.l.b16 %v335
    %v492 = vunpack.c.h.b16 %v335
    %v493 = vunpack.c.l.b16 %v336
    %v494 = vunpack.c.h.b16 %v336
    %v495 = vunpack.c.l.b16 %v337
    %v496 = vunpack.c.h.b16 %v337
    %v497 = vunpack.c.l.b16 %v338
    %v498 = vunpack.c.h.b16 %v338
    %v499 = vunpack.c.l.b16 %v339
    %v500 = vunpack.c.h.b16 %v339
    %v501 = vunpack.c.l.b16 %v340
    %v502 = vunpack.c.h.b16 %v340
    %v503 = vunpack.c.l.b16 %v341
    %v504 = vunpack.c.h.b16 %v341
    %v505 = vunpack.c.l.b16 %v342
    %v506 = vunpack.c.h.b16 %v342
    %v507 = vunpack.c.l.b16 %v343
    %v508 = vunpack.c.h.b16 %v343
    %v509 = vunpack.c.l.b16 %v344
    %v510 = vunpack.c.h.b16 %v344
    %v511 = vunpack.c.l.b16 %v345
    %v512 = vunpack.c.h.b16 %v345
    %v513 = vunpack.c.l.b16 %v346
    %v514 = vunpack.c.h.b16 %v346
    %v515 = vunpack.c.l.b16 %v347
    %v516 = vunpack.c.h.b16 %v347
    %v517 = vunpack.c.l.b16 %v348
    %v518 = vunpack.c.h.b16 %v348
    %v519 = vunpack.c.l.b16 %v349
    %v520 = vunpack.c.h.b16 %v349
    %v521 = vunpack.c.l.b16 %v350
    %v522 = vunpack.c.h.b16 %v350
    %v523 = vunpack.c.l.b16 %v351
    %v524 = vunpack.c.h.b16 %v351
    %v525 = vunpack.c.l.b16 %v352
    %v526 = vunpack.c.h.b16 %v352
    %v527 = vunpack.c.l.b16 %v353
    %v528 = vunpack.c.h.b16 %v353
    %v529 = vunpack.c.l.b16 %v354
    %v530 = vunpack.c.h.b16 %v354
    %v531 = vunpack.c.l.b16 %v355
    %v532 = vunpack.c.h.b16 %v355
    %v533 = vunpack.c.l.b16 %v356
    %v534 = vunpack.c.h.b16 %v356
    %v535 = vunpack.c.l.b16 %v357
    %v536 = vunpack.c.h.b16 %v357
    %v537 = vunpack.c.l.b16 %v358
    %v538 = vunpack.c.h.b16 %v358
    %v539 = vunpack.c.l.b16 %v359
    %v540 = vunpack.c.h.b16 %v359
    %v541 = vunpack.c.l.b16 %v360
    %v542 = vunpack.c.h.b16 %v360
    %v543 = vunpack.c.l.b16 %v361
    %v544 = vunpack.c.h.b16 %v361
    %v545 = vunpack.c.l.b16 %v362
    %v546 = vunpack.c.h.b16 %v362
    %v547 = vunpack.c.l.b16 %v363
    %v548 = vunpack.c.h.b16 %v363
    %v549 = vunpack.c.l.b16 %v364
    %v550 = vunpack.c.h.b16 %v364
    %v551 = vunpack.c.l.b16 %v365
    %v552 = vunpack.c.h.b16 %v365
    %v553 = vunpack.c.l.b16 %v366
    %v554 = vunpack.c.h.b16 %v366
    %v555 = vunpack.c.l.b16 %v367
    %v556 = vunpack.c.h.b16 %v367
    %v557 = vunpack.c.l.b16 %v368
    %v558 = vunpack.c.h.b16 %v368
    %v559 = vunpack.c.l.b16 %v369
    %v560 = vunpack.c.h.b16 %v369
    %v561 = vunpack.c.l.b16 %v370
    %v562 = vunpack.c.h.b16 %v370
    %v563 = vunpack.c.l.b16 %v371
    %v564 = vunpack.c.h.b16 %v371
    %v565 = vunpack.c.l.b16 %v372
    %v566 = vunpack.c.h.b16 %v372
    %v567 = vunpack.c.l.b16 %v373
    %v568 = vunpack.c.h.b16 %v373
    %v569 = vunpack.c.l.b16 %v374
    %v570 = vunpack.c.h.b16 %v374
    %v571 = vunpack.c.l.b16 %v375
    %v572 = vunpack.c.h.b16 %v375
    %v573 = vunpack.c.l.b16 %v376
    %v574 = vunpack.c.h.b16 %v376
    %v575 = vunpack.c.l.b16 %v377
    %v576 = vunpack.c.h.b16 %v377
    %v577 = vunpack.c.l.b16 %v378
    %v578 = vunpack.c.h.b16 %v378
    %v579 = vunpack.c.l.b16 %v379
    %v580 = vunpack.c.h.b16 %v379
    %v581 = vunpack.c.l.b16 %v380
    %v582 = vunpack.c.h.b16 %v380
    %v583 = vpack.c.b16 %v459, %v455
    %v584 = vpack.c.b16 %v460, %v456
    %v585 = vpack.c.b16 %v461, %v457
    %v586 = vpack.c.b16 %v462, %v458
    %v587 = vpack.c.b16 %v467, %v463
    %v588 = vpack.c.b16 %v468, %v464
    %v589 = vpack.c.b16 %v469, %v465
    %v590 = vpack.c.b16 %v470, %v466
    %v591 = vpack.c.b16 %v475, %v471
    %v592 = vpack.c.b16 %v476, %v472
    %v593 = vpack.c.b16 %v477, %v473
    %v594 = vpack.c.b16 %v478, %v474
    %v595 = vpack.c.b16 %v483, %v479
    %v596 = vpack.c.b16 %v484, %v480
    %v597 = vpack.c.b16 %v485, %v481
    %v598 = vpack.c.b16 %v486, %v482
    %v599 = vpack.c.b16 %v491, %v487
    %v600 = vpack.c.b16 %v492, %v488
    %v601 = vpack.c.b16 %v493, %v489
    %v602 = vpack.c.b16 %v494, %v490
    %v603 = vpack.c.b16 %v499, %v495
    %v604 = vpack.c.b16 %v500, %v496
    %v605 = vpack.c.b16 %v501, %v497
    %v606 = vpack.c.b16 %v502, %v498
    %v607 = vpack.c.b16 %v507, %v503
    %v608 = vpack.c.b16 %v508, %v504
    %v609 = vpack.c.b16 %v509, %v505
    %v610 = vpack.c.b16 %v510, %v506
    %v611 = vpack.c.b16 %v515, %v511
    %v612 = vpack.c.b16 %v516, %v512
    %v613 = vpack.c.b16 %v517, %v513
    %v614 = vpack.c.b16 %v518, %v514
    %v615 = vpack.c.b16 %v523, %v519
    %v616 = vpack.c.b16 %v524, %v520
    %v617 = vpack.c.b16 %v525, %v521
    %v618 = vpack.c.b16 %v526, %v522
    %v619 = vpack.c.b16 %v531, %v527
    %v620 = vpack.c.b16 %v532, %v528
    %v621 = vpack.c.b16 %v533, %v529
    %v622 = vpack.c.b16 %v534, %v530
    %v623 = vpack.c.b16 %v539, %v535
    %v624 = vpack.c.b16 %v540, %v536
    %v625 = vpack.c.b16 %v541, %v537
    %v626 = vpack.c.b16 %v542, %v538
    %v627 = vpack.c.b16 %v547, %v543
    %v628 = vpack.c.b16 %v548, %v544
    %v629 = vpack.c.b16 %v549, %v545
    %v630 = vpack.c.b16 %v550, %v546
    %v631 = vpack.c.b16 %v555, %v551
    %v632 = vpack.c.b16 %v556, %v552
    %v633 = vpack.c.b16 %v557, %v553
    %v634 = vpack.c.b16 %v558, %v554
    %v635 = vpack.c.b16 %v563, %v559
    %v636 = vpack.c.b16 %v564, %v560
    %v637 = vpack.c.b16 %v565, %v561
    %v638 = vpack.c.b16 %v566, %v562
    %v639 = vpack.c.b16 %v571, %v567
    %v640 = vpack.c.b16 %v572, %v568
    %v641 = vpack.c.b16 %v573, %v569
    %v642 = vpack.c.b16 %v574, %v570
    %v643 = vpack.c.b16 %v579, %v575
    %v644 = vpack.c.b16 %v580, %v576
    %v645 = vpack.c.b16 %v581, %v577
    %v646 = vpack.c.b16 %v582, %v578
    %711 = vmatpush.bf16.msra.mxu0 %v611
    %712 = vmatpush.bf16.msra.mxu0 %v607
    %713 = vmatpush.bf16.msra.mxu0 %v603
    %714 = vmatpush.bf16.msra.mxu0 %v599
    %715 = vmatpush.bf16.msra.mxu0 %v595
    %716 = vmatpush.bf16.msra.mxu0 %v591
    %717 = vmatpush.bf16.msra.mxu0 %v587
    %718 = vmatpush.bf16.msra.mxu0 %v583
    %719 = vmatmul.bf16.gmra.mxu0 %v315
    %v720 = vpop.f32.mrf.mxu0
    %v721 = vadd.f32 %v383, %v720
    %v722 = vpop.f32.mrf.mxu0
    %v723 = vadd.f32 %v383, %v722
    %724 = vdwg.mxu0
    %725 = vmatpush.bf16.msra.mxu0 %v643
    %726 = vmatpush.bf16.msra.mxu0 %v639
    %727 = vmatpush.bf16.msra.mxu0 %v635
    %728 = vmatpush.bf16.msra.mxu0 %v631
    %729 = vmatpush.bf16.msra.mxu0 %v627
    %730 = vmatpush.bf16.msra.mxu0 %v623
    %731 = vmatpush.bf16.msra.mxu0 %v619
    %732 = vmatpush.bf16.msra.mxu0 %v615
    %733 = vmatmul.bf16.gmra.mxu0 %v316
    %v734 = vpop.f32.mrf.mxu0
    %v735 = vadd.f32 %v721, %v734
    %v736 = vpop.f32.mrf.mxu0
    %v737 = vadd.f32 %v723, %v736
    %738 = vdwg.mxu0
    %739 = vmatpush.bf16.msra.mxu0 %v612
    %740 = vmatpush.bf16.msra.mxu0 %v608
    %741 = vmatpush.bf16.msra.mxu0 %v604
    %742 = vmatpush.bf16.msra.mxu0 %v600
    %743 = vmatpush.bf16.msra.mxu0 %v596
    %744 = vmatpush.bf16.msra.mxu0 %v592
    %745 = vmatpush.bf16.msra.mxu0 %v588
    %746 = vmatpush.bf16.msra.mxu0 %v584
    %747 = vmatmul.bf16.gmra.mxu0 %v315
    %v748 = vpop.f32.mrf.mxu0
    %v749 = vadd.f32 %v384, %v748
    %v750 = vpop.f32.mrf.mxu0
    %v751 = vadd.f32 %v384, %v750
    %752 = vdwg.mxu0
    %753 = vmatpush.bf16.msra.mxu0 %v644
    %754 = vmatpush.bf16.msra.mxu0 %v640
    %755 = vmatpush.bf16.msra.mxu0 %v636
    %756 = vmatpush.bf16.msra.mxu0 %v632
    %757 = vmatpush.bf16.msra.mxu0 %v628
    %758 = vmatpush.bf16.msra.mxu0 %v624
    %759 = vmatpush.bf16.msra.mxu0 %v620
    %760 = vmatpush.bf16.msra.mxu0 %v616
    %761 = vmatmul.bf16.gmra.mxu0 %v316
    %v762 = vpop.f32.mrf.mxu0
    %v763 = vadd.f32 %v749, %v762
    %v764 = vpop.f32.mrf.mxu0
    %v765 = vadd.f32 %v751, %v764
    %766 = vdwg.mxu0
    %767 = vmatpush.bf16.msra.mxu0 %v613
    %768 = vmatpush.bf16.msra.mxu0 %v609
    %769 = vmatpush.bf16.msra.mxu0 %v605
    %770 = vmatpush.bf16.msra.mxu0 %v601
    %771 = vmatpush.bf16.msra.mxu0 %v597
    %772 = vmatpush.bf16.msra.mxu0 %v593
    %773 = vmatpush.bf16.msra.mxu0 %v589
    %774 = vmatpush.bf16.msra.mxu0 %v585
    %775 = vmatmul.bf16.gmra.mxu0 %v315
    %v776 = vpop.f32.mrf.mxu0
    %v777 = vadd.f32 %v385, %v776
    %v778 = vpop.f32.mrf.mxu0
    %v779 = vadd.f32 %v385, %v778
    %780 = vdwg.mxu0
    %781 = vmatpush.bf16.msra.mxu0 %v645
    %782 = vmatpush.bf16.msra.mxu0 %v641
    %783 = vmatpush.bf16.msra.mxu0 %v637
    %784 = vmatpush.bf16.msra.mxu0 %v633
    %785 = vmatpush.bf16.msra.mxu0 %v629
    %786 = vmatpush.bf16.msra.mxu0 %v625
    %787 = vmatpush.bf16.msra.mxu0 %v621
    %788 = vmatpush.bf16.msra.mxu0 %v617
    %789 = vmatmul.bf16.gmra.mxu0 %v316
    %v790 = vpop.f32.mrf.mxu0
    %v791 = vadd.f32 %v777, %v790
    %v792 = vpop.f32.mrf.mxu0
    %v793 = vadd.f32 %v779, %v792
    %794 = vdwg.mxu0
    %795 = vmatpush.bf16.msra.mxu0 %v614
    %796 = vmatpush.bf16.msra.mxu0 %v610
    %797 = vmatpush.bf16.msra.mxu0 %v606
    %798 = vmatpush.bf16.msra.mxu0 %v602
    %799 = vmatpush.bf16.msra.mxu0 %v598
    %800 = vmatpush.bf16.msra.mxu0 %v594
    %801 = vmatpush.bf16.msra.mxu0 %v590
    %802 = vmatpush.bf16.msra.mxu0 %v586
    %803 = vmatmul.bf16.gmra.mxu0 %v315
    %v804 = vpop.f32.mrf.mxu0
    %v805 = vadd.f32 %v386, %v804
    %v806 = vpop.f32.mrf.mxu0
    %v807 = vadd.f32 %v386, %v806
    %808 = vdwg.mxu0
    %809 = vmatpush.bf16.msra.mxu0 %v646
    %810 = vmatpush.bf16.msra.mxu0 %v642
    %811 = vmatpush.bf16.msra.mxu0 %v638
    %812 = vmatpush.bf16.msra.mxu0 %v634
    %813 = vmatpush.bf16.msra.mxu0 %v630
    %814 = vmatpush.bf16.msra.mxu0 %v626
    %815 = vmatpush.bf16.msra.mxu0 %v622
    %816 = vmatpush.bf16.msra.mxu0 %v618
    %817 = vmatmul.bf16.gmra.mxu0 %v316
    %v818 = vpop.f32.mrf.mxu0
    %v819 = vadd.f32 %v805, %v818
    %v820 = vpop.f32.mrf.mxu0
    %v821 = vadd.f32 %v807, %v820
    %822 = vdwg.mxu0
    %vm823 = vcmp.gt.f32.partialorder %v735, 0.0
    %vm824 = vcmp.gt.f32.partialorder %v763, 0.0
    %vm825 = vcmp.gt.f32.partialorder %v791, 0.0
    %vm826 = vcmp.gt.f32.partialorder %v819, 0.0
    %vm827 = vcmp.gt.f32.partialorder %v737, 0.0
    %vm828 = vcmp.gt.f32.partialorder %v765, 0.0
    %vm829 = vcmp.gt.f32.partialorder %v793, 0.0
    %vm830 = vcmp.gt.f32.partialorder %v821, 0.0
    %v831 = vmul.f32 %v735, 0.2
    %v832 = vmul.f32 %v763, 0.2
    %v833 = vmul.f32 %v791, 0.2
    %v834 = vmul.f32 %v819, 0.2
    %v835 = vmul.f32 %v737, 0.2
    %v836 = vmul.f32 %v765, 0.2
    %v837 = vmul.f32 %v793, 0.2
    %v838 = vmul.f32 %v821, 0.2
    %v839 = vsel %vm823, %v735, %v831
    %v840 = vsel %vm824, %v763, %v832
    %v841 = vsel %vm825, %v791, %v833
    %v842 = vsel %vm826, %v819, %v834
    %v843 = vsel %vm827, %v737, %v835
    %v844 = vsel %vm828, %v765, %v836
    %v845 = vsel %vm829, %v793, %v837
    %v846 = vsel %vm830, %v821, %v838
    %v847 = vpack.c.bf16 %v843, %v839
    %v848 = vpack.c.bf16 %v844, %v840
    %v849 = vpack.c.bf16 %v845, %v841
    %v850 = vpack.c.bf16 %v846, %v842
    %v851 = vld [vmem:[#allocation11] sm:$0xff]
    %v852 = vld [vmem:[#allocation11 + $0x8] sm:$0xff]
    %v853 = vld [vmem:[#allocation11 + $0x10] sm:$0xff]
    %v854 = vld [vmem:[#allocation11 + $0x18] sm:$0xff]
    %v855 = vld [vmem:[#allocation11 + $0x20] sm:$0xff]
    %v856 = vld [vmem:[#allocation11 + $0x28] sm:$0xff]
    %v857 = vld [vmem:[#allocation11 + $0x30] sm:$0xff]
    %v858 = vld [vmem:[#allocation11 + $0x38] sm:$0xff]
    %v859 = vld [vmem:[#allocation11 + $0x40] sm:$0xff]
    %v860 = vld [vmem:[#allocation11 + $0x48] sm:$0xff]
    %v861 = vld [vmem:[#allocation11 + $0x50] sm:$0xff]
    %v862 = vld [vmem:[#allocation11 + $0x58] sm:$0xff]
    %v863 = vld [vmem:[#allocation11 + $0x60] sm:$0xff]
    %v864 = vld [vmem:[#allocation11 + $0x68] sm:$0xff]
    %v865 = vld [vmem:[#allocation11 + $0x70] sm:$0xff]
    %v866 = vld [vmem:[#allocation11 + $0x78] sm:$0xff]
    %v867 = vld [vmem:[#allocation11 + $0x80] sm:$0xff]
    %v868 = vld [vmem:[#allocation11 + $0x88] sm:$0xff]
    %v869 = vld [vmem:[#allocation11 + $0x90] sm:$0xff]
    %v870 = vld [vmem:[#allocation11 + $0x98] sm:$0xff]
    %v871 = vld [vmem:[#allocation11 + $0xa0] sm:$0xff]
    %v872 = vld [vmem:[#allocation11 + $0xa8] sm:$0xff]
    %v873 = vld [vmem:[#allocation11 + $0xb0] sm:$0xff]
    %v874 = vld [vmem:[#allocation11 + $0xb8] sm:$0xff]
    %v875 = vld [vmem:[#allocation11 + $0xc0] sm:$0xff]
    %v876 = vld [vmem:[#allocation11 + $0xc8] sm:$0xff]
    %v877 = vld [vmem:[#allocation11 + $0xd0] sm:$0xff]
    %v878 = vld [vmem:[#allocation11 + $0xd8] sm:$0xff]
    %v879 = vld [vmem:[#allocation11 + $0xe0] sm:$0xff]
    %v880 = vld [vmem:[#allocation11 + $0xe8] sm:$0xff]
    %v881 = vld [vmem:[#allocation11 + $0xf0] sm:$0xff]
    %v882 = vld [vmem:[#allocation11 + $0xf8] sm:$0xff]
    %v883 = vld [vmem:[#allocation11 + $0x100] sm:$0xff]
    %v884 = vld [vmem:[#allocation11 + $0x108] sm:$0xff]
    %v885 = vld [vmem:[#allocation11 + $0x110] sm:$0xff]
    %v886 = vld [vmem:[#allocation11 + $0x118] sm:$0xff]
    %v887 = vld [vmem:[#allocation11 + $0x120] sm:$0xff]
    %v888 = vld [vmem:[#allocation11 + $0x128] sm:$0xff]
    %v889 = vld [vmem:[#allocation11 + $0x130] sm:$0xff]
    %v890 = vld [vmem:[#allocation11 + $0x138] sm:$0xff]
    %v891 = vld [vmem:[#allocation11 + $0x140] sm:$0xff]
    %v892 = vld [vmem:[#allocation11 + $0x148] sm:$0xff]
    %v893 = vld [vmem:[#allocation11 + $0x150] sm:$0xff]
    %v894 = vld [vmem:[#allocation11 + $0x158] sm:$0xff]
    %v895 = vld [vmem:[#allocation11 + $0x160] sm:$0xff]
    %v896 = vld [vmem:[#allocation11 + $0x168] sm:$0xff]
    %v897 = vld [vmem:[#allocation11 + $0x170] sm:$0xff]
    %v898 = vld [vmem:[#allocation11 + $0x178] sm:$0xff]
    %v899 = vld [vmem:[#allocation11 + $0x180] sm:$0xff]
    %v900 = vld [vmem:[#allocation11 + $0x188] sm:$0xff]
    %v901 = vld [vmem:[#allocation11 + $0x190] sm:$0xff]
    %v902 = vld [vmem:[#allocation11 + $0x198] sm:$0xff]
    %v903 = vld [vmem:[#allocation11 + $0x1a0] sm:$0xff]
    %v904 = vld [vmem:[#allocation11 + $0x1a8] sm:$0xff]
    %v905 = vld [vmem:[#allocation11 + $0x1b0] sm:$0xff]
    %v906 = vld [vmem:[#allocation11 + $0x1b8] sm:$0xff]
    %v907 = vld [vmem:[#allocation11 + $0x1c0] sm:$0xff]
    %v908 = vld [vmem:[#allocation11 + $0x1c8] sm:$0xff]
    %v909 = vld [vmem:[#allocation11 + $0x1d0] sm:$0xff]
    %v910 = vld [vmem:[#allocation11 + $0x1d8] sm:$0xff]
    %v911 = vld [vmem:[#allocation11 + $0x1e0] sm:$0xff]
    %v912 = vld [vmem:[#allocation11 + $0x1e8] sm:$0xff]
    %v913 = vld [vmem:[#allocation11 + $0x1f0] sm:$0xff]
    %v914 = vld [vmem:[#allocation11 + $0x1f8] sm:$0xff]
    %v915 = vld [vmem:[#allocation11 + $0x200] sm:$0xff]
    %v916 = vld [vmem:[#allocation11 + $0x208] sm:$0xff]
    %v917 = vld [vmem:[#allocation11 + $0x210] sm:$0xff]
    %v918 = vld [vmem:[#allocation11 + $0x218] sm:$0xff]
    %v919 = vld [vmem:[#allocation11 + $0x220] sm:$0xff]
    %v920 = vld [vmem:[#allocation11 + $0x228] sm:$0xff]
    %v921 = vld [vmem:[#allocation11 + $0x230] sm:$0xff]
    %v922 = vld [vmem:[#allocation11 + $0x238] sm:$0xff]
    %v923 = vld [vmem:[#allocation11 + $0x240] sm:$0xff]
    %v924 = vld [vmem:[#allocation11 + $0x248] sm:$0xff]
    %v925 = vld [vmem:[#allocation11 + $0x250] sm:$0xff]
    %v926 = vld [vmem:[#allocation11 + $0x258] sm:$0xff]
    %v927 = vld [vmem:[#allocation11 + $0x260] sm:$0xff]
    %v928 = vld [vmem:[#allocation11 + $0x268] sm:$0xff]
    %v929 = vld [vmem:[#allocation11 + $0x270] sm:$0xff]
    %v930 = vld [vmem:[#allocation11 + $0x278] sm:$0xff]
    %v931 = vld [vmem:[#allocation11 + $0x280] sm:$0xff]
    %v932 = vld [vmem:[#allocation11 + $0x288] sm:$0xff]
    %v933 = vld [vmem:[#allocation11 + $0x290] sm:$0xff]
    %v934 = vld [vmem:[#allocation11 + $0x298] sm:$0xff]
    %v935 = vld [vmem:[#allocation11 + $0x2a0] sm:$0xff]
    %v936 = vld [vmem:[#allocation11 + $0x2a8] sm:$0xff]
    %v937 = vld [vmem:[#allocation11 + $0x2b0] sm:$0xff]
    %v938 = vld [vmem:[#allocation11 + $0x2b8] sm:$0xff]
    %v939 = vld [vmem:[#allocation11 + $0x2c0] sm:$0xff]
    %v940 = vld [vmem:[#allocation11 + $0x2c8] sm:$0xff]
    %v941 = vld [vmem:[#allocation11 + $0x2d0] sm:$0xff]
    %v942 = vld [vmem:[#allocation11 + $0x2d8] sm:$0xff]
    %v943 = vld [vmem:[#allocation11 + $0x2e0] sm:$0xff]
    %v944 = vld [vmem:[#allocation11 + $0x2e8] sm:$0xff]
    %v945 = vld [vmem:[#allocation11 + $0x2f0] sm:$0xff]
    %v946 = vld [vmem:[#allocation11 + $0x2f8] sm:$0xff]
    %v947 = vld [vmem:[#allocation11 + $0x300] sm:$0xff]
    %v948 = vld [vmem:[#allocation11 + $0x308] sm:$0xff]
    %v949 = vld [vmem:[#allocation11 + $0x310] sm:$0xff]
    %v950 = vld [vmem:[#allocation11 + $0x318] sm:$0xff]
    %v951 = vld [vmem:[#allocation11 + $0x320] sm:$0xff]
    %v952 = vld [vmem:[#allocation11 + $0x328] sm:$0xff]
    %v953 = vld [vmem:[#allocation11 + $0x330] sm:$0xff]
    %v954 = vld [vmem:[#allocation11 + $0x338] sm:$0xff]
    %v955 = vld [vmem:[#allocation11 + $0x340] sm:$0xff]
    %v956 = vld [vmem:[#allocation11 + $0x348] sm:$0xff]
    %v957 = vld [vmem:[#allocation11 + $0x350] sm:$0xff]
    %v958 = vld [vmem:[#allocation11 + $0x358] sm:$0xff]
    %v959 = vld [vmem:[#allocation11 + $0x360] sm:$0xff]
    %v960 = vld [vmem:[#allocation11 + $0x368] sm:$0xff]
    %v961 = vld [vmem:[#allocation11 + $0x370] sm:$0xff]
    %v962 = vld [vmem:[#allocation11 + $0x378] sm:$0xff]
    %v963 = vld [vmem:[#allocation11 + $0x380] sm:$0xff]
    %v964 = vld [vmem:[#allocation11 + $0x388] sm:$0xff]
    %v965 = vld [vmem:[#allocation11 + $0x390] sm:$0xff]
    %v966 = vld [vmem:[#allocation11 + $0x398] sm:$0xff]
    %v967 = vld [vmem:[#allocation11 + $0x3a0] sm:$0xff]
    %v968 = vld [vmem:[#allocation11 + $0x3a8] sm:$0xff]
    %v969 = vld [vmem:[#allocation11 + $0x3b0] sm:$0xff]
    %v970 = vld [vmem:[#allocation11 + $0x3b8] sm:$0xff]
    %v971 = vld [vmem:[#allocation11 + $0x3c0] sm:$0xff]
    %v972 = vld [vmem:[#allocation11 + $0x3c8] sm:$0xff]
    %v973 = vld [vmem:[#allocation11 + $0x3d0] sm:$0xff]
    %v974 = vld [vmem:[#allocation11 + $0x3d8] sm:$0xff]
    %v975 = vld [vmem:[#allocation11 + $0x3e0] sm:$0xff]
    %v976 = vld [vmem:[#allocation11 + $0x3e8] sm:$0xff]
    %v977 = vld [vmem:[#allocation11 + $0x3f0] sm:$0xff]
    %v978 = vld [vmem:[#allocation11 + $0x3f8] sm:$0xff]
    %v979 = vld [vmem:[#allocation11 + $0x400] sm:$0xff]
    %v980 = vld [vmem:[#allocation11 + $0x408] sm:$0xff]
    %v981 = vld [vmem:[#allocation11 + $0x410] sm:$0xff]
    %v982 = vld [vmem:[#allocation11 + $0x418] sm:$0xff]
    %v983 = vld [vmem:[#allocation11 + $0x420] sm:$0xff]
    %v984 = vld [vmem:[#allocation11 + $0x428] sm:$0xff]
    %v985 = vld [vmem:[#allocation11 + $0x430] sm:$0xff]
    %v986 = vld [vmem:[#allocation11 + $0x438] sm:$0xff]
    %v987 = vld [vmem:[#allocation11 + $0x440] sm:$0xff]
    %v988 = vld [vmem:[#allocation11 + $0x448] sm:$0xff]
    %v989 = vld [vmem:[#allocation11 + $0x450] sm:$0xff]
    %v990 = vld [vmem:[#allocation11 + $0x458] sm:$0xff]
    %v991 = vld [vmem:[#allocation11 + $0x460] sm:$0xff]
    %v992 = vld [vmem:[#allocation11 + $0x468] sm:$0xff]
    %v993 = vld [vmem:[#allocation11 + $0x470] sm:$0xff]
    %v994 = vld [vmem:[#allocation11 + $0x478] sm:$0xff]
    %v995 = vld [vmem:[#allocation11 + $0x480] sm:$0xff]
    %v996 = vld [vmem:[#allocation11 + $0x488] sm:$0xff]
    %v997 = vld [vmem:[#allocation11 + $0x490] sm:$0xff]
    %v998 = vld [vmem:[#allocation11 + $0x498] sm:$0xff]
    %v999 = vld [vmem:[#allocation11 + $0x4a0] sm:$0xff]
    %v1000 = vld [vmem:[#allocation11 + $0x4a8] sm:$0xff]
    %v1001 = vld [vmem:[#allocation11 + $0x4b0] sm:$0xff]
    %v1002 = vld [vmem:[#allocation11 + $0x4b8] sm:$0xff]
    %v1003 = vld [vmem:[#allocation11 + $0x4c0] sm:$0xff]
    %v1004 = vld [vmem:[#allocation11 + $0x4c8] sm:$0xff]
    %v1005 = vld [vmem:[#allocation11 + $0x4d0] sm:$0xff]
    %v1006 = vld [vmem:[#allocation11 + $0x4d8] sm:$0xff]
    %v1007 = vld [vmem:[#allocation11 + $0x4e0] sm:$0xff]
    %v1008 = vld [vmem:[#allocation11 + $0x4e8] sm:$0xff]
    %v1009 = vld [vmem:[#allocation11 + $0x4f0] sm:$0xff]
    %v1010 = vld [vmem:[#allocation11 + $0x4f8] sm:$0xff]
    %v1011 = vld [vmem:[#allocation11 + $0x500] sm:$0xff]
    %v1012 = vld [vmem:[#allocation11 + $0x508] sm:$0xff]
    %v1013 = vld [vmem:[#allocation11 + $0x510] sm:$0xff]
    %v1014 = vld [vmem:[#allocation11 + $0x518] sm:$0xff]
    %v1015 = vld [vmem:[#allocation11 + $0x520] sm:$0xff]
    %v1016 = vld [vmem:[#allocation11 + $0x528] sm:$0xff]
    %v1017 = vld [vmem:[#allocation11 + $0x530] sm:$0xff]
    %v1018 = vld [vmem:[#allocation11 + $0x538] sm:$0xff]
    %v1019 = vld [vmem:[#allocation11 + $0x540] sm:$0xff]
    %v1020 = vld [vmem:[#allocation11 + $0x548] sm:$0xff]
    %v1021 = vld [vmem:[#allocation11 + $0x550] sm:$0xff]
    %v1022 = vld [vmem:[#allocation11 + $0x558] sm:$0xff]
    %v1023 = vld [vmem:[#allocation11 + $0x560] sm:$0xff]
    %v1024 = vld [vmem:[#allocation11 + $0x568] sm:$0xff]
    %v1025 = vld [vmem:[#allocation11 + $0x570] sm:$0xff]
    %v1026 = vld [vmem:[#allocation11 + $0x578] sm:$0xff]
    %v1027 = vld [vmem:[#allocation11 + $0x580] sm:$0xff]
    %v1028 = vld [vmem:[#allocation11 + $0x588] sm:$0xff]
    %v1029 = vld [vmem:[#allocation11 + $0x590] sm:$0xff]
    %v1030 = vld [vmem:[#allocation11 + $0x598] sm:$0xff]
    %v1031 = vld [vmem:[#allocation11 + $0x5a0] sm:$0xff]
    %v1032 = vld [vmem:[#allocation11 + $0x5a8] sm:$0xff]
    %v1033 = vld [vmem:[#allocation11 + $0x5b0] sm:$0xff]
    %v1034 = vld [vmem:[#allocation11 + $0x5b8] sm:$0xff]
    %v1035 = vld [vmem:[#allocation11 + $0x5c0] sm:$0xff]
    %v1036 = vld [vmem:[#allocation11 + $0x5c8] sm:$0xff]
    %v1037 = vld [vmem:[#allocation11 + $0x5d0] sm:$0xff]
    %v1038 = vld [vmem:[#allocation11 + $0x5d8] sm:$0xff]
    %v1039 = vld [vmem:[#allocation11 + $0x5e0] sm:$0xff]
    %v1040 = vld [vmem:[#allocation11 + $0x5e8] sm:$0xff]
    %v1041 = vld [vmem:[#allocation11 + $0x5f0] sm:$0xff]
    %v1042 = vld [vmem:[#allocation11 + $0x5f8] sm:$0xff]
    %v1043 = vld [vmem:[#allocation11 + $0x600] sm:$0xff]
    %v1044 = vld [vmem:[#allocation11 + $0x608] sm:$0xff]
    %v1045 = vld [vmem:[#allocation11 + $0x610] sm:$0xff]
    %v1046 = vld [vmem:[#allocation11 + $0x618] sm:$0xff]
    %v1047 = vld [vmem:[#allocation11 + $0x620] sm:$0xff]
    %v1048 = vld [vmem:[#allocation11 + $0x628] sm:$0xff]
    %v1049 = vld [vmem:[#allocation11 + $0x630] sm:$0xff]
    %v1050 = vld [vmem:[#allocation11 + $0x638] sm:$0xff]
    %v1051 = vld [vmem:[#allocation11 + $0x640] sm:$0xff]
    %v1052 = vld [vmem:[#allocation11 + $0x648] sm:$0xff]
    %v1053 = vld [vmem:[#allocation11 + $0x650] sm:$0xff]
    %v1054 = vld [vmem:[#allocation11 + $0x658] sm:$0xff]
    %v1055 = vld [vmem:[#allocation11 + $0x660] sm:$0xff]
    %v1056 = vld [vmem:[#allocation11 + $0x668] sm:$0xff]
    %v1057 = vld [vmem:[#allocation11 + $0x670] sm:$0xff]
    %v1058 = vld [vmem:[#allocation11 + $0x678] sm:$0xff]
    %v1059 = vld [vmem:[#allocation11 + $0x680] sm:$0xff]
    %v1060 = vld [vmem:[#allocation11 + $0x688] sm:$0xff]
    %v1061 = vld [vmem:[#allocation11 + $0x690] sm:$0xff]
    %v1062 = vld [vmem:[#allocation11 + $0x698] sm:$0xff]
    %v1063 = vld [vmem:[#allocation11 + $0x6a0] sm:$0xff]
    %v1064 = vld [vmem:[#allocation11 + $0x6a8] sm:$0xff]
    %v1065 = vld [vmem:[#allocation11 + $0x6b0] sm:$0xff]
    %v1066 = vld [vmem:[#allocation11 + $0x6b8] sm:$0xff]
    %v1067 = vld [vmem:[#allocation11 + $0x6c0] sm:$0xff]
    %v1068 = vld [vmem:[#allocation11 + $0x6c8] sm:$0xff]
    %v1069 = vld [vmem:[#allocation11 + $0x6d0] sm:$0xff]
    %v1070 = vld [vmem:[#allocation11 + $0x6d8] sm:$0xff]
    %v1071 = vld [vmem:[#allocation11 + $0x6e0] sm:$0xff]
    %v1072 = vld [vmem:[#allocation11 + $0x6e8] sm:$0xff]
    %v1073 = vld [vmem:[#allocation11 + $0x6f0] sm:$0xff]
    %v1074 = vld [vmem:[#allocation11 + $0x6f8] sm:$0xff]
    %v1075 = vld [vmem:[#allocation11 + $0x700] sm:$0xff]
    %v1076 = vld [vmem:[#allocation11 + $0x708] sm:$0xff]
    %v1077 = vld [vmem:[#allocation11 + $0x710] sm:$0xff]
    %v1078 = vld [vmem:[#allocation11 + $0x718] sm:$0xff]
    %v1079 = vld [vmem:[#allocation11 + $0x720] sm:$0xff]
    %v1080 = vld [vmem:[#allocation11 + $0x728] sm:$0xff]
    %v1081 = vld [vmem:[#allocation11 + $0x730] sm:$0xff]
    %v1082 = vld [vmem:[#allocation11 + $0x738] sm:$0xff]
    %v1083 = vld [vmem:[#allocation11 + $0x740] sm:$0xff]
    %v1084 = vld [vmem:[#allocation11 + $0x748] sm:$0xff]
    %v1085 = vld [vmem:[#allocation11 + $0x750] sm:$0xff]
    %v1086 = vld [vmem:[#allocation11 + $0x758] sm:$0xff]
    %v1087 = vld [vmem:[#allocation11 + $0x760] sm:$0xff]
    %v1088 = vld [vmem:[#allocation11 + $0x768] sm:$0xff]
    %v1089 = vld [vmem:[#allocation11 + $0x770] sm:$0xff]
    %v1090 = vld [vmem:[#allocation11 + $0x778] sm:$0xff]
    %v1091 = vld [vmem:[#allocation11 + $0x780] sm:$0xff]
    %v1092 = vld [vmem:[#allocation11 + $0x788] sm:$0xff]
    %v1093 = vld [vmem:[#allocation11 + $0x790] sm:$0xff]
    %v1094 = vld [vmem:[#allocation11 + $0x798] sm:$0xff]
    %v1095 = vld [vmem:[#allocation11 + $0x7a0] sm:$0xff]
    %v1096 = vld [vmem:[#allocation11 + $0x7a8] sm:$0xff]
    %v1097 = vld [vmem:[#allocation11 + $0x7b0] sm:$0xff]
    %v1098 = vld [vmem:[#allocation11 + $0x7b8] sm:$0xff]
    %v1099 = vld [vmem:[#allocation11 + $0x7c0] sm:$0xff]
    %v1100 = vld [vmem:[#allocation11 + $0x7c8] sm:$0xff]
    %v1101 = vld [vmem:[#allocation11 + $0x7d0] sm:$0xff]
    %v1102 = vld [vmem:[#allocation11 + $0x7d8] sm:$0xff]
    %v1103 = vld [vmem:[#allocation11 + $0x7e0] sm:$0xff]
    %v1104 = vld [vmem:[#allocation11 + $0x7e8] sm:$0xff]
    %v1105 = vld [vmem:[#allocation11 + $0x7f0] sm:$0xff]
    %v1106 = vld [vmem:[#allocation11 + $0x7f8] sm:$0xff]
    %v1107 = vld [vmem:[#allocation13] sm:$0xff]
    %v1109 = vperm.slane %v1107, 0
    %v1110 = vperm.slane %v1107, 1
    %v1111 = vperm.slane %v1107, 2
    %v1112 = vperm.slane %v1107, 3
    %v1113 = vperm.slane %v1107, 4
    %v1114 = vperm.slane %v1107, 5
    %v1115 = vperm.slane %v1107, 6
    %v1116 = vperm.slane %v1107, 7
    %v1381 = vunpack.c.l.b16 %v851
    %v1382 = vunpack.c.h.b16 %v851
    %v1383 = vunpack.c.l.b16 %v852
    %v1384 = vunpack.c.h.b16 %v852
    %v1385 = vunpack.c.l.b16 %v853
    %v1386 = vunpack.c.h.b16 %v853
    %v1387 = vunpack.c.l.b16 %v854
    %v1388 = vunpack.c.h.b16 %v854
    %v1389 = vunpack.c.l.b16 %v855
    %v1390 = vunpack.c.h.b16 %v855
    %v1391 = vunpack.c.l.b16 %v856
    %v1392 = vunpack.c.h.b16 %v856
    %v1393 = vunpack.c.l.b16 %v857
    %v1394 = vunpack.c.h.b16 %v857
    %v1395 = vunpack.c.l.b16 %v858
    %v1396 = vunpack.c.h.b16 %v858
    %v1397 = vunpack.c.l.b16 %v859
    %v1398 = vunpack.c.h.b16 %v859
    %v1399 = vunpack.c.l.b16 %v860
    %v1400 = vunpack.c.h.b16 %v860
    %v1401 = vunpack.c.l.b16 %v861
    %v1402 = vunpack.c.h.b16 %v861
    %v1403 = vunpack.c.l.b16 %v862
    %v1404 = vunpack.c.h.b16 %v862
    %v1405 = vunpack.c.l.b16 %v863
    %v1406 = vunpack.c.h.b16 %v863
    %v1407 = vunpack.c.l.b16 %v864
    %v1408 = vunpack.c.h.b16 %v864
    %v1409 = vunpack.c.l.b16 %v865
    %v1410 = vunpack.c.h.b16 %v865
    %v1411 = vunpack.c.l.b16 %v866
    %v1412 = vunpack.c.h.b16 %v866
    %v1413 = vunpack.c.l.b16 %v867
    %v1414 = vunpack.c.h.b16 %v867
    %v1415 = vunpack.c.l.b16 %v868
    %v1416 = vunpack.c.h.b16 %v868
    %v1417 = vunpack.c.l.b16 %v869
    %v1418 = vunpack.c.h.b16 %v869
    %v1419 = vunpack.c.l.b16 %v870
    %v1420 = vunpack.c.h.b16 %v870
    %v1421 = vunpack.c.l.b16 %v871
    %v1422 = vunpack.c.h.b16 %v871
    %v1423 = vunpack.c.l.b16 %v872
    %v1424 = vunpack.c.h.b16 %v872
    %v1425 = vunpack.c.l.b16 %v873
    %v1426 = vunpack.c.h.b16 %v873
    %v1427 = vunpack.c.l.b16 %v874
    %v1428 = vunpack.c.h.b16 %v874
    %v1429 = vunpack.c.l.b16 %v875
    %v1430 = vunpack.c.h.b16 %v875
    %v1431 = vunpack.c.l.b16 %v876
    %v1432 = vunpack.c.h.b16 %v876
    %v1433 = vunpack.c.l.b16 %v877
    %v1434 = vunpack.c.h.b16 %v877
    %v1435 = vunpack.c.l.b16 %v878
    %v1436 = vunpack.c.h.b16 %v878
    %v1437 = vunpack.c.l.b16 %v879
    %v1438 = vunpack.c.h.b16 %v879
    %v1439 = vunpack.c.l.b16 %v880
    %v1440 = vunpack.c.h.b16 %v880
    %v1441 = vunpack.c.l.b16 %v881
    %v1442 = vunpack.c.h.b16 %v881
    %v1443 = vunpack.c.l.b16 %v882
    %v1444 = vunpack.c.h.b16 %v882
    %v1445 = vunpack.c.l.b16 %v883
    %v1446 = vunpack.c.h.b16 %v883
    %v1447 = vunpack.c.l.b16 %v884
    %v1448 = vunpack.c.h.b16 %v884
    %v1449 = vunpack.c.l.b16 %v885
    %v1450 = vunpack.c.h.b16 %v885
    %v1451 = vunpack.c.l.b16 %v886
    %v1452 = vunpack.c.h.b16 %v886
    %v1453 = vunpack.c.l.b16 %v887
    %v1454 = vunpack.c.h.b16 %v887
    %v1455 = vunpack.c.l.b16 %v888
    %v1456 = vunpack.c.h.b16 %v888
    %v1457 = vunpack.c.l.b16 %v889
    %v1458 = vunpack.c.h.b16 %v889
    %v1459 = vunpack.c.l.b16 %v890
    %v1460 = vunpack.c.h.b16 %v890
    %v1461 = vunpack.c.l.b16 %v891
    %v1462 = vunpack.c.h.b16 %v891
    %v1463 = vunpack.c.l.b16 %v892
    %v1464 = vunpack.c.h.b16 %v892
    %v1465 = vunpack.c.l.b16 %v893
    %v1466 = vunpack.c.h.b16 %v893
    %v1467 = vunpack.c.l.b16 %v894
    %v1468 = vunpack.c.h.b16 %v894
    %v1469 = vunpack.c.l.b16 %v895
    %v1470 = vunpack.c.h.b16 %v895
    %v1471 = vunpack.c.l.b16 %v896
    %v1472 = vunpack.c.h.b16 %v896
    %v1473 = vunpack.c.l.b16 %v897
    %v1474 = vunpack.c.h.b16 %v897
    %v1475 = vunpack.c.l.b16 %v898
    %v1476 = vunpack.c.h.b16 %v898
    %v1477 = vunpack.c.l.b16 %v899
    %v1478 = vunpack.c.h.b16 %v899
    %v1479 = vunpack.c.l.b16 %v900
    %v1480 = vunpack.c.h.b16 %v900
    %v1481 = vunpack.c.l.b16 %v901
    %v1482 = vunpack.c.h.b16 %v901
    %v1483 = vunpack.c.l.b16 %v902
    %v1484 = vunpack.c.h.b16 %v902
    %v1485 = vunpack.c.l.b16 %v903
    %v1486 = vunpack.c.h.b16 %v903
    %v1487 = vunpack.c.l.b16 %v904
    %v1488 = vunpack.c.h.b16 %v904
    %v1489 = vunpack.c.l.b16 %v905
    %v1490 = vunpack.c.h.b16 %v905
    %v1491 = vunpack.c.l.b16 %v906
    %v1492 = vunpack.c.h.b16 %v906
    %v1493 = vunpack.c.l.b16 %v907
    %v1494 = vunpack.c.h.b16 %v907
    %v1495 = vunpack.c.l.b16 %v908
    %v1496 = vunpack.c.h.b16 %v908
    %v1497 = vunpack.c.l.b16 %v909
    %v1498 = vunpack.c.h.b16 %v909
    %v1499 = vunpack.c.l.b16 %v910
    %v1500 = vunpack.c.h.b16 %v910
    %v1501 = vunpack.c.l.b16 %v911
    %v1502 = vunpack.c.h.b16 %v911
    %v1503 = vunpack.c.l.b16 %v912
    %v1504 = vunpack.c.h.b16 %v912
    %v1505 = vunpack.c.l.b16 %v913
    %v1506 = vunpack.c.h.b16 %v913
    %v1507 = vunpack.c.l.b16 %v914
    %v1508 = vunpack.c.h.b16 %v914
    %v1509 = vunpack.c.l.b16 %v915
    %v1510 = vunpack.c.h.b16 %v915
    %v1511 = vunpack.c.l.b16 %v916
    %v1512 = vunpack.c.h.b16 %v916
    %v1513 = vunpack.c.l.b16 %v917
    %v1514 = vunpack.c.h.b16 %v917
    %v1515 = vunpack.c.l.b16 %v918
    %v1516 = vunpack.c.h.b16 %v918
    %v1517 = vunpack.c.l.b16 %v919
    %v1518 = vunpack.c.h.b16 %v919
    %v1519 = vunpack.c.l.b16 %v920
    %v1520 = vunpack.c.h.b16 %v920
    %v1521 = vunpack.c.l.b16 %v921
    %v1522 = vunpack.c.h.b16 %v921
    %v1523 = vunpack.c.l.b16 %v922
    %v1524 = vunpack.c.h.b16 %v922
    %v1525 = vunpack.c.l.b16 %v923
    %v1526 = vunpack.c.h.b16 %v923
    %v1527 = vunpack.c.l.b16 %v924
    %v1528 = vunpack.c.h.b16 %v924
    %v1529 = vunpack.c.l.b16 %v925
    %v1530 = vunpack.c.h.b16 %v925
    %v1531 = vunpack.c.l.b16 %v926
    %v1532 = vunpack.c.h.b16 %v926
    %v1533 = vunpack.c.l.b16 %v927
    %v1534 = vunpack.c.h.b16 %v927
    %v1535 = vunpack.c.l.b16 %v928
    %v1536 = vunpack.c.h.b16 %v928
    %v1537 = vunpack.c.l.b16 %v929
    %v1538 = vunpack.c.h.b16 %v929
    %v1539 = vunpack.c.l.b16 %v930
    %v1540 = vunpack.c.h.b16 %v930
    %v1541 = vunpack.c.l.b16 %v931
    %v1542 = vunpack.c.h.b16 %v931
    %v1543 = vunpack.c.l.b16 %v932
    %v1544 = vunpack.c.h.b16 %v932
    %v1545 = vunpack.c.l.b16 %v933
    %v1546 = vunpack.c.h.b16 %v933
    %v1547 = vunpack.c.l.b16 %v934
    %v1548 = vunpack.c.h.b16 %v934
    %v1549 = vunpack.c.l.b16 %v935
    %v1550 = vunpack.c.h.b16 %v935
    %v1551 = vunpack.c.l.b16 %v936
    %v1552 = vunpack.c.h.b16 %v936
    %v1553 = vunpack.c.l.b16 %v937
    %v1554 = vunpack.c.h.b16 %v937
    %v1555 = vunpack.c.l.b16 %v938
    %v1556 = vunpack.c.h.b16 %v938
    %v1557 = vunpack.c.l.b16 %v939
    %v1558 = vunpack.c.h.b16 %v939
    %v1559 = vunpack.c.l.b16 %v940
    %v1560 = vunpack.c.h.b16 %v940
    %v1561 = vunpack.c.l.b16 %v941
    %v1562 = vunpack.c.h.b16 %v941
    %v1563 = vunpack.c.l.b16 %v942
    %v1564 = vunpack.c.h.b16 %v942
    %v1565 = vunpack.c.l.b16 %v943
    %v1566 = vunpack.c.h.b16 %v943
    %v1567 = vunpack.c.l.b16 %v944
    %v1568 = vunpack.c.h.b16 %v944
    %v1569 = vunpack.c.l.b16 %v945
    %v1570 = vunpack.c.h.b16 %v945
    %v1571 = vunpack.c.l.b16 %v946
    %v1572 = vunpack.c.h.b16 %v946
    %v1573 = vunpack.c.l.b16 %v947
    %v1574 = vunpack.c.h.b16 %v947
    %v1575 = vunpack.c.l.b16 %v948
    %v1576 = vunpack.c.h.b16 %v948
    %v1577 = vunpack.c.l.b16 %v949
    %v1578 = vunpack.c.h.b16 %v949
    %v1579 = vunpack.c.l.b16 %v950
    %v1580 = vunpack.c.h.b16 %v950
    %v1581 = vunpack.c.l.b16 %v951
    %v1582 = vunpack.c.h.b16 %v951
    %v1583 = vunpack.c.l.b16 %v952
    %v1584 = vunpack.c.h.b16 %v952
    %v1585 = vunpack.c.l.b16 %v953
    %v1586 = vunpack.c.h.b16 %v953
    %v1587 = vunpack.c.l.b16 %v954
    %v1588 = vunpack.c.h.b16 %v954
    %v1589 = vunpack.c.l.b16 %v955
    %v1590 = vunpack.c.h.b16 %v955
    %v1591 = vunpack.c.l.b16 %v956
    %v1592 = vunpack.c.h.b16 %v956
    %v1593 = vunpack.c.l.b16 %v957
    %v1594 = vunpack.c.h.b16 %v957
    %v1595 = vunpack.c.l.b16 %v958
    %v1596 = vunpack.c.h.b16 %v958
    %v1597 = vunpack.c.l.b16 %v959
    %v1598 = vunpack.c.h.b16 %v959
    %v1599 = vunpack.c.l.b16 %v960
    %v1600 = vunpack.c.h.b16 %v960
    %v1601 = vunpack.c.l.b16 %v961
    %v1602 = vunpack.c.h.b16 %v961
    %v1603 = vunpack.c.l.b16 %v962
    %v1604 = vunpack.c.h.b16 %v962
    %v1605 = vunpack.c.l.b16 %v963
    %v1606 = vunpack.c.h.b16 %v963
    %v1607 = vunpack.c.l.b16 %v964
    %v1608 = vunpack.c.h.b16 %v964
    %v1609 = vunpack.c.l.b16 %v965
    %v1610 = vunpack.c.h.b16 %v965
    %v1611 = vunpack.c.l.b16 %v966
    %v1612 = vunpack.c.h.b16 %v966
    %v1613 = vunpack.c.l.b16 %v967
    %v1614 = vunpack.c.h.b16 %v967
    %v1615 = vunpack.c.l.b16 %v968
    %v1616 = vunpack.c.h.b16 %v968
    %v1617 = vunpack.c.l.b16 %v969
    %v1618 = vunpack.c.h.b16 %v969
    %v1619 = vunpack.c.l.b16 %v970
    %v1620 = vunpack.c.h.b16 %v970
    %v1621 = vunpack.c.l.b16 %v971
    %v1622 = vunpack.c.h.b16 %v971
    %v1623 = vunpack.c.l.b16 %v972
    %v1624 = vunpack.c.h.b16 %v972
    %v1625 = vunpack.c.l.b16 %v973
    %v1626 = vunpack.c.h.b16 %v973
    %v1627 = vunpack.c.l.b16 %v974
    %v1628 = vunpack.c.h.b16 %v974
    %v1629 = vunpack.c.l.b16 %v975
    %v1630 = vunpack.c.h.b16 %v975
    %v1631 = vunpack.c.l.b16 %v976
    %v1632 = vunpack.c.h.b16 %v976
    %v1633 = vunpack.c.l.b16 %v977
    %v1634 = vunpack.c.h.b16 %v977
    %v1635 = vunpack.c.l.b16 %v978
    %v1636 = vunpack.c.h.b16 %v978
    %v1637 = vunpack.c.l.b16 %v979
    %v1638 = vunpack.c.h.b16 %v979
    %v1639 = vunpack.c.l.b16 %v980
    %v1640 = vunpack.c.h.b16 %v980
    %v1641 = vunpack.c.l.b16 %v981
    %v1642 = vunpack.c.h.b16 %v981
    %v1643 = vunpack.c.l.b16 %v982
    %v1644 = vunpack.c.h.b16 %v982
    %v1645 = vunpack.c.l.b16 %v983
    %v1646 = vunpack.c.h.b16 %v983
    %v1647 = vunpack.c.l.b16 %v984
    %v1648 = vunpack.c.h.b16 %v984
    %v1649 = vunpack.c.l.b16 %v985
    %v1650 = vunpack.c.h.b16 %v985
    %v1651 = vunpack.c.l.b16 %v986
    %v1652 = vunpack.c.h.b16 %v986
    %v1653 = vunpack.c.l.b16 %v987
    %v1654 = vunpack.c.h.b16 %v987
    %v1655 = vunpack.c.l.b16 %v988
    %v1656 = vunpack.c.h.b16 %v988
    %v1657 = vunpack.c.l.b16 %v989
    %v1658 = vunpack.c.h.b16 %v989
    %v1659 = vunpack.c.l.b16 %v990
    %v1660 = vunpack.c.h.b16 %v990
    %v1661 = vunpack.c.l.b16 %v991
    %v1662 = vunpack.c.h.b16 %v991
    %v1663 = vunpack.c.l.b16 %v992
    %v1664 = vunpack.c.h.b16 %v992
    %v1665 = vunpack.c.l.b16 %v993
    %v1666 = vunpack.c.h.b16 %v993
    %v1667 = vunpack.c.l.b16 %v994
    %v1668 = vunpack.c.h.b16 %v994
    %v1669 = vunpack.c.l.b16 %v995
    %v1670 = vunpack.c.h.b16 %v995
    %v1671 = vunpack.c.l.b16 %v996
    %v1672 = vunpack.c.h.b16 %v996
    %v1673 = vunpack.c.l.b16 %v997
    %v1674 = vunpack.c.h.b16 %v997
    %v1675 = vunpack.c.l.b16 %v998
    %v1676 = vunpack.c.h.b16 %v998
    %v1677 = vunpack.c.l.b16 %v999
    %v1678 = vunpack.c.h.b16 %v999
    %v1679 = vunpack.c.l.b16 %v1000
    %v1680 = vunpack.c.h.b16 %v1000
    %v1681 = vunpack.c.l.b16 %v1001
    %v1682 = vunpack.c.h.b16 %v1001
    %v1683 = vunpack.c.l.b16 %v1002
    %v1684 = vunpack.c.h.b16 %v1002
    %v1685 = vunpack.c.l.b16 %v1003
    %v1686 = vunpack.c.h.b16 %v1003
    %v1687 = vunpack.c.l.b16 %v1004
    %v1688 = vunpack.c.h.b16 %v1004
    %v1689 = vunpack.c.l.b16 %v1005
    %v1690 = vunpack.c.h.b16 %v1005
    %v1691 = vunpack.c.l.b16 %v1006
    %v1692 = vunpack.c.h.b16 %v1006
    %v1693 = vunpack.c.l.b16 %v1007
    %v1694 = vunpack.c.h.b16 %v1007
    %v1695 = vunpack.c.l.b16 %v1008
    %v1696 = vunpack.c.h.b16 %v1008
    %v1697 = vunpack.c.l.b16 %v1009
    %v1698 = vunpack.c.h.b16 %v1009
    %v1699 = vunpack.c.l.b16 %v1010
    %v1700 = vunpack.c.h.b16 %v1010
    %v1701 = vunpack.c.l.b16 %v1011
    %v1702 = vunpack.c.h.b16 %v1011
    %v1703 = vunpack.c.l.b16 %v1012
    %v1704 = vunpack.c.h.b16 %v1012
    %v1705 = vunpack.c.l.b16 %v1013
    %v1706 = vunpack.c.h.b16 %v1013
    %v1707 = vunpack.c.l.b16 %v1014
    %v1708 = vunpack.c.h.b16 %v1014
    %v1709 = vunpack.c.l.b16 %v1015
    %v1710 = vunpack.c.h.b16 %v1015
    %v1711 = vunpack.c.l.b16 %v1016
    %v1712 = vunpack.c.h.b16 %v1016
    %v1713 = vunpack.c.l.b16 %v1017
    %v1714 = vunpack.c.h.b16 %v1017
    %v1715 = vunpack.c.l.b16 %v1018
    %v1716 = vunpack.c.h.b16 %v1018
    %v1717 = vunpack.c.l.b16 %v1019
    %v1718 = vunpack.c.h.b16 %v1019
    %v1719 = vunpack.c.l.b16 %v1020
    %v1720 = vunpack.c.h.b16 %v1020
    %v1721 = vunpack.c.l.b16 %v1021
    %v1722 = vunpack.c.h.b16 %v1021
    %v1723 = vunpack.c.l.b16 %v1022
    %v1724 = vunpack.c.h.b16 %v1022
    %v1725 = vunpack.c.l.b16 %v1023
    %v1726 = vunpack.c.h.b16 %v1023
    %v1727 = vunpack.c.l.b16 %v1024
    %v1728 = vunpack.c.h.b16 %v1024
    %v1729 = vunpack.c.l.b16 %v1025
    %v1730 = vunpack.c.h.b16 %v1025
    %v1731 = vunpack.c.l.b16 %v1026
    %v1732 = vunpack.c.h.b16 %v1026
    %v1733 = vunpack.c.l.b16 %v1027
    %v1734 = vunpack.c.h.b16 %v1027
    %v1735 = vunpack.c.l.b16 %v1028
    %v1736 = vunpack.c.h.b16 %v1028
    %v1737 = vunpack.c.l.b16 %v1029
    %v1738 = vunpack.c.h.b16 %v1029
    %v1739 = vunpack.c.l.b16 %v1030
    %v1740 = vunpack.c.h.b16 %v1030
    %v1741 = vunpack.c.l.b16 %v1031
    %v1742 = vunpack.c.h.b16 %v1031
    %v1743 = vunpack.c.l.b16 %v1032
    %v1744 = vunpack.c.h.b16 %v1032
    %v1745 = vunpack.c.l.b16 %v1033
    %v1746 = vunpack.c.h.b16 %v1033
    %v1747 = vunpack.c.l.b16 %v1034
    %v1748 = vunpack.c.h.b16 %v1034
    %v1749 = vunpack.c.l.b16 %v1035
    %v1750 = vunpack.c.h.b16 %v1035
    %v1751 = vunpack.c.l.b16 %v1036
    %v1752 = vunpack.c.h.b16 %v1036
    %v1753 = vunpack.c.l.b16 %v1037
    %v1754 = vunpack.c.h.b16 %v1037
    %v1755 = vunpack.c.l.b16 %v1038
    %v1756 = vunpack.c.h.b16 %v1038
    %v1757 = vunpack.c.l.b16 %v1039
    %v1758 = vunpack.c.h.b16 %v1039
    %v1759 = vunpack.c.l.b16 %v1040
    %v1760 = vunpack.c.h.b16 %v1040
    %v1761 = vunpack.c.l.b16 %v1041
    %v1762 = vunpack.c.h.b16 %v1041
    %v1763 = vunpack.c.l.b16 %v1042
    %v1764 = vunpack.c.h.b16 %v1042
    %v1765 = vunpack.c.l.b16 %v1043
    %v1766 = vunpack.c.h.b16 %v1043
    %v1767 = vunpack.c.l.b16 %v1044
    %v1768 = vunpack.c.h.b16 %v1044
    %v1769 = vunpack.c.l.b16 %v1045
    %v1770 = vunpack.c.h.b16 %v1045
    %v1771 = vunpack.c.l.b16 %v1046
    %v1772 = vunpack.c.h.b16 %v1046
    %v1773 = vunpack.c.l.b16 %v1047
    %v1774 = vunpack.c.h.b16 %v1047
    %v1775 = vunpack.c.l.b16 %v1048
    %v1776 = vunpack.c.h.b16 %v1048
    %v1777 = vunpack.c.l.b16 %v1049
    %v1778 = vunpack.c.h.b16 %v1049
    %v1779 = vunpack.c.l.b16 %v1050
    %v1780 = vunpack.c.h.b16 %v1050
    %v1781 = vunpack.c.l.b16 %v1051
    %v1782 = vunpack.c.h.b16 %v1051
    %v1783 = vunpack.c.l.b16 %v1052
    %v1784 = vunpack.c.h.b16 %v1052
    %v1785 = vunpack.c.l.b16 %v1053
    %v1786 = vunpack.c.h.b16 %v1053
    %v1787 = vunpack.c.l.b16 %v1054
    %v1788 = vunpack.c.h.b16 %v1054
    %v1789 = vunpack.c.l.b16 %v1055
    %v1790 = vunpack.c.h.b16 %v1055
    %v1791 = vunpack.c.l.b16 %v1056
    %v1792 = vunpack.c.h.b16 %v1056
    %v1793 = vunpack.c.l.b16 %v1057
    %v1794 = vunpack.c.h.b16 %v1057
    %v1795 = vunpack.c.l.b16 %v1058
    %v1796 = vunpack.c.h.b16 %v1058
    %v1797 = vunpack.c.l.b16 %v1059
    %v1798 = vunpack.c.h.b16 %v1059
    %v1799 = vunpack.c.l.b16 %v1060
    %v1800 = vunpack.c.h.b16 %v1060
    %v1801 = vunpack.c.l.b16 %v1061
    %v1802 = vunpack.c.h.b16 %v1061
    %v1803 = vunpack.c.l.b16 %v1062
    %v1804 = vunpack.c.h.b16 %v1062
    %v1805 = vunpack.c.l.b16 %v1063
    %v1806 = vunpack.c.h.b16 %v1063
    %v1807 = vunpack.c.l.b16 %v1064
    %v1808 = vunpack.c.h.b16 %v1064
    %v1809 = vunpack.c.l.b16 %v1065
    %v1810 = vunpack.c.h.b16 %v1065
    %v1811 = vunpack.c.l.b16 %v1066
    %v1812 = vunpack.c.h.b16 %v1066
    %v1813 = vunpack.c.l.b16 %v1067
    %v1814 = vunpack.c.h.b16 %v1067
    %v1815 = vunpack.c.l.b16 %v1068
    %v1816 = vunpack.c.h.b16 %v1068
    %v1817 = vunpack.c.l.b16 %v1069
    %v1818 = vunpack.c.h.b16 %v1069
    %v1819 = vunpack.c.l.b16 %v1070
    %v1820 = vunpack.c.h.b16 %v1070
    %v1821 = vunpack.c.l.b16 %v1071
    %v1822 = vunpack.c.h.b16 %v1071
    %v1823 = vunpack.c.l.b16 %v1072
    %v1824 = vunpack.c.h.b16 %v1072
    %v1825 = vunpack.c.l.b16 %v1073
    %v1826 = vunpack.c.h.b16 %v1073
    %v1827 = vunpack.c.l.b16 %v1074
    %v1828 = vunpack.c.h.b16 %v1074
    %v1829 = vunpack.c.l.b16 %v1075
    %v1830 = vunpack.c.h.b16 %v1075
    %v1831 = vunpack.c.l.b16 %v1076
    %v1832 = vunpack.c.h.b16 %v1076
    %v1833 = vunpack.c.l.b16 %v1077
    %v1834 = vunpack.c.h.b16 %v1077
    %v1835 = vunpack.c.l.b16 %v1078
    %v1836 = vunpack.c.h.b16 %v1078
    %v1837 = vunpack.c.l.b16 %v1079
    %v1838 = vunpack.c.h.b16 %v1079
    %v1839 = vunpack.c.l.b16 %v1080
    %v1840 = vunpack.c.h.b16 %v1080
    %v1841 = vunpack.c.l.b16 %v1081
    %v1842 = vunpack.c.h.b16 %v1081
    %v1843 = vunpack.c.l.b16 %v1082
    %v1844 = vunpack.c.h.b16 %v1082
    %v1845 = vunpack.c.l.b16 %v1083
    %v1846 = vunpack.c.h.b16 %v1083
    %v1847 = vunpack.c.l.b16 %v1084
    %v1848 = vunpack.c.h.b16 %v1084
    %v1849 = vunpack.c.l.b16 %v1085
    %v1850 = vunpack.c.h.b16 %v1085
    %v1851 = vunpack.c.l.b16 %v1086
    %v1852 = vunpack.c.h.b16 %v1086
    %v1853 = vunpack.c.l.b16 %v1087
    %v1854 = vunpack.c.h.b16 %v1087
    %v1855 = vunpack.c.l.b16 %v1088
    %v1856 = vunpack.c.h.b16 %v1088
    %v1857 = vunpack.c.l.b16 %v1089
    %v1858 = vunpack.c.h.b16 %v1089
    %v1859 = vunpack.c.l.b16 %v1090
    %v1860 = vunpack.c.h.b16 %v1090
    %v1861 = vunpack.c.l.b16 %v1091
    %v1862 = vunpack.c.h.b16 %v1091
    %v1863 = vunpack.c.l.b16 %v1092
    %v1864 = vunpack.c.h.b16 %v1092
    %v1865 = vunpack.c.l.b16 %v1093
    %v1866 = vunpack.c.h.b16 %v1093
    %v1867 = vunpack.c.l.b16 %v1094
    %v1868 = vunpack.c.h.b16 %v1094
    %v1869 = vunpack.c.l.b16 %v1095
    %v1870 = vunpack.c.h.b16 %v1095
    %v1871 = vunpack.c.l.b16 %v1096
    %v1872 = vunpack.c.h.b16 %v1096
    %v1873 = vunpack.c.l.b16 %v1097
    %v1874 = vunpack.c.h.b16 %v1097
    %v1875 = vunpack.c.l.b16 %v1098
    %v1876 = vunpack.c.h.b16 %v1098
    %v1877 = vunpack.c.l.b16 %v1099
    %v1878 = vunpack.c.h.b16 %v1099
    %v1879 = vunpack.c.l.b16 %v1100
    %v1880 = vunpack.c.h.b16 %v1100
    %v1881 = vunpack.c.l.b16 %v1101
    %v1882 = vunpack.c.h.b16 %v1101
    %v1883 = vunpack.c.l.b16 %v1102
    %v1884 = vunpack.c.h.b16 %v1102
    %v1885 = vunpack.c.l.b16 %v1103
    %v1886 = vunpack.c.h.b16 %v1103
    %v1887 = vunpack.c.l.b16 %v1104
    %v1888 = vunpack.c.h.b16 %v1104
    %v1889 = vunpack.c.l.b16 %v1105
    %v1890 = vunpack.c.h.b16 %v1105
    %v1891 = vunpack.c.l.b16 %v1106
    %v1892 = vunpack.c.h.b16 %v1106
    %v1893 = vpack.c.b16 %v1389, %v1381
    %v1894 = vpack.c.b16 %v1390, %v1382
    %v1895 = vpack.c.b16 %v1391, %v1383
    %v1896 = vpack.c.b16 %v1392, %v1384
    %v1897 = vpack.c.b16 %v1393, %v1385
    %v1898 = vpack.c.b16 %v1394, %v1386
    %v1899 = vpack.c.b16 %v1395, %v1387
    %v1900 = vpack.c.b16 %v1396, %v1388
    %v1901 = vpack.c.b16 %v1405, %v1397
    %v1902 = vpack.c.b16 %v1406, %v1398
    %v1903 = vpack.c.b16 %v1407, %v1399
    %v1904 = vpack.c.b16 %v1408, %v1400
    %v1905 = vpack.c.b16 %v1409, %v1401
    %v1906 = vpack.c.b16 %v1410, %v1402
    %v1907 = vpack.c.b16 %v1411, %v1403
    %v1908 = vpack.c.b16 %v1412, %v1404
    %v1909 = vpack.c.b16 %v1421, %v1413
    %v1910 = vpack.c.b16 %v1422, %v1414
    %v1911 = vpack.c.b16 %v1423, %v1415
    %v1912 = vpack.c.b16 %v1424, %v1416
    %v1913 = vpack.c.b16 %v1425, %v1417
    %v1914 = vpack.c.b16 %v1426, %v1418
    %v1915 = vpack.c.b16 %v1427, %v1419
    %v1916 = vpack.c.b16 %v1428, %v1420
    %v1917 = vpack.c.b16 %v1437, %v1429
    %v1918 = vpack.c.b16 %v1438, %v1430
    %v1919 = vpack.c.b16 %v1439, %v1431
    %v1920 = vpack.c.b16 %v1440, %v1432
    %v1921 = vpack.c.b16 %v1441, %v1433
    %v1922 = vpack.c.b16 %v1442, %v1434
    %v1923 = vpack.c.b16 %v1443, %v1435
    %v1924 = vpack.c.b16 %v1444, %v1436
    %v1925 = vpack.c.b16 %v1453, %v1445
    %v1926 = vpack.c.b16 %v1454, %v1446
    %v1927 = vpack.c.b16 %v1455, %v1447
    %v1928 = vpack.c.b16 %v1456, %v1448
    %v1929 = vpack.c.b16 %v1457, %v1449
    %v1930 = vpack.c.b16 %v1458, %v1450
    %v1931 = vpack.c.b16 %v1459, %v1451
    %v1932 = vpack.c.b16 %v1460, %v1452
    %v1933 = vpack.c.b16 %v1469, %v1461
    %v1934 = vpack.c.b16 %v1470, %v1462
    %v1935 = vpack.c.b16 %v1471, %v1463
    %v1936 = vpack.c.b16 %v1472, %v1464
    %v1937 = vpack.c.b16 %v1473, %v1465
    %v1938 = vpack.c.b16 %v1474, %v1466
    %v1939 = vpack.c.b16 %v1475, %v1467
    %v1940 = vpack.c.b16 %v1476, %v1468
    %v1941 = vpack.c.b16 %v1485, %v1477
    %v1942 = vpack.c.b16 %v1486, %v1478
    %v1943 = vpack.c.b16 %v1487, %v1479
    %v1944 = vpack.c.b16 %v1488, %v1480
    %v1945 = vpack.c.b16 %v1489, %v1481
    %v1946 = vpack.c.b16 %v1490, %v1482
    %v1947 = vpack.c.b16 %v1491, %v1483
    %v1948 = vpack.c.b16 %v1492, %v1484
    %v1949 = vpack.c.b16 %v1501, %v1493
    %v1950 = vpack.c.b16 %v1502, %v1494
    %v1951 = vpack.c.b16 %v1503, %v1495
    %v1952 = vpack.c.b16 %v1504, %v1496
    %v1953 = vpack.c.b16 %v1505, %v1497
    %v1954 = vpack.c.b16 %v1506, %v1498
    %v1955 = vpack.c.b16 %v1507, %v1499
    %v1956 = vpack.c.b16 %v1508, %v1500
    %v1957 = vpack.c.b16 %v1517, %v1509
    %v1958 = vpack.c.b16 %v1518, %v1510
    %v1959 = vpack.c.b16 %v1519, %v1511
    %v1960 = vpack.c.b16 %v1520, %v1512
    %v1961 = vpack.c.b16 %v1521, %v1513
    %v1962 = vpack.c.b16 %v1522, %v1514
    %v1963 = vpack.c.b16 %v1523, %v1515
    %v1964 = vpack.c.b16 %v1524, %v1516
    %v1965 = vpack.c.b16 %v1533, %v1525
    %v1966 = vpack.c.b16 %v1534, %v1526
    %v1967 = vpack.c.b16 %v1535, %v1527
    %v1968 = vpack.c.b16 %v1536, %v1528
    %v1969 = vpack.c.b16 %v1537, %v1529
    %v1970 = vpack.c.b16 %v1538, %v1530
    %v1971 = vpack.c.b16 %v1539, %v1531
    %v1972 = vpack.c.b16 %v1540, %v1532
    %v1973 = vpack.c.b16 %v1549, %v1541
    %v1974 = vpack.c.b16 %v1550, %v1542
    %v1975 = vpack.c.b16 %v1551, %v1543
    %v1976 = vpack.c.b16 %v1552, %v1544
    %v1977 = vpack.c.b16 %v1553, %v1545
    %v1978 = vpack.c.b16 %v1554, %v1546
    %v1979 = vpack.c.b16 %v1555, %v1547
    %v1980 = vpack.c.b16 %v1556, %v1548
    %v1981 = vpack.c.b16 %v1565, %v1557
    %v1982 = vpack.c.b16 %v1566, %v1558
    %v1983 = vpack.c.b16 %v1567, %v1559
    %v1984 = vpack.c.b16 %v1568, %v1560
    %v1985 = vpack.c.b16 %v1569, %v1561
    %v1986 = vpack.c.b16 %v1570, %v1562
    %v1987 = vpack.c.b16 %v1571, %v1563
    %v1988 = vpack.c.b16 %v1572, %v1564
    %v1989 = vpack.c.b16 %v1581, %v1573
    %v1990 = vpack.c.b16 %v1582, %v1574
    %v1991 = vpack.c.b16 %v1583, %v1575
    %v1992 = vpack.c.b16 %v1584, %v1576
    %v1993 = vpack.c.b16 %v1585, %v1577
    %v1994 = vpack.c.b16 %v1586, %v1578
    %v1995 = vpack.c.b16 %v1587, %v1579
    %v1996 = vpack.c.b16 %v1588, %v1580
    %v1997 = vpack.c.b16 %v1597, %v1589
    %v1998 = vpack.c.b16 %v1598, %v1590
    %v1999 = vpack.c.b16 %v1599, %v1591
    %v2000 = vpack.c.b16 %v1600, %v1592
    %v2001 = vpack.c.b16 %v1601, %v1593
    %v2002 = vpack.c.b16 %v1602, %v1594
    %v2003 = vpack.c.b16 %v1603, %v1595
    %v2004 = vpack.c.b16 %v1604, %v1596
    %v2005 = vpack.c.b16 %v1613, %v1605
    %v2006 = vpack.c.b16 %v1614, %v1606
    %v2007 = vpack.c.b16 %v1615, %v1607
    %v2008 = vpack.c.b16 %v1616, %v1608
    %v2009 = vpack.c.b16 %v1617, %v1609
    %v2010 = vpack.c.b16 %v1618, %v1610
    %v2011 = vpack.c.b16 %v1619, %v1611
    %v2012 = vpack.c.b16 %v1620, %v1612
    %v2013 = vpack.c.b16 %v1629, %v1621
    %v2014 = vpack.c.b16 %v1630, %v1622
    %v2015 = vpack.c.b16 %v1631, %v1623
    %v2016 = vpack.c.b16 %v1632, %v1624
    %v2017 = vpack.c.b16 %v1633, %v1625
    %v2018 = vpack.c.b16 %v1634, %v1626
    %v2019 = vpack.c.b16 %v1635, %v1627
    %v2020 = vpack.c.b16 %v1636, %v1628
    %v2021 = vpack.c.b16 %v1645, %v1637
    %v2022 = vpack.c.b16 %v1646, %v1638
    %v2023 = vpack.c.b16 %v1647, %v1639
    %v2024 = vpack.c.b16 %v1648, %v1640
    %v2025 = vpack.c.b16 %v1649, %v1641
    %v2026 = vpack.c.b16 %v1650, %v1642
    %v2027 = vpack.c.b16 %v1651, %v1643
    %v2028 = vpack.c.b16 %v1652, %v1644
    %v2029 = vpack.c.b16 %v1661, %v1653
    %v2030 = vpack.c.b16 %v1662, %v1654
    %v2031 = vpack.c.b16 %v1663, %v1655
    %v2032 = vpack.c.b16 %v1664, %v1656
    %v2033 = vpack.c.b16 %v1665, %v1657
    %v2034 = vpack.c.b16 %v1666, %v1658
    %v2035 = vpack.c.b16 %v1667, %v1659
    %v2036 = vpack.c.b16 %v1668, %v1660
    %v2037 = vpack.c.b16 %v1677, %v1669
    %v2038 = vpack.c.b16 %v1678, %v1670
    %v2039 = vpack.c.b16 %v1679, %v1671
    %v2040 = vpack.c.b16 %v1680, %v1672
    %v2041 = vpack.c.b16 %v1681, %v1673
    %v2042 = vpack.c.b16 %v1682, %v1674
    %v2043 = vpack.c.b16 %v1683, %v1675
    %v2044 = vpack.c.b16 %v1684, %v1676
    %v2045 = vpack.c.b16 %v1693, %v1685
    %v2046 = vpack.c.b16 %v1694, %v1686
    %v2047 = vpack.c.b16 %v1695, %v1687
    %v2048 = vpack.c.b16 %v1696, %v1688
    %v2049 = vpack.c.b16 %v1697, %v1689
    %v2050 = vpack.c.b16 %v1698, %v1690
    %v2051 = vpack.c.b16 %v1699, %v1691
    %v2052 = vpack.c.b16 %v1700, %v1692
    %v2053 = vpack.c.b16 %v1709, %v1701
    %v2054 = vpack.c.b16 %v1710, %v1702
    %v2055 = vpack.c.b16 %v1711, %v1703
    %v2056 = vpack.c.b16 %v1712, %v1704
    %v2057 = vpack.c.b16 %v1713, %v1705
    %v2058 = vpack.c.b16 %v1714, %v1706
    %v2059 = vpack.c.b16 %v1715, %v1707
    %v2060 = vpack.c.b16 %v1716, %v1708
    %v2061 = vpack.c.b16 %v1725, %v1717
    %v2062 = vpack.c.b16 %v1726, %v1718
    %v2063 = vpack.c.b16 %v1727, %v1719
    %v2064 = vpack.c.b16 %v1728, %v1720
    %v2065 = vpack.c.b16 %v1729, %v1721
    %v2066 = vpack.c.b16 %v1730, %v1722
    %v2067 = vpack.c.b16 %v1731, %v1723
    %v2068 = vpack.c.b16 %v1732, %v1724
    %v2069 = vpack.c.b16 %v1741, %v1733
    %v2070 = vpack.c.b16 %v1742, %v1734
    %v2071 = vpack.c.b16 %v1743, %v1735
    %v2072 = vpack.c.b16 %v1744, %v1736
    %v2073 = vpack.c.b16 %v1745, %v1737
    %v2074 = vpack.c.b16 %v1746, %v1738
    %v2075 = vpack.c.b16 %v1747, %v1739
    %v2076 = vpack.c.b16 %v1748, %v1740
    %v2077 = vpack.c.b16 %v1757, %v1749
    %v2078 = vpack.c.b16 %v1758, %v1750
    %v2079 = vpack.c.b16 %v1759, %v1751
    %v2080 = vpack.c.b16 %v1760, %v1752
    %v2081 = vpack.c.b16 %v1761, %v1753
    %v2082 = vpack.c.b16 %v1762, %v1754
    %v2083 = vpack.c.b16 %v1763, %v1755
    %v2084 = vpack.c.b16 %v1764, %v1756
    %v2085 = vpack.c.b16 %v1773, %v1765
    %v2086 = vpack.c.b16 %v1774, %v1766
    %v2087 = vpack.c.b16 %v1775, %v1767
    %v2088 = vpack.c.b16 %v1776, %v1768
    %v2089 = vpack.c.b16 %v1777, %v1769
    %v2090 = vpack.c.b16 %v1778, %v1770
    %v2091 = vpack.c.b16 %v1779, %v1771
    %v2092 = vpack.c.b16 %v1780, %v1772
    %v2093 = vpack.c.b16 %v1789, %v1781
    %v2094 = vpack.c.b16 %v1790, %v1782
    %v2095 = vpack.c.b16 %v1791, %v1783
    %v2096 = vpack.c.b16 %v1792, %v1784
    %v2097 = vpack.c.b16 %v1793, %v1785
    %v2098 = vpack.c.b16 %v1794, %v1786
    %v2099 = vpack.c.b16 %v1795, %v1787
    %v2100 = vpack.c.b16 %v1796, %v1788
    %v2101 = vpack.c.b16 %v1805, %v1797
    %v2102 = vpack.c.b16 %v1806, %v1798
    %v2103 = vpack.c.b16 %v1807, %v1799
    %v2104 = vpack.c.b16 %v1808, %v1800
    %v2105 = vpack.c.b16 %v1809, %v1801
    %v2106 = vpack.c.b16 %v1810, %v1802
    %v2107 = vpack.c.b16 %v1811, %v1803
    %v2108 = vpack.c.b16 %v1812, %v1804
    %v2109 = vpack.c.b16 %v1821, %v1813
    %v2110 = vpack.c.b16 %v1822, %v1814
    %v2111 = vpack.c.b16 %v1823, %v1815
    %v2112 = vpack.c.b16 %v1824, %v1816
    %v2113 = vpack.c.b16 %v1825, %v1817
    %v2114 = vpack.c.b16 %v1826, %v1818
    %v2115 = vpack.c.b16 %v1827, %v1819
    %v2116 = vpack.c.b16 %v1828, %v1820
    %v2117 = vpack.c.b16 %v1837, %v1829
    %v2118 = vpack.c.b16 %v1838, %v1830
    %v2119 = vpack.c.b16 %v1839, %v1831
    %v2120 = vpack.c.b16 %v1840, %v1832
    %v2121 = vpack.c.b16 %v1841, %v1833
    %v2122 = vpack.c.b16 %v1842, %v1834
    %v2123 = vpack.c.b16 %v1843, %v1835
    %v2124 = vpack.c.b16 %v1844, %v1836
    %v2125 = vpack.c.b16 %v1853, %v1845
    %v2126 = vpack.c.b16 %v1854, %v1846
    %v2127 = vpack.c.b16 %v1855, %v1847
    %v2128 = vpack.c.b16 %v1856, %v1848
    %v2129 = vpack.c.b16 %v1857, %v1849
    %v2130 = vpack.c.b16 %v1858, %v1850
    %v2131 = vpack.c.b16 %v1859, %v1851
    %v2132 = vpack.c.b16 %v1860, %v1852
    %v2133 = vpack.c.b16 %v1869, %v1861
    %v2134 = vpack.c.b16 %v1870, %v1862
    %v2135 = vpack.c.b16 %v1871, %v1863
    %v2136 = vpack.c.b16 %v1872, %v1864
    %v2137 = vpack.c.b16 %v1873, %v1865
    %v2138 = vpack.c.b16 %v1874, %v1866
    %v2139 = vpack.c.b16 %v1875, %v1867
    %v2140 = vpack.c.b16 %v1876, %v1868
    %v2141 = vpack.c.b16 %v1885, %v1877
    %v2142 = vpack.c.b16 %v1886, %v1878
    %v2143 = vpack.c.b16 %v1887, %v1879
    %v2144 = vpack.c.b16 %v1888, %v1880
    %v2145 = vpack.c.b16 %v1889, %v1881
    %v2146 = vpack.c.b16 %v1890, %v1882
    %v2147 = vpack.c.b16 %v1891, %v1883
    %v2148 = vpack.c.b16 %v1892, %v1884
    %2405 = vmatpush.bf16.msra.mxu0 %v1949
    %2406 = vmatpush.bf16.msra.mxu0 %v1941
    %2407 = vmatpush.bf16.msra.mxu0 %v1933
    %2408 = vmatpush.bf16.msra.mxu0 %v1925
    %2409 = vmatpush.bf16.msra.mxu0 %v1917
    %2410 = vmatpush.bf16.msra.mxu0 %v1909
    %2411 = vmatpush.bf16.msra.mxu0 %v1901
    %2412 = vmatpush.bf16.msra.mxu0 %v1893
    %2413 = vmatmul.bf16.gmra.mxu0 %v847
    %v2414 = vpop.f32.mrf.mxu0
    %v2415 = vadd.f32 %v1109, %v2414
    %v2416 = vpop.f32.mrf.mxu0
    %v2417 = vadd.f32 %v1109, %v2416
    %2418 = vdwg.mxu0
    %2419 = vmatpush.bf16.msra.mxu0 %v2013
    %2420 = vmatpush.bf16.msra.mxu0 %v2005
    %2421 = vmatpush.bf16.msra.mxu0 %v1997
    %2422 = vmatpush.bf16.msra.mxu0 %v1989
    %2423 = vmatpush.bf16.msra.mxu0 %v1981
    %2424 = vmatpush.bf16.msra.mxu0 %v1973
    %2425 = vmatpush.bf16.msra.mxu0 %v1965
    %2426 = vmatpush.bf16.msra.mxu0 %v1957
    %2427 = vmatmul.bf16.gmra.mxu0 %v848
    %v2428 = vpop.f32.mrf.mxu0
    %v2429 = vadd.f32 %v2415, %v2428
    %v2430 = vpop.f32.mrf.mxu0
    %v2431 = vadd.f32 %v2417, %v2430
    %2432 = vdwg.mxu0
    %2433 = vmatpush.bf16.msra.mxu0 %v2077
    %2434 = vmatpush.bf16.msra.mxu0 %v2069
    %2435 = vmatpush.bf16.msra.mxu0 %v2061
    %2436 = vmatpush.bf16.msra.mxu0 %v2053
    %2437 = vmatpush.bf16.msra.mxu0 %v2045
    %2438 = vmatpush.bf16.msra.mxu0 %v2037
    %2439 = vmatpush.bf16.msra.mxu0 %v2029
    %2440 = vmatpush.bf16.msra.mxu0 %v2021
    %2441 = vmatmul.bf16.gmra.mxu0 %v849
    %v2442 = vpop.f32.mrf.mxu0
    %v2443 = vadd.f32 %v2429, %v2442
    %v2444 = vpop.f32.mrf.mxu0
    %v2445 = vadd.f32 %v2431, %v2444
    %2446 = vdwg.mxu0
    %2447 = vmatpush.bf16.msra.mxu0 %v2141
    %2448 = vmatpush.bf16.msra.mxu0 %v2133
    %2449 = vmatpush.bf16.msra.mxu0 %v2125
    %2450 = vmatpush.bf16.msra.mxu0 %v2117
    %2451 = vmatpush.bf16.msra.mxu0 %v2109
    %2452 = vmatpush.bf16.msra.mxu0 %v2101
    %2453 = vmatpush.bf16.msra.mxu0 %v2093
    %2454 = vmatpush.bf16.msra.mxu0 %v2085
    %2455 = vmatmul.bf16.gmra.mxu0 %v850
    %v2456 = vpop.f32.mrf.mxu0
    %v2457 = vadd.f32 %v2443, %v2456
    %v2458 = vpop.f32.mrf.mxu0
    %v2459 = vadd.f32 %v2445, %v2458
    %2460 = vdwg.mxu0
    %2461 = vmatpush.bf16.msra.mxu0 %v1950
    %2462 = vmatpush.bf16.msra.mxu0 %v1942
    %2463 = vmatpush.bf16.msra.mxu0 %v1934
    %2464 = vmatpush.bf16.msra.mxu0 %v1926
    %2465 = vmatpush.bf16.msra.mxu0 %v1918
    %2466 = vmatpush.bf16.msra.mxu0 %v1910
    %2467 = vmatpush.bf16.msra.mxu0 %v1902
    %2468 = vmatpush.bf16.msra.mxu0 %v1894
    %2469 = vmatmul.bf16.gmra.mxu0 %v847
    %v2470 = vpop.f32.mrf.mxu0
    %v2471 = vadd.f32 %v1110, %v2470
    %v2472 = vpop.f32.mrf.mxu0
    %v2473 = vadd.f32 %v1110, %v2472
    %2474 = vdwg.mxu0
    %2475 = vmatpush.bf16.msra.mxu0 %v2014
    %2476 = vmatpush.bf16.msra.mxu0 %v2006
    %2477 = vmatpush.bf16.msra.mxu0 %v1998
    %2478 = vmatpush.bf16.msra.mxu0 %v1990
    %2479 = vmatpush.bf16.msra.mxu0 %v1982
    %2480 = vmatpush.bf16.msra.mxu0 %v1974
    %2481 = vmatpush.bf16.msra.mxu0 %v1966
    %2482 = vmatpush.bf16.msra.mxu0 %v1958
    %2483 = vmatmul.bf16.gmra.mxu0 %v848
    %v2484 = vpop.f32.mrf.mxu0
    %v2485 = vadd.f32 %v2471, %v2484
    %v2486 = vpop.f32.mrf.mxu0
    %v2487 = vadd.f32 %v2473, %v2486
    %2488 = vdwg.mxu0
    %2489 = vmatpush.bf16.msra.mxu0 %v2078
    %2490 = vmatpush.bf16.msra.mxu0 %v2070
    %2491 = vmatpush.bf16.msra.mxu0 %v2062
    %2492 = vmatpush.bf16.msra.mxu0 %v2054
    %2493 = vmatpush.bf16.msra.mxu0 %v2046
    %2494 = vmatpush.bf16.msra.mxu0 %v2038
    %2495 = vmatpush.bf16.msra.mxu0 %v2030
    %2496 = vmatpush.bf16.msra.mxu0 %v2022
    %2497 = vmatmul.bf16.gmra.mxu0 %v849
    %v2498 = vpop.f32.mrf.mxu0
    %v2499 = vadd.f32 %v2485, %v2498
    %v2500 = vpop.f32.mrf.mxu0
    %v2501 = vadd.f32 %v2487, %v2500
    %2502 = vdwg.mxu0
    %2503 = vmatpush.bf16.msra.mxu0 %v2142
    %2504 = vmatpush.bf16.msra.mxu0 %v2134
    %2505 = vmatpush.bf16.msra.mxu0 %v2126
    %2506 = vmatpush.bf16.msra.mxu0 %v2118
    %2507 = vmatpush.bf16.msra.mxu0 %v2110
    %2508 = vmatpush.bf16.msra.mxu0 %v2102
    %2509 = vmatpush.bf16.msra.mxu0 %v2094
    %2510 = vmatpush.bf16.msra.mxu0 %v2086
    %2511 = vmatmul.bf16.gmra.mxu0 %v850
    %v2512 = vpop.f32.mrf.mxu0
    %v2513 = vadd.f32 %v2499, %v2512
    %v2514 = vpop.f32.mrf.mxu0
    %v2515 = vadd.f32 %v2501, %v2514
    %2516 = vdwg.mxu0
    %2517 = vmatpush.bf16.msra.mxu0 %v1951
    %2518 = vmatpush.bf16.msra.mxu0 %v1943
    %2519 = vmatpush.bf16.msra.mxu0 %v1935
    %2520 = vmatpush.bf16.msra.mxu0 %v1927
    %2521 = vmatpush.bf16.msra.mxu0 %v1919
    %2522 = vmatpush.bf16.msra.mxu0 %v1911
    %2523 = vmatpush.bf16.msra.mxu0 %v1903
    %2524 = vmatpush.bf16.msra.mxu0 %v1895
    %2525 = vmatmul.bf16.gmra.mxu0 %v847
    %v2526 = vpop.f32.mrf.mxu0
    %v2527 = vadd.f32 %v1111, %v2526
    %v2528 = vpop.f32.mrf.mxu0
    %v2529 = vadd.f32 %v1111, %v2528
    %2530 = vdwg.mxu0
    %2531 = vmatpush.bf16.msra.mxu0 %v2015
    %2532 = vmatpush.bf16.msra.mxu0 %v2007
    %2533 = vmatpush.bf16.msra.mxu0 %v1999
    %2534 = vmatpush.bf16.msra.mxu0 %v1991
    %2535 = vmatpush.bf16.msra.mxu0 %v1983
    %2536 = vmatpush.bf16.msra.mxu0 %v1975
    %2537 = vmatpush.bf16.msra.mxu0 %v1967
    %2538 = vmatpush.bf16.msra.mxu0 %v1959
    %2539 = vmatmul.bf16.gmra.mxu0 %v848
    %v2540 = vpop.f32.mrf.mxu0
    %v2541 = vadd.f32 %v2527, %v2540
    %v2542 = vpop.f32.mrf.mxu0
    %v2543 = vadd.f32 %v2529, %v2542
    %2544 = vdwg.mxu0
    %2545 = vmatpush.bf16.msra.mxu0 %v2079
    %2546 = vmatpush.bf16.msra.mxu0 %v2071
    %2547 = vmatpush.bf16.msra.mxu0 %v2063
    %2548 = vmatpush.bf16.msra.mxu0 %v2055
    %2549 = vmatpush.bf16.msra.mxu0 %v2047
    %2550 = vmatpush.bf16.msra.mxu0 %v2039
    %2551 = vmatpush.bf16.msra.mxu0 %v2031
    %2552 = vmatpush.bf16.msra.mxu0 %v2023
    %2553 = vmatmul.bf16.gmra.mxu0 %v849
    %v2554 = vpop.f32.mrf.mxu0
    %v2555 = vadd.f32 %v2541, %v2554
    %v2556 = vpop.f32.mrf.mxu0
    %v2557 = vadd.f32 %v2543, %v2556
    %2558 = vdwg.mxu0
    %2559 = vmatpush.bf16.msra.mxu0 %v2143
    %2560 = vmatpush.bf16.msra.mxu0 %v2135
    %2561 = vmatpush.bf16.msra.mxu0 %v2127
    %2562 = vmatpush.bf16.msra.mxu0 %v2119
    %2563 = vmatpush.bf16.msra.mxu0 %v2111
    %2564 = vmatpush.bf16.msra.mxu0 %v2103
    %2565 = vmatpush.bf16.msra.mxu0 %v2095
    %2566 = vmatpush.bf16.msra.mxu0 %v2087
    %2567 = vmatmul.bf16.gmra.mxu0 %v850
    %v2568 = vpop.f32.mrf.mxu0
    %v2569 = vadd.f32 %v2555, %v2568
    %v2570 = vpop.f32.mrf.mxu0
    %v2571 = vadd.f32 %v2557, %v2570
    %2572 = vdwg.mxu0
    %2573 = vmatpush.bf16.msra.mxu0 %v1952
    %2574 = vmatpush.bf16.msra.mxu0 %v1944
    %2575 = vmatpush.bf16.msra.mxu0 %v1936
    %2576 = vmatpush.bf16.msra.mxu0 %v1928
    %2577 = vmatpush.bf16.msra.mxu0 %v1920
    %2578 = vmatpush.bf16.msra.mxu0 %v1912
    %2579 = vmatpush.bf16.msra.mxu0 %v1904
    %2580 = vmatpush.bf16.msra.mxu0 %v1896
    %2581 = vmatmul.bf16.gmra.mxu0 %v847
    %v2582 = vpop.f32.mrf.mxu0
    %v2583 = vadd.f32 %v1112, %v2582
    %v2584 = vpop.f32.mrf.mxu0
    %v2585 = vadd.f32 %v1112, %v2584
    %2586 = vdwg.mxu0
    %2587 = vmatpush.bf16.msra.mxu0 %v2016
    %2588 = vmatpush.bf16.msra.mxu0 %v2008
    %2589 = vmatpush.bf16.msra.mxu0 %v2000
    %2590 = vmatpush.bf16.msra.mxu0 %v1992
    %2591 = vmatpush.bf16.msra.mxu0 %v1984
    %2592 = vmatpush.bf16.msra.mxu0 %v1976
    %2593 = vmatpush.bf16.msra.mxu0 %v1968
    %2594 = vmatpush.bf16.msra.mxu0 %v1960
    %2595 = vmatmul.bf16.gmra.mxu0 %v848
    %v2596 = vpop.f32.mrf.mxu0
    %v2597 = vadd.f32 %v2583, %v2596
    %v2598 = vpop.f32.mrf.mxu0
    %v2599 = vadd.f32 %v2585, %v2598
    %2600 = vdwg.mxu0
    %2601 = vmatpush.bf16.msra.mxu0 %v2080
    %2602 = vmatpush.bf16.msra.mxu0 %v2072
    %2603 = vmatpush.bf16.msra.mxu0 %v2064
    %2604 = vmatpush.bf16.msra.mxu0 %v2056
    %2605 = vmatpush.bf16.msra.mxu0 %v2048
    %2606 = vmatpush.bf16.msra.mxu0 %v2040
    %2607 = vmatpush.bf16.msra.mxu0 %v2032
    %2608 = vmatpush.bf16.msra.mxu0 %v2024
    %2609 = vmatmul.bf16.gmra.mxu0 %v849
    %v2610 = vpop.f32.mrf.mxu0
    %v2611 = vadd.f32 %v2597, %v2610
    %v2612 = vpop.f32.mrf.mxu0
    %v2613 = vadd.f32 %v2599, %v2612
    %2614 = vdwg.mxu0
    %2615 = vmatpush.bf16.msra.mxu0 %v2144
    %2616 = vmatpush.bf16.msra.mxu0 %v2136
    %2617 = vmatpush.bf16.msra.mxu0 %v2128
    %2618 = vmatpush.bf16.msra.mxu0 %v2120
    %2619 = vmatpush.bf16.msra.mxu0 %v2112
    %2620 = vmatpush.bf16.msra.mxu0 %v2104
    %2621 = vmatpush.bf16.msra.mxu0 %v2096
    %2622 = vmatpush.bf16.msra.mxu0 %v2088
    %2623 = vmatmul.bf16.gmra.mxu0 %v850
    %v2624 = vpop.f32.mrf.mxu0
    %v2625 = vadd.f32 %v2611, %v2624
    %v2626 = vpop.f32.mrf.mxu0
    %v2627 = vadd.f32 %v2613, %v2626
    %2628 = vdwg.mxu0
    %2629 = vmatpush.bf16.msra.mxu0 %v1953
    %2630 = vmatpush.bf16.msra.mxu0 %v1945
    %2631 = vmatpush.bf16.msra.mxu0 %v1937
    %2632 = vmatpush.bf16.msra.mxu0 %v1929
    %2633 = vmatpush.bf16.msra.mxu0 %v1921
    %2634 = vmatpush.bf16.msra.mxu0 %v1913
    %2635 = vmatpush.bf16.msra.mxu0 %v1905
    %2636 = vmatpush.bf16.msra.mxu0 %v1897
    %2637 = vmatmul.bf16.gmra.mxu0 %v847
    %v2638 = vpop.f32.mrf.mxu0
    %v2639 = vadd.f32 %v1113, %v2638
    %v2640 = vpop.f32.mrf.mxu0
    %v2641 = vadd.f32 %v1113, %v2640
    %2642 = vdwg.mxu0
    %2643 = vmatpush.bf16.msra.mxu0 %v2017
    %2644 = vmatpush.bf16.msra.mxu0 %v2009
    %2645 = vmatpush.bf16.msra.mxu0 %v2001
    %2646 = vmatpush.bf16.msra.mxu0 %v1993
    %2647 = vmatpush.bf16.msra.mxu0 %v1985
    %2648 = vmatpush.bf16.msra.mxu0 %v1977
    %2649 = vmatpush.bf16.msra.mxu0 %v1969
    %2650 = vmatpush.bf16.msra.mxu0 %v1961
    %2651 = vmatmul.bf16.gmra.mxu0 %v848
    %v2652 = vpop.f32.mrf.mxu0
    %v2653 = vadd.f32 %v2639, %v2652
    %v2654 = vpop.f32.mrf.mxu0
    %v2655 = vadd.f32 %v2641, %v2654
    %2656 = vdwg.mxu0
    %2657 = vmatpush.bf16.msra.mxu0 %v2081
    %2658 = vmatpush.bf16.msra.mxu0 %v2073
    %2659 = vmatpush.bf16.msra.mxu0 %v2065
    %2660 = vmatpush.bf16.msra.mxu0 %v2057
    %2661 = vmatpush.bf16.msra.mxu0 %v2049
    %2662 = vmatpush.bf16.msra.mxu0 %v2041
    %2663 = vmatpush.bf16.msra.mxu0 %v2033
    %2664 = vmatpush.bf16.msra.mxu0 %v2025
    %2665 = vmatmul.bf16.gmra.mxu0 %v849
    %v2666 = vpop.f32.mrf.mxu0
    %v2667 = vadd.f32 %v2653, %v2666
    %v2668 = vpop.f32.mrf.mxu0
    %v2669 = vadd.f32 %v2655, %v2668
    %2670 = vdwg.mxu0
    %2671 = vmatpush.bf16.msra.mxu0 %v2145
    %2672 = vmatpush.bf16.msra.mxu0 %v2137
    %2673 = vmatpush.bf16.msra.mxu0 %v2129
    %2674 = vmatpush.bf16.msra.mxu0 %v2121
    %2675 = vmatpush.bf16.msra.mxu0 %v2113
    %2676 = vmatpush.bf16.msra.mxu0 %v2105
    %2677 = vmatpush.bf16.msra.mxu0 %v2097
    %2678 = vmatpush.bf16.msra.mxu0 %v2089
    %2679 = vmatmul.bf16.gmra.mxu0 %v850
    %v2680 = vpop.f32.mrf.mxu0
    %v2681 = vadd.f32 %v2667, %v2680
    %v2682 = vpop.f32.mrf.mxu0
    %v2683 = vadd.f32 %v2669, %v2682
    %2684 = vdwg.mxu0
    %2685 = vmatpush.bf16.msra.mxu0 %v1954
    %2686 = vmatpush.bf16.msra.mxu0 %v1946
    %2687 = vmatpush.bf16.msra.mxu0 %v1938
    %2688 = vmatpush.bf16.msra.mxu0 %v1930
    %2689 = vmatpush.bf16.msra.mxu0 %v1922
    %2690 = vmatpush.bf16.msra.mxu0 %v1914
    %2691 = vmatpush.bf16.msra.mxu0 %v1906
    %2692 = vmatpush.bf16.msra.mxu0 %v1898
    %2693 = vmatmul.bf16.gmra.mxu0 %v847
    %v2694 = vpop.f32.mrf.mxu0
    %v2695 = vadd.f32 %v1114, %v2694
    %v2696 = vpop.f32.mrf.mxu0
    %v2697 = vadd.f32 %v1114, %v2696
    %2698 = vdwg.mxu0
    %2699 = vmatpush.bf16.msra.mxu0 %v2018
    %2700 = vmatpush.bf16.msra.mxu0 %v2010
    %2701 = vmatpush.bf16.msra.mxu0 %v2002
    %2702 = vmatpush.bf16.msra.mxu0 %v1994
    %2703 = vmatpush.bf16.msra.mxu0 %v1986
    %2704 = vmatpush.bf16.msra.mxu0 %v1978
    %2705 = vmatpush.bf16.msra.mxu0 %v1970
    %2706 = vmatpush.bf16.msra.mxu0 %v1962
    %2707 = vmatmul.bf16.gmra.mxu0 %v848
    %v2708 = vpop.f32.mrf.mxu0
    %v2709 = vadd.f32 %v2695, %v2708
    %v2710 = vpop.f32.mrf.mxu0
    %v2711 = vadd.f32 %v2697, %v2710
    %2712 = vdwg.mxu0
    %2713 = vmatpush.bf16.msra.mxu0 %v2082
    %2714 = vmatpush.bf16.msra.mxu0 %v2074
    %2715 = vmatpush.bf16.msra.mxu0 %v2066
    %2716 = vmatpush.bf16.msra.mxu0 %v2058
    %2717 = vmatpush.bf16.msra.mxu0 %v2050
    %2718 = vmatpush.bf16.msra.mxu0 %v2042
    %2719 = vmatpush.bf16.msra.mxu0 %v2034
    %2720 = vmatpush.bf16.msra.mxu0 %v2026
    %2721 = vmatmul.bf16.gmra.mxu0 %v849
    %v2722 = vpop.f32.mrf.mxu0
    %v2723 = vadd.f32 %v2709, %v2722
    %v2724 = vpop.f32.mrf.mxu0
    %v2725 = vadd.f32 %v2711, %v2724
    %2726 = vdwg.mxu0
    %2727 = vmatpush.bf16.msra.mxu0 %v2146
    %2728 = vmatpush.bf16.msra.mxu0 %v2138
    %2729 = vmatpush.bf16.msra.mxu0 %v2130
    %2730 = vmatpush.bf16.msra.mxu0 %v2122
    %2731 = vmatpush.bf16.msra.mxu0 %v2114
    %2732 = vmatpush.bf16.msra.mxu0 %v2106
    %2733 = vmatpush.bf16.msra.mxu0 %v2098
    %2734 = vmatpush.bf16.msra.mxu0 %v2090
    %2735 = vmatmul.bf16.gmra.mxu0 %v850
    %v2736 = vpop.f32.mrf.mxu0
    %v2737 = vadd.f32 %v2723, %v2736
    %v2738 = vpop.f32.mrf.mxu0
    %v2739 = vadd.f32 %v2725, %v2738
    %2740 = vdwg.mxu0
    %2741 = vmatpush.bf16.msra.mxu0 %v1955
    %2742 = vmatpush.bf16.msra.mxu0 %v1947
    %2743 = vmatpush.bf16.msra.mxu0 %v1939
    %2744 = vmatpush.bf16.msra.mxu0 %v1931
    %2745 = vmatpush.bf16.msra.mxu0 %v1923
    %2746 = vmatpush.bf16.msra.mxu0 %v1915
    %2747 = vmatpush.bf16.msra.mxu0 %v1907
    %2748 = vmatpush.bf16.msra.mxu0 %v1899
    %2749 = vmatmul.bf16.gmra.mxu0 %v847
    %v2750 = vpop.f32.mrf.mxu0
    %v2751 = vadd.f32 %v1115, %v2750
    %v2752 = vpop.f32.mrf.mxu0
    %v2753 = vadd.f32 %v1115, %v2752
    %2754 = vdwg.mxu0
    %2755 = vmatpush.bf16.msra.mxu0 %v2019
    %2756 = vmatpush.bf16.msra.mxu0 %v2011
    %2757 = vmatpush.bf16.msra.mxu0 %v2003
    %2758 = vmatpush.bf16.msra.mxu0 %v1995
    %2759 = vmatpush.bf16.msra.mxu0 %v1987
    %2760 = vmatpush.bf16.msra.mxu0 %v1979
    %2761 = vmatpush.bf16.msra.mxu0 %v1971
    %2762 = vmatpush.bf16.msra.mxu0 %v1963
    %2763 = vmatmul.bf16.gmra.mxu0 %v848
    %v2764 = vpop.f32.mrf.mxu0
    %v2765 = vadd.f32 %v2751, %v2764
    %v2766 = vpop.f32.mrf.mxu0
    %v2767 = vadd.f32 %v2753, %v2766
    %2768 = vdwg.mxu0
    %2769 = vmatpush.bf16.msra.mxu0 %v2083
    %2770 = vmatpush.bf16.msra.mxu0 %v2075
    %2771 = vmatpush.bf16.msra.mxu0 %v2067
    %2772 = vmatpush.bf16.msra.mxu0 %v2059
    %2773 = vmatpush.bf16.msra.mxu0 %v2051
    %2774 = vmatpush.bf16.msra.mxu0 %v2043
    %2775 = vmatpush.bf16.msra.mxu0 %v2035
    %2776 = vmatpush.bf16.msra.mxu0 %v2027
    %2777 = vmatmul.bf16.gmra.mxu0 %v849
    %v2778 = vpop.f32.mrf.mxu0
    %v2779 = vadd.f32 %v2765, %v2778
    %v2780 = vpop.f32.mrf.mxu0
    %v2781 = vadd.f32 %v2767, %v2780
    %2782 = vdwg.mxu0
    %2783 = vmatpush.bf16.msra.mxu0 %v2147
    %2784 = vmatpush.bf16.msra.mxu0 %v2139
    %2785 = vmatpush.bf16.msra.mxu0 %v2131
    %2786 = vmatpush.bf16.msra.mxu0 %v2123
    %2787 = vmatpush.bf16.msra.mxu0 %v2115
    %2788 = vmatpush.bf16.msra.mxu0 %v2107
    %2789 = vmatpush.bf16.msra.mxu0 %v2099
    %2790 = vmatpush.bf16.msra.mxu0 %v2091
    %2791 = vmatmul.bf16.gmra.mxu0 %v850
    %v2792 = vpop.f32.mrf.mxu0
    %v2793 = vadd.f32 %v2779, %v2792
    %v2794 = vpop.f32.mrf.mxu0
    %v2795 = vadd.f32 %v2781, %v2794
    %2796 = vdwg.mxu0
    %2797 = vmatpush.bf16.msra.mxu0 %v1956
    %2798 = vmatpush.bf16.msra.mxu0 %v1948
    %2799 = vmatpush.bf16.msra.mxu0 %v1940
    %2800 = vmatpush.bf16.msra.mxu0 %v1932
    %2801 = vmatpush.bf16.msra.mxu0 %v1924
    %2802 = vmatpush.bf16.msra.mxu0 %v1916
    %2803 = vmatpush.bf16.msra.mxu0 %v1908
    %2804 = vmatpush.bf16.msra.mxu0 %v1900
    %2805 = vmatmul.bf16.gmra.mxu0 %v847
    %v2806 = vpop.f32.mrf.mxu0
    %v2807 = vadd.f32 %v1116, %v2806
    %v2808 = vpop.f32.mrf.mxu0
    %v2809 = vadd.f32 %v1116, %v2808
    %2810 = vdwg.mxu0
    %2811 = vmatpush.bf16.msra.mxu0 %v2020
    %2812 = vmatpush.bf16.msra.mxu0 %v2012
    %2813 = vmatpush.bf16.msra.mxu0 %v2004
    %2814 = vmatpush.bf16.msra.mxu0 %v1996
    %2815 = vmatpush.bf16.msra.mxu0 %v1988
    %2816 = vmatpush.bf16.msra.mxu0 %v1980
    %2817 = vmatpush.bf16.msra.mxu0 %v1972
    %2818 = vmatpush.bf16.msra.mxu0 %v1964
    %2819 = vmatmul.bf16.gmra.mxu0 %v848
    %v2820 = vpop.f32.mrf.mxu0
    %v2821 = vadd.f32 %v2807, %v2820
    %v2822 = vpop.f32.mrf.mxu0
    %v2823 = vadd.f32 %v2809, %v2822
    %2824 = vdwg.mxu0
    %2825 = vmatpush.bf16.msra.mxu0 %v2084
    %2826 = vmatpush.bf16.msra.mxu0 %v2076
    %2827 = vmatpush.bf16.msra.mxu0 %v2068
    %2828 = vmatpush.bf16.msra.mxu0 %v2060
    %2829 = vmatpush.bf16.msra.mxu0 %v2052
    %2830 = vmatpush.bf16.msra.mxu0 %v2044
    %2831 = vmatpush.bf16.msra.mxu0 %v2036
    %2832 = vmatpush.bf16.msra.mxu0 %v2028
    %2833 = vmatmul.bf16.gmra.mxu0 %v849
    %v2834 = vpop.f32.mrf.mxu0
    %v2835 = vadd.f32 %v2821, %v2834
    %v2836 = vpop.f32.mrf.mxu0
    %v2837 = vadd.f32 %v2823, %v2836
    %2838 = vdwg.mxu0
    %2839 = vmatpush.bf16.msra.mxu0 %v2148
    %2840 = vmatpush.bf16.msra.mxu0 %v2140
    %2841 = vmatpush.bf16.msra.mxu0 %v2132
    %2842 = vmatpush.bf16.msra.mxu0 %v2124
    %2843 = vmatpush.bf16.msra.mxu0 %v2116
    %2844 = vmatpush.bf16.msra.mxu0 %v2108
    %2845 = vmatpush.bf16.msra.mxu0 %v2100
    %2846 = vmatpush.bf16.msra.mxu0 %v2092
    %2847 = vmatmul.bf16.gmra.mxu0 %v850
    %v2848 = vpop.f32.mrf.mxu0
    %v2849 = vadd.f32 %v2835, %v2848
    %v2850 = vpop.f32.mrf.mxu0
    %v2851 = vadd.f32 %v2837, %v2850
    %2852 = vdwg.mxu0
    %vm2853 = vcmp.gt.f32.partialorder %v2457, 0.0
    %vm2854 = vcmp.gt.f32.partialorder %v2513, 0.0
    %vm2855 = vcmp.gt.f32.partialorder %v2569, 0.0
    %vm2856 = vcmp.gt.f32.partialorder %v2625, 0.0
    %vm2857 = vcmp.gt.f32.partialorder %v2681, 0.0
    %vm2858 = vcmp.gt.f32.partialorder %v2737, 0.0
    %vm2859 = vcmp.gt.f32.partialorder %v2793, 0.0
    %vm2860 = vcmp.gt.f32.partialorder %v2849, 0.0
    %vm2861 = vcmp.gt.f32.partialorder %v2459, 0.0
    %vm2862 = vcmp.gt.f32.partialorder %v2515, 0.0
    %vm2863 = vcmp.gt.f32.partialorder %v2571, 0.0
    %vm2864 = vcmp.gt.f32.partialorder %v2627, 0.0
    %vm2865 = vcmp.gt.f32.partialorder %v2683, 0.0
    %vm2866 = vcmp.gt.f32.partialorder %v2739, 0.0
    %vm2867 = vcmp.gt.f32.partialorder %v2795, 0.0
    %vm2868 = vcmp.gt.f32.partialorder %v2851, 0.0
    %v2869 = vmul.f32 %v2457, 0.2
    %v2870 = vmul.f32 %v2513, 0.2
    %v2871 = vmul.f32 %v2569, 0.2
    %v2872 = vmul.f32 %v2625, 0.2
    %v2873 = vmul.f32 %v2681, 0.2
    %v2874 = vmul.f32 %v2737, 0.2
    %v2875 = vmul.f32 %v2793, 0.2
    %v2876 = vmul.f32 %v2849, 0.2
    %v2877 = vmul.f32 %v2459, 0.2
    %v2878 = vmul.f32 %v2515, 0.2
    %v2879 = vmul.f32 %v2571, 0.2
    %v2880 = vmul.f32 %v2627, 0.2
    %v2881 = vmul.f32 %v2683, 0.2
    %v2882 = vmul.f32 %v2739, 0.2
    %v2883 = vmul.f32 %v2795, 0.2
    %v2884 = vmul.f32 %v2851, 0.2
    %v2885 = vsel %vm2853, %v2457, %v2869
    %v2886 = vsel %vm2854, %v2513, %v2870
    %v2887 = vsel %vm2855, %v2569, %v2871
    %v2888 = vsel %vm2856, %v2625, %v2872
    %v2889 = vsel %vm2857, %v2681, %v2873
    %v2890 = vsel %vm2858, %v2737, %v2874
    %v2891 = vsel %vm2859, %v2793, %v2875
    %v2892 = vsel %vm2860, %v2849, %v2876
    %v2893 = vsel %vm2861, %v2459, %v2877
    %v2894 = vsel %vm2862, %v2515, %v2878
    %v2895 = vsel %vm2863, %v2571, %v2879
    %v2896 = vsel %vm2864, %v2627, %v2880
    %v2897 = vsel %vm2865, %v2683, %v2881
    %v2898 = vsel %vm2866, %v2739, %v2882
    %v2899 = vsel %vm2867, %v2795, %v2883
    %v2900 = vsel %vm2868, %v2851, %v2884
    %v2901 = vpack.c.bf16 %v2893, %v2885
    %v2902 = vpack.c.bf16 %v2894, %v2886
    %v2903 = vpack.c.bf16 %v2895, %v2887
    %v2904 = vpack.c.bf16 %v2896, %v2888
    %v2905 = vpack.c.bf16 %v2897, %v2889
    %v2906 = vpack.c.bf16 %v2898, %v2890
    %v2907 = vpack.c.bf16 %v2899, %v2891
    %v2908 = vpack.c.bf16 %v2900, %v2892
    %v2909 = vld [vmem:[#allocation14] sm:$0xff]
    %v2910 = vld [vmem:[#allocation14 + $0x8] sm:$0xff]
    %v2911 = vld [vmem:[#allocation14 + $0x10] sm:$0xff]
    %v2912 = vld [vmem:[#allocation14 + $0x18] sm:$0xf]
    %v2913 = vld [vmem:[#allocation14 + $0x1c] sm:$0xff]
    %v2914 = vld [vmem:[#allocation14 + $0x24] sm:$0xff]
    %v2915 = vld [vmem:[#allocation14 + $0x2c] sm:$0xff]
    %v2916 = vld [vmem:[#allocation14 + $0x34] sm:$0xf]
    %v2917 = vld [vmem:[#allocation14 + $0x38] sm:$0xff]
    %v2918 = vld [vmem:[#allocation14 + $0x40] sm:$0xff]
    %v2919 = vld [vmem:[#allocation14 + $0x48] sm:$0xff]
    %v2920 = vld [vmem:[#allocation14 + $0x50] sm:$0xf]
    %v2921 = vld [vmem:[#allocation14 + $0x54] sm:$0xff]
    %v2922 = vld [vmem:[#allocation14 + $0x5c] sm:$0xff]
    %v2923 = vld [vmem:[#allocation14 + $0x64] sm:$0xff]
    %v2924 = vld [vmem:[#allocation14 + $0x6c] sm:$0xf]
    %v2925 = vld [vmem:[#allocation14 + $0x70] sm:$0xff]
    %v2926 = vld [vmem:[#allocation14 + $0x78] sm:$0xff]
    %v2927 = vld [vmem:[#allocation14 + $0x80] sm:$0xff]
    %v2928 = vld [vmem:[#allocation14 + $0x88] sm:$0xf]
    %v2929 = vld [vmem:[#allocation14 + $0x8c] sm:$0xff]
    %v2930 = vld [vmem:[#allocation14 + $0x94] sm:$0xff]
    %v2931 = vld [vmem:[#allocation14 + $0x9c] sm:$0xff]
    %v2932 = vld [vmem:[#allocation14 + $0xa4] sm:$0xf]
    %v2933 = vld [vmem:[#allocation14 + $0xa8] sm:$0xff]
    %v2934 = vld [vmem:[#allocation14 + $0xb0] sm:$0xff]
    %v2935 = vld [vmem:[#allocation14 + $0xb8] sm:$0xff]
    %v2936 = vld [vmem:[#allocation14 + $0xc0] sm:$0xf]
    %v2937 = vld [vmem:[#allocation14 + $0xc4] sm:$0xff]
    %v2938 = vld [vmem:[#allocation14 + $0xcc] sm:$0xff]
    %v2939 = vld [vmem:[#allocation14 + $0xd4] sm:$0xff]
    %v2940 = vld [vmem:[#allocation14 + $0xdc] sm:$0xf]
    %v2941 = vld [vmem:[#allocation14 + $0xe0] sm:$0xff]
    %v2942 = vld [vmem:[#allocation14 + $0xe8] sm:$0xff]
    %v2943 = vld [vmem:[#allocation14 + $0xf0] sm:$0xff]
    %v2944 = vld [vmem:[#allocation14 + $0xf8] sm:$0xf]
    %v2945 = vld [vmem:[#allocation14 + $0xfc] sm:$0xff]
    %v2946 = vld [vmem:[#allocation14 + $0x104] sm:$0xff]
    %v2947 = vld [vmem:[#allocation14 + $0x10c] sm:$0xff]
    %v2948 = vld [vmem:[#allocation14 + $0x114] sm:$0xf]
    %v2949 = vld [vmem:[#allocation14 + $0x118] sm:$0xff]
    %v2950 = vld [vmem:[#allocation14 + $0x120] sm:$0xff]
    %v2951 = vld [vmem:[#allocation14 + $0x128] sm:$0xff]
    %v2952 = vld [vmem:[#allocation14 + $0x130] sm:$0xf]
    %v2953 = vld [vmem:[#allocation14 + $0x134] sm:$0xff]
    %v2954 = vld [vmem:[#allocation14 + $0x13c] sm:$0xff]
    %v2955 = vld [vmem:[#allocation14 + $0x144] sm:$0xff]
    %v2956 = vld [vmem:[#allocation14 + $0x14c] sm:$0xf]
    %v2957 = vld [vmem:[#allocation14 + $0x150] sm:$0xff]
    %v2958 = vld [vmem:[#allocation14 + $0x158] sm:$0xff]
    %v2959 = vld [vmem:[#allocation14 + $0x160] sm:$0xff]
    %v2960 = vld [vmem:[#allocation14 + $0x168] sm:$0xf]
    %v2961 = vld [vmem:[#allocation14 + $0x16c] sm:$0xff]
    %v2962 = vld [vmem:[#allocation14 + $0x174] sm:$0xff]
    %v2963 = vld [vmem:[#allocation14 + $0x17c] sm:$0xff]
    %v2964 = vld [vmem:[#allocation14 + $0x184] sm:$0xf]
    %v2965 = vld [vmem:[#allocation14 + $0x188] sm:$0xff]
    %v2966 = vld [vmem:[#allocation14 + $0x190] sm:$0xff]
    %v2967 = vld [vmem:[#allocation14 + $0x198] sm:$0xff]
    %v2968 = vld [vmem:[#allocation14 + $0x1a0] sm:$0xf]
    %v2969 = vld [vmem:[#allocation14 + $0x1a4] sm:$0xff]
    %v2970 = vld [vmem:[#allocation14 + $0x1ac] sm:$0xff]
    %v2971 = vld [vmem:[#allocation14 + $0x1b4] sm:$0xff]
    %v2972 = vld [vmem:[#allocation14 + $0x1bc] sm:$0xf]
    %v2973 = vld [vmem:[#allocation14 + $0x1c0] sm:$0xff]
    %v2974 = vld [vmem:[#allocation14 + $0x1c8] sm:$0xff]
    %v2975 = vld [vmem:[#allocation14 + $0x1d0] sm:$0xff]
    %v2976 = vld [vmem:[#allocation14 + $0x1d8] sm:$0xf]
    %v2977 = vld [vmem:[#allocation14 + $0x1dc] sm:$0xff]
    %v2978 = vld [vmem:[#allocation14 + $0x1e4] sm:$0xff]
    %v2979 = vld [vmem:[#allocation14 + $0x1ec] sm:$0xff]
    %v2980 = vld [vmem:[#allocation14 + $0x1f4] sm:$0xf]
    %v2981 = vld [vmem:[#allocation14 + $0x1f8] sm:$0xff]
    %v2982 = vld [vmem:[#allocation14 + $0x200] sm:$0xff]
    %v2983 = vld [vmem:[#allocation14 + $0x208] sm:$0xff]
    %v2984 = vld [vmem:[#allocation14 + $0x210] sm:$0xf]
    %v2985 = vld [vmem:[#allocation14 + $0x214] sm:$0xff]
    %v2986 = vld [vmem:[#allocation14 + $0x21c] sm:$0xff]
    %v2987 = vld [vmem:[#allocation14 + $0x224] sm:$0xff]
    %v2988 = vld [vmem:[#allocation14 + $0x22c] sm:$0xf]
    %v2989 = vld [vmem:[#allocation14 + $0x230] sm:$0xff]
    %v2990 = vld [vmem:[#allocation14 + $0x238] sm:$0xff]
    %v2991 = vld [vmem:[#allocation14 + $0x240] sm:$0xff]
    %v2992 = vld [vmem:[#allocation14 + $0x248] sm:$0xf]
    %v2993 = vld [vmem:[#allocation14 + $0x24c] sm:$0xff]
    %v2994 = vld [vmem:[#allocation14 + $0x254] sm:$0xff]
    %v2995 = vld [vmem:[#allocation14 + $0x25c] sm:$0xff]
    %v2996 = vld [vmem:[#allocation14 + $0x264] sm:$0xf]
    %v2997 = vld [vmem:[#allocation14 + $0x268] sm:$0xff]
    %v2998 = vld [vmem:[#allocation14 + $0x270] sm:$0xff]
    %v2999 = vld [vmem:[#allocation14 + $0x278] sm:$0xff]
    %v3000 = vld [vmem:[#allocation14 + $0x280] sm:$0xf]
    %v3001 = vld [vmem:[#allocation14 + $0x284] sm:$0xff]
    %v3002 = vld [vmem:[#allocation14 + $0x28c] sm:$0xff]
    %v3003 = vld [vmem:[#allocation14 + $0x294] sm:$0xff]
    %v3004 = vld [vmem:[#allocation14 + $0x29c] sm:$0xf]
    %v3005 = vld [vmem:[#allocation14 + $0x2a0] sm:$0xff]
    %v3006 = vld [vmem:[#allocation14 + $0x2a8] sm:$0xff]
    %v3007 = vld [vmem:[#allocation14 + $0x2b0] sm:$0xff]
    %v3008 = vld [vmem:[#allocation14 + $0x2b8] sm:$0xf]
    %v3009 = vld [vmem:[#allocation14 + $0x2bc] sm:$0xff]
    %v3010 = vld [vmem:[#allocation14 + $0x2c4] sm:$0xff]
    %v3011 = vld [vmem:[#allocation14 + $0x2cc] sm:$0xff]
    %v3012 = vld [vmem:[#allocation14 + $0x2d4] sm:$0xf]
    %v3013 = vld [vmem:[#allocation14 + $0x2d8] sm:$0xff]
    %v3014 = vld [vmem:[#allocation14 + $0x2e0] sm:$0xff]
    %v3015 = vld [vmem:[#allocation14 + $0x2e8] sm:$0xff]
    %v3016 = vld [vmem:[#allocation14 + $0x2f0] sm:$0xf]
    %v3017 = vld [vmem:[#allocation14 + $0x2f4] sm:$0xff]
    %v3018 = vld [vmem:[#allocation14 + $0x2fc] sm:$0xff]
    %v3019 = vld [vmem:[#allocation14 + $0x304] sm:$0xff]
    %v3020 = vld [vmem:[#allocation14 + $0x30c] sm:$0xf]
    %v3021 = vld [vmem:[#allocation14 + $0x310] sm:$0xff]
    %v3022 = vld [vmem:[#allocation14 + $0x318] sm:$0xff]
    %v3023 = vld [vmem:[#allocation14 + $0x320] sm:$0xff]
    %v3024 = vld [vmem:[#allocation14 + $0x328] sm:$0xf]
    %v3025 = vld [vmem:[#allocation14 + $0x32c] sm:$0xff]
    %v3026 = vld [vmem:[#allocation14 + $0x334] sm:$0xff]
    %v3027 = vld [vmem:[#allocation14 + $0x33c] sm:$0xff]
    %v3028 = vld [vmem:[#allocation14 + $0x344] sm:$0xf]
    %v3029 = vld [vmem:[#allocation14 + $0x348] sm:$0xff]
    %v3030 = vld [vmem:[#allocation14 + $0x350] sm:$0xff]
    %v3031 = vld [vmem:[#allocation14 + $0x358] sm:$0xff]
    %v3032 = vld [vmem:[#allocation14 + $0x360] sm:$0xf]
    %v3033 = vld [vmem:[#allocation14 + $0x364] sm:$0xff]
    %v3034 = vld [vmem:[#allocation14 + $0x36c] sm:$0xff]
    %v3035 = vld [vmem:[#allocation14 + $0x374] sm:$0xff]
    %v3036 = vld [vmem:[#allocation14 + $0x37c] sm:$0xf]
    %v3037 = vld [vmem:[#allocation14 + $0x380] sm:$0xff]
    %v3038 = vld [vmem:[#allocation14 + $0x388] sm:$0xff]
    %v3039 = vld [vmem:[#allocation14 + $0x390] sm:$0xff]
    %v3040 = vld [vmem:[#allocation14 + $0x398] sm:$0xf]
    %v3041 = vld [vmem:[#allocation14 + $0x39c] sm:$0xff]
    %v3042 = vld [vmem:[#allocation14 + $0x3a4] sm:$0xff]
    %v3043 = vld [vmem:[#allocation14 + $0x3ac] sm:$0xff]
    %v3044 = vld [vmem:[#allocation14 + $0x3b4] sm:$0xf]
    %v3045 = vld [vmem:[#allocation14 + $0x3b8] sm:$0xff]
    %v3046 = vld [vmem:[#allocation14 + $0x3c0] sm:$0xff]
    %v3047 = vld [vmem:[#allocation14 + $0x3c8] sm:$0xff]
    %v3048 = vld [vmem:[#allocation14 + $0x3d0] sm:$0xf]
    %v3049 = vld [vmem:[#allocation14 + $0x3d4] sm:$0xff]
    %v3050 = vld [vmem:[#allocation14 + $0x3dc] sm:$0xff]
    %v3051 = vld [vmem:[#allocation14 + $0x3e4] sm:$0xff]
    %v3052 = vld [vmem:[#allocation14 + $0x3ec] sm:$0xf]
    %v3053 = vld [vmem:[#allocation14 + $0x3f0] sm:$0xff]
    %v3054 = vld [vmem:[#allocation14 + $0x3f8] sm:$0xff]
    %v3055 = vld [vmem:[#allocation14 + $0x400] sm:$0xff]
    %v3056 = vld [vmem:[#allocation14 + $0x408] sm:$0xf]
    %v3057 = vld [vmem:[#allocation14 + $0x40c] sm:$0xff]
    %v3058 = vld [vmem:[#allocation14 + $0x414] sm:$0xff]
    %v3059 = vld [vmem:[#allocation14 + $0x41c] sm:$0xff]
    %v3060 = vld [vmem:[#allocation14 + $0x424] sm:$0xf]
    %v3061 = vld [vmem:[#allocation14 + $0x428] sm:$0xff]
    %v3062 = vld [vmem:[#allocation14 + $0x430] sm:$0xff]
    %v3063 = vld [vmem:[#allocation14 + $0x438] sm:$0xff]
    %v3064 = vld [vmem:[#allocation14 + $0x440] sm:$0xf]
    %v3065 = vld [vmem:[#allocation14 + $0x444] sm:$0xff]
    %v3066 = vld [vmem:[#allocation14 + $0x44c] sm:$0xff]
    %v3067 = vld [vmem:[#allocation14 + $0x454] sm:$0xff]
    %v3068 = vld [vmem:[#allocation14 + $0x45c] sm:$0xf]
    %v3069 = vld [vmem:[#allocation14 + $0x460] sm:$0xff]
    %v3070 = vld [vmem:[#allocation14 + $0x468] sm:$0xff]
    %v3071 = vld [vmem:[#allocation14 + $0x470] sm:$0xff]
    %v3072 = vld [vmem:[#allocation14 + $0x478] sm:$0xf]
    %v3073 = vld [vmem:[#allocation14 + $0x47c] sm:$0xff]
    %v3074 = vld [vmem:[#allocation14 + $0x484] sm:$0xff]
    %v3075 = vld [vmem:[#allocation14 + $0x48c] sm:$0xff]
    %v3076 = vld [vmem:[#allocation14 + $0x494] sm:$0xf]
    %v3077 = vld [vmem:[#allocation14 + $0x498] sm:$0xff]
    %v3078 = vld [vmem:[#allocation14 + $0x4a0] sm:$0xff]
    %v3079 = vld [vmem:[#allocation14 + $0x4a8] sm:$0xff]
    %v3080 = vld [vmem:[#allocation14 + $0x4b0] sm:$0xf]
    %v3081 = vld [vmem:[#allocation14 + $0x4b4] sm:$0xff]
    %v3082 = vld [vmem:[#allocation14 + $0x4bc] sm:$0xff]
    %v3083 = vld [vmem:[#allocation14 + $0x4c4] sm:$0xff]
    %v3084 = vld [vmem:[#allocation14 + $0x4cc] sm:$0xf]
    %v3085 = vld [vmem:[#allocation14 + $0x4d0] sm:$0xff]
    %v3086 = vld [vmem:[#allocation14 + $0x4d8] sm:$0xff]
    %v3087 = vld [vmem:[#allocation14 + $0x4e0] sm:$0xff]
    %v3088 = vld [vmem:[#allocation14 + $0x4e8] sm:$0xf]
    %v3089 = vld [vmem:[#allocation14 + $0x4ec] sm:$0xff]
    %v3090 = vld [vmem:[#allocation14 + $0x4f4] sm:$0xff]
    %v3091 = vld [vmem:[#allocation14 + $0x4fc] sm:$0xff]
    %v3092 = vld [vmem:[#allocation14 + $0x504] sm:$0xf]
    %v3093 = vld [vmem:[#allocation14 + $0x508] sm:$0xff]
    %v3094 = vld [vmem:[#allocation14 + $0x510] sm:$0xff]
    %v3095 = vld [vmem:[#allocation14 + $0x518] sm:$0xff]
    %v3096 = vld [vmem:[#allocation14 + $0x520] sm:$0xf]
    %v3097 = vld [vmem:[#allocation14 + $0x524] sm:$0xff]
    %v3098 = vld [vmem:[#allocation14 + $0x52c] sm:$0xff]
    %v3099 = vld [vmem:[#allocation14 + $0x534] sm:$0xff]
    %v3100 = vld [vmem:[#allocation14 + $0x53c] sm:$0xf]
    %v3101 = vld [vmem:[#allocation14 + $0x540] sm:$0xff]
    %v3102 = vld [vmem:[#allocation14 + $0x548] sm:$0xff]
    %v3103 = vld [vmem:[#allocation14 + $0x550] sm:$0xff]
    %v3104 = vld [vmem:[#allocation14 + $0x558] sm:$0xf]
    %v3105 = vld [vmem:[#allocation14 + $0x55c] sm:$0xff]
    %v3106 = vld [vmem:[#allocation14 + $0x564] sm:$0xff]
    %v3107 = vld [vmem:[#allocation14 + $0x56c] sm:$0xff]
    %v3108 = vld [vmem:[#allocation14 + $0x574] sm:$0xf]
    %v3109 = vld [vmem:[#allocation14 + $0x578] sm:$0xff]
    %v3110 = vld [vmem:[#allocation14 + $0x580] sm:$0xff]
    %v3111 = vld [vmem:[#allocation14 + $0x588] sm:$0xff]
    %v3112 = vld [vmem:[#allocation14 + $0x590] sm:$0xf]
    %v3113 = vld [vmem:[#allocation14 + $0x594] sm:$0xff]
    %v3114 = vld [vmem:[#allocation14 + $0x59c] sm:$0xff]
    %v3115 = vld [vmem:[#allocation14 + $0x5a4] sm:$0xff]
    %v3116 = vld [vmem:[#allocation14 + $0x5ac] sm:$0xf]
    %v3117 = vld [vmem:[#allocation14 + $0x5b0] sm:$0xff]
    %v3118 = vld [vmem:[#allocation14 + $0x5b8] sm:$0xff]
    %v3119 = vld [vmem:[#allocation14 + $0x5c0] sm:$0xff]
    %v3120 = vld [vmem:[#allocation14 + $0x5c8] sm:$0xf]
    %v3121 = vld [vmem:[#allocation14 + $0x5cc] sm:$0xff]
    %v3122 = vld [vmem:[#allocation14 + $0x5d4] sm:$0xff]
    %v3123 = vld [vmem:[#allocation14 + $0x5dc] sm:$0xff]
    %v3124 = vld [vmem:[#allocation14 + $0x5e4] sm:$0xf]
    %v3125 = vld [vmem:[#allocation14 + $0x5e8] sm:$0xff]
    %v3126 = vld [vmem:[#allocation14 + $0x5f0] sm:$0xff]
    %v3127 = vld [vmem:[#allocation14 + $0x5f8] sm:$0xff]
    %v3128 = vld [vmem:[#allocation14 + $0x600] sm:$0xf]
    %v3129 = vld [vmem:[#allocation14 + $0x604] sm:$0xff]
    %v3130 = vld [vmem:[#allocation14 + $0x60c] sm:$0xff]
    %v3131 = vld [vmem:[#allocation14 + $0x614] sm:$0xff]
    %v3132 = vld [vmem:[#allocation14 + $0x61c] sm:$0xf]
    %v3133 = vld [vmem:[#allocation14 + $0x620] sm:$0xff]
    %v3134 = vld [vmem:[#allocation14 + $0x628] sm:$0xff]
    %v3135 = vld [vmem:[#allocation14 + $0x630] sm:$0xff]
    %v3136 = vld [vmem:[#allocation14 + $0x638] sm:$0xf]
    %v3137 = vld [vmem:[#allocation14 + $0x63c] sm:$0xff]
    %v3138 = vld [vmem:[#allocation14 + $0x644] sm:$0xff]
    %v3139 = vld [vmem:[#allocation14 + $0x64c] sm:$0xff]
    %v3140 = vld [vmem:[#allocation14 + $0x654] sm:$0xf]
    %v3141 = vld [vmem:[#allocation14 + $0x658] sm:$0xff]
    %v3142 = vld [vmem:[#allocation14 + $0x660] sm:$0xff]
    %v3143 = vld [vmem:[#allocation14 + $0x668] sm:$0xff]
    %v3144 = vld [vmem:[#allocation14 + $0x670] sm:$0xf]
    %v3145 = vld [vmem:[#allocation14 + $0x674] sm:$0xff]
    %v3146 = vld [vmem:[#allocation14 + $0x67c] sm:$0xff]
    %v3147 = vld [vmem:[#allocation14 + $0x684] sm:$0xff]
    %v3148 = vld [vmem:[#allocation14 + $0x68c] sm:$0xf]
    %v3149 = vld [vmem:[#allocation14 + $0x690] sm:$0xff]
    %v3150 = vld [vmem:[#allocation14 + $0x698] sm:$0xff]
    %v3151 = vld [vmem:[#allocation14 + $0x6a0] sm:$0xff]
    %v3152 = vld [vmem:[#allocation14 + $0x6a8] sm:$0xf]
    %v3153 = vld [vmem:[#allocation14 + $0x6ac] sm:$0xff]
    %v3154 = vld [vmem:[#allocation14 + $0x6b4] sm:$0xff]
    %v3155 = vld [vmem:[#allocation14 + $0x6bc] sm:$0xff]
    %v3156 = vld [vmem:[#allocation14 + $0x6c4] sm:$0xf]
    %v3157 = vld [vmem:[#allocation14 + $0x6c8] sm:$0xff]
    %v3158 = vld [vmem:[#allocation14 + $0x6d0] sm:$0xff]
    %v3159 = vld [vmem:[#allocation14 + $0x6d8] sm:$0xff]
    %v3160 = vld [vmem:[#allocation14 + $0x6e0] sm:$0xf]
    %v3161 = vld [vmem:[#allocation14 + $0x6e4] sm:$0xff]
    %v3162 = vld [vmem:[#allocation14 + $0x6ec] sm:$0xff]
    %v3163 = vld [vmem:[#allocation14 + $0x6f4] sm:$0xff]
    %v3164 = vld [vmem:[#allocation14 + $0x6fc] sm:$0xf]
    %v3165 = vld [vmem:[#allocation14 + $0x700] sm:$0xff]
    %v3166 = vld [vmem:[#allocation14 + $0x708] sm:$0xff]
    %v3167 = vld [vmem:[#allocation14 + $0x710] sm:$0xff]
    %v3168 = vld [vmem:[#allocation14 + $0x718] sm:$0xf]
    %v3169 = vld [vmem:[#allocation14 + $0x71c] sm:$0xff]
    %v3170 = vld [vmem:[#allocation14 + $0x724] sm:$0xff]
    %v3171 = vld [vmem:[#allocation14 + $0x72c] sm:$0xff]
    %v3172 = vld [vmem:[#allocation14 + $0x734] sm:$0xf]
    %v3173 = vld [vmem:[#allocation14 + $0x738] sm:$0xff]
    %v3174 = vld [vmem:[#allocation14 + $0x740] sm:$0xff]
    %v3175 = vld [vmem:[#allocation14 + $0x748] sm:$0xff]
    %v3176 = vld [vmem:[#allocation14 + $0x750] sm:$0xf]
    %v3177 = vld [vmem:[#allocation14 + $0x754] sm:$0xff]
    %v3178 = vld [vmem:[#allocation14 + $0x75c] sm:$0xff]
    %v3179 = vld [vmem:[#allocation14 + $0x764] sm:$0xff]
    %v3180 = vld [vmem:[#allocation14 + $0x76c] sm:$0xf]
    %v3181 = vld [vmem:[#allocation14 + $0x770] sm:$0xff]
    %v3182 = vld [vmem:[#allocation14 + $0x778] sm:$0xff]
    %v3183 = vld [vmem:[#allocation14 + $0x780] sm:$0xff]
    %v3184 = vld [vmem:[#allocation14 + $0x788] sm:$0xf]
    %v3185 = vld [vmem:[#allocation14 + $0x78c] sm:$0xff]
    %v3186 = vld [vmem:[#allocation14 + $0x794] sm:$0xff]
    %v3187 = vld [vmem:[#allocation14 + $0x79c] sm:$0xff]
    %v3188 = vld [vmem:[#allocation14 + $0x7a4] sm:$0xf]
    %v3189 = vld [vmem:[#allocation14 + $0x7a8] sm:$0xff]
    %v3190 = vld [vmem:[#allocation14 + $0x7b0] sm:$0xff]
    %v3191 = vld [vmem:[#allocation14 + $0x7b8] sm:$0xff]
    %v3192 = vld [vmem:[#allocation14 + $0x7c0] sm:$0xf]
    %v3193 = vld [vmem:[#allocation14 + $0x7c4] sm:$0xff]
    %v3194 = vld [vmem:[#allocation14 + $0x7cc] sm:$0xff]
    %v3195 = vld [vmem:[#allocation14 + $0x7d4] sm:$0xff]
    %v3196 = vld [vmem:[#allocation14 + $0x7dc] sm:$0xf]
    %v3197 = vld [vmem:[#allocation14 + $0x7e0] sm:$0xff]
    %v3198 = vld [vmem:[#allocation14 + $0x7e8] sm:$0xff]
    %v3199 = vld [vmem:[#allocation14 + $0x7f0] sm:$0xff]
    %v3200 = vld [vmem:[#allocation14 + $0x7f8] sm:$0xf]
    %v3201 = vld [vmem:[#allocation14 + $0x7fc] sm:$0xff]
    %v3202 = vld [vmem:[#allocation14 + $0x804] sm:$0xff]
    %v3203 = vld [vmem:[#allocation14 + $0x80c] sm:$0xff]
    %v3204 = vld [vmem:[#allocation14 + $0x814] sm:$0xf]
    %v3205 = vld [vmem:[#allocation14 + $0x818] sm:$0xff]
    %v3206 = vld [vmem:[#allocation14 + $0x820] sm:$0xff]
    %v3207 = vld [vmem:[#allocation14 + $0x828] sm:$0xff]
    %v3208 = vld [vmem:[#allocation14 + $0x830] sm:$0xf]
    %v3209 = vld [vmem:[#allocation14 + $0x834] sm:$0xff]
    %v3210 = vld [vmem:[#allocation14 + $0x83c] sm:$0xff]
    %v3211 = vld [vmem:[#allocation14 + $0x844] sm:$0xff]
    %v3212 = vld [vmem:[#allocation14 + $0x84c] sm:$0xf]
    %v3213 = vld [vmem:[#allocation14 + $0x850] sm:$0xff]
    %v3214 = vld [vmem:[#allocation14 + $0x858] sm:$0xff]
    %v3215 = vld [vmem:[#allocation14 + $0x860] sm:$0xff]
    %v3216 = vld [vmem:[#allocation14 + $0x868] sm:$0xf]
    %v3217 = vld [vmem:[#allocation14 + $0x86c] sm:$0xff]
    %v3218 = vld [vmem:[#allocation14 + $0x874] sm:$0xff]
    %v3219 = vld [vmem:[#allocation14 + $0x87c] sm:$0xff]
    %v3220 = vld [vmem:[#allocation14 + $0x884] sm:$0xf]
    %v3221 = vld [vmem:[#allocation14 + $0x888] sm:$0xff]
    %v3222 = vld [vmem:[#allocation14 + $0x890] sm:$0xff]
    %v3223 = vld [vmem:[#allocation14 + $0x898] sm:$0xff]
    %v3224 = vld [vmem:[#allocation14 + $0x8a0] sm:$0xf]
    %v3225 = vld [vmem:[#allocation14 + $0x8a4] sm:$0xff]
    %v3226 = vld [vmem:[#allocation14 + $0x8ac] sm:$0xff]
    %v3227 = vld [vmem:[#allocation14 + $0x8b4] sm:$0xff]
    %v3228 = vld [vmem:[#allocation14 + $0x8bc] sm:$0xf]
    %v3229 = vld [vmem:[#allocation14 + $0x8c0] sm:$0xff]
    %v3230 = vld [vmem:[#allocation14 + $0x8c8] sm:$0xff]
    %v3231 = vld [vmem:[#allocation14 + $0x8d0] sm:$0xff]
    %v3232 = vld [vmem:[#allocation14 + $0x8d8] sm:$0xf]
    %v3233 = vld [vmem:[#allocation14 + $0x8dc] sm:$0xff]
    %v3234 = vld [vmem:[#allocation14 + $0x8e4] sm:$0xff]
    %v3235 = vld [vmem:[#allocation14 + $0x8ec] sm:$0xff]
    %v3236 = vld [vmem:[#allocation14 + $0x8f4] sm:$0xf]
    %v3237 = vld [vmem:[#allocation14 + $0x8f8] sm:$0xff]
    %v3238 = vld [vmem:[#allocation14 + $0x900] sm:$0xff]
    %v3239 = vld [vmem:[#allocation14 + $0x908] sm:$0xff]
    %v3240 = vld [vmem:[#allocation14 + $0x910] sm:$0xf]
    %v3241 = vld [vmem:[#allocation14 + $0x914] sm:$0xff]
    %v3242 = vld [vmem:[#allocation14 + $0x91c] sm:$0xff]
    %v3243 = vld [vmem:[#allocation14 + $0x924] sm:$0xff]
    %v3244 = vld [vmem:[#allocation14 + $0x92c] sm:$0xf]
    %v3245 = vld [vmem:[#allocation14 + $0x930] sm:$0xff]
    %v3246 = vld [vmem:[#allocation14 + $0x938] sm:$0xff]
    %v3247 = vld [vmem:[#allocation14 + $0x940] sm:$0xff]
    %v3248 = vld [vmem:[#allocation14 + $0x948] sm:$0xf]
    %v3249 = vld [vmem:[#allocation14 + $0x94c] sm:$0xff]
    %v3250 = vld [vmem:[#allocation14 + $0x954] sm:$0xff]
    %v3251 = vld [vmem:[#allocation14 + $0x95c] sm:$0xff]
    %v3252 = vld [vmem:[#allocation14 + $0x964] sm:$0xf]
    %v3253 = vld [vmem:[#allocation14 + $0x968] sm:$0xff]
    %v3254 = vld [vmem:[#allocation14 + $0x970] sm:$0xff]
    %v3255 = vld [vmem:[#allocation14 + $0x978] sm:$0xff]
    %v3256 = vld [vmem:[#allocation14 + $0x980] sm:$0xf]
    %v3257 = vld [vmem:[#allocation14 + $0x984] sm:$0xff]
    %v3258 = vld [vmem:[#allocation14 + $0x98c] sm:$0xff]
    %v3259 = vld [vmem:[#allocation14 + $0x994] sm:$0xff]
    %v3260 = vld [vmem:[#allocation14 + $0x99c] sm:$0xf]
    %v3261 = vld [vmem:[#allocation14 + $0x9a0] sm:$0xff]
    %v3262 = vld [vmem:[#allocation14 + $0x9a8] sm:$0xff]
    %v3263 = vld [vmem:[#allocation14 + $0x9b0] sm:$0xff]
    %v3264 = vld [vmem:[#allocation14 + $0x9b8] sm:$0xf]
    %v3265 = vld [vmem:[#allocation14 + $0x9bc] sm:$0xff]
    %v3266 = vld [vmem:[#allocation14 + $0x9c4] sm:$0xff]
    %v3267 = vld [vmem:[#allocation14 + $0x9cc] sm:$0xff]
    %v3268 = vld [vmem:[#allocation14 + $0x9d4] sm:$0xf]
    %v3269 = vld [vmem:[#allocation14 + $0x9d8] sm:$0xff]
    %v3270 = vld [vmem:[#allocation14 + $0x9e0] sm:$0xff]
    %v3271 = vld [vmem:[#allocation14 + $0x9e8] sm:$0xff]
    %v3272 = vld [vmem:[#allocation14 + $0x9f0] sm:$0xf]
    %v3273 = vld [vmem:[#allocation14 + $0x9f4] sm:$0xff]
    %v3274 = vld [vmem:[#allocation14 + $0x9fc] sm:$0xff]
    %v3275 = vld [vmem:[#allocation14 + $0xa04] sm:$0xff]
    %v3276 = vld [vmem:[#allocation14 + $0xa0c] sm:$0xf]
    %v3277 = vld [vmem:[#allocation14 + $0xa10] sm:$0xff]
    %v3278 = vld [vmem:[#allocation14 + $0xa18] sm:$0xff]
    %v3279 = vld [vmem:[#allocation14 + $0xa20] sm:$0xff]
    %v3280 = vld [vmem:[#allocation14 + $0xa28] sm:$0xf]
    %v3281 = vld [vmem:[#allocation14 + $0xa2c] sm:$0xff]
    %v3282 = vld [vmem:[#allocation14 + $0xa34] sm:$0xff]
    %v3283 = vld [vmem:[#allocation14 + $0xa3c] sm:$0xff]
    %v3284 = vld [vmem:[#allocation14 + $0xa44] sm:$0xf]
    %v3285 = vld [vmem:[#allocation14 + $0xa48] sm:$0xff]
    %v3286 = vld [vmem:[#allocation14 + $0xa50] sm:$0xff]
    %v3287 = vld [vmem:[#allocation14 + $0xa58] sm:$0xff]
    %v3288 = vld [vmem:[#allocation14 + $0xa60] sm:$0xf]
    %v3289 = vld [vmem:[#allocation14 + $0xa64] sm:$0xff]
    %v3290 = vld [vmem:[#allocation14 + $0xa6c] sm:$0xff]
    %v3291 = vld [vmem:[#allocation14 + $0xa74] sm:$0xff]
    %v3292 = vld [vmem:[#allocation14 + $0xa7c] sm:$0xf]
    %v3293 = vld [vmem:[#allocation14 + $0xa80] sm:$0xff]
    %v3294 = vld [vmem:[#allocation14 + $0xa88] sm:$0xff]
    %v3295 = vld [vmem:[#allocation14 + $0xa90] sm:$0xff]
    %v3296 = vld [vmem:[#allocation14 + $0xa98] sm:$0xf]
    %v3297 = vld [vmem:[#allocation14 + $0xa9c] sm:$0xff]
    %v3298 = vld [vmem:[#allocation14 + $0xaa4] sm:$0xff]
    %v3299 = vld [vmem:[#allocation14 + $0xaac] sm:$0xff]
    %v3300 = vld [vmem:[#allocation14 + $0xab4] sm:$0xf]
    %v3301 = vld [vmem:[#allocation14 + $0xab8] sm:$0xff]
    %v3302 = vld [vmem:[#allocation14 + $0xac0] sm:$0xff]
    %v3303 = vld [vmem:[#allocation14 + $0xac8] sm:$0xff]
    %v3304 = vld [vmem:[#allocation14 + $0xad0] sm:$0xf]
    %v3305 = vld [vmem:[#allocation14 + $0xad4] sm:$0xff]
    %v3306 = vld [vmem:[#allocation14 + $0xadc] sm:$0xff]
    %v3307 = vld [vmem:[#allocation14 + $0xae4] sm:$0xff]
    %v3308 = vld [vmem:[#allocation14 + $0xaec] sm:$0xf]
    %v3309 = vld [vmem:[#allocation14 + $0xaf0] sm:$0xff]
    %v3310 = vld [vmem:[#allocation14 + $0xaf8] sm:$0xff]
    %v3311 = vld [vmem:[#allocation14 + $0xb00] sm:$0xff]
    %v3312 = vld [vmem:[#allocation14 + $0xb08] sm:$0xf]
    %v3313 = vld [vmem:[#allocation14 + $0xb0c] sm:$0xff]
    %v3314 = vld [vmem:[#allocation14 + $0xb14] sm:$0xff]
    %v3315 = vld [vmem:[#allocation14 + $0xb1c] sm:$0xff]
    %v3316 = vld [vmem:[#allocation14 + $0xb24] sm:$0xf]
    %v3317 = vld [vmem:[#allocation14 + $0xb28] sm:$0xff]
    %v3318 = vld [vmem:[#allocation14 + $0xb30] sm:$0xff]
    %v3319 = vld [vmem:[#allocation14 + $0xb38] sm:$0xff]
    %v3320 = vld [vmem:[#allocation14 + $0xb40] sm:$0xf]
    %v3321 = vld [vmem:[#allocation14 + $0xb44] sm:$0xff]
    %v3322 = vld [vmem:[#allocation14 + $0xb4c] sm:$0xff]
    %v3323 = vld [vmem:[#allocation14 + $0xb54] sm:$0xff]
    %v3324 = vld [vmem:[#allocation14 + $0xb5c] sm:$0xf]
    %v3325 = vld [vmem:[#allocation14 + $0xb60] sm:$0xff]
    %v3326 = vld [vmem:[#allocation14 + $0xb68] sm:$0xff]
    %v3327 = vld [vmem:[#allocation14 + $0xb70] sm:$0xff]
    %v3328 = vld [vmem:[#allocation14 + $0xb78] sm:$0xf]
    %v3329 = vld [vmem:[#allocation14 + $0xb7c] sm:$0xff]
    %v3330 = vld [vmem:[#allocation14 + $0xb84] sm:$0xff]
    %v3331 = vld [vmem:[#allocation14 + $0xb8c] sm:$0xff]
    %v3332 = vld [vmem:[#allocation14 + $0xb94] sm:$0xf]
    %v3333 = vld [vmem:[#allocation14 + $0xb98] sm:$0xff]
    %v3334 = vld [vmem:[#allocation14 + $0xba0] sm:$0xff]
    %v3335 = vld [vmem:[#allocation14 + $0xba8] sm:$0xff]
    %v3336 = vld [vmem:[#allocation14 + $0xbb0] sm:$0xf]
    %v3337 = vld [vmem:[#allocation14 + $0xbb4] sm:$0xff]
    %v3338 = vld [vmem:[#allocation14 + $0xbbc] sm:$0xff]
    %v3339 = vld [vmem:[#allocation14 + $0xbc4] sm:$0xff]
    %v3340 = vld [vmem:[#allocation14 + $0xbcc] sm:$0xf]
    %v3341 = vld [vmem:[#allocation14 + $0xbd0] sm:$0xff]
    %v3342 = vld [vmem:[#allocation14 + $0xbd8] sm:$0xff]
    %v3343 = vld [vmem:[#allocation14 + $0xbe0] sm:$0xff]
    %v3344 = vld [vmem:[#allocation14 + $0xbe8] sm:$0xf]
    %v3345 = vld [vmem:[#allocation14 + $0xbec] sm:$0xff]
    %v3346 = vld [vmem:[#allocation14 + $0xbf4] sm:$0xff]
    %v3347 = vld [vmem:[#allocation14 + $0xbfc] sm:$0xff]
    %v3348 = vld [vmem:[#allocation14 + $0xc04] sm:$0xf]
    %v3349 = vld [vmem:[#allocation14 + $0xc08] sm:$0xff]
    %v3350 = vld [vmem:[#allocation14 + $0xc10] sm:$0xff]
    %v3351 = vld [vmem:[#allocation14 + $0xc18] sm:$0xff]
    %v3352 = vld [vmem:[#allocation14 + $0xc20] sm:$0xf]
    %v3353 = vld [vmem:[#allocation14 + $0xc24] sm:$0xff]
    %v3354 = vld [vmem:[#allocation14 + $0xc2c] sm:$0xff]
    %v3355 = vld [vmem:[#allocation14 + $0xc34] sm:$0xff]
    %v3356 = vld [vmem:[#allocation14 + $0xc3c] sm:$0xf]
    %v3357 = vld [vmem:[#allocation14 + $0xc40] sm:$0xff]
    %v3358 = vld [vmem:[#allocation14 + $0xc48] sm:$0xff]
    %v3359 = vld [vmem:[#allocation14 + $0xc50] sm:$0xff]
    %v3360 = vld [vmem:[#allocation14 + $0xc58] sm:$0xf]
    %v3361 = vld [vmem:[#allocation14 + $0xc5c] sm:$0xff]
    %v3362 = vld [vmem:[#allocation14 + $0xc64] sm:$0xff]
    %v3363 = vld [vmem:[#allocation14 + $0xc6c] sm:$0xff]
    %v3364 = vld [vmem:[#allocation14 + $0xc74] sm:$0xf]
    %v3365 = vld [vmem:[#allocation14 + $0xc78] sm:$0xff]
    %v3366 = vld [vmem:[#allocation14 + $0xc80] sm:$0xff]
    %v3367 = vld [vmem:[#allocation14 + $0xc88] sm:$0xff]
    %v3368 = vld [vmem:[#allocation14 + $0xc90] sm:$0xf]
    %v3369 = vld [vmem:[#allocation14 + $0xc94] sm:$0xff]
    %v3370 = vld [vmem:[#allocation14 + $0xc9c] sm:$0xff]
    %v3371 = vld [vmem:[#allocation14 + $0xca4] sm:$0xff]
    %v3372 = vld [vmem:[#allocation14 + $0xcac] sm:$0xf]
    %v3373 = vld [vmem:[#allocation14 + $0xcb0] sm:$0xff]
    %v3374 = vld [vmem:[#allocation14 + $0xcb8] sm:$0xff]
    %v3375 = vld [vmem:[#allocation14 + $0xcc0] sm:$0xff]
    %v3376 = vld [vmem:[#allocation14 + $0xcc8] sm:$0xf]
    %v3377 = vld [vmem:[#allocation14 + $0xccc] sm:$0xff]
    %v3378 = vld [vmem:[#allocation14 + $0xcd4] sm:$0xff]
    %v3379 = vld [vmem:[#allocation14 + $0xcdc] sm:$0xff]
    %v3380 = vld [vmem:[#allocation14 + $0xce4] sm:$0xf]
    %v3381 = vld [vmem:[#allocation14 + $0xce8] sm:$0xff]
    %v3382 = vld [vmem:[#allocation14 + $0xcf0] sm:$0xff]
    %v3383 = vld [vmem:[#allocation14 + $0xcf8] sm:$0xff]
    %v3384 = vld [vmem:[#allocation14 + $0xd00] sm:$0xf]
    %v3385 = vld [vmem:[#allocation14 + $0xd04] sm:$0xff]
    %v3386 = vld [vmem:[#allocation14 + $0xd0c] sm:$0xff]
    %v3387 = vld [vmem:[#allocation14 + $0xd14] sm:$0xff]
    %v3388 = vld [vmem:[#allocation14 + $0xd1c] sm:$0xf]
    %v3389 = vld [vmem:[#allocation14 + $0xd20] sm:$0xff]
    %v3390 = vld [vmem:[#allocation14 + $0xd28] sm:$0xff]
    %v3391 = vld [vmem:[#allocation14 + $0xd30] sm:$0xff]
    %v3392 = vld [vmem:[#allocation14 + $0xd38] sm:$0xf]
    %v3393 = vld [vmem:[#allocation14 + $0xd3c] sm:$0xff]
    %v3394 = vld [vmem:[#allocation14 + $0xd44] sm:$0xff]
    %v3395 = vld [vmem:[#allocation14 + $0xd4c] sm:$0xff]
    %v3396 = vld [vmem:[#allocation14 + $0xd54] sm:$0xf]
    %v3397 = vld [vmem:[#allocation14 + $0xd58] sm:$0xff]
    %v3398 = vld [vmem:[#allocation14 + $0xd60] sm:$0xff]
    %v3399 = vld [vmem:[#allocation14 + $0xd68] sm:$0xff]
    %v3400 = vld [vmem:[#allocation14 + $0xd70] sm:$0xf]
    %v3401 = vld [vmem:[#allocation14 + $0xd74] sm:$0xff]
    %v3402 = vld [vmem:[#allocation14 + $0xd7c] sm:$0xff]
    %v3403 = vld [vmem:[#allocation14 + $0xd84] sm:$0xff]
    %v3404 = vld [vmem:[#allocation14 + $0xd8c] sm:$0xf]
    %v3405 = vld [vmem:[#allocation14 + $0xd90] sm:$0xff]
    %v3406 = vld [vmem:[#allocation14 + $0xd98] sm:$0xff]
    %v3407 = vld [vmem:[#allocation14 + $0xda0] sm:$0xff]
    %v3408 = vld [vmem:[#allocation14 + $0xda8] sm:$0xf]
    %v3409 = vld [vmem:[#allocation14 + $0xdac] sm:$0xff]
    %v3410 = vld [vmem:[#allocation14 + $0xdb4] sm:$0xff]
    %v3411 = vld [vmem:[#allocation14 + $0xdbc] sm:$0xff]
    %v3412 = vld [vmem:[#allocation14 + $0xdc4] sm:$0xf]
    %v3413 = vld [vmem:[#allocation14 + $0xdc8] sm:$0xff]
    %v3414 = vld [vmem:[#allocation14 + $0xdd0] sm:$0xff]
    %v3415 = vld [vmem:[#allocation14 + $0xdd8] sm:$0xff]
    %v3416 = vld [vmem:[#allocation14 + $0xde0] sm:$0xf]
    %v3417 = vld [vmem:[#allocation14 + $0xde4] sm:$0xff]
    %v3418 = vld [vmem:[#allocation14 + $0xdec] sm:$0xff]
    %v3419 = vld [vmem:[#allocation14 + $0xdf4] sm:$0xff]
    %v3420 = vld [vmem:[#allocation14 + $0xdfc] sm:$0xf]
    %v3421 = vld [vmem:[#allocation16] sm:$0xff]
    %v3423 = vperm.slane %v3421, 0
    %v3424 = vperm.slane %v3421, 1
    %v3425 = vperm.slane %v3421, 2
    %v3426 = vperm.slane %v3421, 3
    %v3427 = vperm.slane %v3421, 4
    %v3428 = vperm.slane %v3421, 5
    %v3429 = vperm.slane %v3421, 6
    %v3949 = vunpack.c.l.b16 %v2909
    %v3950 = vunpack.c.h.b16 %v2909
    %v3951 = vunpack.c.l.b16 %v2910
    %v3952 = vunpack.c.h.b16 %v2910
    %v3953 = vunpack.c.l.b16 %v2911
    %v3954 = vunpack.c.h.b16 %v2911
    %v3955 = vunpack.c.l.b16 %v2912
    %v3956 = vunpack.c.l.b16 %v2913
    %v3957 = vunpack.c.h.b16 %v2913
    %v3958 = vunpack.c.l.b16 %v2914
    %v3959 = vunpack.c.h.b16 %v2914
    %v3960 = vunpack.c.l.b16 %v2915
    %v3961 = vunpack.c.h.b16 %v2915
    %v3962 = vunpack.c.l.b16 %v2916
    %v3963 = vunpack.c.l.b16 %v2917
    %v3964 = vunpack.c.h.b16 %v2917
    %v3965 = vunpack.c.l.b16 %v2918
    %v3966 = vunpack.c.h.b16 %v2918
    %v3967 = vunpack.c.l.b16 %v2919
    %v3968 = vunpack.c.h.b16 %v2919
    %v3969 = vunpack.c.l.b16 %v2920
    %v3970 = vunpack.c.l.b16 %v2921
    %v3971 = vunpack.c.h.b16 %v2921
    %v3972 = vunpack.c.l.b16 %v2922
    %v3973 = vunpack.c.h.b16 %v2922
    %v3974 = vunpack.c.l.b16 %v2923
    %v3975 = vunpack.c.h.b16 %v2923
    %v3976 = vunpack.c.l.b16 %v2924
    %v3977 = vunpack.c.l.b16 %v2925
    %v3978 = vunpack.c.h.b16 %v2925
    %v3979 = vunpack.c.l.b16 %v2926
    %v3980 = vunpack.c.h.b16 %v2926
    %v3981 = vunpack.c.l.b16 %v2927
    %v3982 = vunpack.c.h.b16 %v2927
    %v3983 = vunpack.c.l.b16 %v2928
    %v3984 = vunpack.c.l.b16 %v2929
    %v3985 = vunpack.c.h.b16 %v2929
    %v3986 = vunpack.c.l.b16 %v2930
    %v3987 = vunpack.c.h.b16 %v2930
    %v3988 = vunpack.c.l.b16 %v2931
    %v3989 = vunpack.c.h.b16 %v2931
    %v3990 = vunpack.c.l.b16 %v2932
    %v3991 = vunpack.c.l.b16 %v2933
    %v3992 = vunpack.c.h.b16 %v2933
    %v3993 = vunpack.c.l.b16 %v2934
    %v3994 = vunpack.c.h.b16 %v2934
    %v3995 = vunpack.c.l.b16 %v2935
    %v3996 = vunpack.c.h.b16 %v2935
    %v3997 = vunpack.c.l.b16 %v2936
    %v3998 = vunpack.c.l.b16 %v2937
    %v3999 = vunpack.c.h.b16 %v2937
    %v4000 = vunpack.c.l.b16 %v2938
    %v4001 = vunpack.c.h.b16 %v2938
    %v4002 = vunpack.c.l.b16 %v2939
    %v4003 = vunpack.c.h.b16 %v2939
    %v4004 = vunpack.c.l.b16 %v2940
    %v4005 = vunpack.c.l.b16 %v2941
    %v4006 = vunpack.c.h.b16 %v2941
    %v4007 = vunpack.c.l.b16 %v2942
    %v4008 = vunpack.c.h.b16 %v2942
    %v4009 = vunpack.c.l.b16 %v2943
    %v4010 = vunpack.c.h.b16 %v2943
    %v4011 = vunpack.c.l.b16 %v2944
    %v4012 = vunpack.c.l.b16 %v2945
    %v4013 = vunpack.c.h.b16 %v2945
    %v4014 = vunpack.c.l.b16 %v2946
    %v4015 = vunpack.c.h.b16 %v2946
    %v4016 = vunpack.c.l.b16 %v2947
    %v4017 = vunpack.c.h.b16 %v2947
    %v4018 = vunpack.c.l.b16 %v2948
    %v4019 = vunpack.c.l.b16 %v2949
    %v4020 = vunpack.c.h.b16 %v2949
    %v4021 = vunpack.c.l.b16 %v2950
    %v4022 = vunpack.c.h.b16 %v2950
    %v4023 = vunpack.c.l.b16 %v2951
    %v4024 = vunpack.c.h.b16 %v2951
    %v4025 = vunpack.c.l.b16 %v2952
    %v4026 = vunpack.c.l.b16 %v2953
    %v4027 = vunpack.c.h.b16 %v2953
    %v4028 = vunpack.c.l.b16 %v2954
    %v4029 = vunpack.c.h.b16 %v2954
    %v4030 = vunpack.c.l.b16 %v2955
    %v4031 = vunpack.c.h.b16 %v2955
    %v4032 = vunpack.c.l.b16 %v2956
    %v4033 = vunpack.c.l.b16 %v2957
    %v4034 = vunpack.c.h.b16 %v2957
    %v4035 = vunpack.c.l.b16 %v2958
    %v4036 = vunpack.c.h.b16 %v2958
    %v4037 = vunpack.c.l.b16 %v2959
    %v4038 = vunpack.c.h.b16 %v2959
    %v4039 = vunpack.c.l.b16 %v2960
    %v4040 = vunpack.c.l.b16 %v2961
    %v4041 = vunpack.c.h.b16 %v2961
    %v4042 = vunpack.c.l.b16 %v2962
    %v4043 = vunpack.c.h.b16 %v2962
    %v4044 = vunpack.c.l.b16 %v2963
    %v4045 = vunpack.c.h.b16 %v2963
    %v4046 = vunpack.c.l.b16 %v2964
    %v4047 = vunpack.c.l.b16 %v2965
    %v4048 = vunpack.c.h.b16 %v2965
    %v4049 = vunpack.c.l.b16 %v2966
    %v4050 = vunpack.c.h.b16 %v2966
    %v4051 = vunpack.c.l.b16 %v2967
    %v4052 = vunpack.c.h.b16 %v2967
    %v4053 = vunpack.c.l.b16 %v2968
    %v4054 = vunpack.c.l.b16 %v2969
    %v4055 = vunpack.c.h.b16 %v2969
    %v4056 = vunpack.c.l.b16 %v2970
    %v4057 = vunpack.c.h.b16 %v2970
    %v4058 = vunpack.c.l.b16 %v2971
    %v4059 = vunpack.c.h.b16 %v2971
    %v4060 = vunpack.c.l.b16 %v2972
    %v4061 = vunpack.c.l.b16 %v2973
    %v4062 = vunpack.c.h.b16 %v2973
    %v4063 = vunpack.c.l.b16 %v2974
    %v4064 = vunpack.c.h.b16 %v2974
    %v4065 = vunpack.c.l.b16 %v2975
    %v4066 = vunpack.c.h.b16 %v2975
    %v4067 = vunpack.c.l.b16 %v2976
    %v4068 = vunpack.c.l.b16 %v2977
    %v4069 = vunpack.c.h.b16 %v2977
    %v4070 = vunpack.c.l.b16 %v2978
    %v4071 = vunpack.c.h.b16 %v2978
    %v4072 = vunpack.c.l.b16 %v2979
    %v4073 = vunpack.c.h.b16 %v2979
    %v4074 = vunpack.c.l.b16 %v2980
    %v4075 = vunpack.c.l.b16 %v2981
    %v4076 = vunpack.c.h.b16 %v2981
    %v4077 = vunpack.c.l.b16 %v2982
    %v4078 = vunpack.c.h.b16 %v2982
    %v4079 = vunpack.c.l.b16 %v2983
    %v4080 = vunpack.c.h.b16 %v2983
    %v4081 = vunpack.c.l.b16 %v2984
    %v4082 = vunpack.c.l.b16 %v2985
    %v4083 = vunpack.c.h.b16 %v2985
    %v4084 = vunpack.c.l.b16 %v2986
    %v4085 = vunpack.c.h.b16 %v2986
    %v4086 = vunpack.c.l.b16 %v2987
    %v4087 = vunpack.c.h.b16 %v2987
    %v4088 = vunpack.c.l.b16 %v2988
    %v4089 = vunpack.c.l.b16 %v2989
    %v4090 = vunpack.c.h.b16 %v2989
    %v4091 = vunpack.c.l.b16 %v2990
    %v4092 = vunpack.c.h.b16 %v2990
    %v4093 = vunpack.c.l.b16 %v2991
    %v4094 = vunpack.c.h.b16 %v2991
    %v4095 = vunpack.c.l.b16 %v2992
    %v4096 = vunpack.c.l.b16 %v2993
    %v4097 = vunpack.c.h.b16 %v2993
    %v4098 = vunpack.c.l.b16 %v2994
    %v4099 = vunpack.c.h.b16 %v2994
    %v4100 = vunpack.c.l.b16 %v2995
    %v4101 = vunpack.c.h.b16 %v2995
    %v4102 = vunpack.c.l.b16 %v2996
    %v4103 = vunpack.c.l.b16 %v2997
    %v4104 = vunpack.c.h.b16 %v2997
    %v4105 = vunpack.c.l.b16 %v2998
    %v4106 = vunpack.c.h.b16 %v2998
    %v4107 = vunpack.c.l.b16 %v2999
    %v4108 = vunpack.c.h.b16 %v2999
    %v4109 = vunpack.c.l.b16 %v3000
    %v4110 = vunpack.c.l.b16 %v3001
    %v4111 = vunpack.c.h.b16 %v3001
    %v4112 = vunpack.c.l.b16 %v3002
    %v4113 = vunpack.c.h.b16 %v3002
    %v4114 = vunpack.c.l.b16 %v3003
    %v4115 = vunpack.c.h.b16 %v3003
    %v4116 = vunpack.c.l.b16 %v3004
    %v4117 = vunpack.c.l.b16 %v3005
    %v4118 = vunpack.c.h.b16 %v3005
    %v4119 = vunpack.c.l.b16 %v3006
    %v4120 = vunpack.c.h.b16 %v3006
    %v4121 = vunpack.c.l.b16 %v3007
    %v4122 = vunpack.c.h.b16 %v3007
    %v4123 = vunpack.c.l.b16 %v3008
    %v4124 = vunpack.c.l.b16 %v3009
    %v4125 = vunpack.c.h.b16 %v3009
    %v4126 = vunpack.c.l.b16 %v3010
    %v4127 = vunpack.c.h.b16 %v3010
    %v4128 = vunpack.c.l.b16 %v3011
    %v4129 = vunpack.c.h.b16 %v3011
    %v4130 = vunpack.c.l.b16 %v3012
    %v4131 = vunpack.c.l.b16 %v3013
    %v4132 = vunpack.c.h.b16 %v3013
    %v4133 = vunpack.c.l.b16 %v3014
    %v4134 = vunpack.c.h.b16 %v3014
    %v4135 = vunpack.c.l.b16 %v3015
    %v4136 = vunpack.c.h.b16 %v3015
    %v4137 = vunpack.c.l.b16 %v3016
    %v4138 = vunpack.c.l.b16 %v3017
    %v4139 = vunpack.c.h.b16 %v3017
    %v4140 = vunpack.c.l.b16 %v3018
    %v4141 = vunpack.c.h.b16 %v3018
    %v4142 = vunpack.c.l.b16 %v3019
    %v4143 = vunpack.c.h.b16 %v3019
    %v4144 = vunpack.c.l.b16 %v3020
    %v4145 = vunpack.c.l.b16 %v3021
    %v4146 = vunpack.c.h.b16 %v3021
    %v4147 = vunpack.c.l.b16 %v3022
    %v4148 = vunpack.c.h.b16 %v3022
    %v4149 = vunpack.c.l.b16 %v3023
    %v4150 = vunpack.c.h.b16 %v3023
    %v4151 = vunpack.c.l.b16 %v3024
    %v4152 = vunpack.c.l.b16 %v3025
    %v4153 = vunpack.c.h.b16 %v3025
    %v4154 = vunpack.c.l.b16 %v3026
    %v4155 = vunpack.c.h.b16 %v3026
    %v4156 = vunpack.c.l.b16 %v3027
    %v4157 = vunpack.c.h.b16 %v3027
    %v4158 = vunpack.c.l.b16 %v3028
    %v4159 = vunpack.c.l.b16 %v3029
    %v4160 = vunpack.c.h.b16 %v3029
    %v4161 = vunpack.c.l.b16 %v3030
    %v4162 = vunpack.c.h.b16 %v3030
    %v4163 = vunpack.c.l.b16 %v3031
    %v4164 = vunpack.c.h.b16 %v3031
    %v4165 = vunpack.c.l.b16 %v3032
    %v4166 = vunpack.c.l.b16 %v3033
    %v4167 = vunpack.c.h.b16 %v3033
    %v4168 = vunpack.c.l.b16 %v3034
    %v4169 = vunpack.c.h.b16 %v3034
    %v4170 = vunpack.c.l.b16 %v3035
    %v4171 = vunpack.c.h.b16 %v3035
    %v4172 = vunpack.c.l.b16 %v3036
    %v4173 = vunpack.c.l.b16 %v3037
    %v4174 = vunpack.c.h.b16 %v3037
    %v4175 = vunpack.c.l.b16 %v3038
    %v4176 = vunpack.c.h.b16 %v3038
    %v4177 = vunpack.c.l.b16 %v3039
    %v4178 = vunpack.c.h.b16 %v3039
    %v4179 = vunpack.c.l.b16 %v3040
    %v4180 = vunpack.c.l.b16 %v3041
    %v4181 = vunpack.c.h.b16 %v3041
    %v4182 = vunpack.c.l.b16 %v3042
    %v4183 = vunpack.c.h.b16 %v3042
    %v4184 = vunpack.c.l.b16 %v3043
    %v4185 = vunpack.c.h.b16 %v3043
    %v4186 = vunpack.c.l.b16 %v3044
    %v4187 = vunpack.c.l.b16 %v3045
    %v4188 = vunpack.c.h.b16 %v3045
    %v4189 = vunpack.c.l.b16 %v3046
    %v4190 = vunpack.c.h.b16 %v3046
    %v4191 = vunpack.c.l.b16 %v3047
    %v4192 = vunpack.c.h.b16 %v3047
    %v4193 = vunpack.c.l.b16 %v3048
    %v4194 = vunpack.c.l.b16 %v3049
    %v4195 = vunpack.c.h.b16 %v3049
    %v4196 = vunpack.c.l.b16 %v3050
    %v4197 = vunpack.c.h.b16 %v3050
    %v4198 = vunpack.c.l.b16 %v3051
    %v4199 = vunpack.c.h.b16 %v3051
    %v4200 = vunpack.c.l.b16 %v3052
    %v4201 = vunpack.c.l.b16 %v3053
    %v4202 = vunpack.c.h.b16 %v3053
    %v4203 = vunpack.c.l.b16 %v3054
    %v4204 = vunpack.c.h.b16 %v3054
    %v4205 = vunpack.c.l.b16 %v3055
    %v4206 = vunpack.c.h.b16 %v3055
    %v4207 = vunpack.c.l.b16 %v3056
    %v4208 = vunpack.c.l.b16 %v3057
    %v4209 = vunpack.c.h.b16 %v3057
    %v4210 = vunpack.c.l.b16 %v3058
    %v4211 = vunpack.c.h.b16 %v3058
    %v4212 = vunpack.c.l.b16 %v3059
    %v4213 = vunpack.c.h.b16 %v3059
    %v4214 = vunpack.c.l.b16 %v3060
    %v4215 = vunpack.c.l.b16 %v3061
    %v4216 = vunpack.c.h.b16 %v3061
    %v4217 = vunpack.c.l.b16 %v3062
    %v4218 = vunpack.c.h.b16 %v3062
    %v4219 = vunpack.c.l.b16 %v3063
    %v4220 = vunpack.c.h.b16 %v3063
    %v4221 = vunpack.c.l.b16 %v3064
    %v4222 = vunpack.c.l.b16 %v3065
    %v4223 = vunpack.c.h.b16 %v3065
    %v4224 = vunpack.c.l.b16 %v3066
    %v4225 = vunpack.c.h.b16 %v3066
    %v4226 = vunpack.c.l.b16 %v3067
    %v4227 = vunpack.c.h.b16 %v3067
    %v4228 = vunpack.c.l.b16 %v3068
    %v4229 = vunpack.c.l.b16 %v3069
    %v4230 = vunpack.c.h.b16 %v3069
    %v4231 = vunpack.c.l.b16 %v3070
    %v4232 = vunpack.c.h.b16 %v3070
    %v4233 = vunpack.c.l.b16 %v3071
    %v4234 = vunpack.c.h.b16 %v3071
    %v4235 = vunpack.c.l.b16 %v3072
    %v4236 = vunpack.c.l.b16 %v3073
    %v4237 = vunpack.c.h.b16 %v3073
    %v4238 = vunpack.c.l.b16 %v3074
    %v4239 = vunpack.c.h.b16 %v3074
    %v4240 = vunpack.c.l.b16 %v3075
    %v4241 = vunpack.c.h.b16 %v3075
    %v4242 = vunpack.c.l.b16 %v3076
    %v4243 = vunpack.c.l.b16 %v3077
    %v4244 = vunpack.c.h.b16 %v3077
    %v4245 = vunpack.c.l.b16 %v3078
    %v4246 = vunpack.c.h.b16 %v3078
    %v4247 = vunpack.c.l.b16 %v3079
    %v4248 = vunpack.c.h.b16 %v3079
    %v4249 = vunpack.c.l.b16 %v3080
    %v4250 = vunpack.c.l.b16 %v3081
    %v4251 = vunpack.c.h.b16 %v3081
    %v4252 = vunpack.c.l.b16 %v3082
    %v4253 = vunpack.c.h.b16 %v3082
    %v4254 = vunpack.c.l.b16 %v3083
    %v4255 = vunpack.c.h.b16 %v3083
    %v4256 = vunpack.c.l.b16 %v3084
    %v4257 = vunpack.c.l.b16 %v3085
    %v4258 = vunpack.c.h.b16 %v3085
    %v4259 = vunpack.c.l.b16 %v3086
    %v4260 = vunpack.c.h.b16 %v3086
    %v4261 = vunpack.c.l.b16 %v3087
    %v4262 = vunpack.c.h.b16 %v3087
    %v4263 = vunpack.c.l.b16 %v3088
    %v4264 = vunpack.c.l.b16 %v3089
    %v4265 = vunpack.c.h.b16 %v3089
    %v4266 = vunpack.c.l.b16 %v3090
    %v4267 = vunpack.c.h.b16 %v3090
    %v4268 = vunpack.c.l.b16 %v3091
    %v4269 = vunpack.c.h.b16 %v3091
    %v4270 = vunpack.c.l.b16 %v3092
    %v4271 = vunpack.c.l.b16 %v3093
    %v4272 = vunpack.c.h.b16 %v3093
    %v4273 = vunpack.c.l.b16 %v3094
    %v4274 = vunpack.c.h.b16 %v3094
    %v4275 = vunpack.c.l.b16 %v3095
    %v4276 = vunpack.c.h.b16 %v3095
    %v4277 = vunpack.c.l.b16 %v3096
    %v4278 = vunpack.c.l.b16 %v3097
    %v4279 = vunpack.c.h.b16 %v3097
    %v4280 = vunpack.c.l.b16 %v3098
    %v4281 = vunpack.c.h.b16 %v3098
    %v4282 = vunpack.c.l.b16 %v3099
    %v4283 = vunpack.c.h.b16 %v3099
    %v4284 = vunpack.c.l.b16 %v3100
    %v4285 = vunpack.c.l.b16 %v3101
    %v4286 = vunpack.c.h.b16 %v3101
    %v4287 = vunpack.c.l.b16 %v3102
    %v4288 = vunpack.c.h.b16 %v3102
    %v4289 = vunpack.c.l.b16 %v3103
    %v4290 = vunpack.c.h.b16 %v3103
    %v4291 = vunpack.c.l.b16 %v3104
    %v4292 = vunpack.c.l.b16 %v3105
    %v4293 = vunpack.c.h.b16 %v3105
    %v4294 = vunpack.c.l.b16 %v3106
    %v4295 = vunpack.c.h.b16 %v3106
    %v4296 = vunpack.c.l.b16 %v3107
    %v4297 = vunpack.c.h.b16 %v3107
    %v4298 = vunpack.c.l.b16 %v3108
    %v4299 = vunpack.c.l.b16 %v3109
    %v4300 = vunpack.c.h.b16 %v3109
    %v4301 = vunpack.c.l.b16 %v3110
    %v4302 = vunpack.c.h.b16 %v3110
    %v4303 = vunpack.c.l.b16 %v3111
    %v4304 = vunpack.c.h.b16 %v3111
    %v4305 = vunpack.c.l.b16 %v3112
    %v4306 = vunpack.c.l.b16 %v3113
    %v4307 = vunpack.c.h.b16 %v3113
    %v4308 = vunpack.c.l.b16 %v3114
    %v4309 = vunpack.c.h.b16 %v3114
    %v4310 = vunpack.c.l.b16 %v3115
    %v4311 = vunpack.c.h.b16 %v3115
    %v4312 = vunpack.c.l.b16 %v3116
    %v4313 = vunpack.c.l.b16 %v3117
    %v4314 = vunpack.c.h.b16 %v3117
    %v4315 = vunpack.c.l.b16 %v3118
    %v4316 = vunpack.c.h.b16 %v3118
    %v4317 = vunpack.c.l.b16 %v3119
    %v4318 = vunpack.c.h.b16 %v3119
    %v4319 = vunpack.c.l.b16 %v3120
    %v4320 = vunpack.c.l.b16 %v3121
    %v4321 = vunpack.c.h.b16 %v3121
    %v4322 = vunpack.c.l.b16 %v3122
    %v4323 = vunpack.c.h.b16 %v3122
    %v4324 = vunpack.c.l.b16 %v3123
    %v4325 = vunpack.c.h.b16 %v3123
    %v4326 = vunpack.c.l.b16 %v3124
    %v4327 = vunpack.c.l.b16 %v3125
    %v4328 = vunpack.c.h.b16 %v3125
    %v4329 = vunpack.c.l.b16 %v3126
    %v4330 = vunpack.c.h.b16 %v3126
    %v4331 = vunpack.c.l.b16 %v3127
    %v4332 = vunpack.c.h.b16 %v3127
    %v4333 = vunpack.c.l.b16 %v3128
    %v4334 = vunpack.c.l.b16 %v3129
    %v4335 = vunpack.c.h.b16 %v3129
    %v4336 = vunpack.c.l.b16 %v3130
    %v4337 = vunpack.c.h.b16 %v3130
    %v4338 = vunpack.c.l.b16 %v3131
    %v4339 = vunpack.c.h.b16 %v3131
    %v4340 = vunpack.c.l.b16 %v3132
    %v4341 = vunpack.c.l.b16 %v3133
    %v4342 = vunpack.c.h.b16 %v3133
    %v4343 = vunpack.c.l.b16 %v3134
    %v4344 = vunpack.c.h.b16 %v3134
    %v4345 = vunpack.c.l.b16 %v3135
    %v4346 = vunpack.c.h.b16 %v3135
    %v4347 = vunpack.c.l.b16 %v3136
    %v4348 = vunpack.c.l.b16 %v3137
    %v4349 = vunpack.c.h.b16 %v3137
    %v4350 = vunpack.c.l.b16 %v3138
    %v4351 = vunpack.c.h.b16 %v3138
    %v4352 = vunpack.c.l.b16 %v3139
    %v4353 = vunpack.c.h.b16 %v3139
    %v4354 = vunpack.c.l.b16 %v3140
    %v4355 = vunpack.c.l.b16 %v3141
    %v4356 = vunpack.c.h.b16 %v3141
    %v4357 = vunpack.c.l.b16 %v3142
    %v4358 = vunpack.c.h.b16 %v3142
    %v4359 = vunpack.c.l.b16 %v3143
    %v4360 = vunpack.c.h.b16 %v3143
    %v4361 = vunpack.c.l.b16 %v3144
    %v4362 = vunpack.c.l.b16 %v3145
    %v4363 = vunpack.c.h.b16 %v3145
    %v4364 = vunpack.c.l.b16 %v3146
    %v4365 = vunpack.c.h.b16 %v3146
    %v4366 = vunpack.c.l.b16 %v3147
    %v4367 = vunpack.c.h.b16 %v3147
    %v4368 = vunpack.c.l.b16 %v3148
    %v4369 = vunpack.c.l.b16 %v3149
    %v4370 = vunpack.c.h.b16 %v3149
    %v4371 = vunpack.c.l.b16 %v3150
    %v4372 = vunpack.c.h.b16 %v3150
    %v4373 = vunpack.c.l.b16 %v3151
    %v4374 = vunpack.c.h.b16 %v3151
    %v4375 = vunpack.c.l.b16 %v3152
    %v4376 = vunpack.c.l.b16 %v3153
    %v4377 = vunpack.c.h.b16 %v3153
    %v4378 = vunpack.c.l.b16 %v3154
    %v4379 = vunpack.c.h.b16 %v3154
    %v4380 = vunpack.c.l.b16 %v3155
    %v4381 = vunpack.c.h.b16 %v3155
    %v4382 = vunpack.c.l.b16 %v3156
    %v4383 = vunpack.c.l.b16 %v3157
    %v4384 = vunpack.c.h.b16 %v3157
    %v4385 = vunpack.c.l.b16 %v3158
    %v4386 = vunpack.c.h.b16 %v3158
    %v4387 = vunpack.c.l.b16 %v3159
    %v4388 = vunpack.c.h.b16 %v3159
    %v4389 = vunpack.c.l.b16 %v3160
    %v4390 = vunpack.c.l.b16 %v3161
    %v4391 = vunpack.c.h.b16 %v3161
    %v4392 = vunpack.c.l.b16 %v3162
    %v4393 = vunpack.c.h.b16 %v3162
    %v4394 = vunpack.c.l.b16 %v3163
    %v4395 = vunpack.c.h.b16 %v3163
    %v4396 = vunpack.c.l.b16 %v3164
    %v4397 = vunpack.c.l.b16 %v3165
    %v4398 = vunpack.c.h.b16 %v3165
    %v4399 = vunpack.c.l.b16 %v3166
    %v4400 = vunpack.c.h.b16 %v3166
    %v4401 = vunpack.c.l.b16 %v3167
    %v4402 = vunpack.c.h.b16 %v3167
    %v4403 = vunpack.c.l.b16 %v3168
    %v4404 = vunpack.c.l.b16 %v3169
    %v4405 = vunpack.c.h.b16 %v3169
    %v4406 = vunpack.c.l.b16 %v3170
    %v4407 = vunpack.c.h.b16 %v3170
    %v4408 = vunpack.c.l.b16 %v3171
    %v4409 = vunpack.c.h.b16 %v3171
    %v4410 = vunpack.c.l.b16 %v3172
    %v4411 = vunpack.c.l.b16 %v3173
    %v4412 = vunpack.c.h.b16 %v3173
    %v4413 = vunpack.c.l.b16 %v3174
    %v4414 = vunpack.c.h.b16 %v3174
    %v4415 = vunpack.c.l.b16 %v3175
    %v4416 = vunpack.c.h.b16 %v3175
    %v4417 = vunpack.c.l.b16 %v3176
    %v4418 = vunpack.c.l.b16 %v3177
    %v4419 = vunpack.c.h.b16 %v3177
    %v4420 = vunpack.c.l.b16 %v3178
    %v4421 = vunpack.c.h.b16 %v3178
    %v4422 = vunpack.c.l.b16 %v3179
    %v4423 = vunpack.c.h.b16 %v3179
    %v4424 = vunpack.c.l.b16 %v3180
    %v4425 = vunpack.c.l.b16 %v3181
    %v4426 = vunpack.c.h.b16 %v3181
    %v4427 = vunpack.c.l.b16 %v3182
    %v4428 = vunpack.c.h.b16 %v3182
    %v4429 = vunpack.c.l.b16 %v3183
    %v4430 = vunpack.c.h.b16 %v3183
    %v4431 = vunpack.c.l.b16 %v3184
    %v4432 = vunpack.c.l.b16 %v3185
    %v4433 = vunpack.c.h.b16 %v3185
    %v4434 = vunpack.c.l.b16 %v3186
    %v4435 = vunpack.c.h.b16 %v3186
    %v4436 = vunpack.c.l.b16 %v3187
    %v4437 = vunpack.c.h.b16 %v3187
    %v4438 = vunpack.c.l.b16 %v3188
    %v4439 = vunpack.c.l.b16 %v3189
    %v4440 = vunpack.c.h.b16 %v3189
    %v4441 = vunpack.c.l.b16 %v3190
    %v4442 = vunpack.c.h.b16 %v3190
    %v4443 = vunpack.c.l.b16 %v3191
    %v4444 = vunpack.c.h.b16 %v3191
    %v4445 = vunpack.c.l.b16 %v3192
    %v4446 = vunpack.c.l.b16 %v3193
    %v4447 = vunpack.c.h.b16 %v3193
    %v4448 = vunpack.c.l.b16 %v3194
    %v4449 = vunpack.c.h.b16 %v3194
    %v4450 = vunpack.c.l.b16 %v3195
    %v4451 = vunpack.c.h.b16 %v3195
    %v4452 = vunpack.c.l.b16 %v3196
    %v4453 = vunpack.c.l.b16 %v3197
    %v4454 = vunpack.c.h.b16 %v3197
    %v4455 = vunpack.c.l.b16 %v3198
    %v4456 = vunpack.c.h.b16 %v3198
    %v4457 = vunpack.c.l.b16 %v3199
    %v4458 = vunpack.c.h.b16 %v3199
    %v4459 = vunpack.c.l.b16 %v3200
    %v4460 = vunpack.c.l.b16 %v3201
    %v4461 = vunpack.c.h.b16 %v3201
    %v4462 = vunpack.c.l.b16 %v3202
    %v4463 = vunpack.c.h.b16 %v3202
    %v4464 = vunpack.c.l.b16 %v3203
    %v4465 = vunpack.c.h.b16 %v3203
    %v4466 = vunpack.c.l.b16 %v3204
    %v4467 = vunpack.c.l.b16 %v3205
    %v4468 = vunpack.c.h.b16 %v3205
    %v4469 = vunpack.c.l.b16 %v3206
    %v4470 = vunpack.c.h.b16 %v3206
    %v4471 = vunpack.c.l.b16 %v3207
    %v4472 = vunpack.c.h.b16 %v3207
    %v4473 = vunpack.c.l.b16 %v3208
    %v4474 = vunpack.c.l.b16 %v3209
    %v4475 = vunpack.c.h.b16 %v3209
    %v4476 = vunpack.c.l.b16 %v3210
    %v4477 = vunpack.c.h.b16 %v3210
    %v4478 = vunpack.c.l.b16 %v3211
    %v4479 = vunpack.c.h.b16 %v3211
    %v4480 = vunpack.c.l.b16 %v3212
    %v4481 = vunpack.c.l.b16 %v3213
    %v4482 = vunpack.c.h.b16 %v3213
    %v4483 = vunpack.c.l.b16 %v3214
    %v4484 = vunpack.c.h.b16 %v3214
    %v4485 = vunpack.c.l.b16 %v3215
    %v4486 = vunpack.c.h.b16 %v3215
    %v4487 = vunpack.c.l.b16 %v3216
    %v4488 = vunpack.c.l.b16 %v3217
    %v4489 = vunpack.c.h.b16 %v3217
    %v4490 = vunpack.c.l.b16 %v3218
    %v4491 = vunpack.c.h.b16 %v3218
    %v4492 = vunpack.c.l.b16 %v3219
    %v4493 = vunpack.c.h.b16 %v3219
    %v4494 = vunpack.c.l.b16 %v3220
    %v4495 = vunpack.c.l.b16 %v3221
    %v4496 = vunpack.c.h.b16 %v3221
    %v4497 = vunpack.c.l.b16 %v3222
    %v4498 = vunpack.c.h.b16 %v3222
    %v4499 = vunpack.c.l.b16 %v3223
    %v4500 = vunpack.c.h.b16 %v3223
    %v4501 = vunpack.c.l.b16 %v3224
    %v4502 = vunpack.c.l.b16 %v3225
    %v4503 = vunpack.c.h.b16 %v3225
    %v4504 = vunpack.c.l.b16 %v3226
    %v4505 = vunpack.c.h.b16 %v3226
    %v4506 = vunpack.c.l.b16 %v3227
    %v4507 = vunpack.c.h.b16 %v3227
    %v4508 = vunpack.c.l.b16 %v3228
    %v4509 = vunpack.c.l.b16 %v3229
    %v4510 = vunpack.c.h.b16 %v3229
    %v4511 = vunpack.c.l.b16 %v3230
    %v4512 = vunpack.c.h.b16 %v3230
    %v4513 = vunpack.c.l.b16 %v3231
    %v4514 = vunpack.c.h.b16 %v3231
    %v4515 = vunpack.c.l.b16 %v3232
    %v4516 = vunpack.c.l.b16 %v3233
    %v4517 = vunpack.c.h.b16 %v3233
    %v4518 = vunpack.c.l.b16 %v3234
    %v4519 = vunpack.c.h.b16 %v3234
    %v4520 = vunpack.c.l.b16 %v3235
    %v4521 = vunpack.c.h.b16 %v3235
    %v4522 = vunpack.c.l.b16 %v3236
    %v4523 = vunpack.c.l.b16 %v3237
    %v4524 = vunpack.c.h.b16 %v3237
    %v4525 = vunpack.c.l.b16 %v3238
    %v4526 = vunpack.c.h.b16 %v3238
    %v4527 = vunpack.c.l.b16 %v3239
    %v4528 = vunpack.c.h.b16 %v3239
    %v4529 = vunpack.c.l.b16 %v3240
    %v4530 = vunpack.c.l.b16 %v3241
    %v4531 = vunpack.c.h.b16 %v3241
    %v4532 = vunpack.c.l.b16 %v3242
    %v4533 = vunpack.c.h.b16 %v3242
    %v4534 = vunpack.c.l.b16 %v3243
    %v4535 = vunpack.c.h.b16 %v3243
    %v4536 = vunpack.c.l.b16 %v3244
    %v4537 = vunpack.c.l.b16 %v3245
    %v4538 = vunpack.c.h.b16 %v3245
    %v4539 = vunpack.c.l.b16 %v3246
    %v4540 = vunpack.c.h.b16 %v3246
    %v4541 = vunpack.c.l.b16 %v3247
    %v4542 = vunpack.c.h.b16 %v3247
    %v4543 = vunpack.c.l.b16 %v3248
    %v4544 = vunpack.c.l.b16 %v3249
    %v4545 = vunpack.c.h.b16 %v3249
    %v4546 = vunpack.c.l.b16 %v3250
    %v4547 = vunpack.c.h.b16 %v3250
    %v4548 = vunpack.c.l.b16 %v3251
    %v4549 = vunpack.c.h.b16 %v3251
    %v4550 = vunpack.c.l.b16 %v3252
    %v4551 = vunpack.c.l.b16 %v3253
    %v4552 = vunpack.c.h.b16 %v3253
    %v4553 = vunpack.c.l.b16 %v3254
    %v4554 = vunpack.c.h.b16 %v3254
    %v4555 = vunpack.c.l.b16 %v3255
    %v4556 = vunpack.c.h.b16 %v3255
    %v4557 = vunpack.c.l.b16 %v3256
    %v4558 = vunpack.c.l.b16 %v3257
    %v4559 = vunpack.c.h.b16 %v3257
    %v4560 = vunpack.c.l.b16 %v3258
    %v4561 = vunpack.c.h.b16 %v3258
    %v4562 = vunpack.c.l.b16 %v3259
    %v4563 = vunpack.c.h.b16 %v3259
    %v4564 = vunpack.c.l.b16 %v3260
    %v4565 = vunpack.c.l.b16 %v3261
    %v4566 = vunpack.c.h.b16 %v3261
    %v4567 = vunpack.c.l.b16 %v3262
    %v4568 = vunpack.c.h.b16 %v3262
    %v4569 = vunpack.c.l.b16 %v3263
    %v4570 = vunpack.c.h.b16 %v3263
    %v4571 = vunpack.c.l.b16 %v3264
    %v4572 = vunpack.c.l.b16 %v3265
    %v4573 = vunpack.c.h.b16 %v3265
    %v4574 = vunpack.c.l.b16 %v3266
    %v4575 = vunpack.c.h.b16 %v3266
    %v4576 = vunpack.c.l.b16 %v3267
    %v4577 = vunpack.c.h.b16 %v3267
    %v4578 = vunpack.c.l.b16 %v3268
    %v4579 = vunpack.c.l.b16 %v3269
    %v4580 = vunpack.c.h.b16 %v3269
    %v4581 = vunpack.c.l.b16 %v3270
    %v4582 = vunpack.c.h.b16 %v3270
    %v4583 = vunpack.c.l.b16 %v3271
    %v4584 = vunpack.c.h.b16 %v3271
    %v4585 = vunpack.c.l.b16 %v3272
    %v4586 = vunpack.c.l.b16 %v3273
    %v4587 = vunpack.c.h.b16 %v3273
    %v4588 = vunpack.c.l.b16 %v3274
    %v4589 = vunpack.c.h.b16 %v3274
    %v4590 = vunpack.c.l.b16 %v3275
    %v4591 = vunpack.c.h.b16 %v3275
    %v4592 = vunpack.c.l.b16 %v3276
    %v4593 = vunpack.c.l.b16 %v3277
    %v4594 = vunpack.c.h.b16 %v3277
    %v4595 = vunpack.c.l.b16 %v3278
    %v4596 = vunpack.c.h.b16 %v3278
    %v4597 = vunpack.c.l.b16 %v3279
    %v4598 = vunpack.c.h.b16 %v3279
    %v4599 = vunpack.c.l.b16 %v3280
    %v4600 = vunpack.c.l.b16 %v3281
    %v4601 = vunpack.c.h.b16 %v3281
    %v4602 = vunpack.c.l.b16 %v3282
    %v4603 = vunpack.c.h.b16 %v3282
    %v4604 = vunpack.c.l.b16 %v3283
    %v4605 = vunpack.c.h.b16 %v3283
    %v4606 = vunpack.c.l.b16 %v3284
    %v4607 = vunpack.c.l.b16 %v3285
    %v4608 = vunpack.c.h.b16 %v3285
    %v4609 = vunpack.c.l.b16 %v3286
    %v4610 = vunpack.c.h.b16 %v3286
    %v4611 = vunpack.c.l.b16 %v3287
    %v4612 = vunpack.c.h.b16 %v3287
    %v4613 = vunpack.c.l.b16 %v3288
    %v4614 = vunpack.c.l.b16 %v3289
    %v4615 = vunpack.c.h.b16 %v3289
    %v4616 = vunpack.c.l.b16 %v3290
    %v4617 = vunpack.c.h.b16 %v3290
    %v4618 = vunpack.c.l.b16 %v3291
    %v4619 = vunpack.c.h.b16 %v3291
    %v4620 = vunpack.c.l.b16 %v3292
    %v4621 = vunpack.c.l.b16 %v3293
    %v4622 = vunpack.c.h.b16 %v3293
    %v4623 = vunpack.c.l.b16 %v3294
    %v4624 = vunpack.c.h.b16 %v3294
    %v4625 = vunpack.c.l.b16 %v3295
    %v4626 = vunpack.c.h.b16 %v3295
    %v4627 = vunpack.c.l.b16 %v3296
    %v4628 = vunpack.c.l.b16 %v3297
    %v4629 = vunpack.c.h.b16 %v3297
    %v4630 = vunpack.c.l.b16 %v3298
    %v4631 = vunpack.c.h.b16 %v3298
    %v4632 = vunpack.c.l.b16 %v3299
    %v4633 = vunpack.c.h.b16 %v3299
    %v4634 = vunpack.c.l.b16 %v3300
    %v4635 = vunpack.c.l.b16 %v3301
    %v4636 = vunpack.c.h.b16 %v3301
    %v4637 = vunpack.c.l.b16 %v3302
    %v4638 = vunpack.c.h.b16 %v3302
    %v4639 = vunpack.c.l.b16 %v3303
    %v4640 = vunpack.c.h.b16 %v3303
    %v4641 = vunpack.c.l.b16 %v3304
    %v4642 = vunpack.c.l.b16 %v3305
    %v4643 = vunpack.c.h.b16 %v3305
    %v4644 = vunpack.c.l.b16 %v3306
    %v4645 = vunpack.c.h.b16 %v3306
    %v4646 = vunpack.c.l.b16 %v3307
    %v4647 = vunpack.c.h.b16 %v3307
    %v4648 = vunpack.c.l.b16 %v3308
    %v4649 = vunpack.c.l.b16 %v3309
    %v4650 = vunpack.c.h.b16 %v3309
    %v4651 = vunpack.c.l.b16 %v3310
    %v4652 = vunpack.c.h.b16 %v3310
    %v4653 = vunpack.c.l.b16 %v3311
    %v4654 = vunpack.c.h.b16 %v3311
    %v4655 = vunpack.c.l.b16 %v3312
    %v4656 = vunpack.c.l.b16 %v3313
    %v4657 = vunpack.c.h.b16 %v3313
    %v4658 = vunpack.c.l.b16 %v3314
    %v4659 = vunpack.c.h.b16 %v3314
    %v4660 = vunpack.c.l.b16 %v3315
    %v4661 = vunpack.c.h.b16 %v3315
    %v4662 = vunpack.c.l.b16 %v3316
    %v4663 = vunpack.c.l.b16 %v3317
    %v4664 = vunpack.c.h.b16 %v3317
    %v4665 = vunpack.c.l.b16 %v3318
    %v4666 = vunpack.c.h.b16 %v3318
    %v4667 = vunpack.c.l.b16 %v3319
    %v4668 = vunpack.c.h.b16 %v3319
    %v4669 = vunpack.c.l.b16 %v3320
    %v4670 = vunpack.c.l.b16 %v3321
    %v4671 = vunpack.c.h.b16 %v3321
    %v4672 = vunpack.c.l.b16 %v3322
    %v4673 = vunpack.c.h.b16 %v3322
    %v4674 = vunpack.c.l.b16 %v3323
    %v4675 = vunpack.c.h.b16 %v3323
    %v4676 = vunpack.c.l.b16 %v3324
    %v4677 = vunpack.c.l.b16 %v3325
    %v4678 = vunpack.c.h.b16 %v3325
    %v4679 = vunpack.c.l.b16 %v3326
    %v4680 = vunpack.c.h.b16 %v3326
    %v4681 = vunpack.c.l.b16 %v3327
    %v4682 = vunpack.c.h.b16 %v3327
    %v4683 = vunpack.c.l.b16 %v3328
    %v4684 = vunpack.c.l.b16 %v3329
    %v4685 = vunpack.c.h.b16 %v3329
    %v4686 = vunpack.c.l.b16 %v3330
    %v4687 = vunpack.c.h.b16 %v3330
    %v4688 = vunpack.c.l.b16 %v3331
    %v4689 = vunpack.c.h.b16 %v3331
    %v4690 = vunpack.c.l.b16 %v3332
    %v4691 = vunpack.c.l.b16 %v3333
    %v4692 = vunpack.c.h.b16 %v3333
    %v4693 = vunpack.c.l.b16 %v3334
    %v4694 = vunpack.c.h.b16 %v3334
    %v4695 = vunpack.c.l.b16 %v3335
    %v4696 = vunpack.c.h.b16 %v3335
    %v4697 = vunpack.c.l.b16 %v3336
    %v4698 = vunpack.c.l.b16 %v3337
    %v4699 = vunpack.c.h.b16 %v3337
    %v4700 = vunpack.c.l.b16 %v3338
    %v4701 = vunpack.c.h.b16 %v3338
    %v4702 = vunpack.c.l.b16 %v3339
    %v4703 = vunpack.c.h.b16 %v3339
    %v4704 = vunpack.c.l.b16 %v3340
    %v4705 = vunpack.c.l.b16 %v3341
    %v4706 = vunpack.c.h.b16 %v3341
    %v4707 = vunpack.c.l.b16 %v3342
    %v4708 = vunpack.c.h.b16 %v3342
    %v4709 = vunpack.c.l.b16 %v3343
    %v4710 = vunpack.c.h.b16 %v3343
    %v4711 = vunpack.c.l.b16 %v3344
    %v4712 = vunpack.c.l.b16 %v3345
    %v4713 = vunpack.c.h.b16 %v3345
    %v4714 = vunpack.c.l.b16 %v3346
    %v4715 = vunpack.c.h.b16 %v3346
    %v4716 = vunpack.c.l.b16 %v3347
    %v4717 = vunpack.c.h.b16 %v3347
    %v4718 = vunpack.c.l.b16 %v3348
    %v4719 = vunpack.c.l.b16 %v3349
    %v4720 = vunpack.c.h.b16 %v3349
    %v4721 = vunpack.c.l.b16 %v3350
    %v4722 = vunpack.c.h.b16 %v3350
    %v4723 = vunpack.c.l.b16 %v3351
    %v4724 = vunpack.c.h.b16 %v3351
    %v4725 = vunpack.c.l.b16 %v3352
    %v4726 = vunpack.c.l.b16 %v3353
    %v4727 = vunpack.c.h.b16 %v3353
    %v4728 = vunpack.c.l.b16 %v3354
    %v4729 = vunpack.c.h.b16 %v3354
    %v4730 = vunpack.c.l.b16 %v3355
    %v4731 = vunpack.c.h.b16 %v3355
    %v4732 = vunpack.c.l.b16 %v3356
    %v4733 = vunpack.c.l.b16 %v3357
    %v4734 = vunpack.c.h.b16 %v3357
    %v4735 = vunpack.c.l.b16 %v3358
    %v4736 = vunpack.c.h.b16 %v3358
    %v4737 = vunpack.c.l.b16 %v3359
    %v4738 = vunpack.c.h.b16 %v3359
    %v4739 = vunpack.c.l.b16 %v3360
    %v4740 = vunpack.c.l.b16 %v3361
    %v4741 = vunpack.c.h.b16 %v3361
    %v4742 = vunpack.c.l.b16 %v3362
    %v4743 = vunpack.c.h.b16 %v3362
    %v4744 = vunpack.c.l.b16 %v3363
    %v4745 = vunpack.c.h.b16 %v3363
    %v4746 = vunpack.c.l.b16 %v3364
    %v4747 = vunpack.c.l.b16 %v3365
    %v4748 = vunpack.c.h.b16 %v3365
    %v4749 = vunpack.c.l.b16 %v3366
    %v4750 = vunpack.c.h.b16 %v3366
    %v4751 = vunpack.c.l.b16 %v3367
    %v4752 = vunpack.c.h.b16 %v3367
    %v4753 = vunpack.c.l.b16 %v3368
    %v4754 = vunpack.c.l.b16 %v3369
    %v4755 = vunpack.c.h.b16 %v3369
    %v4756 = vunpack.c.l.b16 %v3370
    %v4757 = vunpack.c.h.b16 %v3370
    %v4758 = vunpack.c.l.b16 %v3371
    %v4759 = vunpack.c.h.b16 %v3371
    %v4760 = vunpack.c.l.b16 %v3372
    %v4761 = vunpack.c.l.b16 %v3373
    %v4762 = vunpack.c.h.b16 %v3373
    %v4763 = vunpack.c.l.b16 %v3374
    %v4764 = vunpack.c.h.b16 %v3374
    %v4765 = vunpack.c.l.b16 %v3375
    %v4766 = vunpack.c.h.b16 %v3375
    %v4767 = vunpack.c.l.b16 %v3376
    %v4768 = vunpack.c.l.b16 %v3377
    %v4769 = vunpack.c.h.b16 %v3377
    %v4770 = vunpack.c.l.b16 %v3378
    %v4771 = vunpack.c.h.b16 %v3378
    %v4772 = vunpack.c.l.b16 %v3379
    %v4773 = vunpack.c.h.b16 %v3379
    %v4774 = vunpack.c.l.b16 %v3380
    %v4775 = vunpack.c.l.b16 %v3381
    %v4776 = vunpack.c.h.b16 %v3381
    %v4777 = vunpack.c.l.b16 %v3382
    %v4778 = vunpack.c.h.b16 %v3382
    %v4779 = vunpack.c.l.b16 %v3383
    %v4780 = vunpack.c.h.b16 %v3383
    %v4781 = vunpack.c.l.b16 %v3384
    %v4782 = vunpack.c.l.b16 %v3385
    %v4783 = vunpack.c.h.b16 %v3385
    %v4784 = vunpack.c.l.b16 %v3386
    %v4785 = vunpack.c.h.b16 %v3386
    %v4786 = vunpack.c.l.b16 %v3387
    %v4787 = vunpack.c.h.b16 %v3387
    %v4788 = vunpack.c.l.b16 %v3388
    %v4789 = vunpack.c.l.b16 %v3389
    %v4790 = vunpack.c.h.b16 %v3389
    %v4791 = vunpack.c.l.b16 %v3390
    %v4792 = vunpack.c.h.b16 %v3390
    %v4793 = vunpack.c.l.b16 %v3391
    %v4794 = vunpack.c.h.b16 %v3391
    %v4795 = vunpack.c.l.b16 %v3392
    %v4796 = vunpack.c.l.b16 %v3393
    %v4797 = vunpack.c.h.b16 %v3393
    %v4798 = vunpack.c.l.b16 %v3394
    %v4799 = vunpack.c.h.b16 %v3394
    %v4800 = vunpack.c.l.b16 %v3395
    %v4801 = vunpack.c.h.b16 %v3395
    %v4802 = vunpack.c.l.b16 %v3396
    %v4803 = vunpack.c.l.b16 %v3397
    %v4804 = vunpack.c.h.b16 %v3397
    %v4805 = vunpack.c.l.b16 %v3398
    %v4806 = vunpack.c.h.b16 %v3398
    %v4807 = vunpack.c.l.b16 %v3399
    %v4808 = vunpack.c.h.b16 %v3399
    %v4809 = vunpack.c.l.b16 %v3400
    %v4810 = vunpack.c.l.b16 %v3401
    %v4811 = vunpack.c.h.b16 %v3401
    %v4812 = vunpack.c.l.b16 %v3402
    %v4813 = vunpack.c.h.b16 %v3402
    %v4814 = vunpack.c.l.b16 %v3403
    %v4815 = vunpack.c.h.b16 %v3403
    %v4816 = vunpack.c.l.b16 %v3404
    %v4817 = vunpack.c.l.b16 %v3405
    %v4818 = vunpack.c.h.b16 %v3405
    %v4819 = vunpack.c.l.b16 %v3406
    %v4820 = vunpack.c.h.b16 %v3406
    %v4821 = vunpack.c.l.b16 %v3407
    %v4822 = vunpack.c.h.b16 %v3407
    %v4823 = vunpack.c.l.b16 %v3408
    %v4824 = vunpack.c.l.b16 %v3409
    %v4825 = vunpack.c.h.b16 %v3409
    %v4826 = vunpack.c.l.b16 %v3410
    %v4827 = vunpack.c.h.b16 %v3410
    %v4828 = vunpack.c.l.b16 %v3411
    %v4829 = vunpack.c.h.b16 %v3411
    %v4830 = vunpack.c.l.b16 %v3412
    %v4831 = vunpack.c.l.b16 %v3413
    %v4832 = vunpack.c.h.b16 %v3413
    %v4833 = vunpack.c.l.b16 %v3414
    %v4834 = vunpack.c.h.b16 %v3414
    %v4835 = vunpack.c.l.b16 %v3415
    %v4836 = vunpack.c.h.b16 %v3415
    %v4837 = vunpack.c.l.b16 %v3416
    %v4838 = vunpack.c.l.b16 %v3417
    %v4839 = vunpack.c.h.b16 %v3417
    %v4840 = vunpack.c.l.b16 %v3418
    %v4841 = vunpack.c.h.b16 %v3418
    %v4842 = vunpack.c.l.b16 %v3419
    %v4843 = vunpack.c.h.b16 %v3419
    %v4844 = vunpack.c.l.b16 %v3420
    %v4845 = vpack.c.b16 %v3956, %v3949
    %v4846 = vpack.c.b16 %v3957, %v3950
    %v4847 = vpack.c.b16 %v3958, %v3951
    %v4848 = vpack.c.b16 %v3959, %v3952
    %v4849 = vpack.c.b16 %v3960, %v3953
    %v4850 = vpack.c.b16 %v3961, %v3954
    %v4851 = vpack.c.b16 %v3962, %v3955
    %v4852 = vpack.c.b16 %v3970, %v3963
    %v4853 = vpack.c.b16 %v3971, %v3964
    %v4854 = vpack.c.b16 %v3972, %v3965
    %v4855 = vpack.c.b16 %v3973, %v3966
    %v4856 = vpack.c.b16 %v3974, %v3967
    %v4857 = vpack.c.b16 %v3975, %v3968
    %v4858 = vpack.c.b16 %v3976, %v3969
    %v4859 = vpack.c.b16 %v3984, %v3977
    %v4860 = vpack.c.b16 %v3985, %v3978
    %v4861 = vpack.c.b16 %v3986, %v3979
    %v4862 = vpack.c.b16 %v3987, %v3980
    %v4863 = vpack.c.b16 %v3988, %v3981
    %v4864 = vpack.c.b16 %v3989, %v3982
    %v4865 = vpack.c.b16 %v3990, %v3983
    %v4866 = vpack.c.b16 %v3998, %v3991
    %v4867 = vpack.c.b16 %v3999, %v3992
    %v4868 = vpack.c.b16 %v4000, %v3993
    %v4869 = vpack.c.b16 %v4001, %v3994
    %v4870 = vpack.c.b16 %v4002, %v3995
    %v4871 = vpack.c.b16 %v4003, %v3996
    %v4872 = vpack.c.b16 %v4004, %v3997
    %v4873 = vpack.c.b16 %v4012, %v4005
    %v4874 = vpack.c.b16 %v4013, %v4006
    %v4875 = vpack.c.b16 %v4014, %v4007
    %v4876 = vpack.c.b16 %v4015, %v4008
    %v4877 = vpack.c.b16 %v4016, %v4009
    %v4878 = vpack.c.b16 %v4017, %v4010
    %v4879 = vpack.c.b16 %v4018, %v4011
    %v4880 = vpack.c.b16 %v4026, %v4019
    %v4881 = vpack.c.b16 %v4027, %v4020
    %v4882 = vpack.c.b16 %v4028, %v4021
    %v4883 = vpack.c.b16 %v4029, %v4022
    %v4884 = vpack.c.b16 %v4030, %v4023
    %v4885 = vpack.c.b16 %v4031, %v4024
    %v4886 = vpack.c.b16 %v4032, %v4025
    %v4887 = vpack.c.b16 %v4040, %v4033
    %v4888 = vpack.c.b16 %v4041, %v4034
    %v4889 = vpack.c.b16 %v4042, %v4035
    %v4890 = vpack.c.b16 %v4043, %v4036
    %v4891 = vpack.c.b16 %v4044, %v4037
    %v4892 = vpack.c.b16 %v4045, %v4038
    %v4893 = vpack.c.b16 %v4046, %v4039
    %v4894 = vpack.c.b16 %v4054, %v4047
    %v4895 = vpack.c.b16 %v4055, %v4048
    %v4896 = vpack.c.b16 %v4056, %v4049
    %v4897 = vpack.c.b16 %v4057, %v4050
    %v4898 = vpack.c.b16 %v4058, %v4051
    %v4899 = vpack.c.b16 %v4059, %v4052
    %v4900 = vpack.c.b16 %v4060, %v4053
    %v4901 = vpack.c.b16 %v4068, %v4061
    %v4902 = vpack.c.b16 %v4069, %v4062
    %v4903 = vpack.c.b16 %v4070, %v4063
    %v4904 = vpack.c.b16 %v4071, %v4064
    %v4905 = vpack.c.b16 %v4072, %v4065
    %v4906 = vpack.c.b16 %v4073, %v4066
    %v4907 = vpack.c.b16 %v4074, %v4067
    %v4908 = vpack.c.b16 %v4082, %v4075
    %v4909 = vpack.c.b16 %v4083, %v4076
    %v4910 = vpack.c.b16 %v4084, %v4077
    %v4911 = vpack.c.b16 %v4085, %v4078
    %v4912 = vpack.c.b16 %v4086, %v4079
    %v4913 = vpack.c.b16 %v4087, %v4080
    %v4914 = vpack.c.b16 %v4088, %v4081
    %v4915 = vpack.c.b16 %v4096, %v4089
    %v4916 = vpack.c.b16 %v4097, %v4090
    %v4917 = vpack.c.b16 %v4098, %v4091
    %v4918 = vpack.c.b16 %v4099, %v4092
    %v4919 = vpack.c.b16 %v4100, %v4093
    %v4920 = vpack.c.b16 %v4101, %v4094
    %v4921 = vpack.c.b16 %v4102, %v4095
    %v4922 = vpack.c.b16 %v4110, %v4103
    %v4923 = vpack.c.b16 %v4111, %v4104
    %v4924 = vpack.c.b16 %v4112, %v4105
    %v4925 = vpack.c.b16 %v4113, %v4106
    %v4926 = vpack.c.b16 %v4114, %v4107
    %v4927 = vpack.c.b16 %v4115, %v4108
    %v4928 = vpack.c.b16 %v4116, %v4109
    %v4929 = vpack.c.b16 %v4124, %v4117
    %v4930 = vpack.c.b16 %v4125, %v4118
    %v4931 = vpack.c.b16 %v4126, %v4119
    %v4932 = vpack.c.b16 %v4127, %v4120
    %v4933 = vpack.c.b16 %v4128, %v4121
    %v4934 = vpack.c.b16 %v4129, %v4122
    %v4935 = vpack.c.b16 %v4130, %v4123
    %v4936 = vpack.c.b16 %v4138, %v4131
    %v4937 = vpack.c.b16 %v4139, %v4132
    %v4938 = vpack.c.b16 %v4140, %v4133
    %v4939 = vpack.c.b16 %v4141, %v4134
    %v4940 = vpack.c.b16 %v4142, %v4135
    %v4941 = vpack.c.b16 %v4143, %v4136
    %v4942 = vpack.c.b16 %v4144, %v4137
    %v4943 = vpack.c.b16 %v4152, %v4145
    %v4944 = vpack.c.b16 %v4153, %v4146
    %v4945 = vpack.c.b16 %v4154, %v4147
    %v4946 = vpack.c.b16 %v4155, %v4148
    %v4947 = vpack.c.b16 %v4156, %v4149
    %v4948 = vpack.c.b16 %v4157, %v4150
    %v4949 = vpack.c.b16 %v4158, %v4151
    %v4950 = vpack.c.b16 %v4166, %v4159
    %v4951 = vpack.c.b16 %v4167, %v4160
    %v4952 = vpack.c.b16 %v4168, %v4161
    %v4953 = vpack.c.b16 %v4169, %v4162
    %v4954 = vpack.c.b16 %v4170, %v4163
    %v4955 = vpack.c.b16 %v4171, %v4164
    %v4956 = vpack.c.b16 %v4172, %v4165
    %v4957 = vpack.c.b16 %v4180, %v4173
    %v4958 = vpack.c.b16 %v4181, %v4174
    %v4959 = vpack.c.b16 %v4182, %v4175
    %v4960 = vpack.c.b16 %v4183, %v4176
    %v4961 = vpack.c.b16 %v4184, %v4177
    %v4962 = vpack.c.b16 %v4185, %v4178
    %v4963 = vpack.c.b16 %v4186, %v4179
    %v4964 = vpack.c.b16 %v4194, %v4187
    %v4965 = vpack.c.b16 %v4195, %v4188
    %v4966 = vpack.c.b16 %v4196, %v4189
    %v4967 = vpack.c.b16 %v4197, %v4190
    %v4968 = vpack.c.b16 %v4198, %v4191
    %v4969 = vpack.c.b16 %v4199, %v4192
    %v4970 = vpack.c.b16 %v4200, %v4193
    %v4971 = vpack.c.b16 %v4208, %v4201
    %v4972 = vpack.c.b16 %v4209, %v4202
    %v4973 = vpack.c.b16 %v4210, %v4203
    %v4974 = vpack.c.b16 %v4211, %v4204
    %v4975 = vpack.c.b16 %v4212, %v4205
    %v4976 = vpack.c.b16 %v4213, %v4206
    %v4977 = vpack.c.b16 %v4214, %v4207
    %v4978 = vpack.c.b16 %v4222, %v4215
    %v4979 = vpack.c.b16 %v4223, %v4216
    %v4980 = vpack.c.b16 %v4224, %v4217
    %v4981 = vpack.c.b16 %v4225, %v4218
    %v4982 = vpack.c.b16 %v4226, %v4219
    %v4983 = vpack.c.b16 %v4227, %v4220
    %v4984 = vpack.c.b16 %v4228, %v4221
    %v4985 = vpack.c.b16 %v4236, %v4229
    %v4986 = vpack.c.b16 %v4237, %v4230
    %v4987 = vpack.c.b16 %v4238, %v4231
    %v4988 = vpack.c.b16 %v4239, %v4232
    %v4989 = vpack.c.b16 %v4240, %v4233
    %v4990 = vpack.c.b16 %v4241, %v4234
    %v4991 = vpack.c.b16 %v4242, %v4235
    %v4992 = vpack.c.b16 %v4250, %v4243
    %v4993 = vpack.c.b16 %v4251, %v4244
    %v4994 = vpack.c.b16 %v4252, %v4245
    %v4995 = vpack.c.b16 %v4253, %v4246
    %v4996 = vpack.c.b16 %v4254, %v4247
    %v4997 = vpack.c.b16 %v4255, %v4248
    %v4998 = vpack.c.b16 %v4256, %v4249
    %v4999 = vpack.c.b16 %v4264, %v4257
    %v5000 = vpack.c.b16 %v4265, %v4258
    %v5001 = vpack.c.b16 %v4266, %v4259
    %v5002 = vpack.c.b16 %v4267, %v4260
    %v5003 = vpack.c.b16 %v4268, %v4261
    %v5004 = vpack.c.b16 %v4269, %v4262
    %v5005 = vpack.c.b16 %v4270, %v4263
    %v5006 = vpack.c.b16 %v4278, %v4271
    %v5007 = vpack.c.b16 %v4279, %v4272
    %v5008 = vpack.c.b16 %v4280, %v4273
    %v5009 = vpack.c.b16 %v4281, %v4274
    %v5010 = vpack.c.b16 %v4282, %v4275
    %v5011 = vpack.c.b16 %v4283, %v4276
    %v5012 = vpack.c.b16 %v4284, %v4277
    %v5013 = vpack.c.b16 %v4292, %v4285
    %v5014 = vpack.c.b16 %v4293, %v4286
    %v5015 = vpack.c.b16 %v4294, %v4287
    %v5016 = vpack.c.b16 %v4295, %v4288
    %v5017 = vpack.c.b16 %v4296, %v4289
    %v5018 = vpack.c.b16 %v4297, %v4290
    %v5019 = vpack.c.b16 %v4298, %v4291
    %v5020 = vpack.c.b16 %v4306, %v4299
    %v5021 = vpack.c.b16 %v4307, %v4300
    %v5022 = vpack.c.b16 %v4308, %v4301
    %v5023 = vpack.c.b16 %v4309, %v4302
    %v5024 = vpack.c.b16 %v4310, %v4303
    %v5025 = vpack.c.b16 %v4311, %v4304
    %v5026 = vpack.c.b16 %v4312, %v4305
    %v5027 = vpack.c.b16 %v4320, %v4313
    %v5028 = vpack.c.b16 %v4321, %v4314
    %v5029 = vpack.c.b16 %v4322, %v4315
    %v5030 = vpack.c.b16 %v4323, %v4316
    %v5031 = vpack.c.b16 %v4324, %v4317
    %v5032 = vpack.c.b16 %v4325, %v4318
    %v5033 = vpack.c.b16 %v4326, %v4319
    %v5034 = vpack.c.b16 %v4334, %v4327
    %v5035 = vpack.c.b16 %v4335, %v4328
    %v5036 = vpack.c.b16 %v4336, %v4329
    %v5037 = vpack.c.b16 %v4337, %v4330
    %v5038 = vpack.c.b16 %v4338, %v4331
    %v5039 = vpack.c.b16 %v4339, %v4332
    %v5040 = vpack.c.b16 %v4340, %v4333
    %v5041 = vpack.c.b16 %v4348, %v4341
    %v5042 = vpack.c.b16 %v4349, %v4342
    %v5043 = vpack.c.b16 %v4350, %v4343
    %v5044 = vpack.c.b16 %v4351, %v4344
    %v5045 = vpack.c.b16 %v4352, %v4345
    %v5046 = vpack.c.b16 %v4353, %v4346
    %v5047 = vpack.c.b16 %v4354, %v4347
    %v5048 = vpack.c.b16 %v4362, %v4355
    %v5049 = vpack.c.b16 %v4363, %v4356
    %v5050 = vpack.c.b16 %v4364, %v4357
    %v5051 = vpack.c.b16 %v4365, %v4358
    %v5052 = vpack.c.b16 %v4366, %v4359
    %v5053 = vpack.c.b16 %v4367, %v4360
    %v5054 = vpack.c.b16 %v4368, %v4361
    %v5055 = vpack.c.b16 %v4376, %v4369
    %v5056 = vpack.c.b16 %v4377, %v4370
    %v5057 = vpack.c.b16 %v4378, %v4371
    %v5058 = vpack.c.b16 %v4379, %v4372
    %v5059 = vpack.c.b16 %v4380, %v4373
    %v5060 = vpack.c.b16 %v4381, %v4374
    %v5061 = vpack.c.b16 %v4382, %v4375
    %v5062 = vpack.c.b16 %v4390, %v4383
    %v5063 = vpack.c.b16 %v4391, %v4384
    %v5064 = vpack.c.b16 %v4392, %v4385
    %v5065 = vpack.c.b16 %v4393, %v4386
    %v5066 = vpack.c.b16 %v4394, %v4387
    %v5067 = vpack.c.b16 %v4395, %v4388
    %v5068 = vpack.c.b16 %v4396, %v4389
    %v5069 = vpack.c.b16 %v4404, %v4397
    %v5070 = vpack.c.b16 %v4405, %v4398
    %v5071 = vpack.c.b16 %v4406, %v4399
    %v5072 = vpack.c.b16 %v4407, %v4400
    %v5073 = vpack.c.b16 %v4408, %v4401
    %v5074 = vpack.c.b16 %v4409, %v4402
    %v5075 = vpack.c.b16 %v4410, %v4403
    %v5076 = vpack.c.b16 %v4418, %v4411
    %v5077 = vpack.c.b16 %v4419, %v4412
    %v5078 = vpack.c.b16 %v4420, %v4413
    %v5079 = vpack.c.b16 %v4421, %v4414
    %v5080 = vpack.c.b16 %v4422, %v4415
    %v5081 = vpack.c.b16 %v4423, %v4416
    %v5082 = vpack.c.b16 %v4424, %v4417
    %v5083 = vpack.c.b16 %v4432, %v4425
    %v5084 = vpack.c.b16 %v4433, %v4426
    %v5085 = vpack.c.b16 %v4434, %v4427
    %v5086 = vpack.c.b16 %v4435, %v4428
    %v5087 = vpack.c.b16 %v4436, %v4429
    %v5088 = vpack.c.b16 %v4437, %v4430
    %v5089 = vpack.c.b16 %v4438, %v4431
    %v5090 = vpack.c.b16 %v4446, %v4439
    %v5091 = vpack.c.b16 %v4447, %v4440
    %v5092 = vpack.c.b16 %v4448, %v4441
    %v5093 = vpack.c.b16 %v4449, %v4442
    %v5094 = vpack.c.b16 %v4450, %v4443
    %v5095 = vpack.c.b16 %v4451, %v4444
    %v5096 = vpack.c.b16 %v4452, %v4445
    %v5097 = vpack.c.b16 %v4460, %v4453
    %v5098 = vpack.c.b16 %v4461, %v4454
    %v5099 = vpack.c.b16 %v4462, %v4455
    %v5100 = vpack.c.b16 %v4463, %v4456
    %v5101 = vpack.c.b16 %v4464, %v4457
    %v5102 = vpack.c.b16 %v4465, %v4458
    %v5103 = vpack.c.b16 %v4466, %v4459
    %v5104 = vpack.c.b16 %v4474, %v4467
    %v5105 = vpack.c.b16 %v4475, %v4468
    %v5106 = vpack.c.b16 %v4476, %v4469
    %v5107 = vpack.c.b16 %v4477, %v4470
    %v5108 = vpack.c.b16 %v4478, %v4471
    %v5109 = vpack.c.b16 %v4479, %v4472
    %v5110 = vpack.c.b16 %v4480, %v4473
    %v5111 = vpack.c.b16 %v4488, %v4481
    %v5112 = vpack.c.b16 %v4489, %v4482
    %v5113 = vpack.c.b16 %v4490, %v4483
    %v5114 = vpack.c.b16 %v4491, %v4484
    %v5115 = vpack.c.b16 %v4492, %v4485
    %v5116 = vpack.c.b16 %v4493, %v4486
    %v5117 = vpack.c.b16 %v4494, %v4487
    %v5118 = vpack.c.b16 %v4502, %v4495
    %v5119 = vpack.c.b16 %v4503, %v4496
    %v5120 = vpack.c.b16 %v4504, %v4497
    %v5121 = vpack.c.b16 %v4505, %v4498
    %v5122 = vpack.c.b16 %v4506, %v4499
    %v5123 = vpack.c.b16 %v4507, %v4500
    %v5124 = vpack.c.b16 %v4508, %v4501
    %v5125 = vpack.c.b16 %v4516, %v4509
    %v5126 = vpack.c.b16 %v4517, %v4510
    %v5127 = vpack.c.b16 %v4518, %v4511
    %v5128 = vpack.c.b16 %v4519, %v4512
    %v5129 = vpack.c.b16 %v4520, %v4513
    %v5130 = vpack.c.b16 %v4521, %v4514
    %v5131 = vpack.c.b16 %v4522, %v4515
    %v5132 = vpack.c.b16 %v4530, %v4523
    %v5133 = vpack.c.b16 %v4531, %v4524
    %v5134 = vpack.c.b16 %v4532, %v4525
    %v5135 = vpack.c.b16 %v4533, %v4526
    %v5136 = vpack.c.b16 %v4534, %v4527
    %v5137 = vpack.c.b16 %v4535, %v4528
    %v5138 = vpack.c.b16 %v4536, %v4529
    %v5139 = vpack.c.b16 %v4544, %v4537
    %v5140 = vpack.c.b16 %v4545, %v4538
    %v5141 = vpack.c.b16 %v4546, %v4539
    %v5142 = vpack.c.b16 %v4547, %v4540
    %v5143 = vpack.c.b16 %v4548, %v4541
    %v5144 = vpack.c.b16 %v4549, %v4542
    %v5145 = vpack.c.b16 %v4550, %v4543
    %v5146 = vpack.c.b16 %v4558, %v4551
    %v5147 = vpack.c.b16 %v4559, %v4552
    %v5148 = vpack.c.b16 %v4560, %v4553
    %v5149 = vpack.c.b16 %v4561, %v4554
    %v5150 = vpack.c.b16 %v4562, %v4555
    %v5151 = vpack.c.b16 %v4563, %v4556
    %v5152 = vpack.c.b16 %v4564, %v4557
    %v5153 = vpack.c.b16 %v4572, %v4565
    %v5154 = vpack.c.b16 %v4573, %v4566
    %v5155 = vpack.c.b16 %v4574, %v4567
    %v5156 = vpack.c.b16 %v4575, %v4568
    %v5157 = vpack.c.b16 %v4576, %v4569
    %v5158 = vpack.c.b16 %v4577, %v4570
    %v5159 = vpack.c.b16 %v4578, %v4571
    %v5160 = vpack.c.b16 %v4586, %v4579
    %v5161 = vpack.c.b16 %v4587, %v4580
    %v5162 = vpack.c.b16 %v4588, %v4581
    %v5163 = vpack.c.b16 %v4589, %v4582
    %v5164 = vpack.c.b16 %v4590, %v4583
    %v5165 = vpack.c.b16 %v4591, %v4584
    %v5166 = vpack.c.b16 %v4592, %v4585
    %v5167 = vpack.c.b16 %v4600, %v4593
    %v5168 = vpack.c.b16 %v4601, %v4594
    %v5169 = vpack.c.b16 %v4602, %v4595
    %v5170 = vpack.c.b16 %v4603, %v4596
    %v5171 = vpack.c.b16 %v4604, %v4597
    %v5172 = vpack.c.b16 %v4605, %v4598
    %v5173 = vpack.c.b16 %v4606, %v4599
    %v5174 = vpack.c.b16 %v4614, %v4607
    %v5175 = vpack.c.b16 %v4615, %v4608
    %v5176 = vpack.c.b16 %v4616, %v4609
    %v5177 = vpack.c.b16 %v4617, %v4610
    %v5178 = vpack.c.b16 %v4618, %v4611
    %v5179 = vpack.c.b16 %v4619, %v4612
    %v5180 = vpack.c.b16 %v4620, %v4613
    %v5181 = vpack.c.b16 %v4628, %v4621
    %v5182 = vpack.c.b16 %v4629, %v4622
    %v5183 = vpack.c.b16 %v4630, %v4623
    %v5184 = vpack.c.b16 %v4631, %v4624
    %v5185 = vpack.c.b16 %v4632, %v4625
    %v5186 = vpack.c.b16 %v4633, %v4626
    %v5187 = vpack.c.b16 %v4634, %v4627
    %v5188 = vpack.c.b16 %v4642, %v4635
    %v5189 = vpack.c.b16 %v4643, %v4636
    %v5190 = vpack.c.b16 %v4644, %v4637
    %v5191 = vpack.c.b16 %v4645, %v4638
    %v5192 = vpack.c.b16 %v4646, %v4639
    %v5193 = vpack.c.b16 %v4647, %v4640
    %v5194 = vpack.c.b16 %v4648, %v4641
    %v5195 = vpack.c.b16 %v4656, %v4649
    %v5196 = vpack.c.b16 %v4657, %v4650
    %v5197 = vpack.c.b16 %v4658, %v4651
    %v5198 = vpack.c.b16 %v4659, %v4652
    %v5199 = vpack.c.b16 %v4660, %v4653
    %v5200 = vpack.c.b16 %v4661, %v4654
    %v5201 = vpack.c.b16 %v4662, %v4655
    %v5202 = vpack.c.b16 %v4670, %v4663
    %v5203 = vpack.c.b16 %v4671, %v4664
    %v5204 = vpack.c.b16 %v4672, %v4665
    %v5205 = vpack.c.b16 %v4673, %v4666
    %v5206 = vpack.c.b16 %v4674, %v4667
    %v5207 = vpack.c.b16 %v4675, %v4668
    %v5208 = vpack.c.b16 %v4676, %v4669
    %v5209 = vpack.c.b16 %v4684, %v4677
    %v5210 = vpack.c.b16 %v4685, %v4678
    %v5211 = vpack.c.b16 %v4686, %v4679
    %v5212 = vpack.c.b16 %v4687, %v4680
    %v5213 = vpack.c.b16 %v4688, %v4681
    %v5214 = vpack.c.b16 %v4689, %v4682
    %v5215 = vpack.c.b16 %v4690, %v4683
    %v5216 = vpack.c.b16 %v4698, %v4691
    %v5217 = vpack.c.b16 %v4699, %v4692
    %v5218 = vpack.c.b16 %v4700, %v4693
    %v5219 = vpack.c.b16 %v4701, %v4694
    %v5220 = vpack.c.b16 %v4702, %v4695
    %v5221 = vpack.c.b16 %v4703, %v4696
    %v5222 = vpack.c.b16 %v4704, %v4697
    %v5223 = vpack.c.b16 %v4712, %v4705
    %v5224 = vpack.c.b16 %v4713, %v4706
    %v5225 = vpack.c.b16 %v4714, %v4707
    %v5226 = vpack.c.b16 %v4715, %v4708
    %v5227 = vpack.c.b16 %v4716, %v4709
    %v5228 = vpack.c.b16 %v4717, %v4710
    %v5229 = vpack.c.b16 %v4718, %v4711
    %v5230 = vpack.c.b16 %v4726, %v4719
    %v5231 = vpack.c.b16 %v4727, %v4720
    %v5232 = vpack.c.b16 %v4728, %v4721
    %v5233 = vpack.c.b16 %v4729, %v4722
    %v5234 = vpack.c.b16 %v4730, %v4723
    %v5235 = vpack.c.b16 %v4731, %v4724
    %v5236 = vpack.c.b16 %v4732, %v4725
    %v5237 = vpack.c.b16 %v4740, %v4733
    %v5238 = vpack.c.b16 %v4741, %v4734
    %v5239 = vpack.c.b16 %v4742, %v4735
    %v5240 = vpack.c.b16 %v4743, %v4736
    %v5241 = vpack.c.b16 %v4744, %v4737
    %v5242 = vpack.c.b16 %v4745, %v4738
    %v5243 = vpack.c.b16 %v4746, %v4739
    %v5244 = vpack.c.b16 %v4754, %v4747
    %v5245 = vpack.c.b16 %v4755, %v4748
    %v5246 = vpack.c.b16 %v4756, %v4749
    %v5247 = vpack.c.b16 %v4757, %v4750
    %v5248 = vpack.c.b16 %v4758, %v4751
    %v5249 = vpack.c.b16 %v4759, %v4752
    %v5250 = vpack.c.b16 %v4760, %v4753
    %v5251 = vpack.c.b16 %v4768, %v4761
    %v5252 = vpack.c.b16 %v4769, %v4762
    %v5253 = vpack.c.b16 %v4770, %v4763
    %v5254 = vpack.c.b16 %v4771, %v4764
    %v5255 = vpack.c.b16 %v4772, %v4765
    %v5256 = vpack.c.b16 %v4773, %v4766
    %v5257 = vpack.c.b16 %v4774, %v4767
    %v5258 = vpack.c.b16 %v4782, %v4775
    %v5259 = vpack.c.b16 %v4783, %v4776
    %v5260 = vpack.c.b16 %v4784, %v4777
    %v5261 = vpack.c.b16 %v4785, %v4778
    %v5262 = vpack.c.b16 %v4786, %v4779
    %v5263 = vpack.c.b16 %v4787, %v4780
    %v5264 = vpack.c.b16 %v4788, %v4781
    %v5265 = vpack.c.b16 %v4796, %v4789
    %v5266 = vpack.c.b16 %v4797, %v4790
    %v5267 = vpack.c.b16 %v4798, %v4791
    %v5268 = vpack.c.b16 %v4799, %v4792
    %v5269 = vpack.c.b16 %v4800, %v4793
    %v5270 = vpack.c.b16 %v4801, %v4794
    %v5271 = vpack.c.b16 %v4802, %v4795
    %v5272 = vpack.c.b16 %v4810, %v4803
    %v5273 = vpack.c.b16 %v4811, %v4804
    %v5274 = vpack.c.b16 %v4812, %v4805
    %v5275 = vpack.c.b16 %v4813, %v4806
    %v5276 = vpack.c.b16 %v4814, %v4807
    %v5277 = vpack.c.b16 %v4815, %v4808
    %v5278 = vpack.c.b16 %v4816, %v4809
    %v5279 = vpack.c.b16 %v4824, %v4817
    %v5280 = vpack.c.b16 %v4825, %v4818
    %v5281 = vpack.c.b16 %v4826, %v4819
    %v5282 = vpack.c.b16 %v4827, %v4820
    %v5283 = vpack.c.b16 %v4828, %v4821
    %v5284 = vpack.c.b16 %v4829, %v4822
    %v5285 = vpack.c.b16 %v4830, %v4823
    %v5286 = vpack.c.b16 %v4838, %v4831
    %v5287 = vpack.c.b16 %v4839, %v4832
    %v5288 = vpack.c.b16 %v4840, %v4833
    %v5289 = vpack.c.b16 %v4841, %v4834
    %v5290 = vpack.c.b16 %v4842, %v4835
    %v5291 = vpack.c.b16 %v4843, %v4836
    %v5292 = vpack.c.b16 %v4844, %v4837
    %5741 = vmatpush.bf16.msra.mxu0 %v4894
    %5742 = vmatpush.bf16.msra.mxu0 %v4887
    %5743 = vmatpush.bf16.msra.mxu0 %v4880
    %5744 = vmatpush.bf16.msra.mxu0 %v4873
    %5745 = vmatpush.bf16.msra.mxu0 %v4866
    %5746 = vmatpush.bf16.msra.mxu0 %v4859
    %5747 = vmatpush.bf16.msra.mxu0 %v4852
    %5748 = vmatpush.bf16.msra.mxu0 %v4845
    %5749 = vmatmul.bf16.gmra.mxu0 %v2901
    %v5750 = vpop.f32.mrf.mxu0
    %v5751 = vadd.f32 %v3423, %v5750
    %v5752 = vpop.f32.mrf.mxu0
    %v5753 = vadd.f32 %v3423, %v5752
    %5754 = vdwg.mxu0
    %5755 = vmatpush.bf16.msra.mxu0 %v4950
    %5756 = vmatpush.bf16.msra.mxu0 %v4943
    %5757 = vmatpush.bf16.msra.mxu0 %v4936
    %5758 = vmatpush.bf16.msra.mxu0 %v4929
    %5759 = vmatpush.bf16.msra.mxu0 %v4922
    %5760 = vmatpush.bf16.msra.mxu0 %v4915
    %5761 = vmatpush.bf16.msra.mxu0 %v4908
    %5762 = vmatpush.bf16.msra.mxu0 %v4901
    %5763 = vmatmul.bf16.gmra.mxu0 %v2902
    %v5764 = vpop.f32.mrf.mxu0
    %v5765 = vadd.f32 %v5751, %v5764
    %v5766 = vpop.f32.mrf.mxu0
    %v5767 = vadd.f32 %v5753, %v5766
    %5768 = vdwg.mxu0
    %5769 = vmatpush.bf16.msra.mxu0 %v5006
    %5770 = vmatpush.bf16.msra.mxu0 %v4999
    %5771 = vmatpush.bf16.msra.mxu0 %v4992
    %5772 = vmatpush.bf16.msra.mxu0 %v4985
    %5773 = vmatpush.bf16.msra.mxu0 %v4978
    %5774 = vmatpush.bf16.msra.mxu0 %v4971
    %5775 = vmatpush.bf16.msra.mxu0 %v4964
    %5776 = vmatpush.bf16.msra.mxu0 %v4957
    %5777 = vmatmul.bf16.gmra.mxu0 %v2903
    %v5778 = vpop.f32.mrf.mxu0
    %v5779 = vadd.f32 %v5765, %v5778
    %v5780 = vpop.f32.mrf.mxu0
    %v5781 = vadd.f32 %v5767, %v5780
    %5782 = vdwg.mxu0
    %5783 = vmatpush.bf16.msra.mxu0 %v5062
    %5784 = vmatpush.bf16.msra.mxu0 %v5055
    %5785 = vmatpush.bf16.msra.mxu0 %v5048
    %5786 = vmatpush.bf16.msra.mxu0 %v5041
    %5787 = vmatpush.bf16.msra.mxu0 %v5034
    %5788 = vmatpush.bf16.msra.mxu0 %v5027
    %5789 = vmatpush.bf16.msra.mxu0 %v5020
    %5790 = vmatpush.bf16.msra.mxu0 %v5013
    %5791 = vmatmul.bf16.gmra.mxu0 %v2904
    %v5792 = vpop.f32.mrf.mxu0
    %v5793 = vadd.f32 %v5779, %v5792
    %v5794 = vpop.f32.mrf.mxu0
    %v5795 = vadd.f32 %v5781, %v5794
    %5796 = vdwg.mxu0
    %5797 = vmatpush.bf16.msra.mxu0 %v5118
    %5798 = vmatpush.bf16.msra.mxu0 %v5111
    %5799 = vmatpush.bf16.msra.mxu0 %v5104
    %5800 = vmatpush.bf16.msra.mxu0 %v5097
    %5801 = vmatpush.bf16.msra.mxu0 %v5090
    %5802 = vmatpush.bf16.msra.mxu0 %v5083
    %5803 = vmatpush.bf16.msra.mxu0 %v5076
    %5804 = vmatpush.bf16.msra.mxu0 %v5069
    %5805 = vmatmul.bf16.gmra.mxu0 %v2905
    %v5806 = vpop.f32.mrf.mxu0
    %v5807 = vadd.f32 %v5793, %v5806
    %v5808 = vpop.f32.mrf.mxu0
    %v5809 = vadd.f32 %v5795, %v5808
    %5810 = vdwg.mxu0
    %5811 = vmatpush.bf16.msra.mxu0 %v5174
    %5812 = vmatpush.bf16.msra.mxu0 %v5167
    %5813 = vmatpush.bf16.msra.mxu0 %v5160
    %5814 = vmatpush.bf16.msra.mxu0 %v5153
    %5815 = vmatpush.bf16.msra.mxu0 %v5146
    %5816 = vmatpush.bf16.msra.mxu0 %v5139
    %5817 = vmatpush.bf16.msra.mxu0 %v5132
    %5818 = vmatpush.bf16.msra.mxu0 %v5125
    %5819 = vmatmul.bf16.gmra.mxu0 %v2906
    %v5820 = vpop.f32.mrf.mxu0
    %v5821 = vadd.f32 %v5807, %v5820
    %v5822 = vpop.f32.mrf.mxu0
    %v5823 = vadd.f32 %v5809, %v5822
    %5824 = vdwg.mxu0
    %5825 = vmatpush.bf16.msra.mxu0 %v5230
    %5826 = vmatpush.bf16.msra.mxu0 %v5223
    %5827 = vmatpush.bf16.msra.mxu0 %v5216
    %5828 = vmatpush.bf16.msra.mxu0 %v5209
    %5829 = vmatpush.bf16.msra.mxu0 %v5202
    %5830 = vmatpush.bf16.msra.mxu0 %v5195
    %5831 = vmatpush.bf16.msra.mxu0 %v5188
    %5832 = vmatpush.bf16.msra.mxu0 %v5181
    %5833 = vmatmul.bf16.gmra.mxu0 %v2907
    %v5834 = vpop.f32.mrf.mxu0
    %v5835 = vadd.f32 %v5821, %v5834
    %v5836 = vpop.f32.mrf.mxu0
    %v5837 = vadd.f32 %v5823, %v5836
    %5838 = vdwg.mxu0
    %5839 = vmatpush.bf16.msra.mxu0 %v5286
    %5840 = vmatpush.bf16.msra.mxu0 %v5279
    %5841 = vmatpush.bf16.msra.mxu0 %v5272
    %5842 = vmatpush.bf16.msra.mxu0 %v5265
    %5843 = vmatpush.bf16.msra.mxu0 %v5258
    %5844 = vmatpush.bf16.msra.mxu0 %v5251
    %5845 = vmatpush.bf16.msra.mxu0 %v5244
    %5846 = vmatpush.bf16.msra.mxu0 %v5237
    %5847 = vmatmul.bf16.gmra.mxu0 %v2908
    %v5848 = vpop.f32.mrf.mxu0
    %v5849 = vadd.f32 %v5835, %v5848
    %v5850 = vpop.f32.mrf.mxu0
    %v5851 = vadd.f32 %v5837, %v5850
    %5852 = vdwg.mxu0
    %5853 = vmatpush.bf16.msra.mxu0 %v4895
    %5854 = vmatpush.bf16.msra.mxu0 %v4888
    %5855 = vmatpush.bf16.msra.mxu0 %v4881
    %5856 = vmatpush.bf16.msra.mxu0 %v4874
    %5857 = vmatpush.bf16.msra.mxu0 %v4867
    %5858 = vmatpush.bf16.msra.mxu0 %v4860
    %5859 = vmatpush.bf16.msra.mxu0 %v4853
    %5860 = vmatpush.bf16.msra.mxu0 %v4846
    %5861 = vmatmul.bf16.gmra.mxu0 %v2901
    %v5862 = vpop.f32.mrf.mxu0
    %v5863 = vadd.f32 %v3424, %v5862
    %v5864 = vpop.f32.mrf.mxu0
    %v5865 = vadd.f32 %v3424, %v5864
    %5866 = vdwg.mxu0
    %5867 = vmatpush.bf16.msra.mxu0 %v4951
    %5868 = vmatpush.bf16.msra.mxu0 %v4944
    %5869 = vmatpush.bf16.msra.mxu0 %v4937
    %5870 = vmatpush.bf16.msra.mxu0 %v4930
    %5871 = vmatpush.bf16.msra.mxu0 %v4923
    %5872 = vmatpush.bf16.msra.mxu0 %v4916
    %5873 = vmatpush.bf16.msra.mxu0 %v4909
    %5874 = vmatpush.bf16.msra.mxu0 %v4902
    %5875 = vmatmul.bf16.gmra.mxu0 %v2902
    %v5876 = vpop.f32.mrf.mxu0
    %v5877 = vadd.f32 %v5863, %v5876
    %v5878 = vpop.f32.mrf.mxu0
    %v5879 = vadd.f32 %v5865, %v5878
    %5880 = vdwg.mxu0
    %5881 = vmatpush.bf16.msra.mxu0 %v5007
    %5882 = vmatpush.bf16.msra.mxu0 %v5000
    %5883 = vmatpush.bf16.msra.mxu0 %v4993
    %5884 = vmatpush.bf16.msra.mxu0 %v4986
    %5885 = vmatpush.bf16.msra.mxu0 %v4979
    %5886 = vmatpush.bf16.msra.mxu0 %v4972
    %5887 = vmatpush.bf16.msra.mxu0 %v4965
    %5888 = vmatpush.bf16.msra.mxu0 %v4958
    %5889 = vmatmul.bf16.gmra.mxu0 %v2903
    %v5890 = vpop.f32.mrf.mxu0
    %v5891 = vadd.f32 %v5877, %v5890
    %v5892 = vpop.f32.mrf.mxu0
    %v5893 = vadd.f32 %v5879, %v5892
    %5894 = vdwg.mxu0
    %5895 = vmatpush.bf16.msra.mxu0 %v5063
    %5896 = vmatpush.bf16.msra.mxu0 %v5056
    %5897 = vmatpush.bf16.msra.mxu0 %v5049
    %5898 = vmatpush.bf16.msra.mxu0 %v5042
    %5899 = vmatpush.bf16.msra.mxu0 %v5035
    %5900 = vmatpush.bf16.msra.mxu0 %v5028
    %5901 = vmatpush.bf16.msra.mxu0 %v5021
    %5902 = vmatpush.bf16.msra.mxu0 %v5014
    %5903 = vmatmul.bf16.gmra.mxu0 %v2904
    %v5904 = vpop.f32.mrf.mxu0
    %v5905 = vadd.f32 %v5891, %v5904
    %v5906 = vpop.f32.mrf.mxu0
    %v5907 = vadd.f32 %v5893, %v5906
    %5908 = vdwg.mxu0
    %5909 = vmatpush.bf16.msra.mxu0 %v5119
    %5910 = vmatpush.bf16.msra.mxu0 %v5112
    %5911 = vmatpush.bf16.msra.mxu0 %v5105
    %5912 = vmatpush.bf16.msra.mxu0 %v5098
    %5913 = vmatpush.bf16.msra.mxu0 %v5091
    %5914 = vmatpush.bf16.msra.mxu0 %v5084
    %5915 = vmatpush.bf16.msra.mxu0 %v5077
    %5916 = vmatpush.bf16.msra.mxu0 %v5070
    %5917 = vmatmul.bf16.gmra.mxu0 %v2905
    %v5918 = vpop.f32.mrf.mxu0
    %v5919 = vadd.f32 %v5905, %v5918
    %v5920 = vpop.f32.mrf.mxu0
    %v5921 = vadd.f32 %v5907, %v5920
    %5922 = vdwg.mxu0
    %5923 = vmatpush.bf16.msra.mxu0 %v5175
    %5924 = vmatpush.bf16.msra.mxu0 %v5168
    %5925 = vmatpush.bf16.msra.mxu0 %v5161
    %5926 = vmatpush.bf16.msra.mxu0 %v5154
    %5927 = vmatpush.bf16.msra.mxu0 %v5147
    %5928 = vmatpush.bf16.msra.mxu0 %v5140
    %5929 = vmatpush.bf16.msra.mxu0 %v5133
    %5930 = vmatpush.bf16.msra.mxu0 %v5126
    %5931 = vmatmul.bf16.gmra.mxu0 %v2906
    %v5932 = vpop.f32.mrf.mxu0
    %v5933 = vadd.f32 %v5919, %v5932
    %v5934 = vpop.f32.mrf.mxu0
    %v5935 = vadd.f32 %v5921, %v5934
    %5936 = vdwg.mxu0
    %5937 = vmatpush.bf16.msra.mxu0 %v5231
    %5938 = vmatpush.bf16.msra.mxu0 %v5224
    %5939 = vmatpush.bf16.msra.mxu0 %v5217
    %5940 = vmatpush.bf16.msra.mxu0 %v5210
    %5941 = vmatpush.bf16.msra.mxu0 %v5203
    %5942 = vmatpush.bf16.msra.mxu0 %v5196
    %5943 = vmatpush.bf16.msra.mxu0 %v5189
    %5944 = vmatpush.bf16.msra.mxu0 %v5182
    %5945 = vmatmul.bf16.gmra.mxu0 %v2907
    %v5946 = vpop.f32.mrf.mxu0
    %v5947 = vadd.f32 %v5933, %v5946
    %v5948 = vpop.f32.mrf.mxu0
    %v5949 = vadd.f32 %v5935, %v5948
    %5950 = vdwg.mxu0
    %5951 = vmatpush.bf16.msra.mxu0 %v5287
    %5952 = vmatpush.bf16.msra.mxu0 %v5280
    %5953 = vmatpush.bf16.msra.mxu0 %v5273
    %5954 = vmatpush.bf16.msra.mxu0 %v5266
    %5955 = vmatpush.bf16.msra.mxu0 %v5259
    %5956 = vmatpush.bf16.msra.mxu0 %v5252
    %5957 = vmatpush.bf16.msra.mxu0 %v5245
    %5958 = vmatpush.bf16.msra.mxu0 %v5238
    %5959 = vmatmul.bf16.gmra.mxu0 %v2908
    %v5960 = vpop.f32.mrf.mxu0
    %v5961 = vadd.f32 %v5947, %v5960
    %v5962 = vpop.f32.mrf.mxu0
    %v5963 = vadd.f32 %v5949, %v5962
    %5964 = vdwg.mxu0
    %5965 = vmatpush.bf16.msra.mxu0 %v4896
    %5966 = vmatpush.bf16.msra.mxu0 %v4889
    %5967 = vmatpush.bf16.msra.mxu0 %v4882
    %5968 = vmatpush.bf16.msra.mxu0 %v4875
    %5969 = vmatpush.bf16.msra.mxu0 %v4868
    %5970 = vmatpush.bf16.msra.mxu0 %v4861
    %5971 = vmatpush.bf16.msra.mxu0 %v4854
    %5972 = vmatpush.bf16.msra.mxu0 %v4847
    %5973 = vmatmul.bf16.gmra.mxu0 %v2901
    %v5974 = vpop.f32.mrf.mxu0
    %v5975 = vadd.f32 %v3425, %v5974
    %v5976 = vpop.f32.mrf.mxu0
    %v5977 = vadd.f32 %v3425, %v5976
    %5978 = vdwg.mxu0
    %5979 = vmatpush.bf16.msra.mxu0 %v4952
    %5980 = vmatpush.bf16.msra.mxu0 %v4945
    %5981 = vmatpush.bf16.msra.mxu0 %v4938
    %5982 = vmatpush.bf16.msra.mxu0 %v4931
    %5983 = vmatpush.bf16.msra.mxu0 %v4924
    %5984 = vmatpush.bf16.msra.mxu0 %v4917
    %5985 = vmatpush.bf16.msra.mxu0 %v4910
    %5986 = vmatpush.bf16.msra.mxu0 %v4903
    %5987 = vmatmul.bf16.gmra.mxu0 %v2902
    %v5988 = vpop.f32.mrf.mxu0
    %v5989 = vadd.f32 %v5975, %v5988
    %v5990 = vpop.f32.mrf.mxu0
    %v5991 = vadd.f32 %v5977, %v5990
    %5992 = vdwg.mxu0
    %5993 = vmatpush.bf16.msra.mxu0 %v5008
    %5994 = vmatpush.bf16.msra.mxu0 %v5001
    %5995 = vmatpush.bf16.msra.mxu0 %v4994
    %5996 = vmatpush.bf16.msra.mxu0 %v4987
    %5997 = vmatpush.bf16.msra.mxu0 %v4980
    %5998 = vmatpush.bf16.msra.mxu0 %v4973
    %5999 = vmatpush.bf16.msra.mxu0 %v4966
    %6000 = vmatpush.bf16.msra.mxu0 %v4959
    %6001 = vmatmul.bf16.gmra.mxu0 %v2903
    %v6002 = vpop.f32.mrf.mxu0
    %v6003 = vadd.f32 %v5989, %v6002
    %v6004 = vpop.f32.mrf.mxu0
    %v6005 = vadd.f32 %v5991, %v6004
    %6006 = vdwg.mxu0
    %6007 = vmatpush.bf16.msra.mxu0 %v5064
    %6008 = vmatpush.bf16.msra.mxu0 %v5057
    %6009 = vmatpush.bf16.msra.mxu0 %v5050
    %6010 = vmatpush.bf16.msra.mxu0 %v5043
    %6011 = vmatpush.bf16.msra.mxu0 %v5036
    %6012 = vmatpush.bf16.msra.mxu0 %v5029
    %6013 = vmatpush.bf16.msra.mxu0 %v5022
    %6014 = vmatpush.bf16.msra.mxu0 %v5015
    %6015 = vmatmul.bf16.gmra.mxu0 %v2904
    %v6016 = vpop.f32.mrf.mxu0
    %v6017 = vadd.f32 %v6003, %v6016
    %v6018 = vpop.f32.mrf.mxu0
    %v6019 = vadd.f32 %v6005, %v6018
    %6020 = vdwg.mxu0
    %6021 = vmatpush.bf16.msra.mxu0 %v5120
    %6022 = vmatpush.bf16.msra.mxu0 %v5113
    %6023 = vmatpush.bf16.msra.mxu0 %v5106
    %6024 = vmatpush.bf16.msra.mxu0 %v5099
    %6025 = vmatpush.bf16.msra.mxu0 %v5092
    %6026 = vmatpush.bf16.msra.mxu0 %v5085
    %6027 = vmatpush.bf16.msra.mxu0 %v5078
    %6028 = vmatpush.bf16.msra.mxu0 %v5071
    %6029 = vmatmul.bf16.gmra.mxu0 %v2905
    %v6030 = vpop.f32.mrf.mxu0
    %v6031 = vadd.f32 %v6017, %v6030
    %v6032 = vpop.f32.mrf.mxu0
    %v6033 = vadd.f32 %v6019, %v6032
    %6034 = vdwg.mxu0
    %6035 = vmatpush.bf16.msra.mxu0 %v5176
    %6036 = vmatpush.bf16.msra.mxu0 %v5169
    %6037 = vmatpush.bf16.msra.mxu0 %v5162
    %6038 = vmatpush.bf16.msra.mxu0 %v5155
    %6039 = vmatpush.bf16.msra.mxu0 %v5148
    %6040 = vmatpush.bf16.msra.mxu0 %v5141
    %6041 = vmatpush.bf16.msra.mxu0 %v5134
    %6042 = vmatpush.bf16.msra.mxu0 %v5127
    %6043 = vmatmul.bf16.gmra.mxu0 %v2906
    %v6044 = vpop.f32.mrf.mxu0
    %v6045 = vadd.f32 %v6031, %v6044
    %v6046 = vpop.f32.mrf.mxu0
    %v6047 = vadd.f32 %v6033, %v6046
    %6048 = vdwg.mxu0
    %6049 = vmatpush.bf16.msra.mxu0 %v5232
    %6050 = vmatpush.bf16.msra.mxu0 %v5225
    %6051 = vmatpush.bf16.msra.mxu0 %v5218
    %6052 = vmatpush.bf16.msra.mxu0 %v5211
    %6053 = vmatpush.bf16.msra.mxu0 %v5204
    %6054 = vmatpush.bf16.msra.mxu0 %v5197
    %6055 = vmatpush.bf16.msra.mxu0 %v5190
    %6056 = vmatpush.bf16.msra.mxu0 %v5183
    %6057 = vmatmul.bf16.gmra.mxu0 %v2907
    %v6058 = vpop.f32.mrf.mxu0
    %v6059 = vadd.f32 %v6045, %v6058
    %v6060 = vpop.f32.mrf.mxu0
    %v6061 = vadd.f32 %v6047, %v6060
    %6062 = vdwg.mxu0
    %6063 = vmatpush.bf16.msra.mxu0 %v5288
    %6064 = vmatpush.bf16.msra.mxu0 %v5281
    %6065 = vmatpush.bf16.msra.mxu0 %v5274
    %6066 = vmatpush.bf16.msra.mxu0 %v5267
    %6067 = vmatpush.bf16.msra.mxu0 %v5260
    %6068 = vmatpush.bf16.msra.mxu0 %v5253
    %6069 = vmatpush.bf16.msra.mxu0 %v5246
    %6070 = vmatpush.bf16.msra.mxu0 %v5239
    %6071 = vmatmul.bf16.gmra.mxu0 %v2908
    %v6072 = vpop.f32.mrf.mxu0
    %v6073 = vadd.f32 %v6059, %v6072
    %v6074 = vpop.f32.mrf.mxu0
    %v6075 = vadd.f32 %v6061, %v6074
    %6076 = vdwg.mxu0
    %6077 = vmatpush.bf16.msra.mxu0 %v4897
    %6078 = vmatpush.bf16.msra.mxu0 %v4890
    %6079 = vmatpush.bf16.msra.mxu0 %v4883
    %6080 = vmatpush.bf16.msra.mxu0 %v4876
    %6081 = vmatpush.bf16.msra.mxu0 %v4869
    %6082 = vmatpush.bf16.msra.mxu0 %v4862
    %6083 = vmatpush.bf16.msra.mxu0 %v4855
    %6084 = vmatpush.bf16.msra.mxu0 %v4848
    %6085 = vmatmul.bf16.gmra.mxu0 %v2901
    %v6086 = vpop.f32.mrf.mxu0
    %v6087 = vadd.f32 %v3426, %v6086
    %v6088 = vpop.f32.mrf.mxu0
    %v6089 = vadd.f32 %v3426, %v6088
    %6090 = vdwg.mxu0
    %6091 = vmatpush.bf16.msra.mxu0 %v4953
    %6092 = vmatpush.bf16.msra.mxu0 %v4946
    %6093 = vmatpush.bf16.msra.mxu0 %v4939
    %6094 = vmatpush.bf16.msra.mxu0 %v4932
    %6095 = vmatpush.bf16.msra.mxu0 %v4925
    %6096 = vmatpush.bf16.msra.mxu0 %v4918
    %6097 = vmatpush.bf16.msra.mxu0 %v4911
    %6098 = vmatpush.bf16.msra.mxu0 %v4904
    %6099 = vmatmul.bf16.gmra.mxu0 %v2902
    %v6100 = vpop.f32.mrf.mxu0
    %v6101 = vadd.f32 %v6087, %v6100
    %v6102 = vpop.f32.mrf.mxu0
    %v6103 = vadd.f32 %v6089, %v6102
    %6104 = vdwg.mxu0
    %6105 = vmatpush.bf16.msra.mxu0 %v5009
    %6106 = vmatpush.bf16.msra.mxu0 %v5002
    %6107 = vmatpush.bf16.msra.mxu0 %v4995
    %6108 = vmatpush.bf16.msra.mxu0 %v4988
    %6109 = vmatpush.bf16.msra.mxu0 %v4981
    %6110 = vmatpush.bf16.msra.mxu0 %v4974
    %6111 = vmatpush.bf16.msra.mxu0 %v4967
    %6112 = vmatpush.bf16.msra.mxu0 %v4960
    %6113 = vmatmul.bf16.gmra.mxu0 %v2903
    %v6114 = vpop.f32.mrf.mxu0
    %v6115 = vadd.f32 %v6101, %v6114
    %v6116 = vpop.f32.mrf.mxu0
    %v6117 = vadd.f32 %v6103, %v6116
    %6118 = vdwg.mxu0
    %6119 = vmatpush.bf16.msra.mxu0 %v5065
    %6120 = vmatpush.bf16.msra.mxu0 %v5058
    %6121 = vmatpush.bf16.msra.mxu0 %v5051
    %6122 = vmatpush.bf16.msra.mxu0 %v5044
    %6123 = vmatpush.bf16.msra.mxu0 %v5037
    %6124 = vmatpush.bf16.msra.mxu0 %v5030
    %6125 = vmatpush.bf16.msra.mxu0 %v5023
    %6126 = vmatpush.bf16.msra.mxu0 %v5016
    %6127 = vmatmul.bf16.gmra.mxu0 %v2904
    %v6128 = vpop.f32.mrf.mxu0
    %v6129 = vadd.f32 %v6115, %v6128
    %v6130 = vpop.f32.mrf.mxu0
    %v6131 = vadd.f32 %v6117, %v6130
    %6132 = vdwg.mxu0
    %6133 = vmatpush.bf16.msra.mxu0 %v5121
    %6134 = vmatpush.bf16.msra.mxu0 %v5114
    %6135 = vmatpush.bf16.msra.mxu0 %v5107
    %6136 = vmatpush.bf16.msra.mxu0 %v5100
    %6137 = vmatpush.bf16.msra.mxu0 %v5093
    %6138 = vmatpush.bf16.msra.mxu0 %v5086
    %6139 = vmatpush.bf16.msra.mxu0 %v5079
    %6140 = vmatpush.bf16.msra.mxu0 %v5072
    %6141 = vmatmul.bf16.gmra.mxu0 %v2905
    %v6142 = vpop.f32.mrf.mxu0
    %v6143 = vadd.f32 %v6129, %v6142
    %v6144 = vpop.f32.mrf.mxu0
    %v6145 = vadd.f32 %v6131, %v6144
    %6146 = vdwg.mxu0
    %6147 = vmatpush.bf16.msra.mxu0 %v5177
    %6148 = vmatpush.bf16.msra.mxu0 %v5170
    %6149 = vmatpush.bf16.msra.mxu0 %v5163
    %6150 = vmatpush.bf16.msra.mxu0 %v5156
    %6151 = vmatpush.bf16.msra.mxu0 %v5149
    %6152 = vmatpush.bf16.msra.mxu0 %v5142
    %6153 = vmatpush.bf16.msra.mxu0 %v5135
    %6154 = vmatpush.bf16.msra.mxu0 %v5128
    %6155 = vmatmul.bf16.gmra.mxu0 %v2906
    %v6156 = vpop.f32.mrf.mxu0
    %v6157 = vadd.f32 %v6143, %v6156
    %v6158 = vpop.f32.mrf.mxu0
    %v6159 = vadd.f32 %v6145, %v6158
    %6160 = vdwg.mxu0
    %6161 = vmatpush.bf16.msra.mxu0 %v5233
    %6162 = vmatpush.bf16.msra.mxu0 %v5226
    %6163 = vmatpush.bf16.msra.mxu0 %v5219
    %6164 = vmatpush.bf16.msra.mxu0 %v5212
    %6165 = vmatpush.bf16.msra.mxu0 %v5205
    %6166 = vmatpush.bf16.msra.mxu0 %v5198
    %6167 = vmatpush.bf16.msra.mxu0 %v5191
    %6168 = vmatpush.bf16.msra.mxu0 %v5184
    %6169 = vmatmul.bf16.gmra.mxu0 %v2907
    %v6170 = vpop.f32.mrf.mxu0
    %v6171 = vadd.f32 %v6157, %v6170
    %v6172 = vpop.f32.mrf.mxu0
    %v6173 = vadd.f32 %v6159, %v6172
    %6174 = vdwg.mxu0
    %6175 = vmatpush.bf16.msra.mxu0 %v5289
    %6176 = vmatpush.bf16.msra.mxu0 %v5282
    %6177 = vmatpush.bf16.msra.mxu0 %v5275
    %6178 = vmatpush.bf16.msra.mxu0 %v5268
    %6179 = vmatpush.bf16.msra.mxu0 %v5261
    %6180 = vmatpush.bf16.msra.mxu0 %v5254
    %6181 = vmatpush.bf16.msra.mxu0 %v5247
    %6182 = vmatpush.bf16.msra.mxu0 %v5240
    %6183 = vmatmul.bf16.gmra.mxu0 %v2908
    %v6184 = vpop.f32.mrf.mxu0
    %v6185 = vadd.f32 %v6171, %v6184
    %v6186 = vpop.f32.mrf.mxu0
    %v6187 = vadd.f32 %v6173, %v6186
    %6188 = vdwg.mxu0
    %6189 = vmatpush.bf16.msra.mxu0 %v4898
    %6190 = vmatpush.bf16.msra.mxu0 %v4891
    %6191 = vmatpush.bf16.msra.mxu0 %v4884
    %6192 = vmatpush.bf16.msra.mxu0 %v4877
    %6193 = vmatpush.bf16.msra.mxu0 %v4870
    %6194 = vmatpush.bf16.msra.mxu0 %v4863
    %6195 = vmatpush.bf16.msra.mxu0 %v4856
    %6196 = vmatpush.bf16.msra.mxu0 %v4849
    %6197 = vmatmul.bf16.gmra.mxu0 %v2901
    %v6198 = vpop.f32.mrf.mxu0
    %v6199 = vadd.f32 %v3427, %v6198
    %v6200 = vpop.f32.mrf.mxu0
    %v6201 = vadd.f32 %v3427, %v6200
    %6202 = vdwg.mxu0
    %6203 = vmatpush.bf16.msra.mxu0 %v4954
    %6204 = vmatpush.bf16.msra.mxu0 %v4947
    %6205 = vmatpush.bf16.msra.mxu0 %v4940
    %6206 = vmatpush.bf16.msra.mxu0 %v4933
    %6207 = vmatpush.bf16.msra.mxu0 %v4926
    %6208 = vmatpush.bf16.msra.mxu0 %v4919
    %6209 = vmatpush.bf16.msra.mxu0 %v4912
    %6210 = vmatpush.bf16.msra.mxu0 %v4905
    %6211 = vmatmul.bf16.gmra.mxu0 %v2902
    %v6212 = vpop.f32.mrf.mxu0
    %v6213 = vadd.f32 %v6199, %v6212
    %v6214 = vpop.f32.mrf.mxu0
    %v6215 = vadd.f32 %v6201, %v6214
    %6216 = vdwg.mxu0
    %6217 = vmatpush.bf16.msra.mxu0 %v5010
    %6218 = vmatpush.bf16.msra.mxu0 %v5003
    %6219 = vmatpush.bf16.msra.mxu0 %v4996
    %6220 = vmatpush.bf16.msra.mxu0 %v4989
    %6221 = vmatpush.bf16.msra.mxu0 %v4982
    %6222 = vmatpush.bf16.msra.mxu0 %v4975
    %6223 = vmatpush.bf16.msra.mxu0 %v4968
    %6224 = vmatpush.bf16.msra.mxu0 %v4961
    %6225 = vmatmul.bf16.gmra.mxu0 %v2903
    %v6226 = vpop.f32.mrf.mxu0
    %v6227 = vadd.f32 %v6213, %v6226
    %v6228 = vpop.f32.mrf.mxu0
    %v6229 = vadd.f32 %v6215, %v6228
    %6230 = vdwg.mxu0
    %6231 = vmatpush.bf16.msra.mxu0 %v5066
    %6232 = vmatpush.bf16.msra.mxu0 %v5059
    %6233 = vmatpush.bf16.msra.mxu0 %v5052
    %6234 = vmatpush.bf16.msra.mxu0 %v5045
    %6235 = vmatpush.bf16.msra.mxu0 %v5038
    %6236 = vmatpush.bf16.msra.mxu0 %v5031
    %6237 = vmatpush.bf16.msra.mxu0 %v5024
    %6238 = vmatpush.bf16.msra.mxu0 %v5017
    %6239 = vmatmul.bf16.gmra.mxu0 %v2904
    %v6240 = vpop.f32.mrf.mxu0
    %v6241 = vadd.f32 %v6227, %v6240
    %v6242 = vpop.f32.mrf.mxu0
    %v6243 = vadd.f32 %v6229, %v6242
    %6244 = vdwg.mxu0
    %6245 = vmatpush.bf16.msra.mxu0 %v5122
    %6246 = vmatpush.bf16.msra.mxu0 %v5115
    %6247 = vmatpush.bf16.msra.mxu0 %v5108
    %6248 = vmatpush.bf16.msra.mxu0 %v5101
    %6249 = vmatpush.bf16.msra.mxu0 %v5094
    %6250 = vmatpush.bf16.msra.mxu0 %v5087
    %6251 = vmatpush.bf16.msra.mxu0 %v5080
    %6252 = vmatpush.bf16.msra.mxu0 %v5073
    %6253 = vmatmul.bf16.gmra.mxu0 %v2905
    %v6254 = vpop.f32.mrf.mxu0
    %v6255 = vadd.f32 %v6241, %v6254
    %v6256 = vpop.f32.mrf.mxu0
    %v6257 = vadd.f32 %v6243, %v6256
    %6258 = vdwg.mxu0
    %6259 = vmatpush.bf16.msra.mxu0 %v5178
    %6260 = vmatpush.bf16.msra.mxu0 %v5171
    %6261 = vmatpush.bf16.msra.mxu0 %v5164
    %6262 = vmatpush.bf16.msra.mxu0 %v5157
    %6263 = vmatpush.bf16.msra.mxu0 %v5150
    %6264 = vmatpush.bf16.msra.mxu0 %v5143
    %6265 = vmatpush.bf16.msra.mxu0 %v5136
    %6266 = vmatpush.bf16.msra.mxu0 %v5129
    %6267 = vmatmul.bf16.gmra.mxu0 %v2906
    %v6268 = vpop.f32.mrf.mxu0
    %v6269 = vadd.f32 %v6255, %v6268
    %v6270 = vpop.f32.mrf.mxu0
    %v6271 = vadd.f32 %v6257, %v6270
    %6272 = vdwg.mxu0
    %6273 = vmatpush.bf16.msra.mxu0 %v5234
    %6274 = vmatpush.bf16.msra.mxu0 %v5227
    %6275 = vmatpush.bf16.msra.mxu0 %v5220
    %6276 = vmatpush.bf16.msra.mxu0 %v5213
    %6277 = vmatpush.bf16.msra.mxu0 %v5206
    %6278 = vmatpush.bf16.msra.mxu0 %v5199
    %6279 = vmatpush.bf16.msra.mxu0 %v5192
    %6280 = vmatpush.bf16.msra.mxu0 %v5185
    %6281 = vmatmul.bf16.gmra.mxu0 %v2907
    %v6282 = vpop.f32.mrf.mxu0
    %v6283 = vadd.f32 %v6269, %v6282
    %v6284 = vpop.f32.mrf.mxu0
    %v6285 = vadd.f32 %v6271, %v6284
    %6286 = vdwg.mxu0
    %6287 = vmatpush.bf16.msra.mxu0 %v5290
    %6288 = vmatpush.bf16.msra.mxu0 %v5283
    %6289 = vmatpush.bf16.msra.mxu0 %v5276
    %6290 = vmatpush.bf16.msra.mxu0 %v5269
    %6291 = vmatpush.bf16.msra.mxu0 %v5262
    %6292 = vmatpush.bf16.msra.mxu0 %v5255
    %6293 = vmatpush.bf16.msra.mxu0 %v5248
    %6294 = vmatpush.bf16.msra.mxu0 %v5241
    %6295 = vmatmul.bf16.gmra.mxu0 %v2908
    %v6296 = vpop.f32.mrf.mxu0
    %v6297 = vadd.f32 %v6283, %v6296
    %v6298 = vpop.f32.mrf.mxu0
    %v6299 = vadd.f32 %v6285, %v6298
    %6300 = vdwg.mxu0
    %6301 = vmatpush.bf16.msra.mxu0 %v4899
    %6302 = vmatpush.bf16.msra.mxu0 %v4892
    %6303 = vmatpush.bf16.msra.mxu0 %v4885
    %6304 = vmatpush.bf16.msra.mxu0 %v4878
    %6305 = vmatpush.bf16.msra.mxu0 %v4871
    %6306 = vmatpush.bf16.msra.mxu0 %v4864
    %6307 = vmatpush.bf16.msra.mxu0 %v4857
    %6308 = vmatpush.bf16.msra.mxu0 %v4850
    %6309 = vmatmul.bf16.gmra.mxu0 %v2901
    %v6310 = vpop.f32.mrf.mxu0
    %v6311 = vadd.f32 %v3428, %v6310
    %v6312 = vpop.f32.mrf.mxu0
    %v6313 = vadd.f32 %v3428, %v6312
    %6314 = vdwg.mxu0
    %6315 = vmatpush.bf16.msra.mxu0 %v4955
    %6316 = vmatpush.bf16.msra.mxu0 %v4948
    %6317 = vmatpush.bf16.msra.mxu0 %v4941
    %6318 = vmatpush.bf16.msra.mxu0 %v4934
    %6319 = vmatpush.bf16.msra.mxu0 %v4927
    %6320 = vmatpush.bf16.msra.mxu0 %v4920
    %6321 = vmatpush.bf16.msra.mxu0 %v4913
    %6322 = vmatpush.bf16.msra.mxu0 %v4906
    %6323 = vmatmul.bf16.gmra.mxu0 %v2902
    %v6324 = vpop.f32.mrf.mxu0
    %v6325 = vadd.f32 %v6311, %v6324
    %v6326 = vpop.f32.mrf.mxu0
    %v6327 = vadd.f32 %v6313, %v6326
    %6328 = vdwg.mxu0
    %6329 = vmatpush.bf16.msra.mxu0 %v5011
    %6330 = vmatpush.bf16.msra.mxu0 %v5004
    %6331 = vmatpush.bf16.msra.mxu0 %v4997
    %6332 = vmatpush.bf16.msra.mxu0 %v4990
    %6333 = vmatpush.bf16.msra.mxu0 %v4983
    %6334 = vmatpush.bf16.msra.mxu0 %v4976
    %6335 = vmatpush.bf16.msra.mxu0 %v4969
    %6336 = vmatpush.bf16.msra.mxu0 %v4962
    %6337 = vmatmul.bf16.gmra.mxu0 %v2903
    %v6338 = vpop.f32.mrf.mxu0
    %v6339 = vadd.f32 %v6325, %v6338
    %v6340 = vpop.f32.mrf.mxu0
    %v6341 = vadd.f32 %v6327, %v6340
    %6342 = vdwg.mxu0
    %6343 = vmatpush.bf16.msra.mxu0 %v5067
    %6344 = vmatpush.bf16.msra.mxu0 %v5060
    %6345 = vmatpush.bf16.msra.mxu0 %v5053
    %6346 = vmatpush.bf16.msra.mxu0 %v5046
    %6347 = vmatpush.bf16.msra.mxu0 %v5039
    %6348 = vmatpush.bf16.msra.mxu0 %v5032
    %6349 = vmatpush.bf16.msra.mxu0 %v5025
    %6350 = vmatpush.bf16.msra.mxu0 %v5018
    %6351 = vmatmul.bf16.gmra.mxu0 %v2904
    %v6352 = vpop.f32.mrf.mxu0
    %v6353 = vadd.f32 %v6339, %v6352
    %v6354 = vpop.f32.mrf.mxu0
    %v6355 = vadd.f32 %v6341, %v6354
    %6356 = vdwg.mxu0
    %6357 = vmatpush.bf16.msra.mxu0 %v5123
    %6358 = vmatpush.bf16.msra.mxu0 %v5116
    %6359 = vmatpush.bf16.msra.mxu0 %v5109
    %6360 = vmatpush.bf16.msra.mxu0 %v5102
    %6361 = vmatpush.bf16.msra.mxu0 %v5095
    %6362 = vmatpush.bf16.msra.mxu0 %v5088
    %6363 = vmatpush.bf16.msra.mxu0 %v5081
    %6364 = vmatpush.bf16.msra.mxu0 %v5074
    %6365 = vmatmul.bf16.gmra.mxu0 %v2905
    %v6366 = vpop.f32.mrf.mxu0
    %v6367 = vadd.f32 %v6353, %v6366
    %v6368 = vpop.f32.mrf.mxu0
    %v6369 = vadd.f32 %v6355, %v6368
    %6370 = vdwg.mxu0
    %6371 = vmatpush.bf16.msra.mxu0 %v5179
    %6372 = vmatpush.bf16.msra.mxu0 %v5172
    %6373 = vmatpush.bf16.msra.mxu0 %v5165
    %6374 = vmatpush.bf16.msra.mxu0 %v5158
    %6375 = vmatpush.bf16.msra.mxu0 %v5151
    %6376 = vmatpush.bf16.msra.mxu0 %v5144
    %6377 = vmatpush.bf16.msra.mxu0 %v5137
    %6378 = vmatpush.bf16.msra.mxu0 %v5130
    %6379 = vmatmul.bf16.gmra.mxu0 %v2906
    %v6380 = vpop.f32.mrf.mxu0
    %v6381 = vadd.f32 %v6367, %v6380
    %v6382 = vpop.f32.mrf.mxu0
    %v6383 = vadd.f32 %v6369, %v6382
    %6384 = vdwg.mxu0
    %6385 = vmatpush.bf16.msra.mxu0 %v5235
    %6386 = vmatpush.bf16.msra.mxu0 %v5228
    %6387 = vmatpush.bf16.msra.mxu0 %v5221
    %6388 = vmatpush.bf16.msra.mxu0 %v5214
    %6389 = vmatpush.bf16.msra.mxu0 %v5207
    %6390 = vmatpush.bf16.msra.mxu0 %v5200
    %6391 = vmatpush.bf16.msra.mxu0 %v5193
    %6392 = vmatpush.bf16.msra.mxu0 %v5186
    %6393 = vmatmul.bf16.gmra.mxu0 %v2907
    %v6394 = vpop.f32.mrf.mxu0
    %v6395 = vadd.f32 %v6381, %v6394
    %v6396 = vpop.f32.mrf.mxu0
    %v6397 = vadd.f32 %v6383, %v6396
    %6398 = vdwg.mxu0
    %6399 = vmatpush.bf16.msra.mxu0 %v5291
    %6400 = vmatpush.bf16.msra.mxu0 %v5284
    %6401 = vmatpush.bf16.msra.mxu0 %v5277
    %6402 = vmatpush.bf16.msra.mxu0 %v5270
    %6403 = vmatpush.bf16.msra.mxu0 %v5263
    %6404 = vmatpush.bf16.msra.mxu0 %v5256
    %6405 = vmatpush.bf16.msra.mxu0 %v5249
    %6406 = vmatpush.bf16.msra.mxu0 %v5242
    %6407 = vmatmul.bf16.gmra.mxu0 %v2908
    %v6408 = vpop.f32.mrf.mxu0
    %v6409 = vadd.f32 %v6395, %v6408
    %v6410 = vpop.f32.mrf.mxu0
    %v6411 = vadd.f32 %v6397, %v6410
    %6412 = vdwg.mxu0
    %6413 = vmatpush.bf16.msra.mxu0 %v4900
    %6414 = vmatpush.bf16.msra.mxu0 %v4893
    %6415 = vmatpush.bf16.msra.mxu0 %v4886
    %6416 = vmatpush.bf16.msra.mxu0 %v4879
    %6417 = vmatpush.bf16.msra.mxu0 %v4872
    %6418 = vmatpush.bf16.msra.mxu0 %v4865
    %6419 = vmatpush.bf16.msra.mxu0 %v4858
    %6420 = vmatpush.bf16.msra.mxu0 %v4851
    %6421 = vmatmul.bf16.gmra.mxu0 %v2901
    %v6422 = vpop.f32.mrf.mxu0
    %v6423 = vadd.f32 %v3429, %v6422
    %v6424 = vpop.f32.mrf.mxu0
    %v6425 = vadd.f32 %v3429, %v6424
    %6426 = vdwg.mxu0
    %6427 = vmatpush.bf16.msra.mxu0 %v4956
    %6428 = vmatpush.bf16.msra.mxu0 %v4949
    %6429 = vmatpush.bf16.msra.mxu0 %v4942
    %6430 = vmatpush.bf16.msra.mxu0 %v4935
    %6431 = vmatpush.bf16.msra.mxu0 %v4928
    %6432 = vmatpush.bf16.msra.mxu0 %v4921
    %6433 = vmatpush.bf16.msra.mxu0 %v4914
    %6434 = vmatpush.bf16.msra.mxu0 %v4907
    %6435 = vmatmul.bf16.gmra.mxu0 %v2902
    %v6436 = vpop.f32.mrf.mxu0
    %v6437 = vadd.f32 %v6423, %v6436
    %v6438 = vpop.f32.mrf.mxu0
    %v6439 = vadd.f32 %v6425, %v6438
    %6440 = vdwg.mxu0
    %6441 = vmatpush.bf16.msra.mxu0 %v5012
    %6442 = vmatpush.bf16.msra.mxu0 %v5005
    %6443 = vmatpush.bf16.msra.mxu0 %v4998
    %6444 = vmatpush.bf16.msra.mxu0 %v4991
    %6445 = vmatpush.bf16.msra.mxu0 %v4984
    %6446 = vmatpush.bf16.msra.mxu0 %v4977
    %6447 = vmatpush.bf16.msra.mxu0 %v4970
    %6448 = vmatpush.bf16.msra.mxu0 %v4963
    %6449 = vmatmul.bf16.gmra.mxu0 %v2903
    %v6450 = vpop.f32.mrf.mxu0
    %v6451 = vadd.f32 %v6437, %v6450
    %v6452 = vpop.f32.mrf.mxu0
    %v6453 = vadd.f32 %v6439, %v6452
    %6454 = vdwg.mxu0
    %6455 = vmatpush.bf16.msra.mxu0 %v5068
    %6456 = vmatpush.bf16.msra.mxu0 %v5061
    %6457 = vmatpush.bf16.msra.mxu0 %v5054
    %6458 = vmatpush.bf16.msra.mxu0 %v5047
    %6459 = vmatpush.bf16.msra.mxu0 %v5040
    %6460 = vmatpush.bf16.msra.mxu0 %v5033
    %6461 = vmatpush.bf16.msra.mxu0 %v5026
    %6462 = vmatpush.bf16.msra.mxu0 %v5019
    %6463 = vmatmul.bf16.gmra.mxu0 %v2904
    %v6464 = vpop.f32.mrf.mxu0
    %v6465 = vadd.f32 %v6451, %v6464
    %v6466 = vpop.f32.mrf.mxu0
    %v6467 = vadd.f32 %v6453, %v6466
    %6468 = vdwg.mxu0
    %6469 = vmatpush.bf16.msra.mxu0 %v5124
    %6470 = vmatpush.bf16.msra.mxu0 %v5117
    %6471 = vmatpush.bf16.msra.mxu0 %v5110
    %6472 = vmatpush.bf16.msra.mxu0 %v5103
    %6473 = vmatpush.bf16.msra.mxu0 %v5096
    %6474 = vmatpush.bf16.msra.mxu0 %v5089
    %6475 = vmatpush.bf16.msra.mxu0 %v5082
    %6476 = vmatpush.bf16.msra.mxu0 %v5075
    %6477 = vmatmul.bf16.gmra.mxu0 %v2905
    %v6478 = vpop.f32.mrf.mxu0
    %v6479 = vadd.f32 %v6465, %v6478
    %v6480 = vpop.f32.mrf.mxu0
    %v6481 = vadd.f32 %v6467, %v6480
    %6482 = vdwg.mxu0
    %6483 = vmatpush.bf16.msra.mxu0 %v5180
    %6484 = vmatpush.bf16.msra.mxu0 %v5173
    %6485 = vmatpush.bf16.msra.mxu0 %v5166
    %6486 = vmatpush.bf16.msra.mxu0 %v5159
    %6487 = vmatpush.bf16.msra.mxu0 %v5152
    %6488 = vmatpush.bf16.msra.mxu0 %v5145
    %6489 = vmatpush.bf16.msra.mxu0 %v5138
    %6490 = vmatpush.bf16.msra.mxu0 %v5131
    %6491 = vmatmul.bf16.gmra.mxu0 %v2906
    %v6492 = vpop.f32.mrf.mxu0
    %v6493 = vadd.f32 %v6479, %v6492
    %v6494 = vpop.f32.mrf.mxu0
    %v6495 = vadd.f32 %v6481, %v6494
    %6496 = vdwg.mxu0
    %6497 = vmatpush.bf16.msra.mxu0 %v5236
    %6498 = vmatpush.bf16.msra.mxu0 %v5229
    %6499 = vmatpush.bf16.msra.mxu0 %v5222
    %6500 = vmatpush.bf16.msra.mxu0 %v5215
    %6501 = vmatpush.bf16.msra.mxu0 %v5208
    %6502 = vmatpush.bf16.msra.mxu0 %v5201
    %6503 = vmatpush.bf16.msra.mxu0 %v5194
    %6504 = vmatpush.bf16.msra.mxu0 %v5187
    %6505 = vmatmul.bf16.gmra.mxu0 %v2907
    %v6506 = vpop.f32.mrf.mxu0
    %v6507 = vadd.f32 %v6493, %v6506
    %v6508 = vpop.f32.mrf.mxu0
    %v6509 = vadd.f32 %v6495, %v6508
    %6510 = vdwg.mxu0
    %6511 = vmatpush.bf16.msra.mxu0 %v5292
    %6512 = vmatpush.bf16.msra.mxu0 %v5285
    %6513 = vmatpush.bf16.msra.mxu0 %v5278
    %6514 = vmatpush.bf16.msra.mxu0 %v5271
    %6515 = vmatpush.bf16.msra.mxu0 %v5264
    %6516 = vmatpush.bf16.msra.mxu0 %v5257
    %6517 = vmatpush.bf16.msra.mxu0 %v5250
    %6518 = vmatpush.bf16.msra.mxu0 %v5243
    %6519 = vmatmul.bf16.gmra.mxu0 %v2908
    %v6520 = vpop.f32.mrf.mxu0
    %v6521 = vadd.f32 %v6507, %v6520
    %v6522 = vpop.f32.mrf.mxu0
    %v6523 = vadd.f32 %v6509, %v6522
    %6524 = vdwg.mxu0
    %v6525 = vtanh.pop %v5849
    %v6526 = vtanh.pop %v5961
    %v6527 = vtanh.pop %v6073
    %v6528 = vtanh.pop %v6185
    %v6529 = vtanh.pop %v6297
    %v6530 = vtanh.pop %v6409
    %v6531 = vtanh.pop %v6521
    %v6532 = vtanh.pop %v5851
    %v6533 = vtanh.pop %v5963
    %v6534 = vtanh.pop %v6075
    %v6535 = vtanh.pop %v6187
    %v6536 = vtanh.pop %v6299
    %v6537 = vtanh.pop %v6411
    %v6538 = vtanh.pop %v6523
    %6539 = vst [vmem:[#allocation17] sm:$0xff] %v6525
    %6540 = vst [vmem:[#allocation17 + $0x8] sm:$0xff] %v6526
    %6541 = vst [vmem:[#allocation17 + $0x10] sm:$0xff] %v6527
    %6542 = vst [vmem:[#allocation17 + $0x18] sm:$0xff] %v6528
    %6543 = vst [vmem:[#allocation17 + $0x20] sm:$0xff] %v6529
    %6544 = vst [vmem:[#allocation17 + $0x28] sm:$0xff] %v6530
    %6545 = vst [vmem:[#allocation17 + $0x30] sm:$0xff] %v6531
    %6546 = vst [vmem:[#allocation17 + $0x38] sm:$0xff] %v6532
    %6547 = vst [vmem:[#allocation17 + $0x40] sm:$0xff] %v6533
    %6548 = vst [vmem:[#allocation17 + $0x48] sm:$0xff] %v6534
    %6549 = vst [vmem:[#allocation17 + $0x50] sm:$0xff] %v6535
    %6550 = vst [vmem:[#allocation17 + $0x58] sm:$0xff] %v6536
    %6551 = vst [vmem:[#allocation17 + $0x60] sm:$0xff] %v6537
    %6552 = vst [vmem:[#allocation17 + $0x68] sm:$0xff] %v6538
    // Predicated region
    $region74: #{tpu_custom_call.1} parent=1 // pred_check
      _
    $region75: #{tpu_custom_call.1} parent=1 // pred_check_branch
      %6554 = sbr.rel (0) target = $region77
    $region76: #{tpu_custom_call.1} parent=1 // pred_region
      %6556 = vsyncadd [#allocation4], 0
      %s6557 = sshll.u32 [#allocation17], 4
      %s6558 = int_to_ptr.vmem [resolvable:$true] %s6557
      %s6559 = sshll.u32 %s9, 4
      %s6560 = int_to_ptr.hbm [resolvable:$true] %s6559
      %6565 = dma.vmem_to_hbm [thread:$0]  %s6558, 1792, %s6560, [#allocation4], 896, 896, 56
    $region77: #{tpu_custom_call.1} parent=1 // pred_fallthru
      _
    // Predicated region
    $region78: #{tpu_custom_call.1} parent=1 // pred_check
      _
    $region79: #{tpu_custom_call.1} parent=1 // pred_check_branch
      %6567 = sbr.rel (0) target = $region81
    $region80: #{tpu_custom_call.1} parent=1 // pred_region
      %6569 = dma.done [#allocation4], 1792
    $region81: #{tpu_custom_call.1} parent=1 // pred_fallthru
      _
    %6570 = vsyncpa [#allocation3], 1
    %6571 = vsyncpa [#allocation6], 1
    %6572 = vsyncpa [#allocation9], 1
    %6573 = vsyncpa [#allocation12], 1
    %6574 = vsyncpa [#allocation15], 1
    %6575 = vsyncpa [#allocation4], 1

// kernel: tpu_custom_call.1
$region0: #{tpu_custom_call.1}
  #allocation0 [shape = 'u32[]', space=smem, size = 0x4, offset = 0x4, fixed_abs, tag = 'smem constant byte address 0x4 - core index']
  #allocation1 [shape = 'u32[72,128]{1,0:T(1,128)}', space=vmem, size = 0x9000, scoped, tag = 'internal scratch']
  %s0 = inlined_call_operand.hbm [shape: bf16[16,128], index: 0, kind: input, shape index: {}]
  %s1 = inlined_call_operand.hbm [shape: bf16[128,256], index: 1, kind: input, shape index: {}]
  %s2 = inlined_call_operand.hbm [shape: f32[1,256], index: 2, kind: input, shape index: {}]
  %s3 = inlined_call_operand.hbm [shape: bf16[256,512], index: 3, kind: input, shape index: {}]
  %s4 = inlined_call_operand.hbm [shape: f32[1,512], index: 4, kind: input, shape index: {}]
  %s5 = inlined_call_operand.hbm [shape: bf16[512,1024], index: 5, kind: input, shape index: {}]
  %s6 = inlined_call_operand.hbm [shape: f32[1,1024], index: 6, kind: input, shape index: {}]
  %s7 = inlined_call_operand.hbm [shape: bf16[1024,896], index: 7, kind: input, shape index: {}]
  %s8 = inlined_call_operand.hbm [shape: f32[1,896], index: 8, kind: input, shape index: {}]
  %s9 = inlined_call_operand.hbm [shape: f32[16,896], index: 9, kind: output, shape index: {}]
  %s10 = sld [smem:[#allocation0]]
  $region82: #{tpu_custom_call.1} parent=0
    _
  %s12 = ssub.s32 1, %s10
  %s13 = scalar_select 0, %s12, %s10
  $region1: #{tpu_custom_call.1} parent=0
    #allocation2 [shape = 'u8[4096]{0}', space=vmem, size = 0x1000, scoped, tag = 'input window, operand 0, single buffered']
    #allocation3 [shape = 's32[1]{0}', space=sflag, size = 0x4, scoped, tag = 'scoped memory for tpu_custom_call.1']
    #allocation4 [shape = 's32[1]{0}', space=sflag, size = 0x4, scoped, tag = 'scoped memory for tpu_custom_call.1']
    #allocation5 [shape = 'u8[65536]{0}', space=vmem, size = 0x10000, scoped, tag = 'input window, operand 1, single buffered']
    #allocation6 [shape = 's32[1]{0}', space=sflag, size = 0x4, scoped, tag = 'scoped memory for tpu_custom_call.1']
    #allocation7 [shape = 'u8[1024]{0}', space=vmem, size = 0x400, scoped, tag = 'input window, operand 2, single buffered']
    #allocation8 [shape = 'u8[262144]{0}', space=vmem, size = 0x40000, scoped, tag = 'input window, operand 3, single buffered']
    #allocation9 [shape = 's32[1]{0}', space=sflag, size = 0x4, scoped, tag = 'scoped memory for tpu_custom_call.1']
    #allocation10 [shape = 'u8[2048]{0}', space=vmem, size = 0x800, scoped, tag = 'input window, operand 4, single buffered']
    #allocation11 [shape = 'u8[1048576]{0}', space=vmem, size = 0x100000, scoped, tag = 'input window, operand 5, single buffered']
    #allocation12 [shape = 's32[1]{0}', space=sflag, size = 0x4, scoped, tag = 'scoped memory for tpu_custom_call.1']
    #allocation13 [shape = 'u8[4096]{0}', space=vmem, size = 0x1000, scoped, tag = 'input window, operand 6, single buffered']
    #allocation14 [shape = 'u8[1835008]{0}', space=vmem, size = 0x1c0000, scoped, tag = 'input window, operand 7, single buffered']
    #allocation15 [shape = 's32[1]{0}', space=sflag, size = 0x4, scoped, tag = 'scoped memory for tpu_custom_call.1']
    #allocation16 [shape = 'u8[3584]{0}', space=vmem, size = 0x1000, scoped, tag = 'input window, operand 8, single buffered']
    #allocation17 [shape = 'u8[57344]{0}', space=vmem, size = 0xe000, scoped, tag = 'output window, operand 0, single buffered']
    %14 = vsyncpa [#allocation3], 0
    %15 = vsyncpa [#allocation6], 0
    %16 = vsyncpa [#allocation9], 0
    %17 = vsyncpa [#allocation12], 0
    %18 = vsyncpa [#allocation15], 0
    %19 = vsyncpa [#allocation4], 0
    // Predicated region
    $region2: #{tpu_custom_call.1} parent=1 // pred_check
      _
    $region3: #{tpu_custom_call.1} parent=1 // pred_check_branch
      %21 = sbr.rel (0) target = $region5
    $region4: #{tpu_custom_call.1} parent=1 // pred_region
      %23 = vsyncadd [#allocation3], 0
      %s24 = sshll.u32 %s0, 4
      %s25 = int_to_ptr.hbm [resolvable:$true] %s24
      %s26 = sshll.u32 [#allocation2], 4
      %s27 = int_to_ptr.vmem [resolvable:$true] %s26
      %32 = dma.hbm_to_vmem [thread:$0]  %s25, 128, %s27, [#allocation3], 64, 64, 4
    $region5: #{tpu_custom_call.1} parent=1 // pred_fallthru
      _
    // Predicated region
    $region6: #{tpu_custom_call.1} parent=1 // pred_check
      _
    $region7: #{tpu_custom_call.1} parent=1 // pred_check_branch
      %34 = sbr.rel (0) target = $region9
    $region8: #{tpu_custom_call.1} parent=1 // pred_region
      %36 = vsyncadd [#allocation6], 0
      %s37 = sshll.u32 %s1, 4
      %s38 = int_to_ptr.hbm [resolvable:$true] %s37
      %s39 = sshll.u32 [#allocation5], 4
      %s40 = int_to_ptr.vmem [resolvable:$true] %s39
      %45 = dma.hbm_to_vmem [thread:$0]  %s38, 2048, %s40, [#allocation6], 128, 128, 8
    $region9: #{tpu_custom_call.1} parent=1 // pred_fallthru
      _
    // Predicated region
    $region10: #{tpu_custom_call.1} parent=1 // pred_check
      _
    $region11: #{tpu_custom_call.1} parent=1 // pred_check_branch
      %47 = sbr.rel (0) target = $region13
    $region12: #{tpu_custom_call.1} parent=1 // pred_region
      %49 = vsyncadd [#allocation6], 0
      %s51 = sshll.u32 %s2, 4
      %s52 = int_to_ptr.hbm [resolvable:$true] %s51
      %s53 = sshll.u32 [#allocation7], 4
      %s54 = int_to_ptr.vmem [resolvable:$true] %s53
      %56 = dma.hbm_to_vmem [thread:$0]  %s52, 32, %s54, [#allocation6]
    $region13: #{tpu_custom_call.1} parent=1 // pred_fallthru
      _
    // Predicated region
    $region14: #{tpu_custom_call.1} parent=1 // pred_check
      _
    $region15: #{tpu_custom_call.1} parent=1 // pred_check_branch
      %58 = sbr.rel (0) target = $region17
    $region16: #{tpu_custom_call.1} parent=1 // pred_region
      %60 = vsyncadd [#allocation9], 0
      %s61 = sshll.u32 %s3, 4
      %s62 = int_to_ptr.hbm [resolvable:$true] %s61
      %s63 = sshll.u32 [#allocation8], 4
      %s64 = int_to_ptr.vmem [resolvable:$true] %s63
      %69 = dma.hbm_to_vmem [thread:$0]  %s62, 8192, %s64, [#allocation9], 256, 256, 16
    $region17: #{tpu_custom_call.1} parent=1 // pred_fallthru
      _
    // Predicated region
    $region18: #{tpu_custom_call.1} parent=1 // pred_check
      _
    $region19: #{tpu_custom_call.1} parent=1 // pred_check_branch
      %71 = sbr.rel (0) target = $region21
    $region20: #{tpu_custom_call.1} parent=1 // pred_region
      %73 = vsyncadd [#allocation9], 0
      %s75 = sshll.u32 %s4, 4
      %s76 = int_to_ptr.hbm [resolvable:$true] %s75
      %s77 = sshll.u32 [#allocation10], 4
      %s78 = int_to_ptr.vmem [resolvable:$true] %s77
      %80 = dma.hbm_to_vmem [thread:$0]  %s76, 64, %s78, [#allocation9]
    $region21: #{tpu_custom_call.1} parent=1 // pred_fallthru
      _
    // Predicated region
    $region22: #{tpu_custom_call.1} parent=1 // pred_check
      _
    $region23: #{tpu_custom_call.1} parent=1 // pred_check_branch
      %82 = sbr.rel (0) target = $region25
    $region24: #{tpu_custom_call.1} parent=1 // pred_region
      %84 = vsyncadd [#allocation12], 0
      %s85 = sshll.u32 %s5, 4
      %s86 = int_to_ptr.hbm [resolvable:$true] %s85
      %s87 = sshll.u32 [#allocation11], 4
      %s88 = int_to_ptr.vmem [resolvable:$true] %s87
      %93 = dma.hbm_to_vmem [thread:$0]  %s86, 32768, %s88, [#allocation12], 512, 512, 32
    $region25: #{tpu_custom_call.1} parent=1 // pred_fallthru
      _
    // Predicated region
    $region26: #{tpu_custom_call.1} parent=1 // pred_check
      _
    $region27: #{tpu_custom_call.1} parent=1 // pred_check_branch
      %95 = sbr.rel (0) target = $region29
    $region28: #{tpu_custom_call.1} parent=1 // pred_region
      %97 = vsyncadd [#allocation12], 0
      %s99 = sshll.u32 %s6, 4
      %s100 = int_to_ptr.hbm [resolvable:$true] %s99
      %s101 = sshll.u32 [#allocation13], 4
      %s102 = int_to_ptr.vmem [resolvable:$true] %s101
      %104 = dma.hbm_to_vmem [thread:$0]  %s100, 128, %s102, [#allocation12]
    $region29: #{tpu_custom_call.1} parent=1 // pred_fallthru
      _
    // Predicated region
    $region30: #{tpu_custom_call.1} parent=1 // pred_check
      _
    $region31: #{tpu_custom_call.1} parent=1 // pred_check_branch
      %106 = sbr.rel (0) target = $region33
    $region32: #{tpu_custom_call.1} parent=1 // pred_region
      %108 = vsyncadd [#allocation15], 0
      %s109 = sshll.u32 %s7, 4
      %s110 = int_to_ptr.hbm [resolvable:$true] %s109
      %s111 = sshll.u32 [#allocation14], 4
      %s112 = int_to_ptr.vmem [resolvable:$true] %s111
      %117 = dma.hbm_to_vmem [thread:$0]  %s110, 57344, %s112, [#allocation15], 448, 448, 28
    $region33: #{tpu_custom_call.1} parent=1 // pred_fallthru
      _
    // Predicated region
    $region34: #{tpu_custom_call.1} parent=1 // pred_check
      _
    $region35: #{tpu_custom_call.1} parent=1 // pred_check_branch
      %119 = sbr.rel (0) target = $region37
    $region36: #{tpu_custom_call.1} parent=1 // pred_region
      %121 = vsyncadd [#allocation15], 0
      %s123 = sshll.u32 %s8, 4
      %s124 = int_to_ptr.hbm [resolvable:$true] %s123
      %s125 = sshll.u32 [#allocation16], 4
      %s126 = int_to_ptr.vmem [resolvable:$true] %s125
      %128 = dma.hbm_to_vmem [thread:$0]  %s124, 112, %s126, [#allocation15]
    $region37: #{tpu_custom_call.1} parent=1 // pred_fallthru
      _
    // Predicated region
    $region38: #{tpu_custom_call.1} parent=1 // pred_check
      _
    $region39: #{tpu_custom_call.1} parent=1 // pred_check_branch
      %130 = sbr.rel (0) target = $region41
    $region40: #{tpu_custom_call.1} parent=1 // pred_region
      %132 = dma.done [#allocation3], 128
    $region41: #{tpu_custom_call.1} parent=1 // pred_fallthru
      _
    // Predicated region
    $region42: #{tpu_custom_call.1} parent=1 // pred_check
      _
    $region43: #{tpu_custom_call.1} parent=1 // pred_check_branch
      %134 = sbr.rel (0) target = $region45
    $region44: #{tpu_custom_call.1} parent=1 // pred_region
      %136 = dma.done [#allocation6], 2048
    $region45: #{tpu_custom_call.1} parent=1 // pred_fallthru
      _
    // Predicated region
    $region46: #{tpu_custom_call.1} parent=1 // pred_check
      _
    $region47: #{tpu_custom_call.1} parent=1 // pred_check_branch
      %138 = sbr.rel (0) target = $region49
    $region48: #{tpu_custom_call.1} parent=1 // pred_region
      %140 = dma.done [#allocation6], 32
    $region49: #{tpu_custom_call.1} parent=1 // pred_fallthru
      _
    // Predicated region
    $region50: #{tpu_custom_call.1} parent=1 // pred_check
      _
    $region51: #{tpu_custom_call.1} parent=1 // pred_check_branch
      %142 = sbr.rel (0) target = $region53
    $region52: #{tpu_custom_call.1} parent=1 // pred_region
      %144 = dma.done [#allocation9], 8192
    $region53: #{tpu_custom_call.1} parent=1 // pred_fallthru
      _
    // Predicated region
    $region54: #{tpu_custom_call.1} parent=1 // pred_check
      _
    $region55: #{tpu_custom_call.1} parent=1 // pred_check_branch
      %146 = sbr.rel (0) target = $region57
    $region56: #{tpu_custom_call.1} parent=1 // pred_region
      %148 = dma.done [#allocation9], 64
    $region57: #{tpu_custom_call.1} parent=1 // pred_fallthru
      _
    // Predicated region
    $region58: #{tpu_custom_call.1} parent=1 // pred_check
      _
    $region59: #{tpu_custom_call.1} parent=1 // pred_check_branch
      %150 = sbr.rel (0) target = $region61
    $region60: #{tpu_custom_call.1} parent=1 // pred_region
      %152 = dma.done [#allocation12], 32768
    $region61: #{tpu_custom_call.1} parent=1 // pred_fallthru
      _
    // Predicated region
    $region62: #{tpu_custom_call.1} parent=1 // pred_check
      _
    $region63: #{tpu_custom_call.1} parent=1 // pred_check_branch
      %154 = sbr.rel (0) target = $region65
    $region64: #{tpu_custom_call.1} parent=1 // pred_region
      %156 = dma.done [#allocation12], 128
    $region65: #{tpu_custom_call.1} parent=1 // pred_fallthru
      _
    // Predicated region
    $region66: #{tpu_custom_call.1} parent=1 // pred_check
      _
    $region67: #{tpu_custom_call.1} parent=1 // pred_check_branch
      %158 = sbr.rel (0) target = $region69
    $region68: #{tpu_custom_call.1} parent=1 // pred_region
      %160 = dma.done [#allocation15], 57344
    $region69: #{tpu_custom_call.1} parent=1 // pred_fallthru
      _
    // Predicated region
    $region70: #{tpu_custom_call.1} parent=1 // pred_check
      _
    $region71: #{tpu_custom_call.1} parent=1 // pred_check_branch
      %162 = sbr.rel (0) target = $region73
    $region72: #{tpu_custom_call.1} parent=1 // pred_region
      %164 = dma.done [#allocation15], 112
    $region73: #{tpu_custom_call.1} parent=1 // pred_fallthru
      _
    %v165 = vld [vmem:[#allocation2] sm:$0xf]
    %v166 = vld [vmem:[#allocation2 + $0x4] sm:$0xf]
    %v167 = vld [vmem:[#allocation5] sm:$0xff]
    %v168 = vld [vmem:[#allocation5 + $0x8] sm:$0xff]
    %v169 = vld [vmem:[#allocation5 + $0x10] sm:$0xff]
    %v170 = vld [vmem:[#allocation5 + $0x18] sm:$0xff]
    %v171 = vld [vmem:[#allocation5 + $0x20] sm:$0xff]
    %v172 = vld [vmem:[#allocation5 + $0x28] sm:$0xff]
    %v173 = vld [vmem:[#allocation5 + $0x30] sm:$0xff]
    %v174 = vld [vmem:[#allocation5 + $0x38] sm:$0xff]
    %v175 = vld [vmem:[#allocation5 + $0x40] sm:$0xff]
    %v176 = vld [vmem:[#allocation5 + $0x48] sm:$0xff]
    %v177 = vld [vmem:[#allocation5 + $0x50] sm:$0xff]
    %v178 = vld [vmem:[#allocation5 + $0x58] sm:$0xff]
    %v179 = vld [vmem:[#allocation5 + $0x60] sm:$0xff]
    %v180 = vld [vmem:[#allocation5 + $0x68] sm:$0xff]
    %v181 = vld [vmem:[#allocation5 + $0x70] sm:$0xff]
    %v182 = vld [vmem:[#allocation5 + $0x78] sm:$0xff]
    %v183 = vld [vmem:[#allocation7] sm:$0x3]
    %v185 = vperm.slane %v183, 0
    %v186 = vperm.slane %v183, 1
    %v191 = vunpack.c.l.b16 %v165
    %v192 = vunpack.c.l.b16 %v166
    %v193 = vpack.c.b16 %v192, %v191
    %v211 = vunpack.c.l.b16 %v167
    %v212 = vunpack.c.h.b16 %v167
    %v213 = vunpack.c.l.b16 %v168
    %v214 = vunpack.c.h.b16 %v168
    %v215 = vunpack.c.l.b16 %v169
    %v216 = vunpack.c.h.b16 %v169
    %v217 = vunpack.c.l.b16 %v170
    %v218 = vunpack.c.h.b16 %v170
    %v219 = vunpack.c.l.b16 %v171
    %v220 = vunpack.c.h.b16 %v171
    %v221 = vunpack.c.l.b16 %v172
    %v222 = vunpack.c.h.b16 %v172
    %v223 = vunpack.c.l.b16 %v173
    %v224 = vunpack.c.h.b16 %v173
    %v225 = vunpack.c.l.b16 %v174
    %v226 = vunpack.c.h.b16 %v174
    %v227 = vunpack.c.l.b16 %v175
    %v228 = vunpack.c.h.b16 %v175
    %v229 = vunpack.c.l.b16 %v176
    %v230 = vunpack.c.h.b16 %v176
    %v231 = vunpack.c.l.b16 %v177
    %v232 = vunpack.c.h.b16 %v177
    %v233 = vunpack.c.l.b16 %v178
    %v234 = vunpack.c.h.b16 %v178
    %v235 = vunpack.c.l.b16 %v179
    %v236 = vunpack.c.h.b16 %v179
    %v237 = vunpack.c.l.b16 %v180
    %v238 = vunpack.c.h.b16 %v180
    %v239 = vunpack.c.l.b16 %v181
    %v240 = vunpack.c.h.b16 %v181
    %v241 = vunpack.c.l.b16 %v182
    %v242 = vunpack.c.h.b16 %v182
    %v243 = vpack.c.b16 %v213, %v211
    %v244 = vpack.c.b16 %v214, %v212
    %v245 = vpack.c.b16 %v217, %v215
    %v246 = vpack.c.b16 %v218, %v216
    %v247 = vpack.c.b16 %v221, %v219
    %v248 = vpack.c.b16 %v222, %v220
    %v249 = vpack.c.b16 %v225, %v223
    %v250 = vpack.c.b16 %v226, %v224
    %v251 = vpack.c.b16 %v229, %v227
    %v252 = vpack.c.b16 %v230, %v228
    %v253 = vpack.c.b16 %v233, %v231
    %v254 = vpack.c.b16 %v234, %v232
    %v255 = vpack.c.b16 %v237, %v235
    %v256 = vpack.c.b16 %v238, %v236
    %v257 = vpack.c.b16 %v241, %v239
    %v258 = vpack.c.b16 %v242, %v240
    %275 = vmatpush.bf16.msra.mxu0 %v257
    %276 = vmatpush.bf16.msra.mxu0 %v255
    %277 = vmatpush.bf16.msra.mxu0 %v253
    %278 = vmatpush.bf16.msra.mxu0 %v251
    %279 = vmatpush.bf16.msra.mxu0 %v249
    %280 = vmatpush.bf16.msra.mxu0 %v247
    %281 = vmatpush.bf16.msra.mxu0 %v245
    %282 = vmatpush.bf16.msra.mxu0 %v243
    %283 = vmatmul.bf16.gmra.mxu0 %v193
    %v284 = vpop.f32.mrf.mxu0
    %v285 = vadd.f32 %v185, %v284
    %v286 = vpop.f32.mrf.mxu0
    %v287 = vadd.f32 %v185, %v286
    %288 = vdwg.mxu0
    %289 = vmatpush.bf16.msra.mxu0 %v258
    %290 = vmatpush.bf16.msra.mxu0 %v256
    %291 = vmatpush.bf16.msra.mxu0 %v254
    %292 = vmatpush.bf16.msra.mxu0 %v252
    %293 = vmatpush.bf16.msra.mxu0 %v250
    %294 = vmatpush.bf16.msra.mxu0 %v248
    %295 = vmatpush.bf16.msra.mxu0 %v246
    %296 = vmatpush.bf16.msra.mxu0 %v244
    %297 = vmatmul.bf16.gmra.mxu0 %v193
    %v298 = vpop.f32.mrf.mxu0
    %v299 = vadd.f32 %v186, %v298
    %v300 = vpop.f32.mrf.mxu0
    %v301 = vadd.f32 %v186, %v300
    %302 = vdwg.mxu0
    %vm303 = vcmp.gt.f32.partialorder %v285, 0.0
    %vm304 = vcmp.gt.f32.partialorder %v299, 0.0
    %vm305 = vcmp.gt.f32.partialorder %v287, 0.0
    %vm306 = vcmp.gt.f32.partialorder %v301, 0.0
    %v307 = vmul.f32 %v285, 0.2
    %v308 = vmul.f32 %v299, 0.2
    %v309 = vmul.f32 %v287, 0.2
    %v310 = vmul.f32 %v301, 0.2
    %v311 = vsel %vm303, %v285, %v307
    %v312 = vsel %vm304, %v299, %v308
    %v313 = vsel %vm305, %v287, %v309
    %v314 = vsel %vm306, %v301, %v310
    %v315 = vpack.c.bf16 %v313, %v311
    %v316 = vpack.c.bf16 %v314, %v312
    %v317 = vld [vmem:[#allocation8] sm:$0xff]
    %v318 = vld [vmem:[#allocation8 + $0x8] sm:$0xff]
    %v319 = vld [vmem:[#allocation8 + $0x10] sm:$0xff]
    %v320 = vld [vmem:[#allocation8 + $0x18] sm:$0xff]
    %v321 = vld [vmem:[#allocation8 + $0x20] sm:$0xff]
    %v322 = vld [vmem:[#allocation8 + $0x28] sm:$0xff]
    %v323 = vld [vmem:[#allocation8 + $0x30] sm:$0xff]
    %v324 = vld [vmem:[#allocation8 + $0x38] sm:$0xff]
    %v325 = vld [vmem:[#allocation8 + $0x40] sm:$0xff]
    %v326 = vld [vmem:[#allocation8 + $0x48] sm:$0xff]
    %v327 = vld [vmem:[#allocation8 + $0x50] sm:$0xff]
    %v328 = vld [vmem:[#allocation8 + $0x58] sm:$0xff]
    %v329 = vld [vmem:[#allocation8 + $0x60] sm:$0xff]
    %v330 = vld [vmem:[#allocation8 + $0x68] sm:$0xff]
    %v331 = vld [vmem:[#allocation8 + $0x70] sm:$0xff]
    %v332 = vld [vmem:[#allocation8 + $0x78] sm:$0xff]
    %v333 = vld [vmem:[#allocation8 + $0x80] sm:$0xff]
    %v334 = vld [vmem:[#allocation8 + $0x88] sm:$0xff]
    %v335 = vld [vmem:[#allocation8 + $0x90] sm:$0xff]
    %v336 = vld [vmem:[#allocation8 + $0x98] sm:$0xff]
    %v337 = vld [vmem:[#allocation8 + $0xa0] sm:$0xff]
    %v338 = vld [vmem:[#allocation8 + $0xa8] sm:$0xff]
    %v339 = vld [vmem:[#allocation8 + $0xb0] sm:$0xff]
    %v340 = vld [vmem:[#allocation8 + $0xb8] sm:$0xff]
    %v341 = vld [vmem:[#allocation8 + $0xc0] sm:$0xff]
    %v342 = vld [vmem:[#allocation8 + $0xc8] sm:$0xff]
    %v343 = vld [vmem:[#allocation8 + $0xd0] sm:$0xff]
    %v344 = vld [vmem:[#allocation8 + $0xd8] sm:$0xff]
    %v345 = vld [vmem:[#allocation8 + $0xe0] sm:$0xff]
    %v346 = vld [vmem:[#allocation8 + $0xe8] sm:$0xff]
    %v347 = vld [vmem:[#allocation8 + $0xf0] sm:$0xff]
    %v348 = vld [vmem:[#allocation8 + $0xf8] sm:$0xff]
    %v349 = vld [vmem:[#allocation8 + $0x100] sm:$0xff]
    %v350 = vld [vmem:[#allocation8 + $0x108] sm:$0xff]
    %v351 = vld [vmem:[#allocation8 + $0x110] sm:$0xff]
    %v352 = vld [vmem:[#allocation8 + $0x118] sm:$0xff]
    %v353 = vld [vmem:[#allocation8 + $0x120] sm:$0xff]
    %v354 = vld [vmem:[#allocation8 + $0x128] sm:$0xff]
    %v355 = vld [vmem:[#allocation8 + $0x130] sm:$0xff]
    %v356 = vld [vmem:[#allocation8 + $0x138] sm:$0xff]
    %v357 = vld [vmem:[#allocation8 + $0x140] sm:$0xff]
    %v358 = vld [vmem:[#allocation8 + $0x148] sm:$0xff]
    %v359 = vld [vmem:[#allocation8 + $0x150] sm:$0xff]
    %v360 = vld [vmem:[#allocation8 + $0x158] sm:$0xff]
    %v361 = vld [vmem:[#allocation8 + $0x160] sm:$0xff]
    %v362 = vld [vmem:[#allocation8 + $0x168] sm:$0xff]
    %v363 = vld [vmem:[#allocation8 + $0x170] sm:$0xff]
    %v364 = vld [vmem:[#allocation8 + $0x178] sm:$0xff]
    %v365 = vld [vmem:[#allocation8 + $0x180] sm:$0xff]
    %v366 = vld [vmem:[#allocation8 + $0x188] sm:$0xff]
    %v367 = vld [vmem:[#allocation8 + $0x190] sm:$0xff]
    %v368 = vld [vmem:[#allocation8 + $0x198] sm:$0xff]
    %v369 = vld [vmem:[#allocation8 + $0x1a0] sm:$0xff]
    %v370 = vld [vmem:[#allocation8 + $0x1a8] sm:$0xff]
    %v371 = vld [vmem:[#allocation8 + $0x1b0] sm:$0xff]
    %v372 = vld [vmem:[#allocation8 + $0x1b8] sm:$0xff]
    %v373 = vld [vmem:[#allocation8 + $0x1c0] sm:$0xff]
    %v374 = vld [vmem:[#allocation8 + $0x1c8] sm:$0xff]
    %v375 = vld [vmem:[#allocation8 + $0x1d0] sm:$0xff]
    %v376 = vld [vmem:[#allocation8 + $0x1d8] sm:$0xff]
    %v377 = vld [vmem:[#allocation8 + $0x1e0] sm:$0xff]
    %v378 = vld [vmem:[#allocation8 + $0x1e8] sm:$0xff]
    %v379 = vld [vmem:[#allocation8 + $0x1f0] sm:$0xff]
    %v380 = vld [vmem:[#allocation8 + $0x1f8] sm:$0xff]
    %v381 = vld [vmem:[#allocation10] sm:$0xf]
    %v383 = vperm.slane %v381, 0
    %v384 = vperm.slane %v381, 1
    %v385 = vperm.slane %v381, 2
    %v386 = vperm.slane %v381, 3
    %v455 = vunpack.c.l.b16 %v317
    %v456 = vunpack.c.h.b16 %v317
    %v457 = vunpack.c.l.b16 %v318
    %v458 = vunpack.c.h.b16 %v318
    %v459 = vunpack.c.l.b16 %v319
    %v460 = vunpack.c.h.b16 %v319
    %v461 = vunpack.c.l.b16 %v320
    %v462 = vunpack.c.h.b16 %v320
    %v463 = vunpack.c.l.b16 %v321
    %v464 = vunpack.c.h.b16 %v321
    %v465 = vunpack.c.l.b16 %v322
    %v466 = vunpack.c.h.b16 %v322
    %v467 = vunpack.c.l.b16 %v323
    %v468 = vunpack.c.h.b16 %v323
    %v469 = vunpack.c.l.b16 %v324
    %v470 = vunpack.c.h.b16 %v324
    %v471 = vunpack.c.l.b16 %v325
    %v472 = vunpack.c.h.b16 %v325
    %v473 = vunpack.c.l.b16 %v326
    %v474 = vunpack.c.h.b16 %v326
    %v475 = vunpack.c.l.b16 %v327
    %v476 = vunpack.c.h.b16 %v327
    %v477 = vunpack.c.l.b16 %v328
    %v478 = vunpack.c.h.b16 %v328
    %v479 = vunpack.c.l.b16 %v329
    %v480 = vunpack.c.h.b16 %v329
    %v481 = vunpack.c.l.b16 %v330
    %v482 = vunpack.c.h.b16 %v330
    %v483 = vunpack.c.l.b16 %v331
    %v484 = vunpack.c.h.b16 %v331
    %v485 = vunpack.c.l.b16 %v332
    %v486 = vunpack.c.h.b16 %v332
    %v487 = vunpack.c.l.b16 %v333
    %v488 = vunpack.c.h.b16 %v333
    %v489 = vunpack.c.l.b16 %v334
    %v490 = vunpack.c.h.b16 %v334
    %v491 = vunpack.c.l.b16 %v335
    %v492 = vunpack.c.h.b16 %v335
    %v493 = vunpack.c.l.b16 %v336
    %v494 = vunpack.c.h.b16 %v336
    %v495 = vunpack.c.l.b16 %v337
    %v496 = vunpack.c.h.b16 %v337
    %v497 = vunpack.c.l.b16 %v338
    %v498 = vunpack.c.h.b16 %v338
    %v499 = vunpack.c.l.b16 %v339
    %v500 = vunpack.c.h.b16 %v339
    %v501 = vunpack.c.l.b16 %v340
    %v502 = vunpack.c.h.b16 %v340
    %v503 = vunpack.c.l.b16 %v341
    %v504 = vunpack.c.h.b16 %v341
    %v505 = vunpack.c.l.b16 %v342
    %v506 = vunpack.c.h.b16 %v342
    %v507 = vunpack.c.l.b16 %v343
    %v508 = vunpack.c.h.b16 %v343
    %v509 = vunpack.c.l.b16 %v344
    %v510 = vunpack.c.h.b16 %v344
    %v511 = vunpack.c.l.b16 %v345
    %v512 = vunpack.c.h.b16 %v345
    %v513 = vunpack.c.l.b16 %v346
    %v514 = vunpack.c.h.b16 %v346
    %v515 = vunpack.c.l.b16 %v347
    %v516 = vunpack.c.h.b16 %v347
    %v517 = vunpack.c.l.b16 %v348
    %v518 = vunpack.c.h.b16 %v348
    %v519 = vunpack.c.l.b16 %v349
    %v520 = vunpack.c.h.b16 %v349
    %v521 = vunpack.c.l.b16 %v350
    %v522 = vunpack.c.h.b16 %v350
    %v523 = vunpack.c.l.b16 %v351
    %v524 = vunpack.c.h.b16 %v351
    %v525 = vunpack.c.l.b16 %v352
    %v526 = vunpack.c.h.b16 %v352
    %v527 = vunpack.c.l.b16 %v353
    %v528 = vunpack.c.h.b16 %v353
    %v529 = vunpack.c.l.b16 %v354
    %v530 = vunpack.c.h.b16 %v354
    %v531 = vunpack.c.l.b16 %v355
    %v532 = vunpack.c.h.b16 %v355
    %v533 = vunpack.c.l.b16 %v356
    %v534 = vunpack.c.h.b16 %v356
    %v535 = vunpack.c.l.b16 %v357
    %v536 = vunpack.c.h.b16 %v357
    %v537 = vunpack.c.l.b16 %v358
    %v538 = vunpack.c.h.b16 %v358
    %v539 = vunpack.c.l.b16 %v359
    %v540 = vunpack.c.h.b16 %v359
    %v541 = vunpack.c.l.b16 %v360
    %v542 = vunpack.c.h.b16 %v360
    %v543 = vunpack.c.l.b16 %v361
    %v544 = vunpack.c.h.b16 %v361
    %v545 = vunpack.c.l.b16 %v362
    %v546 = vunpack.c.h.b16 %v362
    %v547 = vunpack.c.l.b16 %v363
    %v548 = vunpack.c.h.b16 %v363
    %v549 = vunpack.c.l.b16 %v364
    %v550 = vunpack.c.h.b16 %v364
    %v551 = vunpack.c.l.b16 %v365
    %v552 = vunpack.c.h.b16 %v365
    %v553 = vunpack.c.l.b16 %v366
    %v554 = vunpack.c.h.b16 %v366
    %v555 = vunpack.c.l.b16 %v367
    %v556 = vunpack.c.h.b16 %v367
    %v557 = vunpack.c.l.b16 %v368
    %v558 = vunpack.c.h.b16 %v368
    %v559 = vunpack.c.l.b16 %v369
    %v560 = vunpack.c.h.b16 %v369
    %v561 = vunpack.c.l.b16 %v370
    %v562 = vunpack.c.h.b16 %v370
    %v563 = vunpack.c.l.b16 %v371
    %v564 = vunpack.c.h.b16 %v371
    %v565 = vunpack.c.l.b16 %v372
    %v566 = vunpack.c.h.b16 %v372
    %v567 = vunpack.c.l.b16 %v373
    %v568 = vunpack.c.h.b16 %v373
    %v569 = vunpack.c.l.b16 %v374
    %v570 = vunpack.c.h.b16 %v374
    %v571 = vunpack.c.l.b16 %v375
    %v572 = vunpack.c.h.b16 %v375
    %v573 = vunpack.c.l.b16 %v376
    %v574 = vunpack.c.h.b16 %v376
    %v575 = vunpack.c.l.b16 %v377
    %v576 = vunpack.c.h.b16 %v377
    %v577 = vunpack.c.l.b16 %v378
    %v578 = vunpack.c.h.b16 %v378
    %v579 = vunpack.c.l.b16 %v379
    %v580 = vunpack.c.h.b16 %v379
    %v581 = vunpack.c.l.b16 %v380
    %v582 = vunpack.c.h.b16 %v380
    %v583 = vpack.c.b16 %v459, %v455
    %v584 = vpack.c.b16 %v460, %v456
    %v585 = vpack.c.b16 %v461, %v457
    %v586 = vpack.c.b16 %v462, %v458
    %v587 = vpack.c.b16 %v467, %v463
    %v588 = vpack.c.b16 %v468, %v464
    %v589 = vpack.c.b16 %v469, %v465
    %v590 = vpack.c.b16 %v470, %v466
    %v591 = vpack.c.b16 %v475, %v471
    %v592 = vpack.c.b16 %v476, %v472
    %v593 = vpack.c.b16 %v477, %v473
    %v594 = vpack.c.b16 %v478, %v474
    %v595 = vpack.c.b16 %v483, %v479
    %v596 = vpack.c.b16 %v484, %v480
    %v597 = vpack.c.b16 %v485, %v481
    %v598 = vpack.c.b16 %v486, %v482
    %v599 = vpack.c.b16 %v491, %v487
    %v600 = vpack.c.b16 %v492, %v488
    %v601 = vpack.c.b16 %v493, %v489
    %v602 = vpack.c.b16 %v494, %v490
    %v603 = vpack.c.b16 %v499, %v495
    %v604 = vpack.c.b16 %v500, %v496
    %v605 = vpack.c.b16 %v501, %v497
    %v606 = vpack.c.b16 %v502, %v498
    %v607 = vpack.c.b16 %v507, %v503
    %v608 = vpack.c.b16 %v508, %v504
    %v609 = vpack.c.b16 %v509, %v505
    %v610 = vpack.c.b16 %v510, %v506
    %v611 = vpack.c.b16 %v515, %v511
    %v612 = vpack.c.b16 %v516, %v512
    %v613 = vpack.c.b16 %v517, %v513
    %v614 = vpack.c.b16 %v518, %v514
    %v615 = vpack.c.b16 %v523, %v519
    %v616 = vpack.c.b16 %v524, %v520
    %v617 = vpack.c.b16 %v525, %v521
    %v618 = vpack.c.b16 %v526, %v522
    %v619 = vpack.c.b16 %v531, %v527
    %v620 = vpack.c.b16 %v532, %v528
    %v621 = vpack.c.b16 %v533, %v529
    %v622 = vpack.c.b16 %v534, %v530
    %v623 = vpack.c.b16 %v539, %v535
    %v624 = vpack.c.b16 %v540, %v536
    %v625 = vpack.c.b16 %v541, %v537
    %v626 = vpack.c.b16 %v542, %v538
    %v627 = vpack.c.b16 %v547, %v543
    %v628 = vpack.c.b16 %v548, %v544
    %v629 = vpack.c.b16 %v549, %v545
    %v630 = vpack.c.b16 %v550, %v546
    %v631 = vpack.c.b16 %v555, %v551
    %v632 = vpack.c.b16 %v556, %v552
    %v633 = vpack.c.b16 %v557, %v553
    %v634 = vpack.c.b16 %v558, %v554
    %v635 = vpack.c.b16 %v563, %v559
    %v636 = vpack.c.b16 %v564, %v560
    %v637 = vpack.c.b16 %v565, %v561
    %v638 = vpack.c.b16 %v566, %v562
    %v639 = vpack.c.b16 %v571, %v567
    %v640 = vpack.c.b16 %v572, %v568
    %v641 = vpack.c.b16 %v573, %v569
    %v642 = vpack.c.b16 %v574, %v570
    %v643 = vpack.c.b16 %v579, %v575
    %v644 = vpack.c.b16 %v580, %v576
    %v645 = vpack.c.b16 %v581, %v577
    %v646 = vpack.c.b16 %v582, %v578
    %711 = vmatpush.bf16.msra.mxu0 %v611
    %712 = vmatpush.bf16.msra.mxu0 %v607
    %713 = vmatpush.bf16.msra.mxu0 %v603
    %714 = vmatpush.bf16.msra.mxu0 %v599
    %715 = vmatpush.bf16.msra.mxu0 %v595
    %716 = vmatpush.bf16.msra.mxu0 %v591
    %717 = vmatpush.bf16.msra.mxu0 %v587
    %718 = vmatpush.bf16.msra.mxu0 %v583
    %719 = vmatmul.bf16.gmra.mxu0 %v315
    %v720 = vpop.f32.mrf.mxu0
    %v721 = vadd.f32 %v383, %v720
    %v722 = vpop.f32.mrf.mxu0
    %v723 = vadd.f32 %v383, %v722
    %724 = vdwg.mxu0
    %725 = vmatpush.bf16.msra.mxu0 %v643
    %726 = vmatpush.bf16.msra.mxu0 %v639
    %727 = vmatpush.bf16.msra.mxu0 %v635
    %728 = vmatpush.bf16.msra.mxu0 %v631
    %729 = vmatpush.bf16.msra.mxu0 %v627
    %730 = vmatpush.bf16.msra.mxu0 %v623
    %731 = vmatpush.bf16.msra.mxu0 %v619
    %732 = vmatpush.bf16.msra.mxu0 %v615
    %733 = vmatmul.bf16.gmra.mxu0 %v316
    %v734 = vpop.f32.mrf.mxu0
    %v735 = vadd.f32 %v721, %v734
    %v736 = vpop.f32.mrf.mxu0
    %v737 = vadd.f32 %v723, %v736
    %738 = vdwg.mxu0
    %739 = vmatpush.bf16.msra.mxu0 %v612
    %740 = vmatpush.bf16.msra.mxu0 %v608
    %741 = vmatpush.bf16.msra.mxu0 %v604
    %742 = vmatpush.bf16.msra.mxu0 %v600
    %743 = vmatpush.bf16.msra.mxu0 %v596
    %744 = vmatpush.bf16.msra.mxu0 %v592
    %745 = vmatpush.bf16.msra.mxu0 %v588
    %746 = vmatpush.bf16.msra.mxu0 %v584
    %747 = vmatmul.bf16.gmra.mxu0 %v315
    %v748 = vpop.f32.mrf.mxu0
    %v749 = vadd.f32 %v384, %v748
    %v750 = vpop.f32.mrf.mxu0
    %v751 = vadd.f32 %v384, %v750
    %752 = vdwg.mxu0
    %753 = vmatpush.bf16.msra.mxu0 %v644
    %754 = vmatpush.bf16.msra.mxu0 %v640
    %755 = vmatpush.bf16.msra.mxu0 %v636
    %756 = vmatpush.bf16.msra.mxu0 %v632
    %757 = vmatpush.bf16.msra.mxu0 %v628
    %758 = vmatpush.bf16.msra.mxu0 %v624
    %759 = vmatpush.bf16.msra.mxu0 %v620
    %760 = vmatpush.bf16.msra.mxu0 %v616
    %761 = vmatmul.bf16.gmra.mxu0 %v316
    %v762 = vpop.f32.mrf.mxu0
    %v763 = vadd.f32 %v749, %v762
    %v764 = vpop.f32.mrf.mxu0
    %v765 = vadd.f32 %v751, %v764
    %766 = vdwg.mxu0
    %767 = vmatpush.bf16.msra.mxu0 %v613
    %768 = vmatpush.bf16.msra.mxu0 %v609
    %769 = vmatpush.bf16.msra.mxu0 %v605
    %770 = vmatpush.bf16.msra.mxu0 %v601
    %771 = vmatpush.bf16.msra.mxu0 %v597
    %772 = vmatpush.bf16.msra.mxu0 %v593
    %773 = vmatpush.bf16.msra.mxu0 %v589
    %774 = vmatpush.bf16.msra.mxu0 %v585
    %775 = vmatmul.bf16.gmra.mxu0 %v315
    %v776 = vpop.f32.mrf.mxu0
    %v777 = vadd.f32 %v385, %v776
    %v778 = vpop.f32.mrf.mxu0
    %v779 = vadd.f32 %v385, %v778
    %780 = vdwg.mxu0
    %781 = vmatpush.bf16.msra.mxu0 %v645
    %782 = vmatpush.bf16.msra.mxu0 %v641
    %783 = vmatpush.bf16.msra.mxu0 %v637
    %784 = vmatpush.bf16.msra.mxu0 %v633
    %785 = vmatpush.bf16.msra.mxu0 %v629
    %786 = vmatpush.bf16.msra.mxu0 %v625
    %787 = vmatpush.bf16.msra.mxu0 %v621
    %788 = vmatpush.bf16.msra.mxu0 %v617
    %789 = vmatmul.bf16.gmra.mxu0 %v316
    %v790 = vpop.f32.mrf.mxu0
    %v791 = vadd.f32 %v777, %v790
    %v792 = vpop.f32.mrf.mxu0
    %v793 = vadd.f32 %v779, %v792
    %794 = vdwg.mxu0
    %795 = vmatpush.bf16.msra.mxu0 %v614
    %796 = vmatpush.bf16.msra.mxu0 %v610
    %797 = vmatpush.bf16.msra.mxu0 %v606
    %798 = vmatpush.bf16.msra.mxu0 %v602
    %799 = vmatpush.bf16.msra.mxu0 %v598
    %800 = vmatpush.bf16.msra.mxu0 %v594
    %801 = vmatpush.bf16.msra.mxu0 %v590
    %802 = vmatpush.bf16.msra.mxu0 %v586
    %803 = vmatmul.bf16.gmra.mxu0 %v315
    %v804 = vpop.f32.mrf.mxu0
    %v805 = vadd.f32 %v386, %v804
    %v806 = vpop.f32.mrf.mxu0
    %v807 = vadd.f32 %v386, %v806
    %808 = vdwg.mxu0
    %809 = vmatpush.bf16.msra.mxu0 %v646
    %810 = vmatpush.bf16.msra.mxu0 %v642
    %811 = vmatpush.bf16.msra.mxu0 %v638
    %812 = vmatpush.bf16.msra.mxu0 %v634
    %813 = vmatpush.bf16.msra.mxu0 %v630
    %814 = vmatpush.bf16.msra.mxu0 %v626
    %815 = vmatpush.bf16.msra.mxu0 %v622
    %816 = vmatpush.bf16.msra.mxu0 %v618
    %817 = vmatmul.bf16.gmra.mxu0 %v316
    %v818 = vpop.f32.mrf.mxu0
    %v819 = vadd.f32 %v805, %v818
    %v820 = vpop.f32.mrf.mxu0
    %v821 = vadd.f32 %v807, %v820
    %822 = vdwg.mxu0
    %vm823 = vcmp.gt.f32.partialorder %v735, 0.0
    %vm824 = vcmp.gt.f32.partialorder %v763, 0.0
    %vm825 = vcmp.gt.f32.partialorder %v791, 0.0
    %vm826 = vcmp.gt.f32.partialorder %v819, 0.0
    %vm827 = vcmp.gt.f32.partialorder %v737, 0.0
    %vm828 = vcmp.gt.f32.partialorder %v765, 0.0
    %vm829 = vcmp.gt.f32.partialorder %v793, 0.0
    %vm830 = vcmp.gt.f32.partialorder %v821, 0.0
    %v831 = vmul.f32 %v735, 0.2
    %v832 = vmul.f32 %v763, 0.2
    %v833 = vmul.f32 %v791, 0.2
    %v834 = vmul.f32 %v819, 0.2
    %v835 = vmul.f32 %v737, 0.2
    %v836 = vmul.f32 %v765, 0.2
    %v837 = vmul.f32 %v793, 0.2
    %v838 = vmul.f32 %v821, 0.2
    %v839 = vsel %vm823, %v735, %v831
    %v840 = vsel %vm824, %v763, %v832
    %v841 = vsel %vm825, %v791, %v833
    %v842 = vsel %vm826, %v819, %v834
    %v843 = vsel %vm827, %v737, %v835
    %v844 = vsel %vm828, %v765, %v836
    %v845 = vsel %vm829, %v793, %v837
    %v846 = vsel %vm830, %v821, %v838
    %v847 = vpack.c.bf16 %v843, %v839
    %v848 = vpack.c.bf16 %v844, %v840
    %v849 = vpack.c.bf16 %v845, %v841
    %v850 = vpack.c.bf16 %v846, %v842
    %v851 = vld [vmem:[#allocation11] sm:$0xff]
    %v852 = vld [vmem:[#allocation11 + $0x8] sm:$0xff]
    %v853 = vld [vmem:[#allocation11 + $0x10] sm:$0xff]
    %v854 = vld [vmem:[#allocation11 + $0x18] sm:$0xff]
    %v855 = vld [vmem:[#allocation11 + $0x20] sm:$0xff]
    %v856 = vld [vmem:[#allocation11 + $0x28] sm:$0xff]
    %v857 = vld [vmem:[#allocation11 + $0x30] sm:$0xff]
    %v858 = vld [vmem:[#allocation11 + $0x38] sm:$0xff]
    %v859 = vld [vmem:[#allocation11 + $0x40] sm:$0xff]
    %v860 = vld [vmem:[#allocation11 + $0x48] sm:$0xff]
    %v861 = vld [vmem:[#allocation11 + $0x50] sm:$0xff]
    %v862 = vld [vmem:[#allocation11 + $0x58] sm:$0xff]
    %v863 = vld [vmem:[#allocation11 + $0x60] sm:$0xff]
    %v864 = vld [vmem:[#allocation11 + $0x68] sm:$0xff]
    %v865 = vld [vmem:[#allocation11 + $0x70] sm:$0xff]
    %v866 = vld [vmem:[#allocation11 + $0x78] sm:$0xff]
    %v867 = vld [vmem:[#allocation11 + $0x80] sm:$0xff]
    %v868 = vld [vmem:[#allocation11 + $0x88] sm:$0xff]
    %v869 = vld [vmem:[#allocation11 + $0x90] sm:$0xff]
    %v870 = vld [vmem:[#allocation11 + $0x98] sm:$0xff]
    %v871 = vld [vmem:[#allocation11 + $0xa0] sm:$0xff]
    %v872 = vld [vmem:[#allocation11 + $0xa8] sm:$0xff]
    %v873 = vld [vmem:[#allocation11 + $0xb0] sm:$0xff]
    %v874 = vld [vmem:[#allocation11 + $0xb8] sm:$0xff]
    %v875 = vld [vmem:[#allocation11 + $0xc0] sm:$0xff]
    %v876 = vld [vmem:[#allocation11 + $0xc8] sm:$0xff]
    %v877 = vld [vmem:[#allocation11 + $0xd0] sm:$0xff]
    %v878 = vld [vmem:[#allocation11 + $0xd8] sm:$0xff]
    %v879 = vld [vmem:[#allocation11 + $0xe0] sm:$0xff]
    %v880 = vld [vmem:[#allocation11 + $0xe8] sm:$0xff]
    %v881 = vld [vmem:[#allocation11 + $0xf0] sm:$0xff]
    %v882 = vld [vmem:[#allocation11 + $0xf8] sm:$0xff]
    %v883 = vld [vmem:[#allocation11 + $0x100] sm:$0xff]
    %v884 = vld [vmem:[#allocation11 + $0x108] sm:$0xff]
    %v885 = vld [vmem:[#allocation11 + $0x110] sm:$0xff]
    %v886 = vld [vmem:[#allocation11 + $0x118] sm:$0xff]
    %v887 = vld [vmem:[#allocation11 + $0x120] sm:$0xff]
    %v888 = vld [vmem:[#allocation11 + $0x128] sm:$0xff]
    %v889 = vld [vmem:[#allocation11 + $0x130] sm:$0xff]
    %v890 = vld [vmem:[#allocation11 + $0x138] sm:$0xff]
    %v891 = vld [vmem:[#allocation11 + $0x140] sm:$0xff]
    %v892 = vld [vmem:[#allocation11 + $0x148] sm:$0xff]
    %v893 = vld [vmem:[#allocation11 + $0x150] sm:$0xff]
    %v894 = vld [vmem:[#allocation11 + $0x158] sm:$0xff]
    %v895 = vld [vmem:[#allocation11 + $0x160] sm:$0xff]
    %v896 = vld [vmem:[#allocation11 + $0x168] sm:$0xff]
    %v897 = vld [vmem:[#allocation11 + $0x170] sm:$0xff]
    %v898 = vld [vmem:[#allocation11 + $0x178] sm:$0xff]
    %v899 = vld [vmem:[#allocation11 + $0x180] sm:$0xff]
    %v900 = vld [vmem:[#allocation11 + $0x188] sm:$0xff]
    %v901 = vld [vmem:[#allocation11 + $0x190] sm:$0xff]
    %v902 = vld [vmem:[#allocation11 + $0x198] sm:$0xff]
    %v903 = vld [vmem:[#allocation11 + $0x1a0] sm:$0xff]
    %v904 = vld [vmem:[#allocation11 + $0x1a8] sm:$0xff]
    %v905 = vld [vmem:[#allocation11 + $0x1b0] sm:$0xff]
    %v906 = vld [vmem:[#allocation11 + $0x1b8] sm:$0xff]
    %v907 = vld [vmem:[#allocation11 + $0x1c0] sm:$0xff]
    %v908 = vld [vmem:[#allocation11 + $0x1c8] sm:$0xff]
    %v909 = vld [vmem:[#allocation11 + $0x1d0] sm:$0xff]
    %v910 = vld [vmem:[#allocation11 + $0x1d8] sm:$0xff]
    %v911 = vld [vmem:[#allocation11 + $0x1e0] sm:$0xff]
    %v912 = vld [vmem:[#allocation11 + $0x1e8] sm:$0xff]
    %v913 = vld [vmem:[#allocation11 + $0x1f0] sm:$0xff]
    %v914 = vld [vmem:[#allocation11 + $0x1f8] sm:$0xff]
    %v915 = vld [vmem:[#allocation11 + $0x200] sm:$0xff]
    %v916 = vld [vmem:[#allocation11 + $0x208] sm:$0xff]
    %v917 = vld [vmem:[#allocation11 + $0x210] sm:$0xff]
    %v918 = vld [vmem:[#allocation11 + $0x218] sm:$0xff]
    %v919 = vld [vmem:[#allocation11 + $0x220] sm:$0xff]
    %v920 = vld [vmem:[#allocation11 + $0x228] sm:$0xff]
    %v921 = vld [vmem:[#allocation11 + $0x230] sm:$0xff]
    %v922 = vld [vmem:[#allocation11 + $0x238] sm:$0xff]
    %v923 = vld [vmem:[#allocation11 + $0x240] sm:$0xff]
    %v924 = vld [vmem:[#allocation11 + $0x248] sm:$0xff]
    %v925 = vld [vmem:[#allocation11 + $0x250] sm:$0xff]
    %v926 = vld [vmem:[#allocation11 + $0x258] sm:$0xff]
    %v927 = vld [vmem:[#allocation11 + $0x260] sm:$0xff]
    %v928 = vld [vmem:[#allocation11 + $0x268] sm:$0xff]
    %v929 = vld [vmem:[#allocation11 + $0x270] sm:$0xff]
    %v930 = vld [vmem:[#allocation11 + $0x278] sm:$0xff]
    %v931 = vld [vmem:[#allocation11 + $0x280] sm:$0xff]
    %v932 = vld [vmem:[#allocation11 + $0x288] sm:$0xff]
    %v933 = vld [vmem:[#allocation11 + $0x290] sm:$0xff]
    %v934 = vld [vmem:[#allocation11 + $0x298] sm:$0xff]
    %v935 = vld [vmem:[#allocation11 + $0x2a0] sm:$0xff]
    %v936 = vld [vmem:[#allocation11 + $0x2a8] sm:$0xff]
    %v937 = vld [vmem:[#allocation11 + $0x2b0] sm:$0xff]
    %v938 = vld [vmem:[#allocation11 + $0x2b8] sm:$0xff]
    %v939 = vld [vmem:[#allocation11 + $0x2c0] sm:$0xff]
    %v940 = vld [vmem:[#allocation11 + $0x2c8] sm:$0xff]
    %v941 = vld [vmem:[#allocation11 + $0x2d0] sm:$0xff]
    %v942 = vld [vmem:[#allocation11 + $0x2d8] sm:$0xff]
    %v943 = vld [vmem:[#allocation11 + $0x2e0] sm:$0xff]
    %v944 = vld [vmem:[#allocation11 + $0x2e8] sm:$0xff]
    %v945 = vld [vmem:[#allocation11 + $0x2f0] sm:$0xff]
    %v946 = vld [vmem:[#allocation11 + $0x2f8] sm:$0xff]
    %v947 = vld [vmem:[#allocation11 + $0x300] sm:$0xff]
    %v948 = vld [vmem:[#allocation11 + $0x308] sm:$0xff]
    %v949 = vld [vmem:[#allocation11 + $0x310] sm:$0xff]
    %v950 = vld [vmem:[#allocation11 + $0x318] sm:$0xff]
    %v951 = vld [vmem:[#allocation11 + $0x320] sm:$0xff]
    %v952 = vld [vmem:[#allocation11 + $0x328] sm:$0xff]
    %v953 = vld [vmem:[#allocation11 + $0x330] sm:$0xff]
    %v954 = vld [vmem:[#allocation11 + $0x338] sm:$0xff]
    %v955 = vld [vmem:[#allocation11 + $0x340] sm:$0xff]
    %v956 = vld [vmem:[#allocation11 + $0x348] sm:$0xff]
    %v957 = vld [vmem:[#allocation11 + $0x350] sm:$0xff]
    %v958 = vld [vmem:[#allocation11 + $0x358] sm:$0xff]
    %v959 = vld [vmem:[#allocation11 + $0x360] sm:$0xff]
    %v960 = vld [vmem:[#allocation11 + $0x368] sm:$0xff]
    %v961 = vld [vmem:[#allocation11 + $0x370] sm:$0xff]
    %v962 = vld [vmem:[#allocation11 + $0x378] sm:$0xff]
    %v963 = vld [vmem:[#allocation11 + $0x380] sm:$0xff]
    %v964 = vld [vmem:[#allocation11 + $0x388] sm:$0xff]
    %v965 = vld [vmem:[#allocation11 + $0x390] sm:$0xff]
    %v966 = vld [vmem:[#allocation11 + $0x398] sm:$0xff]
    %v967 = vld [vmem:[#allocation11 + $0x3a0] sm:$0xff]
    %v968 = vld [vmem:[#allocation11 + $0x3a8] sm:$0xff]
    %v969 = vld [vmem:[#allocation11 + $0x3b0] sm:$0xff]
    %v970 = vld [vmem:[#allocation11 + $0x3b8] sm:$0xff]
    %v971 = vld [vmem:[#allocation11 + $0x3c0] sm:$0xff]
    %v972 = vld [vmem:[#allocation11 + $0x3c8] sm:$0xff]
    %v973 = vld [vmem:[#allocation11 + $0x3d0] sm:$0xff]
    %v974 = vld [vmem:[#allocation11 + $0x3d8] sm:$0xff]
    %v975 = vld [vmem:[#allocation11 + $0x3e0] sm:$0xff]
    %v976 = vld [vmem:[#allocation11 + $0x3e8] sm:$0xff]
    %v977 = vld [vmem:[#allocation11 + $0x3f0] sm:$0xff]
    %v978 = vld [vmem:[#allocation11 + $0x3f8] sm:$0xff]
    %v979 = vld [vmem:[#allocation11 + $0x400] sm:$0xff]
    %v980 = vld [vmem:[#allocation11 + $0x408] sm:$0xff]
    %v981 = vld [vmem:[#allocation11 + $0x410] sm:$0xff]
    %v982 = vld [vmem:[#allocation11 + $0x418] sm:$0xff]
    %v983 = vld [vmem:[#allocation11 + $0x420] sm:$0xff]
    %v984 = vld [vmem:[#allocation11 + $0x428] sm:$0xff]
    %v985 = vld [vmem:[#allocation11 + $0x430] sm:$0xff]
    %v986 = vld [vmem:[#allocation11 + $0x438] sm:$0xff]
    %v987 = vld [vmem:[#allocation11 + $0x440] sm:$0xff]
    %v988 = vld [vmem:[#allocation11 + $0x448] sm:$0xff]
    %v989 = vld [vmem:[#allocation11 + $0x450] sm:$0xff]
    %v990 = vld [vmem:[#allocation11 + $0x458] sm:$0xff]
    %v991 = vld [vmem:[#allocation11 + $0x460] sm:$0xff]
    %v992 = vld [vmem:[#allocation11 + $0x468] sm:$0xff]
    %v993 = vld [vmem:[#allocation11 + $0x470] sm:$0xff]
    %v994 = vld [vmem:[#allocation11 + $0x478] sm:$0xff]
    %v995 = vld [vmem:[#allocation11 + $0x480] sm:$0xff]
    %v996 = vld [vmem:[#allocation11 + $0x488] sm:$0xff]
    %v997 = vld [vmem:[#allocation11 + $0x490] sm:$0xff]
    %v998 = vld [vmem:[#allocation11 + $0x498] sm:$0xff]
    %v999 = vld [vmem:[#allocation11 + $0x4a0] sm:$0xff]
    %v1000 = vld [vmem:[#allocation11 + $0x4a8] sm:$0xff]
    %v1001 = vld [vmem:[#allocation11 + $0x4b0] sm:$0xff]
    %v1002 = vld [vmem:[#allocation11 + $0x4b8] sm:$0xff]
    %v1003 = vld [vmem:[#allocation11 + $0x4c0] sm:$0xff]
    %v1004 = vld [vmem:[#allocation11 + $0x4c8] sm:$0xff]
    %v1005 = vld [vmem:[#allocation11 + $0x4d0] sm:$0xff]
    %v1006 = vld [vmem:[#allocation11 + $0x4d8] sm:$0xff]
    %v1007 = vld [vmem:[#allocation11 + $0x4e0] sm:$0xff]
    %v1008 = vld [vmem:[#allocation11 + $0x4e8] sm:$0xff]
    %v1009 = vld [vmem:[#allocation11 + $0x4f0] sm:$0xff]
    %v1010 = vld [vmem:[#allocation11 + $0x4f8] sm:$0xff]
    %v1011 = vld [vmem:[#allocation11 + $0x500] sm:$0xff]
    %v1012 = vld [vmem:[#allocation11 + $0x508] sm:$0xff]
    %v1013 = vld [vmem:[#allocation11 + $0x510] sm:$0xff]
    %v1014 = vld [vmem:[#allocation11 + $0x518] sm:$0xff]
    %v1015 = vld [vmem:[#allocation11 + $0x520] sm:$0xff]
    %v1016 = vld [vmem:[#allocation11 + $0x528] sm:$0xff]
    %v1017 = vld [vmem:[#allocation11 + $0x530] sm:$0xff]
    %v1018 = vld [vmem:[#allocation11 + $0x538] sm:$0xff]
    %v1019 = vld [vmem:[#allocation11 + $0x540] sm:$0xff]
    %v1020 = vld [vmem:[#allocation11 + $0x548] sm:$0xff]
    %v1021 = vld [vmem:[#allocation11 + $0x550] sm:$0xff]
    %v1022 = vld [vmem:[#allocation11 + $0x558] sm:$0xff]
    %v1023 = vld [vmem:[#allocation11 + $0x560] sm:$0xff]
    %v1024 = vld [vmem:[#allocation11 + $0x568] sm:$0xff]
    %v1025 = vld [vmem:[#allocation11 + $0x570] sm:$0xff]
    %v1026 = vld [vmem:[#allocation11 + $0x578] sm:$0xff]
    %v1027 = vld [vmem:[#allocation11 + $0x580] sm:$0xff]
    %v1028 = vld [vmem:[#allocation11 + $0x588] sm:$0xff]
    %v1029 = vld [vmem:[#allocation11 + $0x590] sm:$0xff]
    %v1030 = vld [vmem:[#allocation11 + $0x598] sm:$0xff]
    %v1031 = vld [vmem:[#allocation11 + $0x5a0] sm:$0xff]
    %v1032 = vld [vmem:[#allocation11 + $0x5a8] sm:$0xff]
    %v1033 = vld [vmem:[#allocation11 + $0x5b0] sm:$0xff]
    %v1034 = vld [vmem:[#allocation11 + $0x5b8] sm:$0xff]
    %v1035 = vld [vmem:[#allocation11 + $0x5c0] sm:$0xff]
    %v1036 = vld [vmem:[#allocation11 + $0x5c8] sm:$0xff]
    %v1037 = vld [vmem:[#allocation11 + $0x5d0] sm:$0xff]
    %v1038 = vld [vmem:[#allocation11 + $0x5d8] sm:$0xff]
    %v1039 = vld [vmem:[#allocation11 + $0x5e0] sm:$0xff]
    %v1040 = vld [vmem:[#allocation11 + $0x5e8] sm:$0xff]
    %v1041 = vld [vmem:[#allocation11 + $0x5f0] sm:$0xff]
    %v1042 = vld [vmem:[#allocation11 + $0x5f8] sm:$0xff]
    %v1043 = vld [vmem:[#allocation11 + $0x600] sm:$0xff]
    %v1044 = vld [vmem:[#allocation11 + $0x608] sm:$0xff]
    %v1045 = vld [vmem:[#allocation11 + $0x610] sm:$0xff]
    %v1046 = vld [vmem:[#allocation11 + $0x618] sm:$0xff]
    %v1047 = vld [vmem:[#allocation11 + $0x620] sm:$0xff]
    %v1048 = vld [vmem:[#allocation11 + $0x628] sm:$0xff]
    %v1049 = vld [vmem:[#allocation11 + $0x630] sm:$0xff]
    %v1050 = vld [vmem:[#allocation11 + $0x638] sm:$0xff]
    %v1051 = vld [vmem:[#allocation11 + $0x640] sm:$0xff]
    %v1052 = vld [vmem:[#allocation11 + $0x648] sm:$0xff]
    %v1053 = vld [vmem:[#allocation11 + $0x650] sm:$0xff]
    %v1054 = vld [vmem:[#allocation11 + $0x658] sm:$0xff]
    %v1055 = vld [vmem:[#allocation11 + $0x660] sm:$0xff]
    %v1056 = vld [vmem:[#allocation11 + $0x668] sm:$0xff]
    %v1057 = vld [vmem:[#allocation11 + $0x670] sm:$0xff]
    %v1058 = vld [vmem:[#allocation11 + $0x678] sm:$0xff]
    %v1059 = vld [vmem:[#allocation11 + $0x680] sm:$0xff]
    %v1060 = vld [vmem:[#allocation11 + $0x688] sm:$0xff]
    %v1061 = vld [vmem:[#allocation11 + $0x690] sm:$0xff]
    %v1062 = vld [vmem:[#allocation11 + $0x698] sm:$0xff]
    %v1063 = vld [vmem:[#allocation11 + $0x6a0] sm:$0xff]
    %v1064 = vld [vmem:[#allocation11 + $0x6a8] sm:$0xff]
    %v1065 = vld [vmem:[#allocation11 + $0x6b0] sm:$0xff]
    %v1066 = vld [vmem:[#allocation11 + $0x6b8] sm:$0xff]
    %v1067 = vld [vmem:[#allocation11 + $0x6c0] sm:$0xff]
    %v1068 = vld [vmem:[#allocation11 + $0x6c8] sm:$0xff]
    %v1069 = vld [vmem:[#allocation11 + $0x6d0] sm:$0xff]
    %v1070 = vld [vmem:[#allocation11 + $0x6d8] sm:$0xff]
    %v1071 = vld [vmem:[#allocation11 + $0x6e0] sm:$0xff]
    %v1072 = vld [vmem:[#allocation11 + $0x6e8] sm:$0xff]
    %v1073 = vld [vmem:[#allocation11 + $0x6f0] sm:$0xff]
    %v1074 = vld [vmem:[#allocation11 + $0x6f8] sm:$0xff]
    %v1075 = vld [vmem:[#allocation11 + $0x700] sm:$0xff]
    %v1076 = vld [vmem:[#allocation11 + $0x708] sm:$0xff]
    %v1077 = vld [vmem:[#allocation11 + $0x710] sm:$0xff]
    %v1078 = vld [vmem:[#allocation11 + $0x718] sm:$0xff]
    %v1079 = vld [vmem:[#allocation11 + $0x720] sm:$0xff]
    %v1080 = vld [vmem:[#allocation11 + $0x728] sm:$0xff]
    %v1081 = vld [vmem:[#allocation11 + $0x730] sm:$0xff]
    %v1082 = vld [vmem:[#allocation11 + $0x738] sm:$0xff]
    %v1083 = vld [vmem:[#allocation11 + $0x740] sm:$0xff]
    %v1084 = vld [vmem:[#allocation11 + $0x748] sm:$0xff]
    %v1085 = vld [vmem:[#allocation11 + $0x750] sm:$0xff]
    %v1086 = vld [vmem:[#allocation11 + $0x758] sm:$0xff]
    %v1087 = vld [vmem:[#allocation11 + $0x760] sm:$0xff]
    %v1088 = vld [vmem:[#allocation11 + $0x768] sm:$0xff]
    %v1089 = vld [vmem:[#allocation11 + $0x770] sm:$0xff]
    %v1090 = vld [vmem:[#allocation11 + $0x778] sm:$0xff]
    %v1091 = vld [vmem:[#allocation11 + $0x780] sm:$0xff]
    %v1092 = vld [vmem:[#allocation11 + $0x788] sm:$0xff]
    %v1093 = vld [vmem:[#allocation11 + $0x790] sm:$0xff]
    %v1094 = vld [vmem:[#allocation11 + $0x798] sm:$0xff]
    %v1095 = vld [vmem:[#allocation11 + $0x7a0] sm:$0xff]
    %v1096 = vld [vmem:[#allocation11 + $0x7a8] sm:$0xff]
    %v1097 = vld [vmem:[#allocation11 + $0x7b0] sm:$0xff]
    %v1098 = vld [vmem:[#allocation11 + $0x7b8] sm:$0xff]
    %v1099 = vld [vmem:[#allocation11 + $0x7c0] sm:$0xff]
    %v1100 = vld [vmem:[#allocation11 + $0x7c8] sm:$0xff]
    %v1101 = vld [vmem:[#allocation11 + $0x7d0] sm:$0xff]
    %v1102 = vld [vmem:[#allocation11 + $0x7d8] sm:$0xff]
    %v1103 = vld [vmem:[#allocation11 + $0x7e0] sm:$0xff]
    %v1104 = vld [vmem:[#allocation11 + $0x7e8] sm:$0xff]
    %v1105 = vld [vmem:[#allocation11 + $0x7f0] sm:$0xff]
    %v1106 = vld [vmem:[#allocation11 + $0x7f8] sm:$0xff]
    %v1107 = vld [vmem:[#allocation13] sm:$0xff]
    %v1109 = vperm.slane %v1107, 0
    %v1110 = vperm.slane %v1107, 1
    %v1111 = vperm.slane %v1107, 2
    %v1112 = vperm.slane %v1107, 3
    %v1113 = vperm.slane %v1107, 4
    %v1114 = vperm.slane %v1107, 5
    %v1115 = vperm.slane %v1107, 6
    %v1116 = vperm.slane %v1107, 7
    %v1381 = vunpack.c.l.b16 %v851
    %v1382 = vunpack.c.h.b16 %v851
    %v1383 = vunpack.c.l.b16 %v852
    %v1384 = vunpack.c.h.b16 %v852
    %v1385 = vunpack.c.l.b16 %v853
    %v1386 = vunpack.c.h.b16 %v853
    %v1387 = vunpack.c.l.b16 %v854
    %v1388 = vunpack.c.h.b16 %v854
    %v1389 = vunpack.c.l.b16 %v855
    %v1390 = vunpack.c.h.b16 %v855
    %v1391 = vunpack.c.l.b16 %v856
    %v1392 = vunpack.c.h.b16 %v856
    %v1393 = vunpack.c.l.b16 %v857
    %v1394 = vunpack.c.h.b16 %v857
    %v1395 = vunpack.c.l.b16 %v858
    %v1396 = vunpack.c.h.b16 %v858
    %v1397 = vunpack.c.l.b16 %v859
    %v1398 = vunpack.c.h.b16 %v859
    %v1399 = vunpack.c.l.b16 %v860
    %v1400 = vunpack.c.h.b16 %v860
    %v1401 = vunpack.c.l.b16 %v861
    %v1402 = vunpack.c.h.b16 %v861
    %v1403 = vunpack.c.l.b16 %v862
    %v1404 = vunpack.c.h.b16 %v862
    %v1405 = vunpack.c.l.b16 %v863
    %v1406 = vunpack.c.h.b16 %v863
    %v1407 = vunpack.c.l.b16 %v864
    %v1408 = vunpack.c.h.b16 %v864
    %v1409 = vunpack.c.l.b16 %v865
    %v1410 = vunpack.c.h.b16 %v865
    %v1411 = vunpack.c.l.b16 %v866
    %v1412 = vunpack.c.h.b16 %v866
    %v1413 = vunpack.c.l.b16 %v867
    %v1414 = vunpack.c.h.b16 %v867
    %v1415 = vunpack.c.l.b16 %v868
    %v1416 = vunpack.c.h.b16 %v868
    %v1417 = vunpack.c.l.b16 %v869
    %v1418 = vunpack.c.h.b16 %v869
    %v1419 = vunpack.c.l.b16 %v870
    %v1420 = vunpack.c.h.b16 %v870
    %v1421 = vunpack.c.l.b16 %v871
    %v1422 = vunpack.c.h.b16 %v871
    %v1423 = vunpack.c.l.b16 %v872
    %v1424 = vunpack.c.h.b16 %v872
    %v1425 = vunpack.c.l.b16 %v873
    %v1426 = vunpack.c.h.b16 %v873
    %v1427 = vunpack.c.l.b16 %v874
    %v1428 = vunpack.c.h.b16 %v874
    %v1429 = vunpack.c.l.b16 %v875
    %v1430 = vunpack.c.h.b16 %v875
    %v1431 = vunpack.c.l.b16 %v876
    %v1432 = vunpack.c.h.b16 %v876
    %v1433 = vunpack.c.l.b16 %v877
    %v1434 = vunpack.c.h.b16 %v877
    %v1435 = vunpack.c.l.b16 %v878
    %v1436 = vunpack.c.h.b16 %v878
    %v1437 = vunpack.c.l.b16 %v879
    %v1438 = vunpack.c.h.b16 %v879
    %v1439 = vunpack.c.l.b16 %v880
    %v1440 = vunpack.c.h.b16 %v880
    %v1441 = vunpack.c.l.b16 %v881
    %v1442 = vunpack.c.h.b16 %v881
    %v1443 = vunpack.c.l.b16 %v882
    %v1444 = vunpack.c.h.b16 %v882
    %v1445 = vunpack.c.l.b16 %v883
    %v1446 = vunpack.c.h.b16 %v883
    %v1447 = vunpack.c.l.b16 %v884
    %v1448 = vunpack.c.h.b16 %v884
    %v1449 = vunpack.c.l.b16 %v885
    %v1450 = vunpack.c.h.b16 %v885
    %v1451 = vunpack.c.l.b16 %v886
    %v1452 = vunpack.c.h.b16 %v886
    %v1453 = vunpack.c.l.b16 %v887
    %v1454 = vunpack.c.h.b16 %v887
    %v1455 = vunpack.c.l.b16 %v888
    %v1456 = vunpack.c.h.b16 %v888
    %v1457 = vunpack.c.l.b16 %v889
    %v1458 = vunpack.c.h.b16 %v889
    %v1459 = vunpack.c.l.b16 %v890
    %v1460 = vunpack.c.h.b16 %v890
    %v1461 = vunpack.c.l.b16 %v891
    %v1462 = vunpack.c.h.b16 %v891
    %v1463 = vunpack.c.l.b16 %v892
    %v1464 = vunpack.c.h.b16 %v892
    %v1465 = vunpack.c.l.b16 %v893
    %v1466 = vunpack.c.h.b16 %v893
    %v1467 = vunpack.c.l.b16 %v894
    %v1468 = vunpack.c.h.b16 %v894
    %v1469 = vunpack.c.l.b16 %v895
    %v1470 = vunpack.c.h.b16 %v895
    %v1471 = vunpack.c.l.b16 %v896
    %v1472 = vunpack.c.h.b16 %v896
    %v1473 = vunpack.c.l.b16 %v897
    %v1474 = vunpack.c.h.b16 %v897
    %v1475 = vunpack.c.l.b16 %v898
    %v1476 = vunpack.c.h.b16 %v898
    %v1477 = vunpack.c.l.b16 %v899
    %v1478 = vunpack.c.h.b16 %v899
    %v1479 = vunpack.c.l.b16 %v900
    %v1480 = vunpack.c.h.b16 %v900
    %v1481 = vunpack.c.l.b16 %v901
    %v1482 = vunpack.c.h.b16 %v901
    %v1483 = vunpack.c.l.b16 %v902
    %v1484 = vunpack.c.h.b16 %v902
    %v1485 = vunpack.c.l.b16 %v903
    %v1486 = vunpack.c.h.b16 %v903
    %v1487 = vunpack.c.l.b16 %v904
    %v1488 = vunpack.c.h.b16 %v904
    %v1489 = vunpack.c.l.b16 %v905
    %v1490 = vunpack.c.h.b16 %v905
    %v1491 = vunpack.c.l.b16 %v906
    %v1492 = vunpack.c.h.b16 %v906
    %v1493 = vunpack.c.l.b16 %v907
    %v1494 = vunpack.c.h.b16 %v907
    %v1495 = vunpack.c.l.b16 %v908
    %v1496 = vunpack.c.h.b16 %v908
    %v1497 = vunpack.c.l.b16 %v909
    %v1498 = vunpack.c.h.b16 %v909
    %v1499 = vunpack.c.l.b16 %v910
    %v1500 = vunpack.c.h.b16 %v910
    %v1501 = vunpack.c.l.b16 %v911
    %v1502 = vunpack.c.h.b16 %v911
    %v1503 = vunpack.c.l.b16 %v912
    %v1504 = vunpack.c.h.b16 %v912
    %v1505 = vunpack.c.l.b16 %v913
    %v1506 = vunpack.c.h.b16 %v913
    %v1507 = vunpack.c.l.b16 %v914
    %v1508 = vunpack.c.h.b16 %v914
    %v1509 = vunpack.c.l.b16 %v915
    %v1510 = vunpack.c.h.b16 %v915
    %v1511 = vunpack.c.l.b16 %v916
    %v1512 = vunpack.c.h.b16 %v916
    %v1513 = vunpack.c.l.b16 %v917
    %v1514 = vunpack.c.h.b16 %v917
    %v1515 = vunpack.c.l.b16 %v918
    %v1516 = vunpack.c.h.b16 %v918
    %v1517 = vunpack.c.l.b16 %v919
    %v1518 = vunpack.c.h.b16 %v919
    %v1519 = vunpack.c.l.b16 %v920
    %v1520 = vunpack.c.h.b16 %v920
    %v1521 = vunpack.c.l.b16 %v921
    %v1522 = vunpack.c.h.b16 %v921
    %v1523 = vunpack.c.l.b16 %v922
    %v1524 = vunpack.c.h.b16 %v922
    %v1525 = vunpack.c.l.b16 %v923
    %v1526 = vunpack.c.h.b16 %v923
    %v1527 = vunpack.c.l.b16 %v924
    %v1528 = vunpack.c.h.b16 %v924
    %v1529 = vunpack.c.l.b16 %v925
    %v1530 = vunpack.c.h.b16 %v925
    %v1531 = vunpack.c.l.b16 %v926
    %v1532 = vunpack.c.h.b16 %v926
    %v1533 = vunpack.c.l.b16 %v927
    %v1534 = vunpack.c.h.b16 %v927
    %v1535 = vunpack.c.l.b16 %v928
    %v1536 = vunpack.c.h.b16 %v928
    %v1537 = vunpack.c.l.b16 %v929
    %v1538 = vunpack.c.h.b16 %v929
    %v1539 = vunpack.c.l.b16 %v930
    %v1540 = vunpack.c.h.b16 %v930
    %v1541 = vunpack.c.l.b16 %v931
    %v1542 = vunpack.c.h.b16 %v931
    %v1543 = vunpack.c.l.b16 %v932
    %v1544 = vunpack.c.h.b16 %v932
    %v1545 = vunpack.c.l.b16 %v933
    %v1546 = vunpack.c.h.b16 %v933
    %v1547 = vunpack.c.l.b16 %v934
    %v1548 = vunpack.c.h.b16 %v934
    %v1549 = vunpack.c.l.b16 %v935
    %v1550 = vunpack.c.h.b16 %v935
    %v1551 = vunpack.c.l.b16 %v936
    %v1552 = vunpack.c.h.b16 %v936
    %v1553 = vunpack.c.l.b16 %v937
    %v1554 = vunpack.c.h.b16 %v937
    %v1555 = vunpack.c.l.b16 %v938
    %v1556 = vunpack.c.h.b16 %v938
    %v1557 = vunpack.c.l.b16 %v939
    %v1558 = vunpack.c.h.b16 %v939
    %v1559 = vunpack.c.l.b16 %v940
    %v1560 = vunpack.c.h.b16 %v940
    %v1561 = vunpack.c.l.b16 %v941
    %v1562 = vunpack.c.h.b16 %v941
    %v1563 = vunpack.c.l.b16 %v942
    %v1564 = vunpack.c.h.b16 %v942
    %v1565 = vunpack.c.l.b16 %v943
    %v1566 = vunpack.c.h.b16 %v943
    %v1567 = vunpack.c.l.b16 %v944
    %v1568 = vunpack.c.h.b16 %v944
    %v1569 = vunpack.c.l.b16 %v945
    %v1570 = vunpack.c.h.b16 %v945
    %v1571 = vunpack.c.l.b16 %v946
    %v1572 = vunpack.c.h.b16 %v946
    %v1573 = vunpack.c.l.b16 %v947
    %v1574 = vunpack.c.h.b16 %v947
    %v1575 = vunpack.c.l.b16 %v948
    %v1576 = vunpack.c.h.b16 %v948
    %v1577 = vunpack.c.l.b16 %v949
    %v1578 = vunpack.c.h.b16 %v949
    %v1579 = vunpack.c.l.b16 %v950
    %v1580 = vunpack.c.h.b16 %v950
    %v1581 = vunpack.c.l.b16 %v951
    %v1582 = vunpack.c.h.b16 %v951
    %v1583 = vunpack.c.l.b16 %v952
    %v1584 = vunpack.c.h.b16 %v952
    %v1585 = vunpack.c.l.b16 %v953
    %v1586 = vunpack.c.h.b16 %v953
    %v1587 = vunpack.c.l.b16 %v954
    %v1588 = vunpack.c.h.b16 %v954
    %v1589 = vunpack.c.l.b16 %v955
    %v1590 = vunpack.c.h.b16 %v955
    %v1591 = vunpack.c.l.b16 %v956
    %v1592 = vunpack.c.h.b16 %v956
    %v1593 = vunpack.c.l.b16 %v957
    %v1594 = vunpack.c.h.b16 %v957
    %v1595 = vunpack.c.l.b16 %v958
    %v1596 = vunpack.c.h.b16 %v958
    %v1597 = vunpack.c.l.b16 %v959
    %v1598 = vunpack.c.h.b16 %v959
    %v1599 = vunpack.c.l.b16 %v960
    %v1600 = vunpack.c.h.b16 %v960
    %v1601 = vunpack.c.l.b16 %v961
    %v1602 = vunpack.c.h.b16 %v961
    %v1603 = vunpack.c.l.b16 %v962
    %v1604 = vunpack.c.h.b16 %v962
    %v1605 = vunpack.c.l.b16 %v963
    %v1606 = vunpack.c.h.b16 %v963
    %v1607 = vunpack.c.l.b16 %v964
    %v1608 = vunpack.c.h.b16 %v964
    %v1609 = vunpack.c.l.b16 %v965
    %v1610 = vunpack.c.h.b16 %v965
    %v1611 = vunpack.c.l.b16 %v966
    %v1612 = vunpack.c.h.b16 %v966
    %v1613 = vunpack.c.l.b16 %v967
    %v1614 = vunpack.c.h.b16 %v967
    %v1615 = vunpack.c.l.b16 %v968
    %v1616 = vunpack.c.h.b16 %v968
    %v1617 = vunpack.c.l.b16 %v969
    %v1618 = vunpack.c.h.b16 %v969
    %v1619 = vunpack.c.l.b16 %v970
    %v1620 = vunpack.c.h.b16 %v970
    %v1621 = vunpack.c.l.b16 %v971
    %v1622 = vunpack.c.h.b16 %v971
    %v1623 = vunpack.c.l.b16 %v972
    %v1624 = vunpack.c.h.b16 %v972
    %v1625 = vunpack.c.l.b16 %v973
    %v1626 = vunpack.c.h.b16 %v973
    %v1627 = vunpack.c.l.b16 %v974
    %v1628 = vunpack.c.h.b16 %v974
    %v1629 = vunpack.c.l.b16 %v975
    %v1630 = vunpack.c.h.b16 %v975
    %v1631 = vunpack.c.l.b16 %v976
    %v1632 = vunpack.c.h.b16 %v976
    %v1633 = vunpack.c.l.b16 %v977
    %v1634 = vunpack.c.h.b16 %v977
    %v1635 = vunpack.c.l.b16 %v978
    %v1636 = vunpack.c.h.b16 %v978
    %v1637 = vunpack.c.l.b16 %v979
    %v1638 = vunpack.c.h.b16 %v979
    %v1639 = vunpack.c.l.b16 %v980
    %v1640 = vunpack.c.h.b16 %v980
    %v1641 = vunpack.c.l.b16 %v981
    %v1642 = vunpack.c.h.b16 %v981
    %v1643 = vunpack.c.l.b16 %v982
    %v1644 = vunpack.c.h.b16 %v982
    %v1645 = vunpack.c.l.b16 %v983
    %v1646 = vunpack.c.h.b16 %v983
    %v1647 = vunpack.c.l.b16 %v984
    %v1648 = vunpack.c.h.b16 %v984
    %v1649 = vunpack.c.l.b16 %v985
    %v1650 = vunpack.c.h.b16 %v985
    %v1651 = vunpack.c.l.b16 %v986
    %v1652 = vunpack.c.h.b16 %v986
    %v1653 = vunpack.c.l.b16 %v987
    %v1654 = vunpack.c.h.b16 %v987
    %v1655 = vunpack.c.l.b16 %v988
    %v1656 = vunpack.c.h.b16 %v988
    %v1657 = vunpack.c.l.b16 %v989
    %v1658 = vunpack.c.h.b16 %v989
    %v1659 = vunpack.c.l.b16 %v990
    %v1660 = vunpack.c.h.b16 %v990
    %v1661 = vunpack.c.l.b16 %v991
    %v1662 = vunpack.c.h.b16 %v991
    %v1663 = vunpack.c.l.b16 %v992
    %v1664 = vunpack.c.h.b16 %v992
    %v1665 = vunpack.c.l.b16 %v993
    %v1666 = vunpack.c.h.b16 %v993
    %v1667 = vunpack.c.l.b16 %v994
    %v1668 = vunpack.c.h.b16 %v994
    %v1669 = vunpack.c.l.b16 %v995
    %v1670 = vunpack.c.h.b16 %v995
    %v1671 = vunpack.c.l.b16 %v996
    %v1672 = vunpack.c.h.b16 %v996
    %v1673 = vunpack.c.l.b16 %v997
    %v1674 = vunpack.c.h.b16 %v997
    %v1675 = vunpack.c.l.b16 %v998
    %v1676 = vunpack.c.h.b16 %v998
    %v1677 = vunpack.c.l.b16 %v999
    %v1678 = vunpack.c.h.b16 %v999
    %v1679 = vunpack.c.l.b16 %v1000
    %v1680 = vunpack.c.h.b16 %v1000
    %v1681 = vunpack.c.l.b16 %v1001
    %v1682 = vunpack.c.h.b16 %v1001
    %v1683 = vunpack.c.l.b16 %v1002
    %v1684 = vunpack.c.h.b16 %v1002
    %v1685 = vunpack.c.l.b16 %v1003
    %v1686 = vunpack.c.h.b16 %v1003
    %v1687 = vunpack.c.l.b16 %v1004
    %v1688 = vunpack.c.h.b16 %v1004
    %v1689 = vunpack.c.l.b16 %v1005
    %v1690 = vunpack.c.h.b16 %v1005
    %v1691 = vunpack.c.l.b16 %v1006
    %v1692 = vunpack.c.h.b16 %v1006
    %v1693 = vunpack.c.l.b16 %v1007
    %v1694 = vunpack.c.h.b16 %v1007
    %v1695 = vunpack.c.l.b16 %v1008
    %v1696 = vunpack.c.h.b16 %v1008
    %v1697 = vunpack.c.l.b16 %v1009
    %v1698 = vunpack.c.h.b16 %v1009
    %v1699 = vunpack.c.l.b16 %v1010
    %v1700 = vunpack.c.h.b16 %v1010
    %v1701 = vunpack.c.l.b16 %v1011
    %v1702 = vunpack.c.h.b16 %v1011
    %v1703 = vunpack.c.l.b16 %v1012
    %v1704 = vunpack.c.h.b16 %v1012
    %v1705 = vunpack.c.l.b16 %v1013
    %v1706 = vunpack.c.h.b16 %v1013
    %v1707 = vunpack.c.l.b16 %v1014
    %v1708 = vunpack.c.h.b16 %v1014
    %v1709 = vunpack.c.l.b16 %v1015
    %v1710 = vunpack.c.h.b16 %v1015
    %v1711 = vunpack.c.l.b16 %v1016
    %v1712 = vunpack.c.h.b16 %v1016
    %v1713 = vunpack.c.l.b16 %v1017
    %v1714 = vunpack.c.h.b16 %v1017
    %v1715 = vunpack.c.l.b16 %v1018
    %v1716 = vunpack.c.h.b16 %v1018
    %v1717 = vunpack.c.l.b16 %v1019
    %v1718 = vunpack.c.h.b16 %v1019
    %v1719 = vunpack.c.l.b16 %v1020
    %v1720 = vunpack.c.h.b16 %v1020
    %v1721 = vunpack.c.l.b16 %v1021
    %v1722 = vunpack.c.h.b16 %v1021
    %v1723 = vunpack.c.l.b16 %v1022
    %v1724 = vunpack.c.h.b16 %v1022
    %v1725 = vunpack.c.l.b16 %v1023
    %v1726 = vunpack.c.h.b16 %v1023
    %v1727 = vunpack.c.l.b16 %v1024
    %v1728 = vunpack.c.h.b16 %v1024
    %v1729 = vunpack.c.l.b16 %v1025
    %v1730 = vunpack.c.h.b16 %v1025
    %v1731 = vunpack.c.l.b16 %v1026
    %v1732 = vunpack.c.h.b16 %v1026
    %v1733 = vunpack.c.l.b16 %v1027
    %v1734 = vunpack.c.h.b16 %v1027
    %v1735 = vunpack.c.l.b16 %v1028
    %v1736 = vunpack.c.h.b16 %v1028
    %v1737 = vunpack.c.l.b16 %v1029
    %v1738 = vunpack.c.h.b16 %v1029
    %v1739 = vunpack.c.l.b16 %v1030
    %v1740 = vunpack.c.h.b16 %v1030
    %v1741 = vunpack.c.l.b16 %v1031
    %v1742 = vunpack.c.h.b16 %v1031
    %v1743 = vunpack.c.l.b16 %v1032
    %v1744 = vunpack.c.h.b16 %v1032
    %v1745 = vunpack.c.l.b16 %v1033
    %v1746 = vunpack.c.h.b16 %v1033
    %v1747 = vunpack.c.l.b16 %v1034
    %v1748 = vunpack.c.h.b16 %v1034
    %v1749 = vunpack.c.l.b16 %v1035
    %v1750 = vunpack.c.h.b16 %v1035
    %v1751 = vunpack.c.l.b16 %v1036
    %v1752 = vunpack.c.h.b16 %v1036
    %v1753 = vunpack.c.l.b16 %v1037
    %v1754 = vunpack.c.h.b16 %v1037
    %v1755 = vunpack.c.l.b16 %v1038
    %v1756 = vunpack.c.h.b16 %v1038
    %v1757 = vunpack.c.l.b16 %v1039
    %v1758 = vunpack.c.h.b16 %v1039
    %v1759 = vunpack.c.l.b16 %v1040
    %v1760 = vunpack.c.h.b16 %v1040
    %v1761 = vunpack.c.l.b16 %v1041
    %v1762 = vunpack.c.h.b16 %v1041
    %v1763 = vunpack.c.l.b16 %v1042
    %v1764 = vunpack.c.h.b16 %v1042
    %v1765 = vunpack.c.l.b16 %v1043
    %v1766 = vunpack.c.h.b16 %v1043
    %v1767 = vunpack.c.l.b16 %v1044
    %v1768 = vunpack.c.h.b16 %v1044
    %v1769 = vunpack.c.l.b16 %v1045
    %v1770 = vunpack.c.h.b16 %v1045
    %v1771 = vunpack.c.l.b16 %v1046
    %v1772 = vunpack.c.h.b16 %v1046
    %v1773 = vunpack.c.l.b16 %v1047
    %v1774 = vunpack.c.h.b16 %v1047
    %v1775 = vunpack.c.l.b16 %v1048
    %v1776 = vunpack.c.h.b16 %v1048
    %v1777 = vunpack.c.l.b16 %v1049
    %v1778 = vunpack.c.h.b16 %v1049
    %v1779 = vunpack.c.l.b16 %v1050
    %v1780 = vunpack.c.h.b16 %v1050
    %v1781 = vunpack.c.l.b16 %v1051
    %v1782 = vunpack.c.h.b16 %v1051
    %v1783 = vunpack.c.l.b16 %v1052
    %v1784 = vunpack.c.h.b16 %v1052
    %v1785 = vunpack.c.l.b16 %v1053
    %v1786 = vunpack.c.h.b16 %v1053
    %v1787 = vunpack.c.l.b16 %v1054
    %v1788 = vunpack.c.h.b16 %v1054
    %v1789 = vunpack.c.l.b16 %v1055
    %v1790 = vunpack.c.h.b16 %v1055
    %v1791 = vunpack.c.l.b16 %v1056
    %v1792 = vunpack.c.h.b16 %v1056
    %v1793 = vunpack.c.l.b16 %v1057
    %v1794 = vunpack.c.h.b16 %v1057
    %v1795 = vunpack.c.l.b16 %v1058
    %v1796 = vunpack.c.h.b16 %v1058
    %v1797 = vunpack.c.l.b16 %v1059
    %v1798 = vunpack.c.h.b16 %v1059
    %v1799 = vunpack.c.l.b16 %v1060
    %v1800 = vunpack.c.h.b16 %v1060
    %v1801 = vunpack.c.l.b16 %v1061
    %v1802 = vunpack.c.h.b16 %v1061
    %v1803 = vunpack.c.l.b16 %v1062
    %v1804 = vunpack.c.h.b16 %v1062
    %v1805 = vunpack.c.l.b16 %v1063
    %v1806 = vunpack.c.h.b16 %v1063
    %v1807 = vunpack.c.l.b16 %v1064
    %v1808 = vunpack.c.h.b16 %v1064
    %v1809 = vunpack.c.l.b16 %v1065
    %v1810 = vunpack.c.h.b16 %v1065
    %v1811 = vunpack.c.l.b16 %v1066
    %v1812 = vunpack.c.h.b16 %v1066
    %v1813 = vunpack.c.l.b16 %v1067
    %v1814 = vunpack.c.h.b16 %v1067
    %v1815 = vunpack.c.l.b16 %v1068
    %v1816 = vunpack.c.h.b16 %v1068
    %v1817 = vunpack.c.l.b16 %v1069
    %v1818 = vunpack.c.h.b16 %v1069
    %v1819 = vunpack.c.l.b16 %v1070
    %v1820 = vunpack.c.h.b16 %v1070
    %v1821 = vunpack.c.l.b16 %v1071
    %v1822 = vunpack.c.h.b16 %v1071
    %v1823 = vunpack.c.l.b16 %v1072
    %v1824 = vunpack.c.h.b16 %v1072
    %v1825 = vunpack.c.l.b16 %v1073
    %v1826 = vunpack.c.h.b16 %v1073
    %v1827 = vunpack.c.l.b16 %v1074
    %v1828 = vunpack.c.h.b16 %v1074
    %v1829 = vunpack.c.l.b16 %v1075
    %v1830 = vunpack.c.h.b16 %v1075
    %v1831 = vunpack.c.l.b16 %v1076
    %v1832 = vunpack.c.h.b16 %v1076
    %v1833 = vunpack.c.l.b16 %v1077
    %v1834 = vunpack.c.h.b16 %v1077
    %v1835 = vunpack.c.l.b16 %v1078
    %v1836 = vunpack.c.h.b16 %v1078
    %v1837 = vunpack.c.l.b16 %v1079
    %v1838 = vunpack.c.h.b16 %v1079
    %v1839 = vunpack.c.l.b16 %v1080
    %v1840 = vunpack.c.h.b16 %v1080
    %v1841 = vunpack.c.l.b16 %v1081
    %v1842 = vunpack.c.h.b16 %v1081
    %v1843 = vunpack.c.l.b16 %v1082
    %v1844 = vunpack.c.h.b16 %v1082
    %v1845 = vunpack.c.l.b16 %v1083
    %v1846 = vunpack.c.h.b16 %v1083
    %v1847 = vunpack.c.l.b16 %v1084
    %v1848 = vunpack.c.h.b16 %v1084
    %v1849 = vunpack.c.l.b16 %v1085
    %v1850 = vunpack.c.h.b16 %v1085
    %v1851 = vunpack.c.l.b16 %v1086
    %v1852 = vunpack.c.h.b16 %v1086
    %v1853 = vunpack.c.l.b16 %v1087
    %v1854 = vunpack.c.h.b16 %v1087
    %v1855 = vunpack.c.l.b16 %v1088
    %v1856 = vunpack.c.h.b16 %v1088
    %v1857 = vunpack.c.l.b16 %v1089
    %v1858 = vunpack.c.h.b16 %v1089
    %v1859 = vunpack.c.l.b16 %v1090
    %v1860 = vunpack.c.h.b16 %v1090
    %v1861 = vunpack.c.l.b16 %v1091
    %v1862 = vunpack.c.h.b16 %v1091
    %v1863 = vunpack.c.l.b16 %v1092
    %v1864 = vunpack.c.h.b16 %v1092
    %v1865 = vunpack.c.l.b16 %v1093
    %v1866 = vunpack.c.h.b16 %v1093
    %v1867 = vunpack.c.l.b16 %v1094
    %v1868 = vunpack.c.h.b16 %v1094
    %v1869 = vunpack.c.l.b16 %v1095
    %v1870 = vunpack.c.h.b16 %v1095
    %v1871 = vunpack.c.l.b16 %v1096
    %v1872 = vunpack.c.h.b16 %v1096
    %v1873 = vunpack.c.l.b16 %v1097
    %v1874 = vunpack.c.h.b16 %v1097
    %v1875 = vunpack.c.l.b16 %v1098
    %v1876 = vunpack.c.h.b16 %v1098
    %v1877 = vunpack.c.l.b16 %v1099
    %v1878 = vunpack.c.h.b16 %v1099
    %v1879 = vunpack.c.l.b16 %v1100
    %v1880 = vunpack.c.h.b16 %v1100
    %v1881 = vunpack.c.l.b16 %v1101
    %v1882 = vunpack.c.h.b16 %v1101
    %v1883 = vunpack.c.l.b16 %v1102
    %v1884 = vunpack.c.h.b16 %v1102
    %v1885 = vunpack.c.l.b16 %v1103
    %v1886 = vunpack.c.h.b16 %v1103
    %v1887 = vunpack.c.l.b16 %v1104
    %v1888 = vunpack.c.h.b16 %v1104
    %v1889 = vunpack.c.l.b16 %v1105
    %v1890 = vunpack.c.h.b16 %v1105
    %v1891 = vunpack.c.l.b16 %v1106
    %v1892 = vunpack.c.h.b16 %v1106
    %v1893 = vpack.c.b16 %v1389, %v1381
    %v1894 = vpack.c.b16 %v1390, %v1382
    %v1895 = vpack.c.b16 %v1391, %v1383
    %v1896 = vpack.c.b16 %v1392, %v1384
    %v1897 = vpack.c.b16 %v1393, %v1385
    %v1898 = vpack.c.b16 %v1394, %v1386
    %v1899 = vpack.c.b16 %v1395, %v1387
    %v1900 = vpack.c.b16 %v1396, %v1388
    %v1901 = vpack.c.b16 %v1405, %v1397
    %v1902 = vpack.c.b16 %v1406, %v1398
    %v1903 = vpack.c.b16 %v1407, %v1399
    %v1904 = vpack.c.b16 %v1408, %v1400
    %v1905 = vpack.c.b16 %v1409, %v1401
    %v1906 = vpack.c.b16 %v1410, %v1402
    %v1907 = vpack.c.b16 %v1411, %v1403
    %v1908 = vpack.c.b16 %v1412, %v1404
    %v1909 = vpack.c.b16 %v1421, %v1413
    %v1910 = vpack.c.b16 %v1422, %v1414
    %v1911 = vpack.c.b16 %v1423, %v1415
    %v1912 = vpack.c.b16 %v1424, %v1416
    %v1913 = vpack.c.b16 %v1425, %v1417
    %v1914 = vpack.c.b16 %v1426, %v1418
    %v1915 = vpack.c.b16 %v1427, %v1419
    %v1916 = vpack.c.b16 %v1428, %v1420
    %v1917 = vpack.c.b16 %v1437, %v1429
    %v1918 = vpack.c.b16 %v1438, %v1430
    %v1919 = vpack.c.b16 %v1439, %v1431
    %v1920 = vpack.c.b16 %v1440, %v1432
    %v1921 = vpack.c.b16 %v1441, %v1433
    %v1922 = vpack.c.b16 %v1442, %v1434
    %v1923 = vpack.c.b16 %v1443, %v1435
    %v1924 = vpack.c.b16 %v1444, %v1436
    %v1925 = vpack.c.b16 %v1453, %v1445
    %v1926 = vpack.c.b16 %v1454, %v1446
    %v1927 = vpack.c.b16 %v1455, %v1447
    %v1928 = vpack.c.b16 %v1456, %v1448
    %v1929 = vpack.c.b16 %v1457, %v1449
    %v1930 = vpack.c.b16 %v1458, %v1450
    %v1931 = vpack.c.b16 %v1459, %v1451
    %v1932 = vpack.c.b16 %v1460, %v1452
    %v1933 = vpack.c.b16 %v1469, %v1461
    %v1934 = vpack.c.b16 %v1470, %v1462
    %v1935 = vpack.c.b16 %v1471, %v1463
    %v1936 = vpack.c.b16 %v1472, %v1464
    %v1937 = vpack.c.b16 %v1473, %v1465
    %v1938 = vpack.c.b16 %v1474, %v1466
    %v1939 = vpack.c.b16 %v1475, %v1467
    %v1940 = vpack.c.b16 %v1476, %v1468
    %v1941 = vpack.c.b16 %v1485, %v1477
    %v1942 = vpack.c.b16 %v1486, %v1478
    %v1943 = vpack.c.b16 %v1487, %v1479
    %v1944 = vpack.c.b16 %v1488, %v1480
    %v1945 = vpack.c.b16 %v1489, %v1481
    %v1946 = vpack.c.b16 %v1490, %v1482
    %v1947 = vpack.c.b16 %v1491, %v1483
    %v1948 = vpack.c.b16 %v1492, %v1484
    %v1949 = vpack.c.b16 %v1501, %v1493
    %v1950 = vpack.c.b16 %v1502, %v1494
    %v1951 = vpack.c.b16 %v1503, %v1495
    %v1952 = vpack.c.b16 %v1504, %v1496
    %v1953 = vpack.c.b16 %v1505, %v1497
    %v1954 = vpack.c.b16 %v1506, %v1498
    %v1955 = vpack.c.b16 %v1507, %v1499
    %v1956 = vpack.c.b16 %v1508, %v1500
    %v1957 = vpack.c.b16 %v1517, %v1509
    %v1958 = vpack.c.b16 %v1518, %v1510
    %v1959 = vpack.c.b16 %v1519, %v1511
    %v1960 = vpack.c.b16 %v1520, %v1512
    %v1961 = vpack.c.b16 %v1521, %v1513
    %v1962 = vpack.c.b16 %v1522, %v1514
    %v1963 = vpack.c.b16 %v1523, %v1515
    %v1964 = vpack.c.b16 %v1524, %v1516
    %v1965 = vpack.c.b16 %v1533, %v1525
    %v1966 = vpack.c.b16 %v1534, %v1526
    %v1967 = vpack.c.b16 %v1535, %v1527
    %v1968 = vpack.c.b16 %v1536, %v1528
    %v1969 = vpack.c.b16 %v1537, %v1529
    %v1970 = vpack.c.b16 %v1538, %v1530
    %v1971 = vpack.c.b16 %v1539, %v1531
    %v1972 = vpack.c.b16 %v1540, %v1532
    %v1973 = vpack.c.b16 %v1549, %v1541
    %v1974 = vpack.c.b16 %v1550, %v1542
    %v1975 = vpack.c.b16 %v1551, %v1543
    %v1976 = vpack.c.b16 %v1552, %v1544
    %v1977 = vpack.c.b16 %v1553, %v1545
    %v1978 = vpack.c.b16 %v1554, %v1546
    %v1979 = vpack.c.b16 %v1555, %v1547
    %v1980 = vpack.c.b16 %v1556, %v1548
    %v1981 = vpack.c.b16 %v1565, %v1557
    %v1982 = vpack.c.b16 %v1566, %v1558
    %v1983 = vpack.c.b16 %v1567, %v1559
    %v1984 = vpack.c.b16 %v1568, %v1560
    %v1985 = vpack.c.b16 %v1569, %v1561
    %v1986 = vpack.c.b16 %v1570, %v1562
    %v1987 = vpack.c.b16 %v1571, %v1563
    %v1988 = vpack.c.b16 %v1572, %v1564
    %v1989 = vpack.c.b16 %v1581, %v1573
    %v1990 = vpack.c.b16 %v1582, %v1574
    %v1991 = vpack.c.b16 %v1583, %v1575
    %v1992 = vpack.c.b16 %v1584, %v1576
    %v1993 = vpack.c.b16 %v1585, %v1577
    %v1994 = vpack.c.b16 %v1586, %v1578
    %v1995 = vpack.c.b16 %v1587, %v1579
    %v1996 = vpack.c.b16 %v1588, %v1580
    %v1997 = vpack.c.b16 %v1597, %v1589
    %v1998 = vpack.c.b16 %v1598, %v1590
    %v1999 = vpack.c.b16 %v1599, %v1591
    %v2000 = vpack.c.b16 %v1600, %v1592
    %v2001 = vpack.c.b16 %v1601, %v1593
    %v2002 = vpack.c.b16 %v1602, %v1594
    %v2003 = vpack.c.b16 %v1603, %v1595
    %v2004 = vpack.c.b16 %v1604, %v1596
    %v2005 = vpack.c.b16 %v1613, %v1605
    %v2006 = vpack.c.b16 %v1614, %v1606
    %v2007 = vpack.c.b16 %v1615, %v1607
    %v2008 = vpack.c.b16 %v1616, %v1608
    %v2009 = vpack.c.b16 %v1617, %v1609
    %v2010 = vpack.c.b16 %v1618, %v1610
    %v2011 = vpack.c.b16 %v1619, %v1611
    %v2012 = vpack.c.b16 %v1620, %v1612
    %v2013 = vpack.c.b16 %v1629, %v1621
    %v2014 = vpack.c.b16 %v1630, %v1622
    %v2015 = vpack.c.b16 %v1631, %v1623
    %v2016 = vpack.c.b16 %v1632, %v1624
    %v2017 = vpack.c.b16 %v1633, %v1625
    %v2018 = vpack.c.b16 %v1634, %v1626
    %v2019 = vpack.c.b16 %v1635, %v1627
    %v2020 = vpack.c.b16 %v1636, %v1628
    %v2021 = vpack.c.b16 %v1645, %v1637
    %v2022 = vpack.c.b16 %v1646, %v1638
    %v2023 = vpack.c.b16 %v1647, %v1639
    %v2024 = vpack.c.b16 %v1648, %v1640
    %v2025 = vpack.c.b16 %v1649, %v1641
    %v2026 = vpack.c.b16 %v1650, %v1642
    %v2027 = vpack.c.b16 %v1651, %v1643
    %v2028 = vpack.c.b16 %v1652, %v1644
    %v2029 = vpack.c.b16 %v1661, %v1653
    %v2030 = vpack.c.b16 %v1662, %v1654
    %v2031 = vpack.c.b16 %v1663, %v1655
    %v2032 = vpack.c.b16 %v1664, %v1656
    %v2033 = vpack.c.b16 %v1665, %v1657
    %v2034 = vpack.c.b16 %v1666, %v1658
    %v2035 = vpack.c.b16 %v1667, %v1659
    %v2036 = vpack.c.b16 %v1668, %v1660
    %v2037 = vpack.c.b16 %v1677, %v1669
    %v2038 = vpack.c.b16 %v1678, %v1670
    %v2039 = vpack.c.b16 %v1679, %v1671
    %v2040 = vpack.c.b16 %v1680, %v1672
    %v2041 = vpack.c.b16 %v1681, %v1673
    %v2042 = vpack.c.b16 %v1682, %v1674
    %v2043 = vpack.c.b16 %v1683, %v1675
    %v2044 = vpack.c.b16 %v1684, %v1676
    %v2045 = vpack.c.b16 %v1693, %v1685
    %v2046 = vpack.c.b16 %v1694, %v1686
    %v2047 = vpack.c.b16 %v1695, %v1687
    %v2048 = vpack.c.b16 %v1696, %v1688
    %v2049 = vpack.c.b16 %v1697, %v1689
    %v2050 = vpack.c.b16 %v1698, %v1690
    %v2051 = vpack.c.b16 %v1699, %v1691
    %v2052 = vpack.c.b16 %v1700, %v1692
    %v2053 = vpack.c.b16 %v1709, %v1701
    %v2054 = vpack.c.b16 %v1710, %v1702
    %v2055 = vpack.c.b16 %v1711, %v1703
    %v2056 = vpack.c.b16 %v1712, %v1704
    %v2057 = vpack.c.b16 %v1713, %v1705
    %v2058 = vpack.c.b16 %v1714, %v1706
    %v2059 = vpack.c.b16 %v1715, %v1707
    %v2060 = vpack.c.b16 %v1716, %v1708
    %v2061 = vpack.c.b16 %v1725, %v1717
    %v2062 = vpack.c.b16 %v1726, %v1718
    %v2063 = vpack.c.b16 %v1727, %v1719
    %v2064 = vpack.c.b16 %v1728, %v1720
    %v2065 = vpack.c.b16 %v1729, %v1721
    %v2066 = vpack.c.b16 %v1730, %v1722
    %v2067 = vpack.c.b16 %v1731, %v1723
    %v2068 = vpack.c.b16 %v1732, %v1724
    %v2069 = vpack.c.b16 %v1741, %v1733
    %v2070 = vpack.c.b16 %v1742, %v1734
    %v2071 = vpack.c.b16 %v1743, %v1735
    %v2072 = vpack.c.b16 %v1744, %v1736
    %v2073 = vpack.c.b16 %v1745, %v1737
    %v2074 = vpack.c.b16 %v1746, %v1738
    %v2075 = vpack.c.b16 %v1747, %v1739
    %v2076 = vpack.c.b16 %v1748, %v1740
    %v2077 = vpack.c.b16 %v1757, %v1749
    %v2078 = vpack.c.b16 %v1758, %v1750
    %v2079 = vpack.c.b16 %v1759, %v1751
    %v2080 = vpack.c.b16 %v1760, %v1752
    %v2081 = vpack.c.b16 %v1761, %v1753
    %v2082 = vpack.c.b16 %v1762, %v1754
    %v2083 = vpack.c.b16 %v1763, %v1755
    %v2084 = vpack.c.b16 %v1764, %v1756
    %v2085 = vpack.c.b16 %v1773, %v1765
    %v2086 = vpack.c.b16 %v1774, %v1766
    %v2087 = vpack.c.b16 %v1775, %v1767
    %v2088 = vpack.c.b16 %v1776, %v1768
    %v2089 = vpack.c.b16 %v1777, %v1769
    %v2090 = vpack.c.b16 %v1778, %v1770
    %v2091 = vpack.c.b16 %v1779, %v1771
    %v2092 = vpack.c.b16 %v1780, %v1772
    %v2093 = vpack.c.b16 %v1789, %v1781
    %v2094 = vpack.c.b16 %v1790, %v1782
    %v2095 = vpack.c.b16 %v1791, %v1783
    %v2096 = vpack.c.b16 %v1792, %v1784
    %v2097 = vpack.c.b16 %v1793, %v1785
    %v2098 = vpack.c.b16 %v1794, %v1786
    %v2099 = vpack.c.b16 %v1795, %v1787
    %v2100 = vpack.c.b16 %v1796, %v1788
    %v2101 = vpack.c.b16 %v1805, %v1797
    %v2102 = vpack.c.b16 %v1806, %v1798
    %v2103 = vpack.c.b16 %v1807, %v1799
    %v2104 = vpack.c.b16 %v1808, %v1800
    %v2105 = vpack.c.b16 %v1809, %v1801
    %v2106 = vpack.c.b16 %v1810, %v1802
    %v2107 = vpack.c.b16 %v1811, %v1803
    %v2108 = vpack.c.b16 %v1812, %v1804
    %v2109 = vpack.c.b16 %v1821, %v1813
    %v2110 = vpack.c.b16 %v1822, %v1814
    %v2111 = vpack.c.b16 %v1823, %v1815
    %v2112 = vpack.c.b16 %v1824, %v1816
    %v2113 = vpack.c.b16 %v1825, %v1817
    %v2114 = vpack.c.b16 %v1826, %v1818
    %v2115 = vpack.c.b16 %v1827, %v1819
    %v2116 = vpack.c.b16 %v1828, %v1820
    %v2117 = vpack.c.b16 %v1837, %v1829
    %v2118 = vpack.c.b16 %v1838, %v1830
    %v2119 = vpack.c.b16 %v1839, %v1831
    %v2120 = vpack.c.b16 %v1840, %v1832
    %v2121 = vpack.c.b16 %v1841, %v1833
    %v2122 = vpack.c.b16 %v1842, %v1834
    %v2123 = vpack.c.b16 %v1843, %v1835
    %v2124 = vpack.c.b16 %v1844, %v1836
    %v2125 = vpack.c.b16 %v1853, %v1845
    %v2126 = vpack.c.b16 %v1854, %v1846
    %v2127 = vpack.c.b16 %v1855, %v1847
    %v2128 = vpack.c.b16 %v1856, %v1848
    %v2129 = vpack.c.b16 %v1857, %v1849
    %v2130 = vpack.c.b16 %v1858, %v1850
    %v2131 = vpack.c.b16 %v1859, %v1851
    %v2132 = vpack.c.b16 %v1860, %v1852
    %v2133 = vpack.c.b16 %v1869, %v1861
    %v2134 = vpack.c.b16 %v1870, %v1862
    %v2135 = vpack.c.b16 %v1871, %v1863
    %v2136 = vpack.c.b16 %v1872, %v1864
    %v2137 = vpack.c.b16 %v1873, %v1865
    %v2138 = vpack.c.b16 %v1874, %v1866
    %v2139 = vpack.c.b16 %v1875, %v1867
    %v2140 = vpack.c.b16 %v1876, %v1868
    %v2141 = vpack.c.b16 %v1885, %v1877
    %v2142 = vpack.c.b16 %v1886, %v1878
    %v2143 = vpack.c.b16 %v1887, %v1879
    %v2144 = vpack.c.b16 %v1888, %v1880
    %v2145 = vpack.c.b16 %v1889, %v1881
    %v2146 = vpack.c.b16 %v1890, %v1882
    %v2147 = vpack.c.b16 %v1891, %v1883
    %v2148 = vpack.c.b16 %v1892, %v1884
    %2405 = vmatpush.bf16.msra.mxu0 %v1949
    %2406 = vmatpush.bf16.msra.mxu0 %v1941
    %2407 = vmatpush.bf16.msra.mxu0 %v1933
    %2408 = vmatpush.bf16.msra.mxu0 %v1925
    %2409 = vmatpush.bf16.msra.mxu0 %v1917
    %2410 = vmatpush.bf16.msra.mxu0 %v1909
    %2411 = vmatpush.bf16.msra.mxu0 %v1901
    %2412 = vmatpush.bf16.msra.mxu0 %v1893
    %2413 = vmatmul.bf16.gmra.mxu0 %v847
    %v2414 = vpop.f32.mrf.mxu0
    %v2415 = vadd.f32 %v1109, %v2414
    %v2416 = vpop.f32.mrf.mxu0
    %v2417 = vadd.f32 %v1109, %v2416
    %2418 = vdwg.mxu0
    %2419 = vmatpush.bf16.msra.mxu0 %v2013
    %2420 = vmatpush.bf16.msra.mxu0 %v2005
    %2421 = vmatpush.bf16.msra.mxu0 %v1997
    %2422 = vmatpush.bf16.msra.mxu0 %v1989
    %2423 = vmatpush.bf16.msra.mxu0 %v1981
    %2424 = vmatpush.bf16.msra.mxu0 %v1973
    %2425 = vmatpush.bf16.msra.mxu0 %v1965
    %2426 = vmatpush.bf16.msra.mxu0 %v1957
    %2427 = vmatmul.bf16.gmra.mxu0 %v848
    %v2428 = vpop.f32.mrf.mxu0
    %v2429 = vadd.f32 %v2415, %v2428
    %v2430 = vpop.f32.mrf.mxu0
    %v2431 = vadd.f32 %v2417, %v2430
    %2432 = vdwg.mxu0
    %2433 = vmatpush.bf16.msra.mxu0 %v2077
    %2434 = vmatpush.bf16.msra.mxu0 %v2069
    %2435 = vmatpush.bf16.msra.mxu0 %v2061
    %2436 = vmatpush.bf16.msra.mxu0 %v2053
    %2437 = vmatpush.bf16.msra.mxu0 %v2045
    %2438 = vmatpush.bf16.msra.mxu0 %v2037
    %2439 = vmatpush.bf16.msra.mxu0 %v2029
    %2440 = vmatpush.bf16.msra.mxu0 %v2021
    %2441 = vmatmul.bf16.gmra.mxu0 %v849
    %v2442 = vpop.f32.mrf.mxu0
    %v2443 = vadd.f32 %v2429, %v2442
    %v2444 = vpop.f32.mrf.mxu0
    %v2445 = vadd.f32 %v2431, %v2444
    %2446 = vdwg.mxu0
    %2447 = vmatpush.bf16.msra.mxu0 %v2141
    %2448 = vmatpush.bf16.msra.mxu0 %v2133
    %2449 = vmatpush.bf16.msra.mxu0 %v2125
    %2450 = vmatpush.bf16.msra.mxu0 %v2117
    %2451 = vmatpush.bf16.msra.mxu0 %v2109
    %2452 = vmatpush.bf16.msra.mxu0 %v2101
    %2453 = vmatpush.bf16.msra.mxu0 %v2093
    %2454 = vmatpush.bf16.msra.mxu0 %v2085
    %2455 = vmatmul.bf16.gmra.mxu0 %v850
    %v2456 = vpop.f32.mrf.mxu0
    %v2457 = vadd.f32 %v2443, %v2456
    %v2458 = vpop.f32.mrf.mxu0
    %v2459 = vadd.f32 %v2445, %v2458
    %2460 = vdwg.mxu0
    %2461 = vmatpush.bf16.msra.mxu0 %v1950
    %2462 = vmatpush.bf16.msra.mxu0 %v1942
    %2463 = vmatpush.bf16.msra.mxu0 %v1934
    %2464 = vmatpush.bf16.msra.mxu0 %v1926
    %2465 = vmatpush.bf16.msra.mxu0 %v1918
    %2466 = vmatpush.bf16.msra.mxu0 %v1910
    %2467 = vmatpush.bf16.msra.mxu0 %v1902
    %2468 = vmatpush.bf16.msra.mxu0 %v1894
    %2469 = vmatmul.bf16.gmra.mxu0 %v847
    %v2470 = vpop.f32.mrf.mxu0
    %v2471 = vadd.f32 %v1110, %v2470
    %v2472 = vpop.f32.mrf.mxu0
    %v2473 = vadd.f32 %v1110, %v2472
    %2474 = vdwg.mxu0
    %2475 = vmatpush.bf16.msra.mxu0 %v2014
    %2476 = vmatpush.bf16.msra.mxu0 %v2006
    %2477 = vmatpush.bf16.msra.mxu0 %v1998
    %2478 = vmatpush.bf16.msra.mxu0 %v1990
    %2479 = vmatpush.bf16.msra.mxu0 %v1982
    %2480 = vmatpush.bf16.msra.mxu0 %v1974
    %2481 = vmatpush.bf16.msra.mxu0 %v1966
    %2482 = vmatpush.bf16.msra.mxu0 %v1958
    %2483 = vmatmul.bf16.gmra.mxu0 %v848
    %v2484 = vpop.f32.mrf.mxu0
    %v2485 = vadd.f32 %v2471, %v2484
    %v2486 = vpop.f32.mrf.mxu0
    %v2487 = vadd.f32 %v2473, %v2486
    %2488 = vdwg.mxu0
    %2489 = vmatpush.bf16.msra.mxu0 %v2078
    %2490 = vmatpush.bf16.msra.mxu0 %v2070
    %2491 = vmatpush.bf16.msra.mxu0 %v2062
    %2492 = vmatpush.bf16.msra.mxu0 %v2054
    %2493 = vmatpush.bf16.msra.mxu0 %v2046
    %2494 = vmatpush.bf16.msra.mxu0 %v2038
    %2495 = vmatpush.bf16.msra.mxu0 %v2030
    %2496 = vmatpush.bf16.msra.mxu0 %v2022
    %2497 = vmatmul.bf16.gmra.mxu0 %v849
    %v2498 = vpop.f32.mrf.mxu0
    %v2499 = vadd.f32 %v2485, %v2498
    %v2500 = vpop.f32.mrf.mxu0
    %v2501 = vadd.f32 %v2487, %v2500
    %2502 = vdwg.mxu0
    %2503 = vmatpush.bf16.msra.mxu0 %v2142
    %2504 = vmatpush.bf16.msra.mxu0 %v2134
    %2505 = vmatpush.bf16.msra.mxu0 %v2126
    %2506 = vmatpush.bf16.msra.mxu0 %v2118
    %2507 = vmatpush.bf16.msra.mxu0 %v2110
    %2508 = vmatpush.bf16.msra.mxu0 %v2102
    %2509 = vmatpush.bf16.msra.mxu0 %v2094
    %2510 = vmatpush.bf16.msra.mxu0 %v2086
    %2511 = vmatmul.bf16.gmra.mxu0 %v850
    %v2512 = vpop.f32.mrf.mxu0
    %v2513 = vadd.f32 %v2499, %v2512
    %v2514 = vpop.f32.mrf.mxu0
    %v2515 = vadd.f32 %v2501, %v2514
    %2516 = vdwg.mxu0
    %2517 = vmatpush.bf16.msra.mxu0 %v1951
    %2518 = vmatpush.bf16.msra.mxu0 %v1943
    %2519 = vmatpush.bf16.msra.mxu0 %v1935
    %2520 = vmatpush.bf16.msra.mxu0 %v1927
    %2521 = vmatpush.bf16.msra.mxu0 %v1919
    %2522 = vmatpush.bf16.msra.mxu0 %v1911
    %2523 = vmatpush.bf16.msra.mxu0 %v1903
    %2524 = vmatpush.bf16.msra.mxu0 %v1895
    %2525 = vmatmul.bf16.gmra.mxu0 %v847
    %v2526 = vpop.f32.mrf.mxu0
    %v2527 = vadd.f32 %v1111, %v2526
    %v2528 = vpop.f32.mrf.mxu0
    %v2529 = vadd.f32 %v1111, %v2528
    %2530 = vdwg.mxu0
    %2531 = vmatpush.bf16.msra.mxu0 %v2015
    %2532 = vmatpush.bf16.msra.mxu0 %v2007
    %2533 = vmatpush.bf16.msra.mxu0 %v1999
    %2534 = vmatpush.bf16.msra.mxu0 %v1991
    %2535 = vmatpush.bf16.msra.mxu0 %v1983
    %2536 = vmatpush.bf16.msra.mxu0 %v1975
    %2537 = vmatpush.bf16.msra.mxu0 %v1967
    %2538 = vmatpush.bf16.msra.mxu0 %v1959
    %2539 = vmatmul.bf16.gmra.mxu0 %v848
    %v2540 = vpop.f32.mrf.mxu0
    %v2541 = vadd.f32 %v2527, %v2540
    %v2542 = vpop.f32.mrf.mxu0
    %v2543 = vadd.f32 %v2529, %v2542
    %2544 = vdwg.mxu0
    %2545 = vmatpush.bf16.msra.mxu0 %v2079
    %2546 = vmatpush.bf16.msra.mxu0 %v2071
    %2547 = vmatpush.bf16.msra.mxu0 %v2063
    %2548 = vmatpush.bf16.msra.mxu0 %v2055
    %2549 = vmatpush.bf16.msra.mxu0 %v2047
    %2550 = vmatpush.bf16.msra.mxu0 %v2039
    %2551 = vmatpush.bf16.msra.mxu0 %v2031
    %2552 = vmatpush.bf16.msra.mxu0 %v2023
    %2553 = vmatmul.bf16.gmra.mxu0 %v849
    %v2554 = vpop.f32.mrf.mxu0
    %v2555 = vadd.f32 %v2541, %v2554
    %v2556 = vpop.f32.mrf.mxu0
    %v2557 = vadd.f32 %v2543, %v2556
    %2558 = vdwg.mxu0
    %2559 = vmatpush.bf16.msra.mxu0 %v2143
    %2560 = vmatpush.bf16.msra.mxu0 %v2135
    %2561 = vmatpush.bf16.msra.mxu0 %v2127
    %2562 = vmatpush.bf16.msra.mxu0 %v2119
    %2563 = vmatpush.bf16.msra.mxu0 %v2111
    %2564 = vmatpush.bf16.msra.mxu0 %v2103
    %2565 = vmatpush.bf16.msra.mxu0 %v2095
    %2566 = vmatpush.bf16.msra.mxu0 %v2087
    %2567 = vmatmul.bf16.gmra.mxu0 %v850
    %v2568 = vpop.f32.mrf.mxu0
    %v2569 = vadd.f32 %v2555, %v2568
    %v2570 = vpop.f32.mrf.mxu0
    %v2571 = vadd.f32 %v2557, %v2570
    %2572 = vdwg.mxu0
    %2573 = vmatpush.bf16.msra.mxu0 %v1952
    %2574 = vmatpush.bf16.msra.mxu0 %v1944
    %2575 = vmatpush.bf16.msra.mxu0 %v1936
    %2576 = vmatpush.bf16.msra.mxu0 %v1928
    %2577 = vmatpush.bf16.msra.mxu0 %v1920
    %2578 = vmatpush.bf16.msra.mxu0 %v1912
    %2579 = vmatpush.bf16.msra.mxu0 %v1904
    %2580 = vmatpush.bf16.msra.mxu0 %v1896
    %2581 = vmatmul.bf16.gmra.mxu0 %v847
    %v2582 = vpop.f32.mrf.mxu0
    %v2583 = vadd.f32 %v1112, %v2582
    %v2584 = vpop.f32.mrf.mxu0
    %v2585 = vadd.f32 %v1112, %v2584
    %2586 = vdwg.mxu0
    %2587 = vmatpush.bf16.msra.mxu0 %v2016
    %2588 = vmatpush.bf16.msra.mxu0 %v2008
    %2589 = vmatpush.bf16.msra.mxu0 %v2000
    %2590 = vmatpush.bf16.msra.mxu0 %v1992
    %2591 = vmatpush.bf16.msra.mxu0 %v1984
    %2592 = vmatpush.bf16.msra.mxu0 %v1976
    %2593 = vmatpush.bf16.msra.mxu0 %v1968
    %2594 = vmatpush.bf16.msra.mxu0 %v1960
    %2595 = vmatmul.bf16.gmra.mxu0 %v848
    %v2596 = vpop.f32.mrf.mxu0
    %v2597 = vadd.f32 %v2583, %v2596
    %v2598 = vpop.f32.mrf.mxu0
    %v2599 = vadd.f32 %v2585, %v2598
    %2600 = vdwg.mxu0
    %2601 = vmatpush.bf16.msra.mxu0 %v2080
    %2602 = vmatpush.bf16.msra.mxu0 %v2072
    %2603 = vmatpush.bf16.msra.mxu0 %v2064
    %2604 = vmatpush.bf16.msra.mxu0 %v2056
    %2605 = vmatpush.bf16.msra.mxu0 %v2048
    %2606 = vmatpush.bf16.msra.mxu0 %v2040
    %2607 = vmatpush.bf16.msra.mxu0 %v2032
    %2608 = vmatpush.bf16.msra.mxu0 %v2024
    %2609 = vmatmul.bf16.gmra.mxu0 %v849
    %v2610 = vpop.f32.mrf.mxu0
    %v2611 = vadd.f32 %v2597, %v2610
    %v2612 = vpop.f32.mrf.mxu0
    %v2613 = vadd.f32 %v2599, %v2612
    %2614 = vdwg.mxu0
    %2615 = vmatpush.bf16.msra.mxu0 %v2144
    %2616 = vmatpush.bf16.msra.mxu0 %v2136
    %2617 = vmatpush.bf16.msra.mxu0 %v2128
    %2618 = vmatpush.bf16.msra.mxu0 %v2120
    %2619 = vmatpush.bf16.msra.mxu0 %v2112
    %2620 = vmatpush.bf16.msra.mxu0 %v2104
    %2621 = vmatpush.bf16.msra.mxu0 %v2096
    %2622 = vmatpush.bf16.msra.mxu0 %v2088
    %2623 = vmatmul.bf16.gmra.mxu0 %v850
    %v2624 = vpop.f32.mrf.mxu0
    %v2625 = vadd.f32 %v2611, %v2624
    %v2626 = vpop.f32.mrf.mxu0
    %v2627 = vadd.f32 %v2613, %v2626
    %2628 = vdwg.mxu0
    %2629 = vmatpush.bf16.msra.mxu0 %v1953
    %2630 = vmatpush.bf16.msra.mxu0 %v1945
    %2631 = vmatpush.bf16.msra.mxu0 %v1937
    %2632 = vmatpush.bf16.msra.mxu0 %v1929
    %2633 = vmatpush.bf16.msra.mxu0 %v1921
    %2634 = vmatpush.bf16.msra.mxu0 %v1913
    %2635 = vmatpush.bf16.msra.mxu0 %v1905
    %2636 = vmatpush.bf16.msra.mxu0 %v1897
    %2637 = vmatmul.bf16.gmra.mxu0 %v847
    %v2638 = vpop.f32.mrf.mxu0
    %v2639 = vadd.f32 %v1113, %v2638
    %v2640 = vpop.f32.mrf.mxu0
    %v2641 = vadd.f32 %v1113, %v2640
    %2642 = vdwg.mxu0
    %2643 = vmatpush.bf16.msra.mxu0 %v2017
    %2644 = vmatpush.bf16.msra.mxu0 %v2009
    %2645 = vmatpush.bf16.msra.mxu0 %v2001
    %2646 = vmatpush.bf16.msra.mxu0 %v1993
    %2647 = vmatpush.bf16.msra.mxu0 %v1985
    %2648 = vmatpush.bf16.msra.mxu0 %v1977
    %2649 = vmatpush.bf16.msra.mxu0 %v1969
    %2650 = vmatpush.bf16.msra.mxu0 %v1961
    %2651 = vmatmul.bf16.gmra.mxu0 %v848
    %v2652 = vpop.f32.mrf.mxu0
    %v2653 = vadd.f32 %v2639, %v2652
    %v2654 = vpop.f32.mrf.mxu0
    %v2655 = vadd.f32 %v2641, %v2654
    %2656 = vdwg.mxu0
    %2657 = vmatpush.bf16.msra.mxu0 %v2081
    %2658 = vmatpush.bf16.msra.mxu0 %v2073
    %2659 = vmatpush.bf16.msra.mxu0 %v2065
    %2660 = vmatpush.bf16.msra.mxu0 %v2057
    %2661 = vmatpush.bf16.msra.mxu0 %v2049
    %2662 = vmatpush.bf16.msra.mxu0 %v2041
    %2663 = vmatpush.bf16.msra.mxu0 %v2033
    %2664 = vmatpush.bf16.msra.mxu0 %v2025
    %2665 = vmatmul.bf16.gmra.mxu0 %v849
    %v2666 = vpop.f32.mrf.mxu0
    %v2667 = vadd.f32 %v2653, %v2666
    %v2668 = vpop.f32.mrf.mxu0
    %v2669 = vadd.f32 %v2655, %v2668
    %2670 = vdwg.mxu0
    %2671 = vmatpush.bf16.msra.mxu0 %v2145
    %2672 = vmatpush.bf16.msra.mxu0 %v2137
    %2673 = vmatpush.bf16.msra.mxu0 %v2129
    %2674 = vmatpush.bf16.msra.mxu0 %v2121
    %2675 = vmatpush.bf16.msra.mxu0 %v2113
    %2676 = vmatpush.bf16.msra.mxu0 %v2105
    %2677 = vmatpush.bf16.msra.mxu0 %v2097
    %2678 = vmatpush.bf16.msra.mxu0 %v2089
    %2679 = vmatmul.bf16.gmra.mxu0 %v850
    %v2680 = vpop.f32.mrf.mxu0
    %v2681 = vadd.f32 %v2667, %v2680
    %v2682 = vpop.f32.mrf.mxu0
    %v2683 = vadd.f32 %v2669, %v2682
    %2684 = vdwg.mxu0
    %2685 = vmatpush.bf16.msra.mxu0 %v1954
    %2686 = vmatpush.bf16.msra.mxu0 %v1946
    %2687 = vmatpush.bf16.msra.mxu0 %v1938
    %2688 = vmatpush.bf16.msra.mxu0 %v1930
    %2689 = vmatpush.bf16.msra.mxu0 %v1922
    %2690 = vmatpush.bf16.msra.mxu0 %v1914
    %2691 = vmatpush.bf16.msra.mxu0 %v1906
    %2692 = vmatpush.bf16.msra.mxu0 %v1898
    %2693 = vmatmul.bf16.gmra.mxu0 %v847
    %v2694 = vpop.f32.mrf.mxu0
    %v2695 = vadd.f32 %v1114, %v2694
    %v2696 = vpop.f32.mrf.mxu0
    %v2697 = vadd.f32 %v1114, %v2696
    %2698 = vdwg.mxu0
    %2699 = vmatpush.bf16.msra.mxu0 %v2018
    %2700 = vmatpush.bf16.msra.mxu0 %v2010
    %2701 = vmatpush.bf16.msra.mxu0 %v2002
    %2702 = vmatpush.bf16.msra.mxu0 %v1994
    %2703 = vmatpush.bf16.msra.mxu0 %v1986
    %2704 = vmatpush.bf16.msra.mxu0 %v1978
    %2705 = vmatpush.bf16.msra.mxu0 %v1970
    %2706 = vmatpush.bf16.msra.mxu0 %v1962
    %2707 = vmatmul.bf16.gmra.mxu0 %v848
    %v2708 = vpop.f32.mrf.mxu0
    %v2709 = vadd.f32 %v2695, %v2708
    %v2710 = vpop.f32.mrf.mxu0
    %v2711 = vadd.f32 %v2697, %v2710
    %2712 = vdwg.mxu0
    %2713 = vmatpush.bf16.msra.mxu0 %v2082
    %2714 = vmatpush.bf16.msra.mxu0 %v2074
    %2715 = vmatpush.bf16.msra.mxu0 %v2066
    %2716 = vmatpush.bf16.msra.mxu0 %v2058
    %2717 = vmatpush.bf16.msra.mxu0 %v2050
    %2718 = vmatpush.bf16.msra.mxu0 %v2042
    %2719 = vmatpush.bf16.msra.mxu0 %v2034
    %2720 = vmatpush.bf16.msra.mxu0 %v2026
    %2721 = vmatmul.bf16.gmra.mxu0 %v849
    %v2722 = vpop.f32.mrf.mxu0
    %v2723 = vadd.f32 %v2709, %v2722
    %v2724 = vpop.f32.mrf.mxu0
    %v2725 = vadd.f32 %v2711, %v2724
    %2726 = vdwg.mxu0
    %2727 = vmatpush.bf16.msra.mxu0 %v2146
    %2728 = vmatpush.bf16.msra.mxu0 %v2138
    %2729 = vmatpush.bf16.msra.mxu0 %v2130
    %2730 = vmatpush.bf16.msra.mxu0 %v2122
    %2731 = vmatpush.bf16.msra.mxu0 %v2114
    %2732 = vmatpush.bf16.msra.mxu0 %v2106
    %2733 = vmatpush.bf16.msra.mxu0 %v2098
    %2734 = vmatpush.bf16.msra.mxu0 %v2090
    %2735 = vmatmul.bf16.gmra.mxu0 %v850
    %v2736 = vpop.f32.mrf.mxu0
    %v2737 = vadd.f32 %v2723, %v2736
    %v2738 = vpop.f32.mrf.mxu0
    %v2739 = vadd.f32 %v2725, %v2738
    %2740 = vdwg.mxu0
    %2741 = vmatpush.bf16.msra.mxu0 %v1955
    %2742 = vmatpush.bf16.msra.mxu0 %v1947
    %2743 = vmatpush.bf16.msra.mxu0 %v1939
    %2744 = vmatpush.bf16.msra.mxu0 %v1931
    %2745 = vmatpush.bf16.msra.mxu0 %v1923
    %2746 = vmatpush.bf16.msra.mxu0 %v1915
    %2747 = vmatpush.bf16.msra.mxu0 %v1907
    %2748 = vmatpush.bf16.msra.mxu0 %v1899
    %2749 = vmatmul.bf16.gmra.mxu0 %v847
    %v2750 = vpop.f32.mrf.mxu0
    %v2751 = vadd.f32 %v1115, %v2750
    %v2752 = vpop.f32.mrf.mxu0
    %v2753 = vadd.f32 %v1115, %v2752
    %2754 = vdwg.mxu0
    %2755 = vmatpush.bf16.msra.mxu0 %v2019
    %2756 = vmatpush.bf16.msra.mxu0 %v2011
    %2757 = vmatpush.bf16.msra.mxu0 %v2003
    %2758 = vmatpush.bf16.msra.mxu0 %v1995
    %2759 = vmatpush.bf16.msra.mxu0 %v1987
    %2760 = vmatpush.bf16.msra.mxu0 %v1979
    %2761 = vmatpush.bf16.msra.mxu0 %v1971
    %2762 = vmatpush.bf16.msra.mxu0 %v1963
    %2763 = vmatmul.bf16.gmra.mxu0 %v848
    %v2764 = vpop.f32.mrf.mxu0
    %v2765 = vadd.f32 %v2751, %v2764
    %v2766 = vpop.f32.mrf.mxu0
    %v2767 = vadd.f32 %v2753, %v2766
    %2768 = vdwg.mxu0
    %2769 = vmatpush.bf16.msra.mxu0 %v2083
    %2770 = vmatpush.bf16.msra.mxu0 %v2075
    %2771 = vmatpush.bf16.msra.mxu0 %v2067
    %2772 = vmatpush.bf16.msra.mxu0 %v2059
    %2773 = vmatpush.bf16.msra.mxu0 %v2051
    %2774 = vmatpush.bf16.msra.mxu0 %v2043
    %2775 = vmatpush.bf16.msra.mxu0 %v2035
    %2776 = vmatpush.bf16.msra.mxu0 %v2027
    %2777 = vmatmul.bf16.gmra.mxu0 %v849
    %v2778 = vpop.f32.mrf.mxu0
    %v2779 = vadd.f32 %v2765, %v2778
    %v2780 = vpop.f32.mrf.mxu0
    %v2781 = vadd.f32 %v2767, %v2780
    %2782 = vdwg.mxu0
    %2783 = vmatpush.bf16.msra.mxu0 %v2147
    %2784 = vmatpush.bf16.msra.mxu0 %v2139
    %2785 = vmatpush.bf16.msra.mxu0 %v2131
    %2786 = vmatpush.bf16.msra.mxu0 %v2123
    %2787 = vmatpush.bf16.msra.mxu0 %v2115
    %2788 = vmatpush.bf16.msra.mxu0 %v2107
    %2789 = vmatpush.bf16.msra.mxu0 %v2099
    %2790 = vmatpush.bf16.msra.mxu0 %v2091
    %2791 = vmatmul.bf16.gmra.mxu0 %v850
    %v2792 = vpop.f32.mrf.mxu0
    %v2793 = vadd.f32 %v2779, %v2792
    %v2794 = vpop.f32.mrf.mxu0
    %v2795 = vadd.f32 %v2781, %v2794
    %2796 = vdwg.mxu0
    %2797 = vmatpush.bf16.msra.mxu0 %v1956
    %2798 = vmatpush.bf16.msra.mxu0 %v1948
    %2799 = vmatpush.bf16.msra.mxu0 %v1940
    %2800 = vmatpush.bf16.msra.mxu0 %v1932
    %2801 = vmatpush.bf16.msra.mxu0 %v1924
    %2802 = vmatpush.bf16.msra.mxu0 %v1916
    %2803 = vmatpush.bf16.msra.mxu0 %v1908
    %2804 = vmatpush.bf16.msra.mxu0 %v1900
    %2805 = vmatmul.bf16.gmra.mxu0 %v847
    %v2806 = vpop.f32.mrf.mxu0
    %v2807 = vadd.f32 %v1116, %v2806
    %v2808 = vpop.f32.mrf.mxu0
    %v2809 = vadd.f32 %v1116, %v2808
    %2810 = vdwg.mxu0
    %2811 = vmatpush.bf16.msra.mxu0 %v2020
    %2812 = vmatpush.bf16.msra.mxu0 %v2012
    %2813 = vmatpush.bf16.msra.mxu0 %v2004
    %2814 = vmatpush.bf16.msra.mxu0 %v1996
    %2815 = vmatpush.bf16.msra.mxu0 %v1988
    %2816 = vmatpush.bf16.msra.mxu0 %v1980
    %2817 = vmatpush.bf16.msra.mxu0 %v1972
    %2818 = vmatpush.bf16.msra.mxu0 %v1964
    %2819 = vmatmul.bf16.gmra.mxu0 %v848
    %v2820 = vpop.f32.mrf.mxu0
    %v2821 = vadd.f32 %v2807, %v2820
    %v2822 = vpop.f32.mrf.mxu0
    %v2823 = vadd.f32 %v2809, %v2822
    %2824 = vdwg.mxu0
    %2825 = vmatpush.bf16.msra.mxu0 %v2084
    %2826 = vmatpush.bf16.msra.mxu0 %v2076
    %2827 = vmatpush.bf16.msra.mxu0 %v2068
    %2828 = vmatpush.bf16.msra.mxu0 %v2060
    %2829 = vmatpush.bf16.msra.mxu0 %v2052
    %2830 = vmatpush.bf16.msra.mxu0 %v2044
    %2831 = vmatpush.bf16.msra.mxu0 %v2036
    %2832 = vmatpush.bf16.msra.mxu0 %v2028
    %2833 = vmatmul.bf16.gmra.mxu0 %v849
    %v2834 = vpop.f32.mrf.mxu0
    %v2835 = vadd.f32 %v2821, %v2834
    %v2836 = vpop.f32.mrf.mxu0
    %v2837 = vadd.f32 %v2823, %v2836
    %2838 = vdwg.mxu0
    %2839 = vmatpush.bf16.msra.mxu0 %v2148
    %2840 = vmatpush.bf16.msra.mxu0 %v2140
    %2841 = vmatpush.bf16.msra.mxu0 %v2132
    %2842 = vmatpush.bf16.msra.mxu0 %v2124
    %2843 = vmatpush.bf16.msra.mxu0 %v2116
    %2844 = vmatpush.bf16.msra.mxu0 %v2108
    %2845 = vmatpush.bf16.msra.mxu0 %v2100
    %2846 = vmatpush.bf16.msra.mxu0 %v2092
    %2847 = vmatmul.bf16.gmra.mxu0 %v850
    %v2848 = vpop.f32.mrf.mxu0
    %v2849 = vadd.f32 %v2835, %v2848
    %v2850 = vpop.f32.mrf.mxu0
    %v2851 = vadd.f32 %v2837, %v2850
    %2852 = vdwg.mxu0
    %vm2853 = vcmp.gt.f32.partialorder %v2457, 0.0
    %vm2854 = vcmp.gt.f32.partialorder %v2513, 0.0
    %vm2855 = vcmp.gt.f32.partialorder %v2569, 0.0
    %vm2856 = vcmp.gt.f32.partialorder %v2625, 0.0
    %vm2857 = vcmp.gt.f32.partialorder %v2681, 0.0
    %vm2858 = vcmp.gt.f32.partialorder %v2737, 0.0
    %vm2859 = vcmp.gt.f32.partialorder %v2793, 0.0
    %vm2860 = vcmp.gt.f32.partialorder %v2849, 0.0
    %vm2861 = vcmp.gt.f32.partialorder %v2459, 0.0
    %vm2862 = vcmp.gt.f32.partialorder %v2515, 0.0
    %vm2863 = vcmp.gt.f32.partialorder %v2571, 0.0
    %vm2864 = vcmp.gt.f32.partialorder %v2627, 0.0
    %vm2865 = vcmp.gt.f32.partialorder %v2683, 0.0
    %vm2866 = vcmp.gt.f32.partialorder %v2739, 0.0
    %vm2867 = vcmp.gt.f32.partialorder %v2795, 0.0
    %vm2868 = vcmp.gt.f32.partialorder %v2851, 0.0
    %v2869 = vmul.f32 %v2457, 0.2
    %v2870 = vmul.f32 %v2513, 0.2
    %v2871 = vmul.f32 %v2569, 0.2
    %v2872 = vmul.f32 %v2625, 0.2
    %v2873 = vmul.f32 %v2681, 0.2
    %v2874 = vmul.f32 %v2737, 0.2
    %v2875 = vmul.f32 %v2793, 0.2
    %v2876 = vmul.f32 %v2849, 0.2
    %v2877 = vmul.f32 %v2459, 0.2
    %v2878 = vmul.f32 %v2515, 0.2
    %v2879 = vmul.f32 %v2571, 0.2
    %v2880 = vmul.f32 %v2627, 0.2
    %v2881 = vmul.f32 %v2683, 0.2
    %v2882 = vmul.f32 %v2739, 0.2
    %v2883 = vmul.f32 %v2795, 0.2
    %v2884 = vmul.f32 %v2851, 0.2
    %v2885 = vsel %vm2853, %v2457, %v2869
    %v2886 = vsel %vm2854, %v2513, %v2870
    %v2887 = vsel %vm2855, %v2569, %v2871
    %v2888 = vsel %vm2856, %v2625, %v2872
    %v2889 = vsel %vm2857, %v2681, %v2873
    %v2890 = vsel %vm2858, %v2737, %v2874
    %v2891 = vsel %vm2859, %v2793, %v2875
    %v2892 = vsel %vm2860, %v2849, %v2876
    %v2893 = vsel %vm2861, %v2459, %v2877
    %v2894 = vsel %vm2862, %v2515, %v2878
    %v2895 = vsel %vm2863, %v2571, %v2879
    %v2896 = vsel %vm2864, %v2627, %v2880
    %v2897 = vsel %vm2865, %v2683, %v2881
    %v2898 = vsel %vm2866, %v2739, %v2882
    %v2899 = vsel %vm2867, %v2795, %v2883
    %v2900 = vsel %vm2868, %v2851, %v2884
    %v2901 = vpack.c.bf16 %v2893, %v2885
    %v2902 = vpack.c.bf16 %v2894, %v2886
    %v2903 = vpack.c.bf16 %v2895, %v2887
    %v2904 = vpack.c.bf16 %v2896, %v2888
    %v2905 = vpack.c.bf16 %v2897, %v2889
    %v2906 = vpack.c.bf16 %v2898, %v2890
    %v2907 = vpack.c.bf16 %v2899, %v2891
    %v2908 = vpack.c.bf16 %v2900, %v2892
    %v2909 = vld [vmem:[#allocation14] sm:$0xff]
    %v2910 = vld [vmem:[#allocation14 + $0x8] sm:$0xff]
    %v2911 = vld [vmem:[#allocation14 + $0x10] sm:$0xff]
    %v2912 = vld [vmem:[#allocation14 + $0x18] sm:$0xf]
    %v2913 = vld [vmem:[#allocation14 + $0x1c] sm:$0xff]
    %v2914 = vld [vmem:[#allocation14 + $0x24] sm:$0xff]
    %v2915 = vld [vmem:[#allocation14 + $0x2c] sm:$0xff]
    %v2916 = vld [vmem:[#allocation14 + $0x34] sm:$0xf]
    %v2917 = vld [vmem:[#allocation14 + $0x38] sm:$0xff]
    %v2918 = vld [vmem:[#allocation14 + $0x40] sm:$0xff]
    %v2919 = vld [vmem:[#allocation14 + $0x48] sm:$0xff]
    %v2920 = vld [vmem:[#allocation14 + $0x50] sm:$0xf]
    %v2921 = vld [vmem:[#allocation14 + $0x54] sm:$0xff]
    %v2922 = vld [vmem:[#allocation14 + $0x5c] sm:$0xff]
    %v2923 = vld [vmem:[#allocation14 + $0x64] sm:$0xff]
    %v2924 = vld [vmem:[#allocation14 + $0x6c] sm:$0xf]
    %v2925 = vld [vmem:[#allocation14 + $0x70] sm:$0xff]
    %v2926 = vld [vmem:[#allocation14 + $0x78] sm:$0xff]
    %v2927 = vld [vmem:[#allocation14 + $0x80] sm:$0xff]
    %v2928 = vld [vmem:[#allocation14 + $0x88] sm:$0xf]
    %v2929 = vld [vmem:[#allocation14 + $0x8c] sm:$0xff]
    %v2930 = vld [vmem:[#allocation14 + $0x94] sm:$0xff]
    %v2931 = vld [vmem:[#allocation14 + $0x9c] sm:$0xff]
    %v2932 = vld [vmem:[#allocation14 + $0xa4] sm:$0xf]
    %v2933 = vld [vmem:[#allocation14 + $0xa8] sm:$0xff]
    %v2934 = vld [vmem:[#allocation14 + $0xb0] sm:$0xff]
    %v2935 = vld [vmem:[#allocation14 + $0xb8] sm:$0xff]
    %v2936 = vld [vmem:[#allocation14 + $0xc0] sm:$0xf]
    %v2937 = vld [vmem:[#allocation14 + $0xc4] sm:$0xff]
    %v2938 = vld [vmem:[#allocation14 + $0xcc] sm:$0xff]
    %v2939 = vld [vmem:[#allocation14 + $0xd4] sm:$0xff]
    %v2940 = vld [vmem:[#allocation14 + $0xdc] sm:$0xf]
    %v2941 = vld [vmem:[#allocation14 + $0xe0] sm:$0xff]
    %v2942 = vld [vmem:[#allocation14 + $0xe8] sm:$0xff]
    %v2943 = vld [vmem:[#allocation14 + $0xf0] sm:$0xff]
    %v2944 = vld [vmem:[#allocation14 + $0xf8] sm:$0xf]
    %v2945 = vld [vmem:[#allocation14 + $0xfc] sm:$0xff]
    %v2946 = vld [vmem:[#allocation14 + $0x104] sm:$0xff]
    %v2947 = vld [vmem:[#allocation14 + $0x10c] sm:$0xff]
    %v2948 = vld [vmem:[#allocation14 + $0x114] sm:$0xf]
    %v2949 = vld [vmem:[#allocation14 + $0x118] sm:$0xff]
    %v2950 = vld [vmem:[#allocation14 + $0x120] sm:$0xff]
    %v2951 = vld [vmem:[#allocation14 + $0x128] sm:$0xff]
    %v2952 = vld [vmem:[#allocation14 + $0x130] sm:$0xf]
    %v2953 = vld [vmem:[#allocation14 + $0x134] sm:$0xff]
    %v2954 = vld [vmem:[#allocation14 + $0x13c] sm:$0xff]
    %v2955 = vld [vmem:[#allocation14 + $0x144] sm:$0xff]
    %v2956 = vld [vmem:[#allocation14 + $0x14c] sm:$0xf]
    %v2957 = vld [vmem:[#allocation14 + $0x150] sm:$0xff]
    %v2958 = vld [vmem:[#allocation14 + $0x158] sm:$0xff]
    %v2959 = vld [vmem:[#allocation14 + $0x160] sm:$0xff]
    %v2960 = vld [vmem:[#allocation14 + $0x168] sm:$0xf]
    %v2961 = vld [vmem:[#allocation14 + $0x16c] sm:$0xff]
    %v2962 = vld [vmem:[#allocation14 + $0x174] sm:$0xff]
    %v2963 = vld [vmem:[#allocation14 + $0x17c] sm:$0xff]
    %v2964 = vld [vmem:[#allocation14 + $0x184] sm:$0xf]
    %v2965 = vld [vmem:[#allocation14 + $0x188] sm:$0xff]
    %v2966 = vld [vmem:[#allocation14 + $0x190] sm:$0xff]
    %v2967 = vld [vmem:[#allocation14 + $0x198] sm:$0xff]
    %v2968 = vld [vmem:[#allocation14 + $0x1a0] sm:$0xf]
    %v2969 = vld [vmem:[#allocation14 + $0x1a4] sm:$0xff]
    %v2970 = vld [vmem:[#allocation14 + $0x1ac] sm:$0xff]
    %v2971 = vld [vmem:[#allocation14 + $0x1b4] sm:$0xff]
    %v2972 = vld [vmem:[#allocation14 + $0x1bc] sm:$0xf]
    %v2973 = vld [vmem:[#allocation14 + $0x1c0] sm:$0xff]
    %v2974 = vld [vmem:[#allocation14 + $0x1c8] sm:$0xff]
    %v2975 = vld [vmem:[#allocation14 + $0x1d0] sm:$0xff]
    %v2976 = vld [vmem:[#allocation14 + $0x1d8] sm:$0xf]
    %v2977 = vld [vmem:[#allocation14 + $0x1dc] sm:$0xff]
    %v2978 = vld [vmem:[#allocation14 + $0x1e4] sm:$0xff]
    %v2979 = vld [vmem:[#allocation14 + $0x1ec] sm:$0xff]
    %v2980 = vld [vmem:[#allocation14 + $0x1f4] sm:$0xf]
    %v2981 = vld [vmem:[#allocation14 + $0x1f8] sm:$0xff]
    %v2982 = vld [vmem:[#allocation14 + $0x200] sm:$0xff]
    %v2983 = vld [vmem:[#allocation14 + $0x208] sm:$0xff]
    %v2984 = vld [vmem:[#allocation14 + $0x210] sm:$0xf]
    %v2985 = vld [vmem:[#allocation14 + $0x214] sm:$0xff]
    %v2986 = vld [vmem:[#allocation14 + $0x21c] sm:$0xff]
    %v2987 = vld [vmem:[#allocation14 + $0x224] sm:$0xff]
    %v2988 = vld [vmem:[#allocation14 + $0x22c] sm:$0xf]
    %v2989 = vld [vmem:[#allocation14 + $0x230] sm:$0xff]
    %v2990 = vld [vmem:[#allocation14 + $0x238] sm:$0xff]
    %v2991 = vld [vmem:[#allocation14 + $0x240] sm:$0xff]
    %v2992 = vld [vmem:[#allocation14 + $0x248] sm:$0xf]
    %v2993 = vld [vmem:[#allocation14 + $0x24c] sm:$0xff]
    %v2994 = vld [vmem:[#allocation14 + $0x254] sm:$0xff]
    %v2995 = vld [vmem:[#allocation14 + $0x25c] sm:$0xff]
    %v2996 = vld [vmem:[#allocation14 + $0x264] sm:$0xf]
    %v2997 = vld [vmem:[#allocation14 + $0x268] sm:$0xff]
    %v2998 = vld [vmem:[#allocation14 + $0x270] sm:$0xff]
    %v2999 = vld [vmem:[#allocation14 + $0x278] sm:$0xff]
    %v3000 = vld [vmem:[#allocation14 + $0x280] sm:$0xf]
    %v3001 = vld [vmem:[#allocation14 + $0x284] sm:$0xff]
    %v3002 = vld [vmem:[#allocation14 + $0x28c] sm:$0xff]
    %v3003 = vld [vmem:[#allocation14 + $0x294] sm:$0xff]
    %v3004 = vld [vmem:[#allocation14 + $0x29c] sm:$0xf]
    %v3005 = vld [vmem:[#allocation14 + $0x2a0] sm:$0xff]
    %v3006 = vld [vmem:[#allocation14 + $0x2a8] sm:$0xff]
    %v3007 = vld [vmem:[#allocation14 + $0x2b0] sm:$0xff]
    %v3008 = vld [vmem:[#allocation14 + $0x2b8] sm:$0xf]
    %v3009 = vld [vmem:[#allocation14 + $0x2bc] sm:$0xff]
    %v3010 = vld [vmem:[#allocation14 + $0x2c4] sm:$0xff]
    %v3011 = vld [vmem:[#allocation14 + $0x2cc] sm:$0xff]
    %v3012 = vld [vmem:[#allocation14 + $0x2d4] sm:$0xf]
    %v3013 = vld [vmem:[#allocation14 + $0x2d8] sm:$0xff]
    %v3014 = vld [vmem:[#allocation14 + $0x2e0] sm:$0xff]
    %v3015 = vld [vmem:[#allocation14 + $0x2e8] sm:$0xff]
    %v3016 = vld [vmem:[#allocation14 + $0x2f0] sm:$0xf]
    %v3017 = vld [vmem:[#allocation14 + $0x2f4] sm:$0xff]
    %v3018 = vld [vmem:[#allocation14 + $0x2fc] sm:$0xff]
    %v3019 = vld [vmem:[#allocation14 + $0x304] sm:$0xff]
    %v3020 = vld [vmem:[#allocation14 + $0x30c] sm:$0xf]
    %v3021 = vld [vmem:[#allocation14 + $0x310] sm:$0xff]
    %v3022 = vld [vmem:[#allocation14 + $0x318] sm:$0xff]
    %v3023 = vld [vmem:[#allocation14 + $0x320] sm:$0xff]
    %v3024 = vld [vmem:[#allocation14 + $0x328] sm:$0xf]
    %v3025 = vld [vmem:[#allocation14 + $0x32c] sm:$0xff]
    %v3026 = vld [vmem:[#allocation14 + $0x334] sm:$0xff]
    %v3027 = vld [vmem:[#allocation14 + $0x33c] sm:$0xff]
    %v3028 = vld [vmem:[#allocation14 + $0x344] sm:$0xf]
    %v3029 = vld [vmem:[#allocation14 + $0x348] sm:$0xff]
    %v3030 = vld [vmem:[#allocation14 + $0x350] sm:$0xff]
    %v3031 = vld [vmem:[#allocation14 + $0x358] sm:$0xff]
    %v3032 = vld [vmem:[#allocation14 + $0x360] sm:$0xf]
    %v3033 = vld [vmem:[#allocation14 + $0x364] sm:$0xff]
    %v3034 = vld [vmem:[#allocation14 + $0x36c] sm:$0xff]
    %v3035 = vld [vmem:[#allocation14 + $0x374] sm:$0xff]
    %v3036 = vld [vmem:[#allocation14 + $0x37c] sm:$0xf]
    %v3037 = vld [vmem:[#allocation14 + $0x380] sm:$0xff]
    %v3038 = vld [vmem:[#allocation14 + $0x388] sm:$0xff]
    %v3039 = vld [vmem:[#allocation14 + $0x390] sm:$0xff]
    %v3040 = vld [vmem:[#allocation14 + $0x398] sm:$0xf]
    %v3041 = vld [vmem:[#allocation14 + $0x39c] sm:$0xff]
    %v3042 = vld [vmem:[#allocation14 + $0x3a4] sm:$0xff]
    %v3043 = vld [vmem:[#allocation14 + $0x3ac] sm:$0xff]
    %v3044 = vld [vmem:[#allocation14 + $0x3b4] sm:$0xf]
    %v3045 = vld [vmem:[#allocation14 + $0x3b8] sm:$0xff]
    %v3046 = vld [vmem:[#allocation14 + $0x3c0] sm:$0xff]
    %v3047 = vld [vmem:[#allocation14 + $0x3c8] sm:$0xff]
    %v3048 = vld [vmem:[#allocation14 + $0x3d0] sm:$0xf]
    %v3049 = vld [vmem:[#allocation14 + $0x3d4] sm:$0xff]
    %v3050 = vld [vmem:[#allocation14 + $0x3dc] sm:$0xff]
    %v3051 = vld [vmem:[#allocation14 + $0x3e4] sm:$0xff]
    %v3052 = vld [vmem:[#allocation14 + $0x3ec] sm:$0xf]
    %v3053 = vld [vmem:[#allocation14 + $0x3f0] sm:$0xff]
    %v3054 = vld [vmem:[#allocation14 + $0x3f8] sm:$0xff]
    %v3055 = vld [vmem:[#allocation14 + $0x400] sm:$0xff]
    %v3056 = vld [vmem:[#allocation14 + $0x408] sm:$0xf]
    %v3057 = vld [vmem:[#allocation14 + $0x40c] sm:$0xff]
    %v3058 = vld [vmem:[#allocation14 + $0x414] sm:$0xff]
    %v3059 = vld [vmem:[#allocation14 + $0x41c] sm:$0xff]
    %v3060 = vld [vmem:[#allocation14 + $0x424] sm:$0xf]
    %v3061 = vld [vmem:[#allocation14 + $0x428] sm:$0xff]
    %v3062 = vld [vmem:[#allocation14 + $0x430] sm:$0xff]
    %v3063 = vld [vmem:[#allocation14 + $0x438] sm:$0xff]
    %v3064 = vld [vmem:[#allocation14 + $0x440] sm:$0xf]
    %v3065 = vld [vmem:[#allocation14 + $0x444] sm:$0xff]
    %v3066 = vld [vmem:[#allocation14 + $0x44c] sm:$0xff]
    %v3067 = vld [vmem:[#allocation14 + $0x454] sm:$0xff]
    %v3068 = vld [vmem:[#allocation14 + $0x45c] sm:$0xf]
    %v3069 = vld [vmem:[#allocation14 + $0x460] sm:$0xff]
    %v3070 = vld [vmem:[#allocation14 + $0x468] sm:$0xff]
    %v3071 = vld [vmem:[#allocation14 + $0x470] sm:$0xff]
    %v3072 = vld [vmem:[#allocation14 + $0x478] sm:$0xf]
    %v3073 = vld [vmem:[#allocation14 + $0x47c] sm:$0xff]
    %v3074 = vld [vmem:[#allocation14 + $0x484] sm:$0xff]
    %v3075 = vld [vmem:[#allocation14 + $0x48c] sm:$0xff]
    %v3076 = vld [vmem:[#allocation14 + $0x494] sm:$0xf]
    %v3077 = vld [vmem:[#allocation14 + $0x498] sm:$0xff]
    %v3078 = vld [vmem:[#allocation14 + $0x4a0] sm:$0xff]
    %v3079 = vld [vmem:[#allocation14 + $0x4a8] sm:$0xff]
    %v3080 = vld [vmem:[#allocation14 + $0x4b0] sm:$0xf]
    %v3081 = vld [vmem:[#allocation14 + $0x4b4] sm:$0xff]
    %v3082 = vld [vmem:[#allocation14 + $0x4bc] sm:$0xff]
    %v3083 = vld [vmem:[#allocation14 + $0x4c4] sm:$0xff]
    %v3084 = vld [vmem:[#allocation14 + $0x4cc] sm:$0xf]
    %v3085 = vld [vmem:[#allocation14 + $0x4d0] sm:$0xff]
    %v3086 = vld [vmem:[#allocation14 + $0x4d8] sm:$0xff]
    %v3087 = vld [vmem:[#allocation14 + $0x4e0] sm:$0xff]
    %v3088 = vld [vmem:[#allocation14 + $0x4e8] sm:$0xf]
    %v3089 = vld [vmem:[#allocation14 + $0x4ec] sm:$0xff]
    %v3090 = vld [vmem:[#allocation14 + $0x4f4] sm:$0xff]
    %v3091 = vld [vmem:[#allocation14 + $0x4fc] sm:$0xff]
    %v3092 = vld [vmem:[#allocation14 + $0x504] sm:$0xf]
    %v3093 = vld [vmem:[#allocation14 + $0x508] sm:$0xff]
    %v3094 = vld [vmem:[#allocation14 + $0x510] sm:$0xff]
    %v3095 = vld [vmem:[#allocation14 + $0x518] sm:$0xff]
    %v3096 = vld [vmem:[#allocation14 + $0x520] sm:$0xf]
    %v3097 = vld [vmem:[#allocation14 + $0x524] sm:$0xff]
    %v3098 = vld [vmem:[#allocation14 + $0x52c] sm:$0xff]
    %v3099 = vld [vmem:[#allocation14 + $0x534] sm:$0xff]
    %v3100 = vld [vmem:[#allocation14 + $0x53c] sm:$0xf]
    %v3101 = vld [vmem:[#allocation14 + $0x540] sm:$0xff]
    %v3102 = vld [vmem:[#allocation14 + $0x548] sm:$0xff]
    %v3103 = vld [vmem:[#allocation14 + $0x550] sm:$0xff]
    %v3104 = vld [vmem:[#allocation14 + $0x558] sm:$0xf]
    %v3105 = vld [vmem:[#allocation14 + $0x55c] sm:$0xff]
    %v3106 = vld [vmem:[#allocation14 + $0x564] sm:$0xff]
    %v3107 = vld [vmem:[#allocation14 + $0x56c] sm:$0xff]
    %v3108 = vld [vmem:[#allocation14 + $0x574] sm:$0xf]
    %v3109 = vld [vmem:[#allocation14 + $0x578] sm:$0xff]
    %v3110 = vld [vmem:[#allocation14 + $0x580] sm:$0xff]
    %v3111 = vld [vmem:[#allocation14 + $0x588] sm:$0xff]
    %v3112 = vld [vmem:[#allocation14 + $0x590] sm:$0xf]
    %v3113 = vld [vmem:[#allocation14 + $0x594] sm:$0xff]
    %v3114 = vld [vmem:[#allocation14 + $0x59c] sm:$0xff]
    %v3115 = vld [vmem:[#allocation14 + $0x5a4] sm:$0xff]
    %v3116 = vld [vmem:[#allocation14 + $0x5ac] sm:$0xf]
    %v3117 = vld [vmem:[#allocation14 + $0x5b0] sm:$0xff]
    %v3118 = vld [vmem:[#allocation14 + $0x5b8] sm:$0xff]
    %v3119 = vld [vmem:[#allocation14 + $0x5c0] sm:$0xff]
    %v3120 = vld [vmem:[#allocation14 + $0x5c8] sm:$0xf]
    %v3121 = vld [vmem:[#allocation14 + $0x5cc] sm:$0xff]
    %v3122 = vld [vmem:[#allocation14 + $0x5d4] sm:$0xff]
    %v3123 = vld [vmem:[#allocation14 + $0x5dc] sm:$0xff]
    %v3124 = vld [vmem:[#allocation14 + $0x5e4] sm:$0xf]
    %v3125 = vld [vmem:[#allocation14 + $0x5e8] sm:$0xff]
    %v3126 = vld [vmem:[#allocation14 + $0x5f0] sm:$0xff]
    %v3127 = vld [vmem:[#allocation14 + $0x5f8] sm:$0xff]
    %v3128 = vld [vmem:[#allocation14 + $0x600] sm:$0xf]
    %v3129 = vld [vmem:[#allocation14 + $0x604] sm:$0xff]
    %v3130 = vld [vmem:[#allocation14 + $0x60c] sm:$0xff]
    %v3131 = vld [vmem:[#allocation14 + $0x614] sm:$0xff]
    %v3132 = vld [vmem:[#allocation14 + $0x61c] sm:$0xf]
    %v3133 = vld [vmem:[#allocation14 + $0x620] sm:$0xff]
    %v3134 = vld [vmem:[#allocation14 + $0x628] sm:$0xff]
    %v3135 = vld [vmem:[#allocation14 + $0x630] sm:$0xff]
    %v3136 = vld [vmem:[#allocation14 + $0x638] sm:$0xf]
    %v3137 = vld [vmem:[#allocation14 + $0x63c] sm:$0xff]
    %v3138 = vld [vmem:[#allocation14 + $0x644] sm:$0xff]
    %v3139 = vld [vmem:[#allocation14 + $0x64c] sm:$0xff]
    %v3140 = vld [vmem:[#allocation14 + $0x654] sm:$0xf]
    %v3141 = vld [vmem:[#allocation14 + $0x658] sm:$0xff]
    %v3142 = vld [vmem:[#allocation14 + $0x660] sm:$0xff]
    %v3143 = vld [vmem:[#allocation14 + $0x668] sm:$0xff]
    %v3144 = vld [vmem:[#allocation14 + $0x670] sm:$0xf]
    %v3145 = vld [vmem:[#allocation14 + $0x674] sm:$0xff]
    %v3146 = vld [vmem:[#allocation14 + $0x67c] sm:$0xff]
    %v3147 = vld [vmem:[#allocation14 + $0x684] sm:$0xff]
    %v3148 = vld [vmem:[#allocation14 + $0x68c] sm:$0xf]
    %v3149 = vld [vmem:[#allocation14 + $0x690] sm:$0xff]
    %v3150 = vld [vmem:[#allocation14 + $0x698] sm:$0xff]
    %v3151 = vld [vmem:[#allocation14 + $0x6a0] sm:$0xff]
    %v3152 = vld [vmem:[#allocation14 + $0x6a8] sm:$0xf]
    %v3153 = vld [vmem:[#allocation14 + $0x6ac] sm:$0xff]
    %v3154 = vld [vmem:[#allocation14 + $0x6b4] sm:$0xff]
    %v3155 = vld [vmem:[#allocation14 + $0x6bc] sm:$0xff]
    %v3156 = vld [vmem:[#allocation14 + $0x6c4] sm:$0xf]
    %v3157 = vld [vmem:[#allocation14 + $0x6c8] sm:$0xff]
    %v3158 = vld [vmem:[#allocation14 + $0x6d0] sm:$0xff]
    %v3159 = vld [vmem:[#allocation14 + $0x6d8] sm:$0xff]
    %v3160 = vld [vmem:[#allocation14 + $0x6e0] sm:$0xf]
    %v3161 = vld [vmem:[#allocation14 + $0x6e4] sm:$0xff]
    %v3162 = vld [vmem:[#allocation14 + $0x6ec] sm:$0xff]
    %v3163 = vld [vmem:[#allocation14 + $0x6f4] sm:$0xff]
    %v3164 = vld [vmem:[#allocation14 + $0x6fc] sm:$0xf]
    %v3165 = vld [vmem:[#allocation14 + $0x700] sm:$0xff]
    %v3166 = vld [vmem:[#allocation14 + $0x708] sm:$0xff]
    %v3167 = vld [vmem:[#allocation14 + $0x710] sm:$0xff]
    %v3168 = vld [vmem:[#allocation14 + $0x718] sm:$0xf]
    %v3169 = vld [vmem:[#allocation14 + $0x71c] sm:$0xff]
    %v3170 = vld [vmem:[#allocation14 + $0x724] sm:$0xff]
    %v3171 = vld [vmem:[#allocation14 + $0x72c] sm:$0xff]
    %v3172 = vld [vmem:[#allocation14 + $0x734] sm:$0xf]
    %v3173 = vld [vmem:[#allocation14 + $0x738] sm:$0xff]
    %v3174 = vld [vmem:[#allocation14 + $0x740] sm:$0xff]
    %v3175 = vld [vmem:[#allocation14 + $0x748] sm:$0xff]
    %v3176 = vld [vmem:[#allocation14 + $0x750] sm:$0xf]
    %v3177 = vld [vmem:[#allocation14 + $0x754] sm:$0xff]
    %v3178 = vld [vmem:[#allocation14 + $0x75c] sm:$0xff]
    %v3179 = vld [vmem:[#allocation14 + $0x764] sm:$0xff]
    %v3180 = vld [vmem:[#allocation14 + $0x76c] sm:$0xf]
    %v3181 = vld [vmem:[#allocation14 + $0x770] sm:$0xff]
    %v3182 = vld [vmem:[#allocation14 + $0x778] sm:$0xff]
    %v3183 = vld [vmem:[#allocation14 + $0x780] sm:$0xff]
    %v3184 = vld [vmem:[#allocation14 + $0x788] sm:$0xf]
    %v3185 = vld [vmem:[#allocation14 + $0x78c] sm:$0xff]
    %v3186 = vld [vmem:[#allocation14 + $0x794] sm:$0xff]
    %v3187 = vld [vmem:[#allocation14 + $0x79c] sm:$0xff]
    %v3188 = vld [vmem:[#allocation14 + $0x7a4] sm:$0xf]
    %v3189 = vld [vmem:[#allocation14 + $0x7a8] sm:$0xff]
    %v3190 = vld [vmem:[#allocation14 + $0x7b0] sm:$0xff]
    %v3191 = vld [vmem:[#allocation14 + $0x7b8] sm:$0xff]
    %v3192 = vld [vmem:[#allocation14 + $0x7c0] sm:$0xf]
    %v3193 = vld [vmem:[#allocation14 + $0x7c4] sm:$0xff]
    %v3194 = vld [vmem:[#allocation14 + $0x7cc] sm:$0xff]
    %v3195 = vld [vmem:[#allocation14 + $0x7d4] sm:$0xff]
    %v3196 = vld [vmem:[#allocation14 + $0x7dc] sm:$0xf]
    %v3197 = vld [vmem:[#allocation14 + $0x7e0] sm:$0xff]
    %v3198 = vld [vmem:[#allocation14 + $0x7e8] sm:$0xff]
    %v3199 = vld [vmem:[#allocation14 + $0x7f0] sm:$0xff]
    %v3200 = vld [vmem:[#allocation14 + $0x7f8] sm:$0xf]
    %v3201 = vld [vmem:[#allocation14 + $0x7fc] sm:$0xff]
    %v3202 = vld [vmem:[#allocation14 + $0x804] sm:$0xff]
    %v3203 = vld [vmem:[#allocation14 + $0x80c] sm:$0xff]
    %v3204 = vld [vmem:[#allocation14 + $0x814] sm:$0xf]
    %v3205 = vld [vmem:[#allocation14 + $0x818] sm:$0xff]
    %v3206 = vld [vmem:[#allocation14 + $0x820] sm:$0xff]
    %v3207 = vld [vmem:[#allocation14 + $0x828] sm:$0xff]
    %v3208 = vld [vmem:[#allocation14 + $0x830] sm:$0xf]
    %v3209 = vld [vmem:[#allocation14 + $0x834] sm:$0xff]
    %v3210 = vld [vmem:[#allocation14 + $0x83c] sm:$0xff]
    %v3211 = vld [vmem:[#allocation14 + $0x844] sm:$0xff]
    %v3212 = vld [vmem:[#allocation14 + $0x84c] sm:$0xf]
    %v3213 = vld [vmem:[#allocation14 + $0x850] sm:$0xff]
    %v3214 = vld [vmem:[#allocation14 + $0x858] sm:$0xff]
    %v3215 = vld [vmem:[#allocation14 + $0x860] sm:$0xff]
    %v3216 = vld [vmem:[#allocation14 + $0x868] sm:$0xf]
    %v3217 = vld [vmem:[#allocation14 + $0x86c] sm:$0xff]
    %v3218 = vld [vmem:[#allocation14 + $0x874] sm:$0xff]
    %v3219 = vld [vmem:[#allocation14 + $0x87c] sm:$0xff]
    %v3220 = vld [vmem:[#allocation14 + $0x884] sm:$0xf]
    %v3221 = vld [vmem:[#allocation14 + $0x888] sm:$0xff]
    %v3222 = vld [vmem:[#allocation14 + $0x890] sm:$0xff]
    %v3223 = vld [vmem:[#allocation14 + $0x898] sm:$0xff]
    %v3224 = vld [vmem:[#allocation14 + $0x8a0] sm:$0xf]
    %v3225 = vld [vmem:[#allocation14 + $0x8a4] sm:$0xff]
    %v3226 = vld [vmem:[#allocation14 + $0x8ac] sm:$0xff]
    %v3227 = vld [vmem:[#allocation14 + $0x8b4] sm:$0xff]
    %v3228 = vld [vmem:[#allocation14 + $0x8bc] sm:$0xf]
    %v3229 = vld [vmem:[#allocation14 + $0x8c0] sm:$0xff]
    %v3230 = vld [vmem:[#allocation14 + $0x8c8] sm:$0xff]
    %v3231 = vld [vmem:[#allocation14 + $0x8d0] sm:$0xff]
    %v3232 = vld [vmem:[#allocation14 + $0x8d8] sm:$0xf]
    %v3233 = vld [vmem:[#allocation14 + $0x8dc] sm:$0xff]
    %v3234 = vld [vmem:[#allocation14 + $0x8e4] sm:$0xff]
    %v3235 = vld [vmem:[#allocation14 + $0x8ec] sm:$0xff]
    %v3236 = vld [vmem:[#allocation14 + $0x8f4] sm:$0xf]
    %v3237 = vld [vmem:[#allocation14 + $0x8f8] sm:$0xff]
    %v3238 = vld [vmem:[#allocation14 + $0x900] sm:$0xff]
    %v3239 = vld [vmem:[#allocation14 + $0x908] sm:$0xff]
    %v3240 = vld [vmem:[#allocation14 + $0x910] sm:$0xf]
    %v3241 = vld [vmem:[#allocation14 + $0x914] sm:$0xff]
    %v3242 = vld [vmem:[#allocation14 + $0x91c] sm:$0xff]
    %v3243 = vld [vmem:[#allocation14 + $0x924] sm:$0xff]
    %v3244 = vld [vmem:[#allocation14 + $0x92c] sm:$0xf]
    %v3245 = vld [vmem:[#allocation14 + $0x930] sm:$0xff]
    %v3246 = vld [vmem:[#allocation14 + $0x938] sm:$0xff]
    %v3247 = vld [vmem:[#allocation14 + $0x940] sm:$0xff]
    %v3248 = vld [vmem:[#allocation14 + $0x948] sm:$0xf]
    %v3249 = vld [vmem:[#allocation14 + $0x94c] sm:$0xff]
    %v3250 = vld [vmem:[#allocation14 + $0x954] sm:$0xff]
    %v3251 = vld [vmem:[#allocation14 + $0x95c] sm:$0xff]
    %v3252 = vld [vmem:[#allocation14 + $0x964] sm:$0xf]
    %v3253 = vld [vmem:[#allocation14 + $0x968] sm:$0xff]
    %v3254 = vld [vmem:[#allocation14 + $0x970] sm:$0xff]
    %v3255 = vld [vmem:[#allocation14 + $0x978] sm:$0xff]
    %v3256 = vld [vmem:[#allocation14 + $0x980] sm:$0xf]
    %v3257 = vld [vmem:[#allocation14 + $0x984] sm:$0xff]
    %v3258 = vld [vmem:[#allocation14 + $0x98c] sm:$0xff]
    %v3259 = vld [vmem:[#allocation14 + $0x994] sm:$0xff]
    %v3260 = vld [vmem:[#allocation14 + $0x99c] sm:$0xf]
    %v3261 = vld [vmem:[#allocation14 + $0x9a0] sm:$0xff]
    %v3262 = vld [vmem:[#allocation14 + $0x9a8] sm:$0xff]
    %v3263 = vld [vmem:[#allocation14 + $0x9b0] sm:$0xff]
    %v3264 = vld [vmem:[#allocation14 + $0x9b8] sm:$0xf]
    %v3265 = vld [vmem:[#allocation14 + $0x9bc] sm:$0xff]
    %v3266 = vld [vmem:[#allocation14 + $0x9c4] sm:$0xff]
    %v3267 = vld [vmem:[#allocation14 + $0x9cc] sm:$0xff]
    %v3268 = vld [vmem:[#allocation14 + $0x9d4] sm:$0xf]
    %v3269 = vld [vmem:[#allocation14 + $0x9d8] sm:$0xff]
    %v3270 = vld [vmem:[#allocation14 + $0x9e0] sm:$0xff]
    %v3271 = vld [vmem:[#allocation14 + $0x9e8] sm:$0xff]
    %v3272 = vld [vmem:[#allocation14 + $0x9f0] sm:$0xf]
    %v3273 = vld [vmem:[#allocation14 + $0x9f4] sm:$0xff]
    %v3274 = vld [vmem:[#allocation14 + $0x9fc] sm:$0xff]
    %v3275 = vld [vmem:[#allocation14 + $0xa04] sm:$0xff]
    %v3276 = vld [vmem:[#allocation14 + $0xa0c] sm:$0xf]
    %v3277 = vld [vmem:[#allocation14 + $0xa10] sm:$0xff]
    %v3278 = vld [vmem:[#allocation14 + $0xa18] sm:$0xff]
    %v3279 = vld [vmem:[#allocation14 + $0xa20] sm:$0xff]
    %v3280 = vld [vmem:[#allocation14 + $0xa28] sm:$0xf]
    %v3281 = vld [vmem:[#allocation14 + $0xa2c] sm:$0xff]
    %v3282 = vld [vmem:[#allocation14 + $0xa34] sm:$0xff]
    %v3283 = vld [vmem:[#allocation14 + $0xa3c] sm:$0xff]
    %v3284 = vld [vmem:[#allocation14 + $0xa44] sm:$0xf]
    %v3285 = vld [vmem:[#allocation14 + $0xa48] sm:$0xff]
    %v3286 = vld [vmem:[#allocation14 + $0xa50] sm:$0xff]
    %v3287 = vld [vmem:[#allocation14 + $0xa58] sm:$0xff]
    %v3288 = vld [vmem:[#allocation14 + $0xa60] sm:$0xf]
    %v3289 = vld [vmem:[#allocation14 + $0xa64] sm:$0xff]
    %v3290 = vld [vmem:[#allocation14 + $0xa6c] sm:$0xff]
    %v3291 = vld [vmem:[#allocation14 + $0xa74] sm:$0xff]
    %v3292 = vld [vmem:[#allocation14 + $0xa7c] sm:$0xf]
    %v3293 = vld [vmem:[#allocation14 + $0xa80] sm:$0xff]
    %v3294 = vld [vmem:[#allocation14 + $0xa88] sm:$0xff]
    %v3295 = vld [vmem:[#allocation14 + $0xa90] sm:$0xff]
    %v3296 = vld [vmem:[#allocation14 + $0xa98] sm:$0xf]
    %v3297 = vld [vmem:[#allocation14 + $0xa9c] sm:$0xff]
    %v3298 = vld [vmem:[#allocation14 + $0xaa4] sm:$0xff]
    %v3299 = vld [vmem:[#allocation14 + $0xaac] sm:$0xff]
    %v3300 = vld [vmem:[#allocation14 + $0xab4] sm:$0xf]
    %v3301 = vld [vmem:[#allocation14 + $0xab8] sm:$0xff]
    %v3302 = vld [vmem:[#allocation14 + $0xac0] sm:$0xff]
    %v3303 = vld [vmem:[#allocation14 + $0xac8] sm:$0xff]
    %v3304 = vld [vmem:[#allocation14 + $0xad0] sm:$0xf]
    %v3305 = vld [vmem:[#allocation14 + $0xad4] sm:$0xff]
    %v3306 = vld [vmem:[#allocation14 + $0xadc] sm:$0xff]
    %v3307 = vld [vmem:[#allocation14 + $0xae4] sm:$0xff]
    %v3308 = vld [vmem:[#allocation14 + $0xaec] sm:$0xf]
    %v3309 = vld [vmem:[#allocation14 + $0xaf0] sm:$0xff]
    %v3310 = vld [vmem:[#allocation14 + $0xaf8] sm:$0xff]
    %v3311 = vld [vmem:[#allocation14 + $0xb00] sm:$0xff]
    %v3312 = vld [vmem:[#allocation14 + $0xb08] sm:$0xf]
    %v3313 = vld [vmem:[#allocation14 + $0xb0c] sm:$0xff]
    %v3314 = vld [vmem:[#allocation14 + $0xb14] sm:$0xff]
    %v3315 = vld [vmem:[#allocation14 + $0xb1c] sm:$0xff]
    %v3316 = vld [vmem:[#allocation14 + $0xb24] sm:$0xf]
    %v3317 = vld [vmem:[#allocation14 + $0xb28] sm:$0xff]
    %v3318 = vld [vmem:[#allocation14 + $0xb30] sm:$0xff]
    %v3319 = vld [vmem:[#allocation14 + $0xb38] sm:$0xff]
    %v3320 = vld [vmem:[#allocation14 + $0xb40] sm:$0xf]
    %v3321 = vld [vmem:[#allocation14 + $0xb44] sm:$0xff]
    %v3322 = vld [vmem:[#allocation14 + $0xb4c] sm:$0xff]
    %v3323 = vld [vmem:[#allocation14 + $0xb54] sm:$0xff]
    %v3324 = vld [vmem:[#allocation14 + $0xb5c] sm:$0xf]
    %v3325 = vld [vmem:[#allocation14 + $0xb60] sm:$0xff]
    %v3326 = vld [vmem:[#allocation14 + $0xb68] sm:$0xff]
    %v3327 = vld [vmem:[#allocation14 + $0xb70] sm:$0xff]
    %v3328 = vld [vmem:[#allocation14 + $0xb78] sm:$0xf]
    %v3329 = vld [vmem:[#allocation14 + $0xb7c] sm:$0xff]
    %v3330 = vld [vmem:[#allocation14 + $0xb84] sm:$0xff]
    %v3331 = vld [vmem:[#allocation14 + $0xb8c] sm:$0xff]
    %v3332 = vld [vmem:[#allocation14 + $0xb94] sm:$0xf]
    %v3333 = vld [vmem:[#allocation14 + $0xb98] sm:$0xff]
    %v3334 = vld [vmem:[#allocation14 + $0xba0] sm:$0xff]
    %v3335 = vld [vmem:[#allocation14 + $0xba8] sm:$0xff]
    %v3336 = vld [vmem:[#allocation14 + $0xbb0] sm:$0xf]
    %v3337 = vld [vmem:[#allocation14 + $0xbb4] sm:$0xff]
    %v3338 = vld [vmem:[#allocation14 + $0xbbc] sm:$0xff]
    %v3339 = vld [vmem:[#allocation14 + $0xbc4] sm:$0xff]
    %v3340 = vld [vmem:[#allocation14 + $0xbcc] sm:$0xf]
    %v3341 = vld [vmem:[#allocation14 + $0xbd0] sm:$0xff]
    %v3342 = vld [vmem:[#allocation14 + $0xbd8] sm:$0xff]
    %v3343 = vld [vmem:[#allocation14 + $0xbe0] sm:$0xff]
    %v3344 = vld [vmem:[#allocation14 + $0xbe8] sm:$0xf]
    %v3345 = vld [vmem:[#allocation14 + $0xbec] sm:$0xff]
    %v3346 = vld [vmem:[#allocation14 + $0xbf4] sm:$0xff]
    %v3347 = vld [vmem:[#allocation14 + $0xbfc] sm:$0xff]
    %v3348 = vld [vmem:[#allocation14 + $0xc04] sm:$0xf]
    %v3349 = vld [vmem:[#allocation14 + $0xc08] sm:$0xff]
    %v3350 = vld [vmem:[#allocation14 + $0xc10] sm:$0xff]
    %v3351 = vld [vmem:[#allocation14 + $0xc18] sm:$0xff]
    %v3352 = vld [vmem:[#allocation14 + $0xc20] sm:$0xf]
    %v3353 = vld [vmem:[#allocation14 + $0xc24] sm:$0xff]
    %v3354 = vld [vmem:[#allocation14 + $0xc2c] sm:$0xff]
    %v3355 = vld [vmem:[#allocation14 + $0xc34] sm:$0xff]
    %v3356 = vld [vmem:[#allocation14 + $0xc3c] sm:$0xf]
    %v3357 = vld [vmem:[#allocation14 + $0xc40] sm:$0xff]
    %v3358 = vld [vmem:[#allocation14 + $0xc48] sm:$0xff]
    %v3359 = vld [vmem:[#allocation14 + $0xc50] sm:$0xff]
    %v3360 = vld [vmem:[#allocation14 + $0xc58] sm:$0xf]
    %v3361 = vld [vmem:[#allocation14 + $0xc5c] sm:$0xff]
    %v3362 = vld [vmem:[#allocation14 + $0xc64] sm:$0xff]
    %v3363 = vld [vmem:[#allocation14 + $0xc6c] sm:$0xff]
    %v3364 = vld [vmem:[#allocation14 + $0xc74] sm:$0xf]
    %v3365 = vld [vmem:[#allocation14 + $0xc78] sm:$0xff]
    %v3366 = vld [vmem:[#allocation14 + $0xc80] sm:$0xff]
    %v3367 = vld [vmem:[#allocation14 + $0xc88] sm:$0xff]
    %v3368 = vld [vmem:[#allocation14 + $0xc90] sm:$0xf]
    %v3369 = vld [vmem:[#allocation14 + $0xc94] sm:$0xff]
    %v3370 = vld [vmem:[#allocation14 + $0xc9c] sm:$0xff]
    %v3371 = vld [vmem:[#allocation14 + $0xca4] sm:$0xff]
    %v3372 = vld [vmem:[#allocation14 + $0xcac] sm:$0xf]
    %v3373 = vld [vmem:[#allocation14 + $0xcb0] sm:$0xff]
    %v3374 = vld [vmem:[#allocation14 + $0xcb8] sm:$0xff]
    %v3375 = vld [vmem:[#allocation14 + $0xcc0] sm:$0xff]
    %v3376 = vld [vmem:[#allocation14 + $0xcc8] sm:$0xf]
    %v3377 = vld [vmem:[#allocation14 + $0xccc] sm:$0xff]
    %v3378 = vld [vmem:[#allocation14 + $0xcd4] sm:$0xff]
    %v3379 = vld [vmem:[#allocation14 + $0xcdc] sm:$0xff]
    %v3380 = vld [vmem:[#allocation14 + $0xce4] sm:$0xf]
    %v3381 = vld [vmem:[#allocation14 + $0xce8] sm:$0xff]
    %v3382 = vld [vmem:[#allocation14 + $0xcf0] sm:$0xff]
    %v3383 = vld [vmem:[#allocation14 + $0xcf8] sm:$0xff]
    %v3384 = vld [vmem:[#allocation14 + $0xd00] sm:$0xf]
    %v3385 = vld [vmem:[#allocation14 + $0xd04] sm:$0xff]
    %v3386 = vld [vmem:[#allocation14 + $0xd0c] sm:$0xff]
    %v3387 = vld [vmem:[#allocation14 + $0xd14] sm:$0xff]
    %v3388 = vld [vmem:[#allocation14 + $0xd1c] sm:$0xf]
    %v3389 = vld [vmem:[#allocation14 + $0xd20] sm:$0xff]
    %v3390 = vld [vmem:[#allocation14 + $0xd28] sm:$0xff]
    %v3391 = vld [vmem:[#allocation14 + $0xd30] sm:$0xff]
    %v3392 = vld [vmem:[#allocation14 + $0xd38] sm:$0xf]
    %v3393 = vld [vmem:[#allocation14 + $0xd3c] sm:$0xff]
    %v3394 = vld [vmem:[#allocation14 + $0xd44] sm:$0xff]
    %v3395 = vld [vmem:[#allocation14 + $0xd4c] sm:$0xff]
    %v3396 = vld [vmem:[#allocation14 + $0xd54] sm:$0xf]
    %v3397 = vld [vmem:[#allocation14 + $0xd58] sm:$0xff]
    %v3398 = vld [vmem:[#allocation14 + $0xd60] sm:$0xff]
    %v3399 = vld [vmem:[#allocation14 + $0xd68] sm:$0xff]
    %v3400 = vld [vmem:[#allocation14 + $0xd70] sm:$0xf]
    %v3401 = vld [vmem:[#allocation14 + $0xd74] sm:$0xff]
    %v3402 = vld [vmem:[#allocation14 + $0xd7c] sm:$0xff]
    %v3403 = vld [vmem:[#allocation14 + $0xd84] sm:$0xff]
    %v3404 = vld [vmem:[#allocation14 + $0xd8c] sm:$0xf]
    %v3405 = vld [vmem:[#allocation14 + $0xd90] sm:$0xff]
    %v3406 = vld [vmem:[#allocation14 + $0xd98] sm:$0xff]
    %v3407 = vld [vmem:[#allocation14 + $0xda0] sm:$0xff]
    %v3408 = vld [vmem:[#allocation14 + $0xda8] sm:$0xf]
    %v3409 = vld [vmem:[#allocation14 + $0xdac] sm:$0xff]
    %v3410 = vld [vmem:[#allocation14 + $0xdb4] sm:$0xff]
    %v3411 = vld [vmem:[#allocation14 + $0xdbc] sm:$0xff]
    %v3412 = vld [vmem:[#allocation14 + $0xdc4] sm:$0xf]
    %v3413 = vld [vmem:[#allocation14 + $0xdc8] sm:$0xff]
    %v3414 = vld [vmem:[#allocation14 + $0xdd0] sm:$0xff]
    %v3415 = vld [vmem:[#allocation14 + $0xdd8] sm:$0xff]
    %v3416 = vld [vmem:[#allocation14 + $0xde0] sm:$0xf]
    %v3417 = vld [vmem:[#allocation14 + $0xde4] sm:$0xff]
    %v3418 = vld [vmem:[#allocation14 + $0xdec] sm:$0xff]
    %v3419 = vld [vmem:[#allocation14 + $0xdf4] sm:$0xff]
    %v3420 = vld [vmem:[#allocation14 + $0xdfc] sm:$0xf]
    %v3421 = vld [vmem:[#allocation16] sm:$0xff]
    %v3423 = vperm.slane %v3421, 0
    %v3424 = vperm.slane %v3421, 1
    %v3425 = vperm.slane %v3421, 2
    %v3426 = vperm.slane %v3421, 3
    %v3427 = vperm.slane %v3421, 4
    %v3428 = vperm.slane %v3421, 5
    %v3429 = vperm.slane %v3421, 6
    %v3949 = vunpack.c.l.b16 %v2909
    %v3950 = vunpack.c.h.b16 %v2909
    %v3951 = vunpack.c.l.b16 %v2910
    %v3952 = vunpack.c.h.b16 %v2910
    %v3953 = vunpack.c.l.b16 %v2911
    %v3954 = vunpack.c.h.b16 %v2911
    %v3955 = vunpack.c.l.b16 %v2912
    %v3956 = vunpack.c.l.b16 %v2913
    %v3957 = vunpack.c.h.b16 %v2913
    %v3958 = vunpack.c.l.b16 %v2914
    %v3959 = vunpack.c.h.b16 %v2914
    %v3960 = vunpack.c.l.b16 %v2915
    %v3961 = vunpack.c.h.b16 %v2915
    %v3962 = vunpack.c.l.b16 %v2916
    %v3963 = vunpack.c.l.b16 %v2917
    %v3964 = vunpack.c.h.b16 %v2917
    %v3965 = vunpack.c.l.b16 %v2918
    %v3966 = vunpack.c.h.b16 %v2918
    %v3967 = vunpack.c.l.b16 %v2919
    %v3968 = vunpack.c.h.b16 %v2919
    %v3969 = vunpack.c.l.b16 %v2920
    %v3970 = vunpack.c.l.b16 %v2921
    %v3971 = vunpack.c.h.b16 %v2921
    %v3972 = vunpack.c.l.b16 %v2922
    %v3973 = vunpack.c.h.b16 %v2922
    %v3974 = vunpack.c.l.b16 %v2923
    %v3975 = vunpack.c.h.b16 %v2923
    %v3976 = vunpack.c.l.b16 %v2924
    %v3977 = vunpack.c.l.b16 %v2925
    %v3978 = vunpack.c.h.b16 %v2925
    %v3979 = vunpack.c.l.b16 %v2926
    %v3980 = vunpack.c.h.b16 %v2926
    %v3981 = vunpack.c.l.b16 %v2927
    %v3982 = vunpack.c.h.b16 %v2927
    %v3983 = vunpack.c.l.b16 %v2928
    %v3984 = vunpack.c.l.b16 %v2929
    %v3985 = vunpack.c.h.b16 %v2929
    %v3986 = vunpack.c.l.b16 %v2930
    %v3987 = vunpack.c.h.b16 %v2930
    %v3988 = vunpack.c.l.b16 %v2931
    %v3989 = vunpack.c.h.b16 %v2931
    %v3990 = vunpack.c.l.b16 %v2932
    %v3991 = vunpack.c.l.b16 %v2933
    %v3992 = vunpack.c.h.b16 %v2933
    %v3993 = vunpack.c.l.b16 %v2934
    %v3994 = vunpack.c.h.b16 %v2934
    %v3995 = vunpack.c.l.b16 %v2935
    %v3996 = vunpack.c.h.b16 %v2935
    %v3997 = vunpack.c.l.b16 %v2936
    %v3998 = vunpack.c.l.b16 %v2937
    %v3999 = vunpack.c.h.b16 %v2937
    %v4000 = vunpack.c.l.b16 %v2938
    %v4001 = vunpack.c.h.b16 %v2938
    %v4002 = vunpack.c.l.b16 %v2939
    %v4003 = vunpack.c.h.b16 %v2939
    %v4004 = vunpack.c.l.b16 %v2940
    %v4005 = vunpack.c.l.b16 %v2941
    %v4006 = vunpack.c.h.b16 %v2941
    %v4007 = vunpack.c.l.b16 %v2942
    %v4008 = vunpack.c.h.b16 %v2942
    %v4009 = vunpack.c.l.b16 %v2943
    %v4010 = vunpack.c.h.b16 %v2943
    %v4011 = vunpack.c.l.b16 %v2944
    %v4012 = vunpack.c.l.b16 %v2945
    %v4013 = vunpack.c.h.b16 %v2945
    %v4014 = vunpack.c.l.b16 %v2946
    %v4015 = vunpack.c.h.b16 %v2946
    %v4016 = vunpack.c.l.b16 %v2947
    %v4017 = vunpack.c.h.b16 %v2947
    %v4018 = vunpack.c.l.b16 %v2948
    %v4019 = vunpack.c.l.b16 %v2949
    %v4020 = vunpack.c.h.b16 %v2949
    %v4021 = vunpack.c.l.b16 %v2950
    %v4022 = vunpack.c.h.b16 %v2950
    %v4023 = vunpack.c.l.b16 %v2951
    %v4024 = vunpack.c.h.b16 %v2951
    %v4025 = vunpack.c.l.b16 %v2952
    %v4026 = vunpack.c.l.b16 %v2953
    %v4027 = vunpack.c.h.b16 %v2953
    %v4028 = vunpack.c.l.b16 %v2954
    %v4029 = vunpack.c.h.b16 %v2954
    %v4030 = vunpack.c.l.b16 %v2955
    %v4031 = vunpack.c.h.b16 %v2955
    %v4032 = vunpack.c.l.b16 %v2956
    %v4033 = vunpack.c.l.b16 %v2957
    %v4034 = vunpack.c.h.b16 %v2957
    %v4035 = vunpack.c.l.b16 %v2958
    %v4036 = vunpack.c.h.b16 %v2958
    %v4037 = vunpack.c.l.b16 %v2959
    %v4038 = vunpack.c.h.b16 %v2959
    %v4039 = vunpack.c.l.b16 %v2960
    %v4040 = vunpack.c.l.b16 %v2961
    %v4041 = vunpack.c.h.b16 %v2961
    %v4042 = vunpack.c.l.b16 %v2962
    %v4043 = vunpack.c.h.b16 %v2962
    %v4044 = vunpack.c.l.b16 %v2963
    %v4045 = vunpack.c.h.b16 %v2963
    %v4046 = vunpack.c.l.b16 %v2964
    %v4047 = vunpack.c.l.b16 %v2965
    %v4048 = vunpack.c.h.b16 %v2965
    %v4049 = vunpack.c.l.b16 %v2966
    %v4050 = vunpack.c.h.b16 %v2966
    %v4051 = vunpack.c.l.b16 %v2967
    %v4052 = vunpack.c.h.b16 %v2967
    %v4053 = vunpack.c.l.b16 %v2968
    %v4054 = vunpack.c.l.b16 %v2969
    %v4055 = vunpack.c.h.b16 %v2969
    %v4056 = vunpack.c.l.b16 %v2970
    %v4057 = vunpack.c.h.b16 %v2970
    %v4058 = vunpack.c.l.b16 %v2971
    %v4059 = vunpack.c.h.b16 %v2971
    %v4060 = vunpack.c.l.b16 %v2972
    %v4061 = vunpack.c.l.b16 %v2973
    %v4062 = vunpack.c.h.b16 %v2973
    %v4063 = vunpack.c.l.b16 %v2974
    %v4064 = vunpack.c.h.b16 %v2974
    %v4065 = vunpack.c.l.b16 %v2975
    %v4066 = vunpack.c.h.b16 %v2975
    %v4067 = vunpack.c.l.b16 %v2976
    %v4068 = vunpack.c.l.b16 %v2977
    %v4069 = vunpack.c.h.b16 %v2977
    %v4070 = vunpack.c.l.b16 %v2978
    %v4071 = vunpack.c.h.b16 %v2978
    %v4072 = vunpack.c.l.b16 %v2979
    %v4073 = vunpack.c.h.b16 %v2979
    %v4074 = vunpack.c.l.b16 %v2980
    %v4075 = vunpack.c.l.b16 %v2981
    %v4076 = vunpack.c.h.b16 %v2981
    %v4077 = vunpack.c.l.b16 %v2982
    %v4078 = vunpack.c.h.b16 %v2982
    %v4079 = vunpack.c.l.b16 %v2983
    %v4080 = vunpack.c.h.b16 %v2983
    %v4081 = vunpack.c.l.b16 %v2984
    %v4082 = vunpack.c.l.b16 %v2985
    %v4083 = vunpack.c.h.b16 %v2985
    %v4084 = vunpack.c.l.b16 %v2986
    %v4085 = vunpack.c.h.b16 %v2986
    %v4086 = vunpack.c.l.b16 %v2987
    %v4087 = vunpack.c.h.b16 %v2987
    %v4088 = vunpack.c.l.b16 %v2988
    %v4089 = vunpack.c.l.b16 %v2989
    %v4090 = vunpack.c.h.b16 %v2989
    %v4091 = vunpack.c.l.b16 %v2990
    %v4092 = vunpack.c.h.b16 %v2990
    %v4093 = vunpack.c.l.b16 %v2991
    %v4094 = vunpack.c.h.b16 %v2991
    %v4095 = vunpack.c.l.b16 %v2992
    %v4096 = vunpack.c.l.b16 %v2993
    %v4097 = vunpack.c.h.b16 %v2993
    %v4098 = vunpack.c.l.b16 %v2994
    %v4099 = vunpack.c.h.b16 %v2994
    %v4100 = vunpack.c.l.b16 %v2995
    %v4101 = vunpack.c.h.b16 %v2995
    %v4102 = vunpack.c.l.b16 %v2996
    %v4103 = vunpack.c.l.b16 %v2997
    %v4104 = vunpack.c.h.b16 %v2997
    %v4105 = vunpack.c.l.b16 %v2998
    %v4106 = vunpack.c.h.b16 %v2998
    %v4107 = vunpack.c.l.b16 %v2999
    %v4108 = vunpack.c.h.b16 %v2999
    %v4109 = vunpack.c.l.b16 %v3000
    %v4110 = vunpack.c.l.b16 %v3001
    %v4111 = vunpack.c.h.b16 %v3001
    %v4112 = vunpack.c.l.b16 %v3002
    %v4113 = vunpack.c.h.b16 %v3002
    %v4114 = vunpack.c.l.b16 %v3003
    %v4115 = vunpack.c.h.b16 %v3003
    %v4116 = vunpack.c.l.b16 %v3004
    %v4117 = vunpack.c.l.b16 %v3005
    %v4118 = vunpack.c.h.b16 %v3005
    %v4119 = vunpack.c.l.b16 %v3006
    %v4120 = vunpack.c.h.b16 %v3006
    %v4121 = vunpack.c.l.b16 %v3007
    %v4122 = vunpack.c.h.b16 %v3007
    %v4123 = vunpack.c.l.b16 %v3008
    %v4124 = vunpack.c.l.b16 %v3009
    %v4125 = vunpack.c.h.b16 %v3009
    %v4126 = vunpack.c.l.b16 %v3010
    %v4127 = vunpack.c.h.b16 %v3010
    %v4128 = vunpack.c.l.b16 %v3011
    %v4129 = vunpack.c.h.b16 %v3011
    %v4130 = vunpack.c.l.b16 %v3012
    %v4131 = vunpack.c.l.b16 %v3013
    %v4132 = vunpack.c.h.b16 %v3013
    %v4133 = vunpack.c.l.b16 %v3014
    %v4134 = vunpack.c.h.b16 %v3014
    %v4135 = vunpack.c.l.b16 %v3015
    %v4136 = vunpack.c.h.b16 %v3015
    %v4137 = vunpack.c.l.b16 %v3016
    %v4138 = vunpack.c.l.b16 %v3017
    %v4139 = vunpack.c.h.b16 %v3017
    %v4140 = vunpack.c.l.b16 %v3018
    %v4141 = vunpack.c.h.b16 %v3018
    %v4142 = vunpack.c.l.b16 %v3019
    %v4143 = vunpack.c.h.b16 %v3019
    %v4144 = vunpack.c.l.b16 %v3020
    %v4145 = vunpack.c.l.b16 %v3021
    %v4146 = vunpack.c.h.b16 %v3021
    %v4147 = vunpack.c.l.b16 %v3022
    %v4148 = vunpack.c.h.b16 %v3022
    %v4149 = vunpack.c.l.b16 %v3023
    %v4150 = vunpack.c.h.b16 %v3023
    %v4151 = vunpack.c.l.b16 %v3024
    %v4152 = vunpack.c.l.b16 %v3025
    %v4153 = vunpack.c.h.b16 %v3025
    %v4154 = vunpack.c.l.b16 %v3026
    %v4155 = vunpack.c.h.b16 %v3026
    %v4156 = vunpack.c.l.b16 %v3027
    %v4157 = vunpack.c.h.b16 %v3027
    %v4158 = vunpack.c.l.b16 %v3028
    %v4159 = vunpack.c.l.b16 %v3029
    %v4160 = vunpack.c.h.b16 %v3029
    %v4161 = vunpack.c.l.b16 %v3030
    %v4162 = vunpack.c.h.b16 %v3030
    %v4163 = vunpack.c.l.b16 %v3031
    %v4164 = vunpack.c.h.b16 %v3031
    %v4165 = vunpack.c.l.b16 %v3032
    %v4166 = vunpack.c.l.b16 %v3033
    %v4167 = vunpack.c.h.b16 %v3033
    %v4168 = vunpack.c.l.b16 %v3034
    %v4169 = vunpack.c.h.b16 %v3034
    %v4170 = vunpack.c.l.b16 %v3035
    %v4171 = vunpack.c.h.b16 %v3035
    %v4172 = vunpack.c.l.b16 %v3036
    %v4173 = vunpack.c.l.b16 %v3037
    %v4174 = vunpack.c.h.b16 %v3037
    %v4175 = vunpack.c.l.b16 %v3038
    %v4176 = vunpack.c.h.b16 %v3038
    %v4177 = vunpack.c.l.b16 %v3039
    %v4178 = vunpack.c.h.b16 %v3039
    %v4179 = vunpack.c.l.b16 %v3040
    %v4180 = vunpack.c.l.b16 %v3041
    %v4181 = vunpack.c.h.b16 %v3041
    %v4182 = vunpack.c.l.b16 %v3042
    %v4183 = vunpack.c.h.b16 %v3042
    %v4184 = vunpack.c.l.b16 %v3043
    %v4185 = vunpack.c.h.b16 %v3043
    %v4186 = vunpack.c.l.b16 %v3044
    %v4187 = vunpack.c.l.b16 %v3045
    %v4188 = vunpack.c.h.b16 %v3045
    %v4189 = vunpack.c.l.b16 %v3046
    %v4190 = vunpack.c.h.b16 %v3046
    %v4191 = vunpack.c.l.b16 %v3047
    %v4192 = vunpack.c.h.b16 %v3047
    %v4193 = vunpack.c.l.b16 %v3048
    %v4194 = vunpack.c.l.b16 %v3049
    %v4195 = vunpack.c.h.b16 %v3049
    %v4196 = vunpack.c.l.b16 %v3050
    %v4197 = vunpack.c.h.b16 %v3050
    %v4198 = vunpack.c.l.b16 %v3051
    %v4199 = vunpack.c.h.b16 %v3051
    %v4200 = vunpack.c.l.b16 %v3052
    %v4201 = vunpack.c.l.b16 %v3053
    %v4202 = vunpack.c.h.b16 %v3053
    %v4203 = vunpack.c.l.b16 %v3054
    %v4204 = vunpack.c.h.b16 %v3054
    %v4205 = vunpack.c.l.b16 %v3055
    %v4206 = vunpack.c.h.b16 %v3055
    %v4207 = vunpack.c.l.b16 %v3056
    %v4208 = vunpack.c.l.b16 %v3057
    %v4209 = vunpack.c.h.b16 %v3057
    %v4210 = vunpack.c.l.b16 %v3058
    %v4211 = vunpack.c.h.b16 %v3058
    %v4212 = vunpack.c.l.b16 %v3059
    %v4213 = vunpack.c.h.b16 %v3059
    %v4214 = vunpack.c.l.b16 %v3060
    %v4215 = vunpack.c.l.b16 %v3061
    %v4216 = vunpack.c.h.b16 %v3061
    %v4217 = vunpack.c.l.b16 %v3062
    %v4218 = vunpack.c.h.b16 %v3062
    %v4219 = vunpack.c.l.b16 %v3063
    %v4220 = vunpack.c.h.b16 %v3063
    %v4221 = vunpack.c.l.b16 %v3064
    %v4222 = vunpack.c.l.b16 %v3065
    %v4223 = vunpack.c.h.b16 %v3065
    %v4224 = vunpack.c.l.b16 %v3066
    %v4225 = vunpack.c.h.b16 %v3066
    %v4226 = vunpack.c.l.b16 %v3067
    %v4227 = vunpack.c.h.b16 %v3067
    %v4228 = vunpack.c.l.b16 %v3068
    %v4229 = vunpack.c.l.b16 %v3069
    %v4230 = vunpack.c.h.b16 %v3069
    %v4231 = vunpack.c.l.b16 %v3070
    %v4232 = vunpack.c.h.b16 %v3070
    %v4233 = vunpack.c.l.b16 %v3071
    %v4234 = vunpack.c.h.b16 %v3071
    %v4235 = vunpack.c.l.b16 %v3072
    %v4236 = vunpack.c.l.b16 %v3073
    %v4237 = vunpack.c.h.b16 %v3073
    %v4238 = vunpack.c.l.b16 %v3074
    %v4239 = vunpack.c.h.b16 %v3074
    %v4240 = vunpack.c.l.b16 %v3075
    %v4241 = vunpack.c.h.b16 %v3075
    %v4242 = vunpack.c.l.b16 %v3076
    %v4243 = vunpack.c.l.b16 %v3077
    %v4244 = vunpack.c.h.b16 %v3077
    %v4245 = vunpack.c.l.b16 %v3078
    %v4246 = vunpack.c.h.b16 %v3078
    %v4247 = vunpack.c.l.b16 %v3079
    %v4248 = vunpack.c.h.b16 %v3079
    %v4249 = vunpack.c.l.b16 %v3080
    %v4250 = vunpack.c.l.b16 %v3081
    %v4251 = vunpack.c.h.b16 %v3081
    %v4252 = vunpack.c.l.b16 %v3082
    %v4253 = vunpack.c.h.b16 %v3082
    %v4254 = vunpack.c.l.b16 %v3083
    %v4255 = vunpack.c.h.b16 %v3083
    %v4256 = vunpack.c.l.b16 %v3084
    %v4257 = vunpack.c.l.b16 %v3085
    %v4258 = vunpack.c.h.b16 %v3085
    %v4259 = vunpack.c.l.b16 %v3086
    %v4260 = vunpack.c.h.b16 %v3086
    %v4261 = vunpack.c.l.b16 %v3087
    %v4262 = vunpack.c.h.b16 %v3087
    %v4263 = vunpack.c.l.b16 %v3088
    %v4264 = vunpack.c.l.b16 %v3089
    %v4265 = vunpack.c.h.b16 %v3089
    %v4266 = vunpack.c.l.b16 %v3090
    %v4267 = vunpack.c.h.b16 %v3090
    %v4268 = vunpack.c.l.b16 %v3091
    %v4269 = vunpack.c.h.b16 %v3091
    %v4270 = vunpack.c.l.b16 %v3092
    %v4271 = vunpack.c.l.b16 %v3093
    %v4272 = vunpack.c.h.b16 %v3093
    %v4273 = vunpack.c.l.b16 %v3094
    %v4274 = vunpack.c.h.b16 %v3094
    %v4275 = vunpack.c.l.b16 %v3095
    %v4276 = vunpack.c.h.b16 %v3095
    %v4277 = vunpack.c.l.b16 %v3096
    %v4278 = vunpack.c.l.b16 %v3097
    %v4279 = vunpack.c.h.b16 %v3097
    %v4280 = vunpack.c.l.b16 %v3098
    %v4281 = vunpack.c.h.b16 %v3098
    %v4282 = vunpack.c.l.b16 %v3099
    %v4283 = vunpack.c.h.b16 %v3099
    %v4284 = vunpack.c.l.b16 %v3100
    %v4285 = vunpack.c.l.b16 %v3101
    %v4286 = vunpack.c.h.b16 %v3101
    %v4287 = vunpack.c.l.b16 %v3102
    %v4288 = vunpack.c.h.b16 %v3102
    %v4289 = vunpack.c.l.b16 %v3103
    %v4290 = vunpack.c.h.b16 %v3103
    %v4291 = vunpack.c.l.b16 %v3104
    %v4292 = vunpack.c.l.b16 %v3105
    %v4293 = vunpack.c.h.b16 %v3105
    %v4294 = vunpack.c.l.b16 %v3106
    %v4295 = vunpack.c.h.b16 %v3106
    %v4296 = vunpack.c.l.b16 %v3107
    %v4297 = vunpack.c.h.b16 %v3107
    %v4298 = vunpack.c.l.b16 %v3108
    %v4299 = vunpack.c.l.b16 %v3109
    %v4300 = vunpack.c.h.b16 %v3109
    %v4301 = vunpack.c.l.b16 %v3110
    %v4302 = vunpack.c.h.b16 %v3110
    %v4303 = vunpack.c.l.b16 %v3111
    %v4304 = vunpack.c.h.b16 %v3111
    %v4305 = vunpack.c.l.b16 %v3112
    %v4306 = vunpack.c.l.b16 %v3113
    %v4307 = vunpack.c.h.b16 %v3113
    %v4308 = vunpack.c.l.b16 %v3114
    %v4309 = vunpack.c.h.b16 %v3114
    %v4310 = vunpack.c.l.b16 %v3115
    %v4311 = vunpack.c.h.b16 %v3115
    %v4312 = vunpack.c.l.b16 %v3116
    %v4313 = vunpack.c.l.b16 %v3117
    %v4314 = vunpack.c.h.b16 %v3117
    %v4315 = vunpack.c.l.b16 %v3118
    %v4316 = vunpack.c.h.b16 %v3118
    %v4317 = vunpack.c.l.b16 %v3119
    %v4318 = vunpack.c.h.b16 %v3119
    %v4319 = vunpack.c.l.b16 %v3120
    %v4320 = vunpack.c.l.b16 %v3121
    %v4321 = vunpack.c.h.b16 %v3121
    %v4322 = vunpack.c.l.b16 %v3122
    %v4323 = vunpack.c.h.b16 %v3122
    %v4324 = vunpack.c.l.b16 %v3123
    %v4325 = vunpack.c.h.b16 %v3123
    %v4326 = vunpack.c.l.b16 %v3124
    %v4327 = vunpack.c.l.b16 %v3125
    %v4328 = vunpack.c.h.b16 %v3125
    %v4329 = vunpack.c.l.b16 %v3126
    %v4330 = vunpack.c.h.b16 %v3126
    %v4331 = vunpack.c.l.b16 %v3127
    %v4332 = vunpack.c.h.b16 %v3127
    %v4333 = vunpack.c.l.b16 %v3128
    %v4334 = vunpack.c.l.b16 %v3129
    %v4335 = vunpack.c.h.b16 %v3129
    %v4336 = vunpack.c.l.b16 %v3130
    %v4337 = vunpack.c.h.b16 %v3130
    %v4338 = vunpack.c.l.b16 %v3131
    %v4339 = vunpack.c.h.b16 %v3131
    %v4340 = vunpack.c.l.b16 %v3132
    %v4341 = vunpack.c.l.b16 %v3133
    %v4342 = vunpack.c.h.b16 %v3133
    %v4343 = vunpack.c.l.b16 %v3134
    %v4344 = vunpack.c.h.b16 %v3134
    %v4345 = vunpack.c.l.b16 %v3135
    %v4346 = vunpack.c.h.b16 %v3135
    %v4347 = vunpack.c.l.b16 %v3136
    %v4348 = vunpack.c.l.b16 %v3137
    %v4349 = vunpack.c.h.b16 %v3137
    %v4350 = vunpack.c.l.b16 %v3138
    %v4351 = vunpack.c.h.b16 %v3138
    %v4352 = vunpack.c.l.b16 %v3139
    %v4353 = vunpack.c.h.b16 %v3139
    %v4354 = vunpack.c.l.b16 %v3140
    %v4355 = vunpack.c.l.b16 %v3141
    %v4356 = vunpack.c.h.b16 %v3141
    %v4357 = vunpack.c.l.b16 %v3142
    %v4358 = vunpack.c.h.b16 %v3142
    %v4359 = vunpack.c.l.b16 %v3143
    %v4360 = vunpack.c.h.b16 %v3143
    %v4361 = vunpack.c.l.b16 %v3144
    %v4362 = vunpack.c.l.b16 %v3145
    %v4363 = vunpack.c.h.b16 %v3145
    %v4364 = vunpack.c.l.b16 %v3146
    %v4365 = vunpack.c.h.b16 %v3146
    %v4366 = vunpack.c.l.b16 %v3147
    %v4367 = vunpack.c.h.b16 %v3147
    %v4368 = vunpack.c.l.b16 %v3148
    %v4369 = vunpack.c.l.b16 %v3149
    %v4370 = vunpack.c.h.b16 %v3149
    %v4371 = vunpack.c.l.b16 %v3150
    %v4372 = vunpack.c.h.b16 %v3150
    %v4373 = vunpack.c.l.b16 %v3151
    %v4374 = vunpack.c.h.b16 %v3151
    %v4375 = vunpack.c.l.b16 %v3152
    %v4376 = vunpack.c.l.b16 %v3153
    %v4377 = vunpack.c.h.b16 %v3153
    %v4378 = vunpack.c.l.b16 %v3154
    %v4379 = vunpack.c.h.b16 %v3154
    %v4380 = vunpack.c.l.b16 %v3155
    %v4381 = vunpack.c.h.b16 %v3155
    %v4382 = vunpack.c.l.b16 %v3156
    %v4383 = vunpack.c.l.b16 %v3157
    %v4384 = vunpack.c.h.b16 %v3157
    %v4385 = vunpack.c.l.b16 %v3158
    %v4386 = vunpack.c.h.b16 %v3158
    %v4387 = vunpack.c.l.b16 %v3159
    %v4388 = vunpack.c.h.b16 %v3159
    %v4389 = vunpack.c.l.b16 %v3160
    %v4390 = vunpack.c.l.b16 %v3161
    %v4391 = vunpack.c.h.b16 %v3161
    %v4392 = vunpack.c.l.b16 %v3162
    %v4393 = vunpack.c.h.b16 %v3162
    %v4394 = vunpack.c.l.b16 %v3163
    %v4395 = vunpack.c.h.b16 %v3163
    %v4396 = vunpack.c.l.b16 %v3164
    %v4397 = vunpack.c.l.b16 %v3165
    %v4398 = vunpack.c.h.b16 %v3165
    %v4399 = vunpack.c.l.b16 %v3166
    %v4400 = vunpack.c.h.b16 %v3166
    %v4401 = vunpack.c.l.b16 %v3167
    %v4402 = vunpack.c.h.b16 %v3167
    %v4403 = vunpack.c.l.b16 %v3168
    %v4404 = vunpack.c.l.b16 %v3169
    %v4405 = vunpack.c.h.b16 %v3169
    %v4406 = vunpack.c.l.b16 %v3170
    %v4407 = vunpack.c.h.b16 %v3170
    %v4408 = vunpack.c.l.b16 %v3171
    %v4409 = vunpack.c.h.b16 %v3171
    %v4410 = vunpack.c.l.b16 %v3172
    %v4411 = vunpack.c.l.b16 %v3173
    %v4412 = vunpack.c.h.b16 %v3173
    %v4413 = vunpack.c.l.b16 %v3174
    %v4414 = vunpack.c.h.b16 %v3174
    %v4415 = vunpack.c.l.b16 %v3175
    %v4416 = vunpack.c.h.b16 %v3175
    %v4417 = vunpack.c.l.b16 %v3176
    %v4418 = vunpack.c.l.b16 %v3177
    %v4419 = vunpack.c.h.b16 %v3177
    %v4420 = vunpack.c.l.b16 %v3178
    %v4421 = vunpack.c.h.b16 %v3178
    %v4422 = vunpack.c.l.b16 %v3179
    %v4423 = vunpack.c.h.b16 %v3179
    %v4424 = vunpack.c.l.b16 %v3180
    %v4425 = vunpack.c.l.b16 %v3181
    %v4426 = vunpack.c.h.b16 %v3181
    %v4427 = vunpack.c.l.b16 %v3182
    %v4428 = vunpack.c.h.b16 %v3182
    %v4429 = vunpack.c.l.b16 %v3183
    %v4430 = vunpack.c.h.b16 %v3183
    %v4431 = vunpack.c.l.b16 %v3184
    %v4432 = vunpack.c.l.b16 %v3185
    %v4433 = vunpack.c.h.b16 %v3185
    %v4434 = vunpack.c.l.b16 %v3186
    %v4435 = vunpack.c.h.b16 %v3186
    %v4436 = vunpack.c.l.b16 %v3187
    %v4437 = vunpack.c.h.b16 %v3187
    %v4438 = vunpack.c.l.b16 %v3188
    %v4439 = vunpack.c.l.b16 %v3189
    %v4440 = vunpack.c.h.b16 %v3189
    %v4441 = vunpack.c.l.b16 %v3190
    %v4442 = vunpack.c.h.b16 %v3190
    %v4443 = vunpack.c.l.b16 %v3191
    %v4444 = vunpack.c.h.b16 %v3191
    %v4445 = vunpack.c.l.b16 %v3192
    %v4446 = vunpack.c.l.b16 %v3193
    %v4447 = vunpack.c.h.b16 %v3193
    %v4448 = vunpack.c.l.b16 %v3194
    %v4449 = vunpack.c.h.b16 %v3194
    %v4450 = vunpack.c.l.b16 %v3195
    %v4451 = vunpack.c.h.b16 %v3195
    %v4452 = vunpack.c.l.b16 %v3196
    %v4453 = vunpack.c.l.b16 %v3197
    %v4454 = vunpack.c.h.b16 %v3197
    %v4455 = vunpack.c.l.b16 %v3198
    %v4456 = vunpack.c.h.b16 %v3198
    %v4457 = vunpack.c.l.b16 %v3199
    %v4458 = vunpack.c.h.b16 %v3199
    %v4459 = vunpack.c.l.b16 %v3200
    %v4460 = vunpack.c.l.b16 %v3201
    %v4461 = vunpack.c.h.b16 %v3201
    %v4462 = vunpack.c.l.b16 %v3202
    %v4463 = vunpack.c.h.b16 %v3202
    %v4464 = vunpack.c.l.b16 %v3203
    %v4465 = vunpack.c.h.b16 %v3203
    %v4466 = vunpack.c.l.b16 %v3204
    %v4467 = vunpack.c.l.b16 %v3205
    %v4468 = vunpack.c.h.b16 %v3205
    %v4469 = vunpack.c.l.b16 %v3206
    %v4470 = vunpack.c.h.b16 %v3206
    %v4471 = vunpack.c.l.b16 %v3207
    %v4472 = vunpack.c.h.b16 %v3207
    %v4473 = vunpack.c.l.b16 %v3208
    %v4474 = vunpack.c.l.b16 %v3209
    %v4475 = vunpack.c.h.b16 %v3209
    %v4476 = vunpack.c.l.b16 %v3210
    %v4477 = vunpack.c.h.b16 %v3210
    %v4478 = vunpack.c.l.b16 %v3211
    %v4479 = vunpack.c.h.b16 %v3211
    %v4480 = vunpack.c.l.b16 %v3212
    %v4481 = vunpack.c.l.b16 %v3213
    %v4482 = vunpack.c.h.b16 %v3213
    %v4483 = vunpack.c.l.b16 %v3214
    %v4484 = vunpack.c.h.b16 %v3214
    %v4485 = vunpack.c.l.b16 %v3215
    %v4486 = vunpack.c.h.b16 %v3215
    %v4487 = vunpack.c.l.b16 %v3216
    %v4488 = vunpack.c.l.b16 %v3217
    %v4489 = vunpack.c.h.b16 %v3217
    %v4490 = vunpack.c.l.b16 %v3218
    %v4491 = vunpack.c.h.b16 %v3218
    %v4492 = vunpack.c.l.b16 %v3219
    %v4493 = vunpack.c.h.b16 %v3219
    %v4494 = vunpack.c.l.b16 %v3220
    %v4495 = vunpack.c.l.b16 %v3221
    %v4496 = vunpack.c.h.b16 %v3221
    %v4497 = vunpack.c.l.b16 %v3222
    %v4498 = vunpack.c.h.b16 %v3222
    %v4499 = vunpack.c.l.b16 %v3223
    %v4500 = vunpack.c.h.b16 %v3223
    %v4501 = vunpack.c.l.b16 %v3224
    %v4502 = vunpack.c.l.b16 %v3225
    %v4503 = vunpack.c.h.b16 %v3225
    %v4504 = vunpack.c.l.b16 %v3226
    %v4505 = vunpack.c.h.b16 %v3226
    %v4506 = vunpack.c.l.b16 %v3227
    %v4507 = vunpack.c.h.b16 %v3227
    %v4508 = vunpack.c.l.b16 %v3228
    %v4509 = vunpack.c.l.b16 %v3229
    %v4510 = vunpack.c.h.b16 %v3229
    %v4511 = vunpack.c.l.b16 %v3230
    %v4512 = vunpack.c.h.b16 %v3230
    %v4513 = vunpack.c.l.b16 %v3231
    %v4514 = vunpack.c.h.b16 %v3231
    %v4515 = vunpack.c.l.b16 %v3232
    %v4516 = vunpack.c.l.b16 %v3233
    %v4517 = vunpack.c.h.b16 %v3233
    %v4518 = vunpack.c.l.b16 %v3234
    %v4519 = vunpack.c.h.b16 %v3234
    %v4520 = vunpack.c.l.b16 %v3235
    %v4521 = vunpack.c.h.b16 %v3235
    %v4522 = vunpack.c.l.b16 %v3236
    %v4523 = vunpack.c.l.b16 %v3237
    %v4524 = vunpack.c.h.b16 %v3237
    %v4525 = vunpack.c.l.b16 %v3238
    %v4526 = vunpack.c.h.b16 %v3238
    %v4527 = vunpack.c.l.b16 %v3239
    %v4528 = vunpack.c.h.b16 %v3239
    %v4529 = vunpack.c.l.b16 %v3240
    %v4530 = vunpack.c.l.b16 %v3241
    %v4531 = vunpack.c.h.b16 %v3241
    %v4532 = vunpack.c.l.b16 %v3242
    %v4533 = vunpack.c.h.b16 %v3242
    %v4534 = vunpack.c.l.b16 %v3243
    %v4535 = vunpack.c.h.b16 %v3243
    %v4536 = vunpack.c.l.b16 %v3244
    %v4537 = vunpack.c.l.b16 %v3245
    %v4538 = vunpack.c.h.b16 %v3245
    %v4539 = vunpack.c.l.b16 %v3246
    %v4540 = vunpack.c.h.b16 %v3246
    %v4541 = vunpack.c.l.b16 %v3247
    %v4542 = vunpack.c.h.b16 %v3247
    %v4543 = vunpack.c.l.b16 %v3248
    %v4544 = vunpack.c.l.b16 %v3249
    %v4545 = vunpack.c.h.b16 %v3249
    %v4546 = vunpack.c.l.b16 %v3250
    %v4547 = vunpack.c.h.b16 %v3250
    %v4548 = vunpack.c.l.b16 %v3251
    %v4549 = vunpack.c.h.b16 %v3251
    %v4550 = vunpack.c.l.b16 %v3252
    %v4551 = vunpack.c.l.b16 %v3253
    %v4552 = vunpack.c.h.b16 %v3253
    %v4553 = vunpack.c.l.b16 %v3254
    %v4554 = vunpack.c.h.b16 %v3254
    %v4555 = vunpack.c.l.b16 %v3255
    %v4556 = vunpack.c.h.b16 %v3255
    %v4557 = vunpack.c.l.b16 %v3256
    %v4558 = vunpack.c.l.b16 %v3257
    %v4559 = vunpack.c.h.b16 %v3257
    %v4560 = vunpack.c.l.b16 %v3258
    %v4561 = vunpack.c.h.b16 %v3258
    %v4562 = vunpack.c.l.b16 %v3259
    %v4563 = vunpack.c.h.b16 %v3259
    %v4564 = vunpack.c.l.b16 %v3260
    %v4565 = vunpack.c.l.b16 %v3261
    %v4566 = vunpack.c.h.b16 %v3261
    %v4567 = vunpack.c.l.b16 %v3262
    %v4568 = vunpack.c.h.b16 %v3262
    %v4569 = vunpack.c.l.b16 %v3263
    %v4570 = vunpack.c.h.b16 %v3263
    %v4571 = vunpack.c.l.b16 %v3264
    %v4572 = vunpack.c.l.b16 %v3265
    %v4573 = vunpack.c.h.b16 %v3265
    %v4574 = vunpack.c.l.b16 %v3266
    %v4575 = vunpack.c.h.b16 %v3266
    %v4576 = vunpack.c.l.b16 %v3267
    %v4577 = vunpack.c.h.b16 %v3267
    %v4578 = vunpack.c.l.b16 %v3268
    %v4579 = vunpack.c.l.b16 %v3269
    %v4580 = vunpack.c.h.b16 %v3269
    %v4581 = vunpack.c.l.b16 %v3270
    %v4582 = vunpack.c.h.b16 %v3270
    %v4583 = vunpack.c.l.b16 %v3271
    %v4584 = vunpack.c.h.b16 %v3271
    %v4585 = vunpack.c.l.b16 %v3272
    %v4586 = vunpack.c.l.b16 %v3273
    %v4587 = vunpack.c.h.b16 %v3273
    %v4588 = vunpack.c.l.b16 %v3274
    %v4589 = vunpack.c.h.b16 %v3274
    %v4590 = vunpack.c.l.b16 %v3275
    %v4591 = vunpack.c.h.b16 %v3275
    %v4592 = vunpack.c.l.b16 %v3276
    %v4593 = vunpack.c.l.b16 %v3277
    %v4594 = vunpack.c.h.b16 %v3277
    %v4595 = vunpack.c.l.b16 %v3278
    %v4596 = vunpack.c.h.b16 %v3278
    %v4597 = vunpack.c.l.b16 %v3279
    %v4598 = vunpack.c.h.b16 %v3279
    %v4599 = vunpack.c.l.b16 %v3280
    %v4600 = vunpack.c.l.b16 %v3281
    %v4601 = vunpack.c.h.b16 %v3281
    %v4602 = vunpack.c.l.b16 %v3282
    %v4603 = vunpack.c.h.b16 %v3282
    %v4604 = vunpack.c.l.b16 %v3283
    %v4605 = vunpack.c.h.b16 %v3283
    %v4606 = vunpack.c.l.b16 %v3284
    %v4607 = vunpack.c.l.b16 %v3285
    %v4608 = vunpack.c.h.b16 %v3285
    %v4609 = vunpack.c.l.b16 %v3286
    %v4610 = vunpack.c.h.b16 %v3286
    %v4611 = vunpack.c.l.b16 %v3287
    %v4612 = vunpack.c.h.b16 %v3287
    %v4613 = vunpack.c.l.b16 %v3288
    %v4614 = vunpack.c.l.b16 %v3289
    %v4615 = vunpack.c.h.b16 %v3289
    %v4616 = vunpack.c.l.b16 %v3290
    %v4617 = vunpack.c.h.b16 %v3290
    %v4618 = vunpack.c.l.b16 %v3291
    %v4619 = vunpack.c.h.b16 %v3291
    %v4620 = vunpack.c.l.b16 %v3292
    %v4621 = vunpack.c.l.b16 %v3293
    %v4622 = vunpack.c.h.b16 %v3293
    %v4623 = vunpack.c.l.b16 %v3294
    %v4624 = vunpack.c.h.b16 %v3294
    %v4625 = vunpack.c.l.b16 %v3295
    %v4626 = vunpack.c.h.b16 %v3295
    %v4627 = vunpack.c.l.b16 %v3296
    %v4628 = vunpack.c.l.b16 %v3297
    %v4629 = vunpack.c.h.b16 %v3297
    %v4630 = vunpack.c.l.b16 %v3298
    %v4631 = vunpack.c.h.b16 %v3298
    %v4632 = vunpack.c.l.b16 %v3299
    %v4633 = vunpack.c.h.b16 %v3299
    %v4634 = vunpack.c.l.b16 %v3300
    %v4635 = vunpack.c.l.b16 %v3301
    %v4636 = vunpack.c.h.b16 %v3301
    %v4637 = vunpack.c.l.b16 %v3302
    %v4638 = vunpack.c.h.b16 %v3302
    %v4639 = vunpack.c.l.b16 %v3303
    %v4640 = vunpack.c.h.b16 %v3303
    %v4641 = vunpack.c.l.b16 %v3304
    %v4642 = vunpack.c.l.b16 %v3305
    %v4643 = vunpack.c.h.b16 %v3305
    %v4644 = vunpack.c.l.b16 %v3306
    %v4645 = vunpack.c.h.b16 %v3306
    %v4646 = vunpack.c.l.b16 %v3307
    %v4647 = vunpack.c.h.b16 %v3307
    %v4648 = vunpack.c.l.b16 %v3308
    %v4649 = vunpack.c.l.b16 %v3309
    %v4650 = vunpack.c.h.b16 %v3309
    %v4651 = vunpack.c.l.b16 %v3310
    %v4652 = vunpack.c.h.b16 %v3310
    %v4653 = vunpack.c.l.b16 %v3311
    %v4654 = vunpack.c.h.b16 %v3311
    %v4655 = vunpack.c.l.b16 %v3312
    %v4656 = vunpack.c.l.b16 %v3313
    %v4657 = vunpack.c.h.b16 %v3313
    %v4658 = vunpack.c.l.b16 %v3314
    %v4659 = vunpack.c.h.b16 %v3314
    %v4660 = vunpack.c.l.b16 %v3315
    %v4661 = vunpack.c.h.b16 %v3315
    %v4662 = vunpack.c.l.b16 %v3316
    %v4663 = vunpack.c.l.b16 %v3317
    %v4664 = vunpack.c.h.b16 %v3317
    %v4665 = vunpack.c.l.b16 %v3318
    %v4666 = vunpack.c.h.b16 %v3318
    %v4667 = vunpack.c.l.b16 %v3319
    %v4668 = vunpack.c.h.b16 %v3319
    %v4669 = vunpack.c.l.b16 %v3320
    %v4670 = vunpack.c.l.b16 %v3321
    %v4671 = vunpack.c.h.b16 %v3321
    %v4672 = vunpack.c.l.b16 %v3322
    %v4673 = vunpack.c.h.b16 %v3322
    %v4674 = vunpack.c.l.b16 %v3323
    %v4675 = vunpack.c.h.b16 %v3323
    %v4676 = vunpack.c.l.b16 %v3324
    %v4677 = vunpack.c.l.b16 %v3325
    %v4678 = vunpack.c.h.b16 %v3325
    %v4679 = vunpack.c.l.b16 %v3326
    %v4680 = vunpack.c.h.b16 %v3326
    %v4681 = vunpack.c.l.b16 %v3327
    %v4682 = vunpack.c.h.b16 %v3327
    %v4683 = vunpack.c.l.b16 %v3328
    %v4684 = vunpack.c.l.b16 %v3329
    %v4685 = vunpack.c.h.b16 %v3329
    %v4686 = vunpack.c.l.b16 %v3330
    %v4687 = vunpack.c.h.b16 %v3330
    %v4688 = vunpack.c.l.b16 %v3331
    %v4689 = vunpack.c.h.b16 %v3331
    %v4690 = vunpack.c.l.b16 %v3332
    %v4691 = vunpack.c.l.b16 %v3333
    %v4692 = vunpack.c.h.b16 %v3333
    %v4693 = vunpack.c.l.b16 %v3334
    %v4694 = vunpack.c.h.b16 %v3334
    %v4695 = vunpack.c.l.b16 %v3335
    %v4696 = vunpack.c.h.b16 %v3335
    %v4697 = vunpack.c.l.b16 %v3336
    %v4698 = vunpack.c.l.b16 %v3337
    %v4699 = vunpack.c.h.b16 %v3337
    %v4700 = vunpack.c.l.b16 %v3338
    %v4701 = vunpack.c.h.b16 %v3338
    %v4702 = vunpack.c.l.b16 %v3339
    %v4703 = vunpack.c.h.b16 %v3339
    %v4704 = vunpack.c.l.b16 %v3340
    %v4705 = vunpack.c.l.b16 %v3341
    %v4706 = vunpack.c.h.b16 %v3341
    %v4707 = vunpack.c.l.b16 %v3342
    %v4708 = vunpack.c.h.b16 %v3342
    %v4709 = vunpack.c.l.b16 %v3343
    %v4710 = vunpack.c.h.b16 %v3343
    %v4711 = vunpack.c.l.b16 %v3344
    %v4712 = vunpack.c.l.b16 %v3345
    %v4713 = vunpack.c.h.b16 %v3345
    %v4714 = vunpack.c.l.b16 %v3346
    %v4715 = vunpack.c.h.b16 %v3346
    %v4716 = vunpack.c.l.b16 %v3347
    %v4717 = vunpack.c.h.b16 %v3347
    %v4718 = vunpack.c.l.b16 %v3348
    %v4719 = vunpack.c.l.b16 %v3349
    %v4720 = vunpack.c.h.b16 %v3349
    %v4721 = vunpack.c.l.b16 %v3350
    %v4722 = vunpack.c.h.b16 %v3350
    %v4723 = vunpack.c.l.b16 %v3351
    %v4724 = vunpack.c.h.b16 %v3351
    %v4725 = vunpack.c.l.b16 %v3352
    %v4726 = vunpack.c.l.b16 %v3353
    %v4727 = vunpack.c.h.b16 %v3353
    %v4728 = vunpack.c.l.b16 %v3354
    %v4729 = vunpack.c.h.b16 %v3354
    %v4730 = vunpack.c.l.b16 %v3355
    %v4731 = vunpack.c.h.b16 %v3355
    %v4732 = vunpack.c.l.b16 %v3356
    %v4733 = vunpack.c.l.b16 %v3357
    %v4734 = vunpack.c.h.b16 %v3357
    %v4735 = vunpack.c.l.b16 %v3358
    %v4736 = vunpack.c.h.b16 %v3358
    %v4737 = vunpack.c.l.b16 %v3359
    %v4738 = vunpack.c.h.b16 %v3359
    %v4739 = vunpack.c.l.b16 %v3360
    %v4740 = vunpack.c.l.b16 %v3361
    %v4741 = vunpack.c.h.b16 %v3361
    %v4742 = vunpack.c.l.b16 %v3362
    %v4743 = vunpack.c.h.b16 %v3362
    %v4744 = vunpack.c.l.b16 %v3363
    %v4745 = vunpack.c.h.b16 %v3363
    %v4746 = vunpack.c.l.b16 %v3364
    %v4747 = vunpack.c.l.b16 %v3365
    %v4748 = vunpack.c.h.b16 %v3365
    %v4749 = vunpack.c.l.b16 %v3366
    %v4750 = vunpack.c.h.b16 %v3366
    %v4751 = vunpack.c.l.b16 %v3367
    %v4752 = vunpack.c.h.b16 %v3367
    %v4753 = vunpack.c.l.b16 %v3368
    %v4754 = vunpack.c.l.b16 %v3369
    %v4755 = vunpack.c.h.b16 %v3369
    %v4756 = vunpack.c.l.b16 %v3370
    %v4757 = vunpack.c.h.b16 %v3370
    %v4758 = vunpack.c.l.b16 %v3371
    %v4759 = vunpack.c.h.b16 %v3371
    %v4760 = vunpack.c.l.b16 %v3372
    %v4761 = vunpack.c.l.b16 %v3373
    %v4762 = vunpack.c.h.b16 %v3373
    %v4763 = vunpack.c.l.b16 %v3374
    %v4764 = vunpack.c.h.b16 %v3374
    %v4765 = vunpack.c.l.b16 %v3375
    %v4766 = vunpack.c.h.b16 %v3375
    %v4767 = vunpack.c.l.b16 %v3376
    %v4768 = vunpack.c.l.b16 %v3377
    %v4769 = vunpack.c.h.b16 %v3377
    %v4770 = vunpack.c.l.b16 %v3378
    %v4771 = vunpack.c.h.b16 %v3378
    %v4772 = vunpack.c.l.b16 %v3379
    %v4773 = vunpack.c.h.b16 %v3379
    %v4774 = vunpack.c.l.b16 %v3380
    %v4775 = vunpack.c.l.b16 %v3381
    %v4776 = vunpack.c.h.b16 %v3381
    %v4777 = vunpack.c.l.b16 %v3382
    %v4778 = vunpack.c.h.b16 %v3382
    %v4779 = vunpack.c.l.b16 %v3383
    %v4780 = vunpack.c.h.b16 %v3383
    %v4781 = vunpack.c.l.b16 %v3384
    %v4782 = vunpack.c.l.b16 %v3385
    %v4783 = vunpack.c.h.b16 %v3385
    %v4784 = vunpack.c.l.b16 %v3386
    %v4785 = vunpack.c.h.b16 %v3386
    %v4786 = vunpack.c.l.b16 %v3387
    %v4787 = vunpack.c.h.b16 %v3387
    %v4788 = vunpack.c.l.b16 %v3388
    %v4789 = vunpack.c.l.b16 %v3389
    %v4790 = vunpack.c.h.b16 %v3389
    %v4791 = vunpack.c.l.b16 %v3390
    %v4792 = vunpack.c.h.b16 %v3390
    %v4793 = vunpack.c.l.b16 %v3391
    %v4794 = vunpack.c.h.b16 %v3391
    %v4795 = vunpack.c.l.b16 %v3392
    %v4796 = vunpack.c.l.b16 %v3393
    %v4797 = vunpack.c.h.b16 %v3393
    %v4798 = vunpack.c.l.b16 %v3394
    %v4799 = vunpack.c.h.b16 %v3394
    %v4800 = vunpack.c.l.b16 %v3395
    %v4801 = vunpack.c.h.b16 %v3395
    %v4802 = vunpack.c.l.b16 %v3396
    %v4803 = vunpack.c.l.b16 %v3397
    %v4804 = vunpack.c.h.b16 %v3397
    %v4805 = vunpack.c.l.b16 %v3398
    %v4806 = vunpack.c.h.b16 %v3398
    %v4807 = vunpack.c.l.b16 %v3399
    %v4808 = vunpack.c.h.b16 %v3399
    %v4809 = vunpack.c.l.b16 %v3400
    %v4810 = vunpack.c.l.b16 %v3401
    %v4811 = vunpack.c.h.b16 %v3401
    %v4812 = vunpack.c.l.b16 %v3402
    %v4813 = vunpack.c.h.b16 %v3402
    %v4814 = vunpack.c.l.b16 %v3403
    %v4815 = vunpack.c.h.b16 %v3403
    %v4816 = vunpack.c.l.b16 %v3404
    %v4817 = vunpack.c.l.b16 %v3405
    %v4818 = vunpack.c.h.b16 %v3405
    %v4819 = vunpack.c.l.b16 %v3406
    %v4820 = vunpack.c.h.b16 %v3406
    %v4821 = vunpack.c.l.b16 %v3407
    %v4822 = vunpack.c.h.b16 %v3407
    %v4823 = vunpack.c.l.b16 %v3408
    %v4824 = vunpack.c.l.b16 %v3409
    %v4825 = vunpack.c.h.b16 %v3409
    %v4826 = vunpack.c.l.b16 %v3410
    %v4827 = vunpack.c.h.b16 %v3410
    %v4828 = vunpack.c.l.b16 %v3411
    %v4829 = vunpack.c.h.b16 %v3411
    %v4830 = vunpack.c.l.b16 %v3412
    %v4831 = vunpack.c.l.b16 %v3413
    %v4832 = vunpack.c.h.b16 %v3413
    %v4833 = vunpack.c.l.b16 %v3414
    %v4834 = vunpack.c.h.b16 %v3414
    %v4835 = vunpack.c.l.b16 %v3415
    %v4836 = vunpack.c.h.b16 %v3415
    %v4837 = vunpack.c.l.b16 %v3416
    %v4838 = vunpack.c.l.b16 %v3417
    %v4839 = vunpack.c.h.b16 %v3417
    %v4840 = vunpack.c.l.b16 %v3418
    %v4841 = vunpack.c.h.b16 %v3418
    %v4842 = vunpack.c.l.b16 %v3419
    %v4843 = vunpack.c.h.b16 %v3419
    %v4844 = vunpack.c.l.b16 %v3420
    %v4845 = vpack.c.b16 %v3956, %v3949
    %v4846 = vpack.c.b16 %v3957, %v3950
    %v4847 = vpack.c.b16 %v3958, %v3951
    %v4848 = vpack.c.b16 %v3959, %v3952
    %v4849 = vpack.c.b16 %v3960, %v3953
    %v4850 = vpack.c.b16 %v3961, %v3954
    %v4851 = vpack.c.b16 %v3962, %v3955
    %v4852 = vpack.c.b16 %v3970, %v3963
    %v4853 = vpack.c.b16 %v3971, %v3964
    %v4854 = vpack.c.b16 %v3972, %v3965
    %v4855 = vpack.c.b16 %v3973, %v3966
    %v4856 = vpack.c.b16 %v3974, %v3967
    %v4857 = vpack.c.b16 %v3975, %v3968
    %v4858 = vpack.c.b16 %v3976, %v3969
    %v4859 = vpack.c.b16 %v3984, %v3977
    %v4860 = vpack.c.b16 %v3985, %v3978
    %v4861 = vpack.c.b16 %v3986, %v3979
    %v4862 = vpack.c.b16 %v3987, %v3980
    %v4863 = vpack.c.b16 %v3988, %v3981
    %v4864 = vpack.c.b16 %v3989, %v3982
    %v4865 = vpack.c.b16 %v3990, %v3983
    %v4866 = vpack.c.b16 %v3998, %v3991
    %v4867 = vpack.c.b16 %v3999, %v3992
    %v4868 = vpack.c.b16 %v4000, %v3993
    %v4869 = vpack.c.b16 %v4001, %v3994
    %v4870 = vpack.c.b16 %v4002, %v3995
    %v4871 = vpack.c.b16 %v4003, %v3996
    %v4872 = vpack.c.b16 %v4004, %v3997
    %v4873 = vpack.c.b16 %v4012, %v4005
    %v4874 = vpack.c.b16 %v4013, %v4006
    %v4875 = vpack.c.b16 %v4014, %v4007
    %v4876 = vpack.c.b16 %v4015, %v4008
    %v4877 = vpack.c.b16 %v4016, %v4009
    %v4878 = vpack.c.b16 %v4017, %v4010
    %v4879 = vpack.c.b16 %v4018, %v4011
    %v4880 = vpack.c.b16 %v4026, %v4019
    %v4881 = vpack.c.b16 %v4027, %v4020
    %v4882 = vpack.c.b16 %v4028, %v4021
    %v4883 = vpack.c.b16 %v4029, %v4022
    %v4884 = vpack.c.b16 %v4030, %v4023
    %v4885 = vpack.c.b16 %v4031, %v4024
    %v4886 = vpack.c.b16 %v4032, %v4025
    %v4887 = vpack.c.b16 %v4040, %v4033
    %v4888 = vpack.c.b16 %v4041, %v4034
    %v4889 = vpack.c.b16 %v4042, %v4035
    %v4890 = vpack.c.b16 %v4043, %v4036
    %v4891 = vpack.c.b16 %v4044, %v4037
    %v4892 = vpack.c.b16 %v4045, %v4038
    %v4893 = vpack.c.b16 %v4046, %v4039
    %v4894 = vpack.c.b16 %v4054, %v4047
    %v4895 = vpack.c.b16 %v4055, %v4048
    %v4896 = vpack.c.b16 %v4056, %v4049
    %v4897 = vpack.c.b16 %v4057, %v4050
    %v4898 = vpack.c.b16 %v4058, %v4051
    %v4899 = vpack.c.b16 %v4059, %v4052
    %v4900 = vpack.c.b16 %v4060, %v4053
    %v4901 = vpack.c.b16 %v4068, %v4061
    %v4902 = vpack.c.b16 %v4069, %v4062
    %v4903 = vpack.c.b16 %v4070, %v4063
    %v4904 = vpack.c.b16 %v4071, %v4064
    %v4905 = vpack.c.b16 %v4072, %v4065
    %v4906 = vpack.c.b16 %v4073, %v4066
    %v4907 = vpack.c.b16 %v4074, %v4067
    %v4908 = vpack.c.b16 %v4082, %v4075
    %v4909 = vpack.c.b16 %v4083, %v4076
    %v4910 = vpack.c.b16 %v4084, %v4077
    %v4911 = vpack.c.b16 %v4085, %v4078
    %v4912 = vpack.c.b16 %v4086, %v4079
    %v4913 = vpack.c.b16 %v4087, %v4080
    %v4914 = vpack.c.b16 %v4088, %v4081
    %v4915 = vpack.c.b16 %v4096, %v4089
    %v4916 = vpack.c.b16 %v4097, %v4090
    %v4917 = vpack.c.b16 %v4098, %v4091
    %v4918 = vpack.c.b16 %v4099, %v4092
    %v4919 = vpack.c.b16 %v4100, %v4093
    %v4920 = vpack.c.b16 %v4101, %v4094
    %v4921 = vpack.c.b16 %v4102, %v4095
    %v4922 = vpack.c.b16 %v4110, %v4103
    %v4923 = vpack.c.b16 %v4111, %v4104
    %v4924 = vpack.c.b16 %v4112, %v4105
    %v4925 = vpack.c.b16 %v4113, %v4106
    %v4926 = vpack.c.b16 %v4114, %v4107
    %v4927 = vpack.c.b16 %v4115, %v4108
    %v4928 = vpack.c.b16 %v4116, %v4109
    %v4929 = vpack.c.b16 %v4124, %v4117
    %v4930 = vpack.c.b16 %v4125, %v4118
    %v4931 = vpack.c.b16 %v4126, %v4119
    %v4932 = vpack.c.b16 %v4127, %v4120
    %v4933 = vpack.c.b16 %v4128, %v4121
    %v4934 = vpack.c.b16 %v4129, %v4122
    %v4935 = vpack.c.b16 %v4130, %v4123
    %v4936 = vpack.c.b16 %v4138, %v4131
    %v4937 = vpack.c.b16 %v4139, %v4132
    %v4938 = vpack.c.b16 %v4140, %v4133
    %v4939 = vpack.c.b16 %v4141, %v4134
    %v4940 = vpack.c.b16 %v4142, %v4135
    %v4941 = vpack.c.b16 %v4143, %v4136
    %v4942 = vpack.c.b16 %v4144, %v4137
    %v4943 = vpack.c.b16 %v4152, %v4145
    %v4944 = vpack.c.b16 %v4153, %v4146
    %v4945 = vpack.c.b16 %v4154, %v4147
    %v4946 = vpack.c.b16 %v4155, %v4148
    %v4947 = vpack.c.b16 %v4156, %v4149
    %v4948 = vpack.c.b16 %v4157, %v4150
    %v4949 = vpack.c.b16 %v4158, %v4151
    %v4950 = vpack.c.b16 %v4166, %v4159
    %v4951 = vpack.c.b16 %v4167, %v4160
    %v4952 = vpack.c.b16 %v4168, %v4161
    %v4953 = vpack.c.b16 %v4169, %v4162
    %v4954 = vpack.c.b16 %v4170, %v4163
    %v4955 = vpack.c.b16 %v4171, %v4164
    %v4956 = vpack.c.b16 %v4172, %v4165
    %v4957 = vpack.c.b16 %v4180, %v4173
    %v4958 = vpack.c.b16 %v4181, %v4174
    %v4959 = vpack.c.b16 %v4182, %v4175
    %v4960 = vpack.c.b16 %v4183, %v4176
    %v4961 = vpack.c.b16 %v4184, %v4177
    %v4962 = vpack.c.b16 %v4185, %v4178
    %v4963 = vpack.c.b16 %v4186, %v4179
    %v4964 = vpack.c.b16 %v4194, %v4187
    %v4965 = vpack.c.b16 %v4195, %v4188
    %v4966 = vpack.c.b16 %v4196, %v4189
    %v4967 = vpack.c.b16 %v4197, %v4190
    %v4968 = vpack.c.b16 %v4198, %v4191
    %v4969 = vpack.c.b16 %v4199, %v4192
    %v4970 = vpack.c.b16 %v4200, %v4193
    %v4971 = vpack.c.b16 %v4208, %v4201
    %v4972 = vpack.c.b16 %v4209, %v4202
    %v4973 = vpack.c.b16 %v4210, %v4203
    %v4974 = vpack.c.b16 %v4211, %v4204
    %v4975 = vpack.c.b16 %v4212, %v4205
    %v4976 = vpack.c.b16 %v4213, %v4206
    %v4977 = vpack.c.b16 %v4214, %v4207
    %v4978 = vpack.c.b16 %v4222, %v4215
    %v4979 = vpack.c.b16 %v4223, %v4216
    %v4980 = vpack.c.b16 %v4224, %v4217
    %v4981 = vpack.c.b16 %v4225, %v4218
    %v4982 = vpack.c.b16 %v4226, %v4219
    %v4983 = vpack.c.b16 %v4227, %v4220
    %v4984 = vpack.c.b16 %v4228, %v4221
    %v4985 = vpack.c.b16 %v4236, %v4229
    %v4986 = vpack.c.b16 %v4237, %v4230
    %v4987 = vpack.c.b16 %v4238, %v4231
    %v4988 = vpack.c.b16 %v4239, %v4232
    %v4989 = vpack.c.b16 %v4240, %v4233
    %v4990 = vpack.c.b16 %v4241, %v4234
    %v4991 = vpack.c.b16 %v4242, %v4235
    %v4992 = vpack.c.b16 %v4250, %v4243
    %v4993 = vpack.c.b16 %v4251, %v4244
    %v4994 = vpack.c.b16 %v4252, %v4245
    %v4995 = vpack.c.b16 %v4253, %v4246
    %v4996 = vpack.c.b16 %v4254, %v4247
    %v4997 = vpack.c.b16 %v4255, %v4248
    %v4998 = vpack.c.b16 %v4256, %v4249
    %v4999 = vpack.c.b16 %v4264, %v4257
    %v5000 = vpack.c.b16 %v4265, %v4258
    %v5001 = vpack.c.b16 %v4266, %v4259
    %v5002 = vpack.c.b16 %v4267, %v4260
    %v5003 = vpack.c.b16 %v4268, %v4261
    %v5004 = vpack.c.b16 %v4269, %v4262
    %v5005 = vpack.c.b16 %v4270, %v4263
    %v5006 = vpack.c.b16 %v4278, %v4271
    %v5007 = vpack.c.b16 %v4279, %v4272
    %v5008 = vpack.c.b16 %v4280, %v4273
    %v5009 = vpack.c.b16 %v4281, %v4274
    %v5010 = vpack.c.b16 %v4282, %v4275
    %v5011 = vpack.c.b16 %v4283, %v4276
    %v5012 = vpack.c.b16 %v4284, %v4277
    %v5013 = vpack.c.b16 %v4292, %v4285
    %v5014 = vpack.c.b16 %v4293, %v4286
    %v5015 = vpack.c.b16 %v4294, %v4287
    %v5016 = vpack.c.b16 %v4295, %v4288
    %v5017 = vpack.c.b16 %v4296, %v4289
    %v5018 = vpack.c.b16 %v4297, %v4290
    %v5019 = vpack.c.b16 %v4298, %v4291
    %v5020 = vpack.c.b16 %v4306, %v4299
    %v5021 = vpack.c.b16 %v4307, %v4300
    %v5022 = vpack.c.b16 %v4308, %v4301
    %v5023 = vpack.c.b16 %v4309, %v4302
    %v5024 = vpack.c.b16 %v4310, %v4303
    %v5025 = vpack.c.b16 %v4311, %v4304
    %v5026 = vpack.c.b16 %v4312, %v4305
    %v5027 = vpack.c.b16 %v4320, %v4313
    %v5028 = vpack.c.b16 %v4321, %v4314
    %v5029 = vpack.c.b16 %v4322, %v4315
    %v5030 = vpack.c.b16 %v4323, %v4316
    %v5031 = vpack.c.b16 %v4324, %v4317
    %v5032 = vpack.c.b16 %v4325, %v4318
    %v5033 = vpack.c.b16 %v4326, %v4319
    %v5034 = vpack.c.b16 %v4334, %v4327
    %v5035 = vpack.c.b16 %v4335, %v4328
    %v5036 = vpack.c.b16 %v4336, %v4329
    %v5037 = vpack.c.b16 %v4337, %v4330
    %v5038 = vpack.c.b16 %v4338, %v4331
    %v5039 = vpack.c.b16 %v4339, %v4332
    %v5040 = vpack.c.b16 %v4340, %v4333
    %v5041 = vpack.c.b16 %v4348, %v4341
    %v5042 = vpack.c.b16 %v4349, %v4342
    %v5043 = vpack.c.b16 %v4350, %v4343
    %v5044 = vpack.c.b16 %v4351, %v4344
    %v5045 = vpack.c.b16 %v4352, %v4345
    %v5046 = vpack.c.b16 %v4353, %v4346
    %v5047 = vpack.c.b16 %v4354, %v4347
    %v5048 = vpack.c.b16 %v4362, %v4355
    %v5049 = vpack.c.b16 %v4363, %v4356
    %v5050 = vpack.c.b16 %v4364, %v4357
    %v5051 = vpack.c.b16 %v4365, %v4358
    %v5052 = vpack.c.b16 %v4366, %v4359
    %v5053 = vpack.c.b16 %v4367, %v4360
    %v5054 = vpack.c.b16 %v4368, %v4361
    %v5055 = vpack.c.b16 %v4376, %v4369
    %v5056 = vpack.c.b16 %v4377, %v4370
    %v5057 = vpack.c.b16 %v4378, %v4371
    %v5058 = vpack.c.b16 %v4379, %v4372
    %v5059 = vpack.c.b16 %v4380, %v4373
    %v5060 = vpack.c.b16 %v4381, %v4374
    %v5061 = vpack.c.b16 %v4382, %v4375
    %v5062 = vpack.c.b16 %v4390, %v4383
    %v5063 = vpack.c.b16 %v4391, %v4384
    %v5064 = vpack.c.b16 %v4392, %v4385
    %v5065 = vpack.c.b16 %v4393, %v4386
    %v5066 = vpack.c.b16 %v4394, %v4387
    %v5067 = vpack.c.b16 %v4395, %v4388
    %v5068 = vpack.c.b16 %v4396, %v4389
    %v5069 = vpack.c.b16 %v4404, %v4397
    %v5070 = vpack.c.b16 %v4405, %v4398
    %v5071 = vpack.c.b16 %v4406, %v4399
    %v5072 = vpack.c.b16 %v4407, %v4400
    %v5073 = vpack.c.b16 %v4408, %v4401
    %v5074 = vpack.c.b16 %v4409, %v4402
    %v5075 = vpack.c.b16 %v4410, %v4403
    %v5076 = vpack.c.b16 %v4418, %v4411
    %v5077 = vpack.c.b16 %v4419, %v4412
    %v5078 = vpack.c.b16 %v4420, %v4413
    %v5079 = vpack.c.b16 %v4421, %v4414
    %v5080 = vpack.c.b16 %v4422, %v4415
    %v5081 = vpack.c.b16 %v4423, %v4416
    %v5082 = vpack.c.b16 %v4424, %v4417
    %v5083 = vpack.c.b16 %v4432, %v4425
    %v5084 = vpack.c.b16 %v4433, %v4426
    %v5085 = vpack.c.b16 %v4434, %v4427
    %v5086 = vpack.c.b16 %v4435, %v4428
    %v5087 = vpack.c.b16 %v4436, %v4429
    %v5088 = vpack.c.b16 %v4437, %v4430
    %v5089 = vpack.c.b16 %v4438, %v4431
    %v5090 = vpack.c.b16 %v4446, %v4439
    %v5091 = vpack.c.b16 %v4447, %v4440
    %v5092 = vpack.c.b16 %v4448, %v4441
    %v5093 = vpack.c.b16 %v4449, %v4442
    %v5094 = vpack.c.b16 %v4450, %v4443
    %v5095 = vpack.c.b16 %v4451, %v4444
    %v5096 = vpack.c.b16 %v4452, %v4445
    %v5097 = vpack.c.b16 %v4460, %v4453
    %v5098 = vpack.c.b16 %v4461, %v4454
    %v5099 = vpack.c.b16 %v4462, %v4455
    %v5100 = vpack.c.b16 %v4463, %v4456
    %v5101 = vpack.c.b16 %v4464, %v4457
    %v5102 = vpack.c.b16 %v4465, %v4458
    %v5103 = vpack.c.b16 %v4466, %v4459
    %v5104 = vpack.c.b16 %v4474, %v4467
    %v5105 = vpack.c.b16 %v4475, %v4468
    %v5106 = vpack.c.b16 %v4476, %v4469
    %v5107 = vpack.c.b16 %v4477, %v4470
    %v5108 = vpack.c.b16 %v4478, %v4471
    %v5109 = vpack.c.b16 %v4479, %v4472
    %v5110 = vpack.c.b16 %v4480, %v4473
    %v5111 = vpack.c.b16 %v4488, %v4481
    %v5112 = vpack.c.b16 %v4489, %v4482
    %v5113 = vpack.c.b16 %v4490, %v4483
    %v5114 = vpack.c.b16 %v4491, %v4484
    %v5115 = vpack.c.b16 %v4492, %v4485
    %v5116 = vpack.c.b16 %v4493, %v4486
    %v5117 = vpack.c.b16 %v4494, %v4487
    %v5118 = vpack.c.b16 %v4502, %v4495
    %v5119 = vpack.c.b16 %v4503, %v4496
    %v5120 = vpack.c.b16 %v4504, %v4497
    %v5121 = vpack.c.b16 %v4505, %v4498
    %v5122 = vpack.c.b16 %v4506, %v4499
    %v5123 = vpack.c.b16 %v4507, %v4500
    %v5124 = vpack.c.b16 %v4508, %v4501
    %v5125 = vpack.c.b16 %v4516, %v4509
    %v5126 = vpack.c.b16 %v4517, %v4510
    %v5127 = vpack.c.b16 %v4518, %v4511
    %v5128 = vpack.c.b16 %v4519, %v4512
    %v5129 = vpack.c.b16 %v4520, %v4513
    %v5130 = vpack.c.b16 %v4521, %v4514
    %v5131 = vpack.c.b16 %v4522, %v4515
    %v5132 = vpack.c.b16 %v4530, %v4523
    %v5133 = vpack.c.b16 %v4531, %v4524
    %v5134 = vpack.c.b16 %v4532, %v4525
    %v5135 = vpack.c.b16 %v4533, %v4526
    %v5136 = vpack.c.b16 %v4534, %v4527
    %v5137 = vpack.c.b16 %v4535, %v4528
    %v5138 = vpack.c.b16 %v4536, %v4529
    %v5139 = vpack.c.b16 %v4544, %v4537
    %v5140 = vpack.c.b16 %v4545, %v4538
    %v5141 = vpack.c.b16 %v4546, %v4539
    %v5142 = vpack.c.b16 %v4547, %v4540
    %v5143 = vpack.c.b16 %v4548, %v4541
    %v5144 = vpack.c.b16 %v4549, %v4542
    %v5145 = vpack.c.b16 %v4550, %v4543
    %v5146 = vpack.c.b16 %v4558, %v4551
    %v5147 = vpack.c.b16 %v4559, %v4552
    %v5148 = vpack.c.b16 %v4560, %v4553
    %v5149 = vpack.c.b16 %v4561, %v4554
    %v5150 = vpack.c.b16 %v4562, %v4555
    %v5151 = vpack.c.b16 %v4563, %v4556
    %v5152 = vpack.c.b16 %v4564, %v4557
    %v5153 = vpack.c.b16 %v4572, %v4565
    %v5154 = vpack.c.b16 %v4573, %v4566
    %v5155 = vpack.c.b16 %v4574, %v4567
    %v5156 = vpack.c.b16 %v4575, %v4568
    %v5157 = vpack.c.b16 %v4576, %v4569
    %v5158 = vpack.c.b16 %v4577, %v4570
    %v5159 = vpack.c.b16 %v4578, %v4571
    %v5160 = vpack.c.b16 %v4586, %v4579
    %v5161 = vpack.c.b16 %v4587, %v4580
    %v5162 = vpack.c.b16 %v4588, %v4581
    %v5163 = vpack.c.b16 %v4589, %v4582
    %v5164 = vpack.c.b16 %v4590, %v4583
    %v5165 = vpack.c.b16 %v4591, %v4584
    %v5166 = vpack.c.b16 %v4592, %v4585
    %v5167 = vpack.c.b16 %v4600, %v4593
    %v5168 = vpack.c.b16 %v4601, %v4594
    %v5169 = vpack.c.b16 %v4602, %v4595
    %v5170 = vpack.c.b16 %v4603, %v4596
    %v5171 = vpack.c.b16 %v4604, %v4597
    %v5172 = vpack.c.b16 %v4605, %v4598
    %v5173 = vpack.c.b16 %v4606, %v4599
    %v5174 = vpack.c.b16 %v4614, %v4607
    %v5175 = vpack.c.b16 %v4615, %v4608
    %v5176 = vpack.c.b16 %v4616, %v4609
    %v5177 = vpack.c.b16 %v4617, %v4610
    %v5178 = vpack.c.b16 %v4618, %v4611
    %v5179 = vpack.c.b16 %v4619, %v4612
    %v5180 = vpack.c.b16 %v4620, %v4613
    %v5181 = vpack.c.b16 %v4628, %v4621
    %v5182 = vpack.c.b16 %v4629, %v4622
    %v5183 = vpack.c.b16 %v4630, %v4623
    %v5184 = vpack.c.b16 %v4631, %v4624
    %v5185 = vpack.c.b16 %v4632, %v4625
    %v5186 = vpack.c.b16 %v4633, %v4626
    %v5187 = vpack.c.b16 %v4634, %v4627
    %v5188 = vpack.c.b16 %v4642, %v4635
    %v5189 = vpack.c.b16 %v4643, %v4636
    %v5190 = vpack.c.b16 %v4644, %v4637
    %v5191 = vpack.c.b16 %v4645, %v4638
    %v5192 = vpack.c.b16 %v4646, %v4639
    %v5193 = vpack.c.b16 %v4647, %v4640
    %v5194 = vpack.c.b16 %v4648, %v4641
    %v5195 = vpack.c.b16 %v4656, %v4649
    %v5196 = vpack.c.b16 %v4657, %v4650
    %v5197 = vpack.c.b16 %v4658, %v4651
    %v5198 = vpack.c.b16 %v4659, %v4652
    %v5199 = vpack.c.b16 %v4660, %v4653
    %v5200 = vpack.c.b16 %v4661, %v4654
    %v5201 = vpack.c.b16 %v4662, %v4655
    %v5202 = vpack.c.b16 %v4670, %v4663
    %v5203 = vpack.c.b16 %v4671, %v4664
    %v5204 = vpack.c.b16 %v4672, %v4665
    %v5205 = vpack.c.b16 %v4673, %v4666
    %v5206 = vpack.c.b16 %v4674, %v4667
    %v5207 = vpack.c.b16 %v4675, %v4668
    %v5208 = vpack.c.b16 %v4676, %v4669
    %v5209 = vpack.c.b16 %v4684, %v4677
    %v5210 = vpack.c.b16 %v4685, %v4678
    %v5211 = vpack.c.b16 %v4686, %v4679
    %v5212 = vpack.c.b16 %v4687, %v4680
    %v5213 = vpack.c.b16 %v4688, %v4681
    %v5214 = vpack.c.b16 %v4689, %v4682
    %v5215 = vpack.c.b16 %v4690, %v4683
    %v5216 = vpack.c.b16 %v4698, %v4691
    %v5217 = vpack.c.b16 %v4699, %v4692
    %v5218 = vpack.c.b16 %v4700, %v4693
    %v5219 = vpack.c.b16 %v4701, %v4694
    %v5220 = vpack.c.b16 %v4702, %v4695
    %v5221 = vpack.c.b16 %v4703, %v4696
    %v5222 = vpack.c.b16 %v4704, %v4697
    %v5223 = vpack.c.b16 %v4712, %v4705
    %v5224 = vpack.c.b16 %v4713, %v4706
    %v5225 = vpack.c.b16 %v4714, %v4707
    %v5226 = vpack.c.b16 %v4715, %v4708
    %v5227 = vpack.c.b16 %v4716, %v4709
    %v5228 = vpack.c.b16 %v4717, %v4710
    %v5229 = vpack.c.b16 %v4718, %v4711
    %v5230 = vpack.c.b16 %v4726, %v4719
    %v5231 = vpack.c.b16 %v4727, %v4720
    %v5232 = vpack.c.b16 %v4728, %v4721
    %v5233 = vpack.c.b16 %v4729, %v4722
    %v5234 = vpack.c.b16 %v4730, %v4723
    %v5235 = vpack.c.b16 %v4731, %v4724
    %v5236 = vpack.c.b16 %v4732, %v4725
    %v5237 = vpack.c.b16 %v4740, %v4733
    %v5238 = vpack.c.b16 %v4741, %v4734
    %v5239 = vpack.c.b16 %v4742, %v4735
    %v5240 = vpack.c.b16 %v4743, %v4736
    %v5241 = vpack.c.b16 %v4744, %v4737
    %v5242 = vpack.c.b16 %v4745, %v4738
    %v5243 = vpack.c.b16 %v4746, %v4739
    %v5244 = vpack.c.b16 %v4754, %v4747
    %v5245 = vpack.c.b16 %v4755, %v4748
    %v5246 = vpack.c.b16 %v4756, %v4749
    %v5247 = vpack.c.b16 %v4757, %v4750
    %v5248 = vpack.c.b16 %v4758, %v4751
    %v5249 = vpack.c.b16 %v4759, %v4752
    %v5250 = vpack.c.b16 %v4760, %v4753
    %v5251 = vpack.c.b16 %v4768, %v4761
    %v5252 = vpack.c.b16 %v4769, %v4762
    %v5253 = vpack.c.b16 %v4770, %v4763
    %v5254 = vpack.c.b16 %v4771, %v4764
    %v5255 = vpack.c.b16 %v4772, %v4765
    %v5256 = vpack.c.b16 %v4773, %v4766
    %v5257 = vpack.c.b16 %v4774, %v4767
    %v5258 = vpack.c.b16 %v4782, %v4775
    %v5259 = vpack.c.b16 %v4783, %v4776
    %v5260 = vpack.c.b16 %v4784, %v4777
    %v5261 = vpack.c.b16 %v4785, %v4778
    %v5262 = vpack.c.b16 %v4786, %v4779
    %v5263 = vpack.c.b16 %v4787, %v4780
    %v5264 = vpack.c.b16 %v4788, %v4781
    %v5265 = vpack.c.b16 %v4796, %v4789
    %v5266 = vpack.c.b16 %v4797, %v4790
    %v5267 = vpack.c.b16 %v4798, %v4791
    %v5268 = vpack.c.b16 %v4799, %v4792
    %v5269 = vpack.c.b16 %v4800, %v4793
    %v5270 = vpack.c.b16 %v4801, %v4794
    %v5271 = vpack.c.b16 %v4802, %v4795
    %v5272 = vpack.c.b16 %v4810, %v4803
    %v5273 = vpack.c.b16 %v4811, %v4804
    %v5274 = vpack.c.b16 %v4812, %v4805
    %v5275 = vpack.c.b16 %v4813, %v4806
    %v5276 = vpack.c.b16 %v4814, %v4807
    %v5277 = vpack.c.b16 %v4815, %v4808
    %v5278 = vpack.c.b16 %v4816, %v4809
    %v5279 = vpack.c.b16 %v4824, %v4817
    %v5280 = vpack.c.b16 %v4825, %v4818
    %v5281 = vpack.c.b16 %v4826, %v4819
    %v5282 = vpack.c.b16 %v4827, %v4820
    %v5283 = vpack.c.b16 %v4828, %v4821
    %v5284 = vpack.c.b16 %v4829, %v4822
    %v5285 = vpack.c.b16 %v4830, %v4823
    %v5286 = vpack.c.b16 %v4838, %v4831
    %v5287 = vpack.c.b16 %v4839, %v4832
    %v5288 = vpack.c.b16 %v4840, %v4833
    %v5289 = vpack.c.b16 %v4841, %v4834
    %v5290 = vpack.c.b16 %v4842, %v4835
    %v5291 = vpack.c.b16 %v4843, %v4836
    %v5292 = vpack.c.b16 %v4844, %v4837
    %5741 = vmatpush.bf16.msra.mxu0 %v4894
    %5742 = vmatpush.bf16.msra.mxu0 %v4887
    %5743 = vmatpush.bf16.msra.mxu0 %v4880
    %5744 = vmatpush.bf16.msra.mxu0 %v4873
    %5745 = vmatpush.bf16.msra.mxu0 %v4866
    %5746 = vmatpush.bf16.msra.mxu0 %v4859
    %5747 = vmatpush.bf16.msra.mxu0 %v4852
    %5748 = vmatpush.bf16.msra.mxu0 %v4845
    %5749 = vmatmul.bf16.gmra.mxu0 %v2901
    %v5750 = vpop.f32.mrf.mxu0
    %v5751 = vadd.f32 %v3423, %v5750
    %v5752 = vpop.f32.mrf.mxu0
    %v5753 = vadd.f32 %v3423, %v5752
    %5754 = vdwg.mxu0
    %5755 = vmatpush.bf16.msra.mxu0 %v4950
    %5756 = vmatpush.bf16.msra.mxu0 %v4943
    %5757 = vmatpush.bf16.msra.mxu0 %v4936
    %5758 = vmatpush.bf16.msra.mxu0 %v4929
    %5759 = vmatpush.bf16.msra.mxu0 %v4922
    %5760 = vmatpush.bf16.msra.mxu0 %v4915
    %5761 = vmatpush.bf16.msra.mxu0 %v4908
    %5762 = vmatpush.bf16.msra.mxu0 %v4901
    %5763 = vmatmul.bf16.gmra.mxu0 %v2902
    %v5764 = vpop.f32.mrf.mxu0
    %v5765 = vadd.f32 %v5751, %v5764
    %v5766 = vpop.f32.mrf.mxu0
    %v5767 = vadd.f32 %v5753, %v5766
    %5768 = vdwg.mxu0
    %5769 = vmatpush.bf16.msra.mxu0 %v5006
    %5770 = vmatpush.bf16.msra.mxu0 %v4999
    %5771 = vmatpush.bf16.msra.mxu0 %v4992
    %5772 = vmatpush.bf16.msra.mxu0 %v4985
    %5773 = vmatpush.bf16.msra.mxu0 %v4978
    %5774 = vmatpush.bf16.msra.mxu0 %v4971
    %5775 = vmatpush.bf16.msra.mxu0 %v4964
    %5776 = vmatpush.bf16.msra.mxu0 %v4957
    %5777 = vmatmul.bf16.gmra.mxu0 %v2903
    %v5778 = vpop.f32.mrf.mxu0
    %v5779 = vadd.f32 %v5765, %v5778
    %v5780 = vpop.f32.mrf.mxu0
    %v5781 = vadd.f32 %v5767, %v5780
    %5782 = vdwg.mxu0
    %5783 = vmatpush.bf16.msra.mxu0 %v5062
    %5784 = vmatpush.bf16.msra.mxu0 %v5055
    %5785 = vmatpush.bf16.msra.mxu0 %v5048
    %5786 = vmatpush.bf16.msra.mxu0 %v5041
    %5787 = vmatpush.bf16.msra.mxu0 %v5034
    %5788 = vmatpush.bf16.msra.mxu0 %v5027
    %5789 = vmatpush.bf16.msra.mxu0 %v5020
    %5790 = vmatpush.bf16.msra.mxu0 %v5013
    %5791 = vmatmul.bf16.gmra.mxu0 %v2904
    %v5792 = vpop.f32.mrf.mxu0
    %v5793 = vadd.f32 %v5779, %v5792
    %v5794 = vpop.f32.mrf.mxu0
    %v5795 = vadd.f32 %v5781, %v5794
    %5796 = vdwg.mxu0
    %5797 = vmatpush.bf16.msra.mxu0 %v5118
    %5798 = vmatpush.bf16.msra.mxu0 %v5111
    %5799 = vmatpush.bf16.msra.mxu0 %v5104
    %5800 = vmatpush.bf16.msra.mxu0 %v5097
    %5801 = vmatpush.bf16.msra.mxu0 %v5090
    %5802 = vmatpush.bf16.msra.mxu0 %v5083
    %5803 = vmatpush.bf16.msra.mxu0 %v5076
    %5804 = vmatpush.bf16.msra.mxu0 %v5069
    %5805 = vmatmul.bf16.gmra.mxu0 %v2905
    %v5806 = vpop.f32.mrf.mxu0
    %v5807 = vadd.f32 %v5793, %v5806
    %v5808 = vpop.f32.mrf.mxu0
    %v5809 = vadd.f32 %v5795, %v5808
    %5810 = vdwg.mxu0
    %5811 = vmatpush.bf16.msra.mxu0 %v5174
    %5812 = vmatpush.bf16.msra.mxu0 %v5167
    %5813 = vmatpush.bf16.msra.mxu0 %v5160
    %5814 = vmatpush.bf16.msra.mxu0 %v5153
    %5815 = vmatpush.bf16.msra.mxu0 %v5146
    %5816 = vmatpush.bf16.msra.mxu0 %v5139
    %5817 = vmatpush.bf16.msra.mxu0 %v5132
    %5818 = vmatpush.bf16.msra.mxu0 %v5125
    %5819 = vmatmul.bf16.gmra.mxu0 %v2906
    %v5820 = vpop.f32.mrf.mxu0
    %v5821 = vadd.f32 %v5807, %v5820
    %v5822 = vpop.f32.mrf.mxu0
    %v5823 = vadd.f32 %v5809, %v5822
    %5824 = vdwg.mxu0
    %5825 = vmatpush.bf16.msra.mxu0 %v5230
    %5826 = vmatpush.bf16.msra.mxu0 %v5223
    %5827 = vmatpush.bf16.msra.mxu0 %v5216
    %5828 = vmatpush.bf16.msra.mxu0 %v5209
    %5829 = vmatpush.bf16.msra.mxu0 %v5202
    %5830 = vmatpush.bf16.msra.mxu0 %v5195
    %5831 = vmatpush.bf16.msra.mxu0 %v5188
    %5832 = vmatpush.bf16.msra.mxu0 %v5181
    %5833 = vmatmul.bf16.gmra.mxu0 %v2907
    %v5834 = vpop.f32.mrf.mxu0
    %v5835 = vadd.f32 %v5821, %v5834
    %v5836 = vpop.f32.mrf.mxu0
    %v5837 = vadd.f32 %v5823, %v5836
    %5838 = vdwg.mxu0
    %5839 = vmatpush.bf16.msra.mxu0 %v5286
    %5840 = vmatpush.bf16.msra.mxu0 %v5279
    %5841 = vmatpush.bf16.msra.mxu0 %v5272
    %5842 = vmatpush.bf16.msra.mxu0 %v5265
    %5843 = vmatpush.bf16.msra.mxu0 %v5258
    %5844 = vmatpush.bf16.msra.mxu0 %v5251
    %5845 = vmatpush.bf16.msra.mxu0 %v5244
    %5846 = vmatpush.bf16.msra.mxu0 %v5237
    %5847 = vmatmul.bf16.gmra.mxu0 %v2908
    %v5848 = vpop.f32.mrf.mxu0
    %v5849 = vadd.f32 %v5835, %v5848
    %v5850 = vpop.f32.mrf.mxu0
    %v5851 = vadd.f32 %v5837, %v5850
    %5852 = vdwg.mxu0
    %5853 = vmatpush.bf16.msra.mxu0 %v4895
    %5854 = vmatpush.bf16.msra.mxu0 %v4888
    %5855 = vmatpush.bf16.msra.mxu0 %v4881
    %5856 = vmatpush.bf16.msra.mxu0 %v4874
    %5857 = vmatpush.bf16.msra.mxu0 %v4867
    %5858 = vmatpush.bf16.msra.mxu0 %v4860
    %5859 = vmatpush.bf16.msra.mxu0 %v4853
    %5860 = vmatpush.bf16.msra.mxu0 %v4846
    %5861 = vmatmul.bf16.gmra.mxu0 %v2901
    %v5862 = vpop.f32.mrf.mxu0
    %v5863 = vadd.f32 %v3424, %v5862
    %v5864 = vpop.f32.mrf.mxu0
    %v5865 = vadd.f32 %v3424, %v5864
    %5866 = vdwg.mxu0
    %5867 = vmatpush.bf16.msra.mxu0 %v4951
    %5868 = vmatpush.bf16.msra.mxu0 %v4944
    %5869 = vmatpush.bf16.msra.mxu0 %v4937
    %5870 = vmatpush.bf16.msra.mxu0 %v4930
    %5871 = vmatpush.bf16.msra.mxu0 %v4923
    %5872 = vmatpush.bf16.msra.mxu0 %v4916
    %5873 = vmatpush.bf16.msra.mxu0 %v4909
    %5874 = vmatpush.bf16.msra.mxu0 %v4902
    %5875 = vmatmul.bf16.gmra.mxu0 %v2902
    %v5876 = vpop.f32.mrf.mxu0
    %v5877 = vadd.f32 %v5863, %v5876
    %v5878 = vpop.f32.mrf.mxu0
    %v5879 = vadd.f32 %v5865, %v5878
    %5880 = vdwg.mxu0
    %5881 = vmatpush.bf16.msra.mxu0 %v5007
    %5882 = vmatpush.bf16.msra.mxu0 %v5000
    %5883 = vmatpush.bf16.msra.mxu0 %v4993
    %5884 = vmatpush.bf16.msra.mxu0 %v4986
    %5885 = vmatpush.bf16.msra.mxu0 %v4979
    %5886 = vmatpush.bf16.msra.mxu0 %v4972
    %5887 = vmatpush.bf16.msra.mxu0 %v4965
    %5888 = vmatpush.bf16.msra.mxu0 %v4958
    %5889 = vmatmul.bf16.gmra.mxu0 %v2903
    %v5890 = vpop.f32.mrf.mxu0
    %v5891 = vadd.f32 %v5877, %v5890
    %v5892 = vpop.f32.mrf.mxu0
    %v5893 = vadd.f32 %v5879, %v5892
    %5894 = vdwg.mxu0
    %5895 = vmatpush.bf16.msra.mxu0 %v5063
    %5896 = vmatpush.bf16.msra.mxu0 %v5056
    %5897 = vmatpush.bf16.msra.mxu0 %v5049
    %5898 = vmatpush.bf16.msra.mxu0 %v5042
    %5899 = vmatpush.bf16.msra.mxu0 %v5035
    %5900 = vmatpush.bf16.msra.mxu0 %v5028
    %5901 = vmatpush.bf16.msra.mxu0 %v5021
    %5902 = vmatpush.bf16.msra.mxu0 %v5014
    %5903 = vmatmul.bf16.gmra.mxu0 %v2904
    %v5904 = vpop.f32.mrf.mxu0
    %v5905 = vadd.f32 %v5891, %v5904
    %v5906 = vpop.f32.mrf.mxu0
    %v5907 = vadd.f32 %v5893, %v5906
    %5908 = vdwg.mxu0
    %5909 = vmatpush.bf16.msra.mxu0 %v5119
    %5910 = vmatpush.bf16.msra.mxu0 %v5112
    %5911 = vmatpush.bf16.msra.mxu0 %v5105
    %5912 = vmatpush.bf16.msra.mxu0 %v5098
    %5913 = vmatpush.bf16.msra.mxu0 %v5091
    %5914 = vmatpush.bf16.msra.mxu0 %v5084
    %5915 = vmatpush.bf16.msra.mxu0 %v5077
    %5916 = vmatpush.bf16.msra.mxu0 %v5070
    %5917 = vmatmul.bf16.gmra.mxu0 %v2905
    %v5918 = vpop.f32.mrf.mxu0
    %v5919 = vadd.f32 %v5905, %v5918
    %v5920 = vpop.f32.mrf.mxu0
    %v5921 = vadd.f32 %v5907, %v5920
    %5922 = vdwg.mxu0
    %5923 = vmatpush.bf16.msra.mxu0 %v5175
    %5924 = vmatpush.bf16.msra.mxu0 %v5168
    %5925 = vmatpush.bf16.msra.mxu0 %v5161
    %5926 = vmatpush.bf16.msra.mxu0 %v5154
    %5927 = vmatpush.bf16.msra.mxu0 %v5147
    %5928 = vmatpush.bf16.msra.mxu0 %v5140
    %5929 = vmatpush.bf16.msra.mxu0 %v5133
    %5930 = vmatpush.bf16.msra.mxu0 %v5126
    %5931 = vmatmul.bf16.gmra.mxu0 %v2906
    %v5932 = vpop.f32.mrf.mxu0
    %v5933 = vadd.f32 %v5919, %v5932
    %v5934 = vpop.f32.mrf.mxu0
    %v5935 = vadd.f32 %v5921, %v5934
    %5936 = vdwg.mxu0
    %5937 = vmatpush.bf16.msra.mxu0 %v5231
    %5938 = vmatpush.bf16.msra.mxu0 %v5224
    %5939 = vmatpush.bf16.msra.mxu0 %v5217
    %5940 = vmatpush.bf16.msra.mxu0 %v5210
    %5941 = vmatpush.bf16.msra.mxu0 %v5203
    %5942 = vmatpush.bf16.msra.mxu0 %v5196
    %5943 = vmatpush.bf16.msra.mxu0 %v5189
    %5944 = vmatpush.bf16.msra.mxu0 %v5182
    %5945 = vmatmul.bf16.gmra.mxu0 %v2907
    %v5946 = vpop.f32.mrf.mxu0
    %v5947 = vadd.f32 %v5933, %v5946
    %v5948 = vpop.f32.mrf.mxu0
    %v5949 = vadd.f32 %v5935, %v5948
    %5950 = vdwg.mxu0
    %5951 = vmatpush.bf16.msra.mxu0 %v5287
    %5952 = vmatpush.bf16.msra.mxu0 %v5280
    %5953 = vmatpush.bf16.msra.mxu0 %v5273
    %5954 = vmatpush.bf16.msra.mxu0 %v5266
    %5955 = vmatpush.bf16.msra.mxu0 %v5259
    %5956 = vmatpush.bf16.msra.mxu0 %v5252
    %5957 = vmatpush.bf16.msra.mxu0 %v5245
    %5958 = vmatpush.bf16.msra.mxu0 %v5238
    %5959 = vmatmul.bf16.gmra.mxu0 %v2908
    %v5960 = vpop.f32.mrf.mxu0
    %v5961 = vadd.f32 %v5947, %v5960
    %v5962 = vpop.f32.mrf.mxu0
    %v5963 = vadd.f32 %v5949, %v5962
    %5964 = vdwg.mxu0
    %5965 = vmatpush.bf16.msra.mxu0 %v4896
    %5966 = vmatpush.bf16.msra.mxu0 %v4889
    %5967 = vmatpush.bf16.msra.mxu0 %v4882
    %5968 = vmatpush.bf16.msra.mxu0 %v4875
    %5969 = vmatpush.bf16.msra.mxu0 %v4868
    %5970 = vmatpush.bf16.msra.mxu0 %v4861
    %5971 = vmatpush.bf16.msra.mxu0 %v4854
    %5972 = vmatpush.bf16.msra.mxu0 %v4847
    %5973 = vmatmul.bf16.gmra.mxu0 %v2901
    %v5974 = vpop.f32.mrf.mxu0
    %v5975 = vadd.f32 %v3425, %v5974
    %v5976 = vpop.f32.mrf.mxu0
    %v5977 = vadd.f32 %v3425, %v5976
    %5978 = vdwg.mxu0
    %5979 = vmatpush.bf16.msra.mxu0 %v4952
    %5980 = vmatpush.bf16.msra.mxu0 %v4945
    %5981 = vmatpush.bf16.msra.mxu0 %v4938
    %5982 = vmatpush.bf16.msra.mxu0 %v4931
    %5983 = vmatpush.bf16.msra.mxu0 %v4924
    %5984 = vmatpush.bf16.msra.mxu0 %v4917
    %5985 = vmatpush.bf16.msra.mxu0 %v4910
    %5986 = vmatpush.bf16.msra.mxu0 %v4903
    %5987 = vmatmul.bf16.gmra.mxu0 %v2902
    %v5988 = vpop.f32.mrf.mxu0
    %v5989 = vadd.f32 %v5975, %v5988
    %v5990 = vpop.f32.mrf.mxu0
    %v5991 = vadd.f32 %v5977, %v5990
    %5992 = vdwg.mxu0
    %5993 = vmatpush.bf16.msra.mxu0 %v5008
    %5994 = vmatpush.bf16.msra.mxu0 %v5001
    %5995 = vmatpush.bf16.msra.mxu0 %v4994
    %5996 = vmatpush.bf16.msra.mxu0 %v4987
    %5997 = vmatpush.bf16.msra.mxu0 %v4980
    %5998 = vmatpush.bf16.msra.mxu0 %v4973
    %5999 = vmatpush.bf16.msra.mxu0 %v4966
    %6000 = vmatpush.bf16.msra.mxu0 %v4959
    %6001 = vmatmul.bf16.gmra.mxu0 %v2903
    %v6002 = vpop.f32.mrf.mxu0
    %v6003 = vadd.f32 %v5989, %v6002
    %v6004 = vpop.f32.mrf.mxu0
    %v6005 = vadd.f32 %v5991, %v6004
    %6006 = vdwg.mxu0
    %6007 = vmatpush.bf16.msra.mxu0 %v5064
    %6008 = vmatpush.bf16.msra.mxu0 %v5057
    %6009 = vmatpush.bf16.msra.mxu0 %v5050
    %6010 = vmatpush.bf16.msra.mxu0 %v5043
    %6011 = vmatpush.bf16.msra.mxu0 %v5036
    %6012 = vmatpush.bf16.msra.mxu0 %v5029
    %6013 = vmatpush.bf16.msra.mxu0 %v5022
    %6014 = vmatpush.bf16.msra.mxu0 %v5015
    %6015 = vmatmul.bf16.gmra.mxu0 %v2904
    %v6016 = vpop.f32.mrf.mxu0
    %v6017 = vadd.f32 %v6003, %v6016
    %v6018 = vpop.f32.mrf.mxu0
    %v6019 = vadd.f32 %v6005, %v6018
    %6020 = vdwg.mxu0
    %6021 = vmatpush.bf16.msra.mxu0 %v5120
    %6022 = vmatpush.bf16.msra.mxu0 %v5113
    %6023 = vmatpush.bf16.msra.mxu0 %v5106
    %6024 = vmatpush.bf16.msra.mxu0 %v5099
    %6025 = vmatpush.bf16.msra.mxu0 %v5092
    %6026 = vmatpush.bf16.msra.mxu0 %v5085
    %6027 = vmatpush.bf16.msra.mxu0 %v5078
    %6028 = vmatpush.bf16.msra.mxu0 %v5071
    %6029 = vmatmul.bf16.gmra.mxu0 %v2905
    %v6030 = vpop.f32.mrf.mxu0
    %v6031 = vadd.f32 %v6017, %v6030
    %v6032 = vpop.f32.mrf.mxu0
    %v6033 = vadd.f32 %v6019, %v6032
    %6034 = vdwg.mxu0
    %6035 = vmatpush.bf16.msra.mxu0 %v5176
    %6036 = vmatpush.bf16.msra.mxu0 %v5169
    %6037 = vmatpush.bf16.msra.mxu0 %v5162
    %6038 = vmatpush.bf16.msra.mxu0 %v5155
    %6039 = vmatpush.bf16.msra.mxu0 %v5148
    %6040 = vmatpush.bf16.msra.mxu0 %v5141
    %6041 = vmatpush.bf16.msra.mxu0 %v5134
    %6042 = vmatpush.bf16.msra.mxu0 %v5127
    %6043 = vmatmul.bf16.gmra.mxu0 %v2906
    %v6044 = vpop.f32.mrf.mxu0
    %v6045 = vadd.f32 %v6031, %v6044
    %v6046 = vpop.f32.mrf.mxu0
    %v6047 = vadd.f32 %v6033, %v6046
    %6048 = vdwg.mxu0
    %6049 = vmatpush.bf16.msra.mxu0 %v5232
    %6050 = vmatpush.bf16.msra.mxu0 %v5225
    %6051 = vmatpush.bf16.msra.mxu0 %v5218
    %6052 = vmatpush.bf16.msra.mxu0 %v5211
    %6053 = vmatpush.bf16.msra.mxu0 %v5204
    %6054 = vmatpush.bf16.msra.mxu0 %v5197
    %6055 = vmatpush.bf16.msra.mxu0 %v5190
    %6056 = vmatpush.bf16.msra.mxu0 %v5183
    %6057 = vmatmul.bf16.gmra.mxu0 %v2907
    %v6058 = vpop.f32.mrf.mxu0
    %v6059 = vadd.f32 %v6045, %v6058
    %v6060 = vpop.f32.mrf.mxu0
    %v6061 = vadd.f32 %v6047, %v6060
    %6062 = vdwg.mxu0
    %6063 = vmatpush.bf16.msra.mxu0 %v5288
    %6064 = vmatpush.bf16.msra.mxu0 %v5281
    %6065 = vmatpush.bf16.msra.mxu0 %v5274
    %6066 = vmatpush.bf16.msra.mxu0 %v5267
    %6067 = vmatpush.bf16.msra.mxu0 %v5260
    %6068 = vmatpush.bf16.msra.mxu0 %v5253
    %6069 = vmatpush.bf16.msra.mxu0 %v5246
    %6070 = vmatpush.bf16.msra.mxu0 %v5239
    %6071 = vmatmul.bf16.gmra.mxu0 %v2908
    %v6072 = vpop.f32.mrf.mxu0
    %v6073 = vadd.f32 %v6059, %v6072
    %v6074 = vpop.f32.mrf.mxu0
    %v6075 = vadd.f32 %v6061, %v6074
    %6076 = vdwg.mxu0
    %6077 = vmatpush.bf16.msra.mxu0 %v4897
    %6078 = vmatpush.bf16.msra.mxu0 %v4890
    %6079 = vmatpush.bf16.msra.mxu0 %v4883
    %6080 = vmatpush.bf16.msra.mxu0 %v4876
    %6081 = vmatpush.bf16.msra.mxu0 %v4869
    %6082 = vmatpush.bf16.msra.mxu0 %v4862
    %6083 = vmatpush.bf16.msra.mxu0 %v4855
    %6084 = vmatpush.bf16.msra.mxu0 %v4848
    %6085 = vmatmul.bf16.gmra.mxu0 %v2901
    %v6086 = vpop.f32.mrf.mxu0
    %v6087 = vadd.f32 %v3426, %v6086
    %v6088 = vpop.f32.mrf.mxu0
    %v6089 = vadd.f32 %v3426, %v6088
    %6090 = vdwg.mxu0
    %6091 = vmatpush.bf16.msra.mxu0 %v4953
    %6092 = vmatpush.bf16.msra.mxu0 %v4946
    %6093 = vmatpush.bf16.msra.mxu0 %v4939
    %6094 = vmatpush.bf16.msra.mxu0 %v4932
    %6095 = vmatpush.bf16.msra.mxu0 %v4925
    %6096 = vmatpush.bf16.msra.mxu0 %v4918
    %6097 = vmatpush.bf16.msra.mxu0 %v4911
    %6098 = vmatpush.bf16.msra.mxu0 %v4904
    %6099 = vmatmul.bf16.gmra.mxu0 %v2902
    %v6100 = vpop.f32.mrf.mxu0
    %v6101 = vadd.f32 %v6087, %v6100
    %v6102 = vpop.f32.mrf.mxu0
    %v6103 = vadd.f32 %v6089, %v6102
    %6104 = vdwg.mxu0
    %6105 = vmatpush.bf16.msra.mxu0 %v5009
    %6106 = vmatpush.bf16.msra.mxu0 %v5002
    %6107 = vmatpush.bf16.msra.mxu0 %v4995
    %6108 = vmatpush.bf16.msra.mxu0 %v4988
    %6109 = vmatpush.bf16.msra.mxu0 %v4981
    %6110 = vmatpush.bf16.msra.mxu0 %v4974
    %6111 = vmatpush.bf16.msra.mxu0 %v4967
    %6112 = vmatpush.bf16.msra.mxu0 %v4960
    %6113 = vmatmul.bf16.gmra.mxu0 %v2903
    %v6114 = vpop.f32.mrf.mxu0
    %v6115 = vadd.f32 %v6101, %v6114
    %v6116 = vpop.f32.mrf.mxu0
    %v6117 = vadd.f32 %v6103, %v6116
    %6118 = vdwg.mxu0
    %6119 = vmatpush.bf16.msra.mxu0 %v5065
    %6120 = vmatpush.bf16.msra.mxu0 %v5058
    %6121 = vmatpush.bf16.msra.mxu0 %v5051
    %6122 = vmatpush.bf16.msra.mxu0 %v5044
    %6123 = vmatpush.bf16.msra.mxu0 %v5037
    %6124 = vmatpush.bf16.msra.mxu0 %v5030
    %6125 = vmatpush.bf16.msra.mxu0 %v5023
    %6126 = vmatpush.bf16.msra.mxu0 %v5016
    %6127 = vmatmul.bf16.gmra.mxu0 %v2904
    %v6128 = vpop.f32.mrf.mxu0
    %v6129 = vadd.f32 %v6115, %v6128
    %v6130 = vpop.f32.mrf.mxu0
    %v6131 = vadd.f32 %v6117, %v6130
    %6132 = vdwg.mxu0
    %6133 = vmatpush.bf16.msra.mxu0 %v5121
    %6134 = vmatpush.bf16.msra.mxu0 %v5114
    %6135 = vmatpush.bf16.msra.mxu0 %v5107
    %6136 = vmatpush.bf16.msra.mxu0 %v5100
    %6137 = vmatpush.bf16.msra.mxu0 %v5093
    %6138 = vmatpush.bf16.msra.mxu0 %v5086
    %6139 = vmatpush.bf16.msra.mxu0 %v5079
    %6140 = vmatpush.bf16.msra.mxu0 %v5072
    %6141 = vmatmul.bf16.gmra.mxu0 %v2905
    %v6142 = vpop.f32.mrf.mxu0
    %v6143 = vadd.f32 %v6129, %v6142
    %v6144 = vpop.f32.mrf.mxu0
    %v6145 = vadd.f32 %v6131, %v6144
    %6146 = vdwg.mxu0
    %6147 = vmatpush.bf16.msra.mxu0 %v5177
    %6148 = vmatpush.bf16.msra.mxu0 %v5170
    %6149 = vmatpush.bf16.msra.mxu0 %v5163
    %6150 = vmatpush.bf16.msra.mxu0 %v5156
    %6151 = vmatpush.bf16.msra.mxu0 %v5149
    %6152 = vmatpush.bf16.msra.mxu0 %v5142
    %6153 = vmatpush.bf16.msra.mxu0 %v5135
    %6154 = vmatpush.bf16.msra.mxu0 %v5128
    %6155 = vmatmul.bf16.gmra.mxu0 %v2906
    %v6156 = vpop.f32.mrf.mxu0
    %v6157 = vadd.f32 %v6143, %v6156
    %v6158 = vpop.f32.mrf.mxu0
    %v6159 = vadd.f32 %v6145, %v6158
    %6160 = vdwg.mxu0
    %6161 = vmatpush.bf16.msra.mxu0 %v5233
    %6162 = vmatpush.bf16.msra.mxu0 %v5226
    %6163 = vmatpush.bf16.msra.mxu0 %v5219
    %6164 = vmatpush.bf16.msra.mxu0 %v5212
    %6165 = vmatpush.bf16.msra.mxu0 %v5205
    %6166 = vmatpush.bf16.msra.mxu0 %v5198
    %6167 = vmatpush.bf16.msra.mxu0 %v5191
    %6168 = vmatpush.bf16.msra.mxu0 %v5184
    %6169 = vmatmul.bf16.gmra.mxu0 %v2907
    %v6170 = vpop.f32.mrf.mxu0
    %v6171 = vadd.f32 %v6157, %v6170
    %v6172 = vpop.f32.mrf.mxu0
    %v6173 = vadd.f32 %v6159, %v6172
    %6174 = vdwg.mxu0
    %6175 = vmatpush.bf16.msra.mxu0 %v5289
    %6176 = vmatpush.bf16.msra.mxu0 %v5282
    %6177 = vmatpush.bf16.msra.mxu0 %v5275
    %6178 = vmatpush.bf16.msra.mxu0 %v5268
    %6179 = vmatpush.bf16.msra.mxu0 %v5261
    %6180 = vmatpush.bf16.msra.mxu0 %v5254
    %6181 = vmatpush.bf16.msra.mxu0 %v5247
    %6182 = vmatpush.bf16.msra.mxu0 %v5240
    %6183 = vmatmul.bf16.gmra.mxu0 %v2908
    %v6184 = vpop.f32.mrf.mxu0
    %v6185 = vadd.f32 %v6171, %v6184
    %v6186 = vpop.f32.mrf.mxu0
    %v6187 = vadd.f32 %v6173, %v6186
    %6188 = vdwg.mxu0
    %6189 = vmatpush.bf16.msra.mxu0 %v4898
    %6190 = vmatpush.bf16.msra.mxu0 %v4891
    %6191 = vmatpush.bf16.msra.mxu0 %v4884
    %6192 = vmatpush.bf16.msra.mxu0 %v4877
    %6193 = vmatpush.bf16.msra.mxu0 %v4870
    %6194 = vmatpush.bf16.msra.mxu0 %v4863
    %6195 = vmatpush.bf16.msra.mxu0 %v4856
    %6196 = vmatpush.bf16.msra.mxu0 %v4849
    %6197 = vmatmul.bf16.gmra.mxu0 %v2901
    %v6198 = vpop.f32.mrf.mxu0
    %v6199 = vadd.f32 %v3427, %v6198
    %v6200 = vpop.f32.mrf.mxu0
    %v6201 = vadd.f32 %v3427, %v6200
    %6202 = vdwg.mxu0
    %6203 = vmatpush.bf16.msra.mxu0 %v4954
    %6204 = vmatpush.bf16.msra.mxu0 %v4947
    %6205 = vmatpush.bf16.msra.mxu0 %v4940
    %6206 = vmatpush.bf16.msra.mxu0 %v4933
    %6207 = vmatpush.bf16.msra.mxu0 %v4926
    %6208 = vmatpush.bf16.msra.mxu0 %v4919
    %6209 = vmatpush.bf16.msra.mxu0 %v4912
    %6210 = vmatpush.bf16.msra.mxu0 %v4905
    %6211 = vmatmul.bf16.gmra.mxu0 %v2902
    %v6212 = vpop.f32.mrf.mxu0
    %v6213 = vadd.f32 %v6199, %v6212
    %v6214 = vpop.f32.mrf.mxu0
    %v6215 = vadd.f32 %v6201, %v6214
    %6216 = vdwg.mxu0
    %6217 = vmatpush.bf16.msra.mxu0 %v5010
    %6218 = vmatpush.bf16.msra.mxu0 %v5003
    %6219 = vmatpush.bf16.msra.mxu0 %v4996
    %6220 = vmatpush.bf16.msra.mxu0 %v4989
    %6221 = vmatpush.bf16.msra.mxu0 %v4982
    %6222 = vmatpush.bf16.msra.mxu0 %v4975
    %6223 = vmatpush.bf16.msra.mxu0 %v4968
    %6224 = vmatpush.bf16.msra.mxu0 %v4961
    %6225 = vmatmul.bf16.gmra.mxu0 %v2903
    %v6226 = vpop.f32.mrf.mxu0
    %v6227 = vadd.f32 %v6213, %v6226
    %v6228 = vpop.f32.mrf.mxu0
    %v6229 = vadd.f32 %v6215, %v6228
    %6230 = vdwg.mxu0
    %6231 = vmatpush.bf16.msra.mxu0 %v5066
    %6232 = vmatpush.bf16.msra.mxu0 %v5059
    %6233 = vmatpush.bf16.msra.mxu0 %v5052
    %6234 = vmatpush.bf16.msra.mxu0 %v5045
    %6235 = vmatpush.bf16.msra.mxu0 %v5038
    %6236 = vmatpush.bf16.msra.mxu0 %v5031
    %6237 = vmatpush.bf16.msra.mxu0 %v5024
    %6238 = vmatpush.bf16.msra.mxu0 %v5017
    %6239 = vmatmul.bf16.gmra.mxu0 %v2904
    %v6240 = vpop.f32.mrf.mxu0
    %v6241 = vadd.f32 %v6227, %v6240
    %v6242 = vpop.f32.mrf.mxu0
    %v6243 = vadd.f32 %v6229, %v6242
    %6244 = vdwg.mxu0
    %6245 = vmatpush.bf16.msra.mxu0 %v5122
    %6246 = vmatpush.bf16.msra.mxu0 %v5115
    %6247 = vmatpush.bf16.msra.mxu0 %v5108
    %6248 = vmatpush.bf16.msra.mxu0 %v5101
    %6249 = vmatpush.bf16.msra.mxu0 %v5094
    %6250 = vmatpush.bf16.msra.mxu0 %v5087
    %6251 = vmatpush.bf16.msra.mxu0 %v5080
    %6252 = vmatpush.bf16.msra.mxu0 %v5073
    %6253 = vmatmul.bf16.gmra.mxu0 %v2905
    %v6254 = vpop.f32.mrf.mxu0
    %v6255 = vadd.f32 %v6241, %v6254
    %v6256 = vpop.f32.mrf.mxu0
    %v6257 = vadd.f32 %v6243, %v6256
    %6258 = vdwg.mxu0
    %6259 = vmatpush.bf16.msra.mxu0 %v5178
    %6260 = vmatpush.bf16.msra.mxu0 %v5171
    %6261 = vmatpush.bf16.msra.mxu0 %v5164
    %6262 = vmatpush.bf16.msra.mxu0 %v5157
    %6263 = vmatpush.bf16.msra.mxu0 %v5150
    %6264 = vmatpush.bf16.msra.mxu0 %v5143
    %6265 = vmatpush.bf16.msra.mxu0 %v5136
    %6266 = vmatpush.bf16.msra.mxu0 %v5129
    %6267 = vmatmul.bf16.gmra.mxu0 %v2906
    %v6268 = vpop.f32.mrf.mxu0
    %v6269 = vadd.f32 %v6255, %v6268
    %v6270 = vpop.f32.mrf.mxu0
    %v6271 = vadd.f32 %v6257, %v6270
    %6272 = vdwg.mxu0
    %6273 = vmatpush.bf16.msra.mxu0 %v5234
    %6274 = vmatpush.bf16.msra.mxu0 %v5227
    %6275 = vmatpush.bf16.msra.mxu0 %v5220
    %6276 = vmatpush.bf16.msra.mxu0 %v5213
    %6277 = vmatpush.bf16.msra.mxu0 %v5206
    %6278 = vmatpush.bf16.msra.mxu0 %v5199
    %6279 = vmatpush.bf16.msra.mxu0 %v5192
    %6280 = vmatpush.bf16.msra.mxu0 %v5185
    %6281 = vmatmul.bf16.gmra.mxu0 %v2907
    %v6282 = vpop.f32.mrf.mxu0
    %v6283 = vadd.f32 %v6269, %v6282
    %v6284 = vpop.f32.mrf.mxu0
    %v6285 = vadd.f32 %v6271, %v6284
    %6286 = vdwg.mxu0
    %6287 = vmatpush.bf16.msra.mxu0 %v5290
    %6288 = vmatpush.bf16.msra.mxu0 %v5283
    %6289 = vmatpush.bf16.msra.mxu0 %v5276
    %6290 = vmatpush.bf16.msra.mxu0 %v5269
    %6291 = vmatpush.bf16.msra.mxu0 %v5262
    %6292 = vmatpush.bf16.msra.mxu0 %v5255
    %6293 = vmatpush.bf16.msra.mxu0 %v5248
    %6294 = vmatpush.bf16.msra.mxu0 %v5241
    %6295 = vmatmul.bf16.gmra.mxu0 %v2908
    %v6296 = vpop.f32.mrf.mxu0
    %v6297 = vadd.f32 %v6283, %v6296
    %v6298 = vpop.f32.mrf.mxu0
    %v6299 = vadd.f32 %v6285, %v6298
    %6300 = vdwg.mxu0
    %6301 = vmatpush.bf16.msra.mxu0 %v4899
    %6302 = vmatpush.bf16.msra.mxu0 %v4892
    %6303 = vmatpush.bf16.msra.mxu0 %v4885
    %6304 = vmatpush.bf16.msra.mxu0 %v4878
    %6305 = vmatpush.bf16.msra.mxu0 %v4871
    %6306 = vmatpush.bf16.msra.mxu0 %v4864
    %6307 = vmatpush.bf16.msra.mxu0 %v4857
    %6308 = vmatpush.bf16.msra.mxu0 %v4850
    %6309 = vmatmul.bf16.gmra.mxu0 %v2901
    %v6310 = vpop.f32.mrf.mxu0
    %v6311 = vadd.f32 %v3428, %v6310
    %v6312 = vpop.f32.mrf.mxu0
    %v6313 = vadd.f32 %v3428, %v6312
    %6314 = vdwg.mxu0
    %6315 = vmatpush.bf16.msra.mxu0 %v4955
    %6316 = vmatpush.bf16.msra.mxu0 %v4948
    %6317 = vmatpush.bf16.msra.mxu0 %v4941
    %6318 = vmatpush.bf16.msra.mxu0 %v4934
    %6319 = vmatpush.bf16.msra.mxu0 %v4927
    %6320 = vmatpush.bf16.msra.mxu0 %v4920
    %6321 = vmatpush.bf16.msra.mxu0 %v4913
    %6322 = vmatpush.bf16.msra.mxu0 %v4906
    %6323 = vmatmul.bf16.gmra.mxu0 %v2902
    %v6324 = vpop.f32.mrf.mxu0
    %v6325 = vadd.f32 %v6311, %v6324
    %v6326 = vpop.f32.mrf.mxu0
    %v6327 = vadd.f32 %v6313, %v6326
    %6328 = vdwg.mxu0
    %6329 = vmatpush.bf16.msra.mxu0 %v5011
    %6330 = vmatpush.bf16.msra.mxu0 %v5004
    %6331 = vmatpush.bf16.msra.mxu0 %v4997
    %6332 = vmatpush.bf16.msra.mxu0 %v4990
    %6333 = vmatpush.bf16.msra.mxu0 %v4983
    %6334 = vmatpush.bf16.msra.mxu0 %v4976
    %6335 = vmatpush.bf16.msra.mxu0 %v4969
    %6336 = vmatpush.bf16.msra.mxu0 %v4962
    %6337 = vmatmul.bf16.gmra.mxu0 %v2903
    %v6338 = vpop.f32.mrf.mxu0
    %v6339 = vadd.f32 %v6325, %v6338
    %v6340 = vpop.f32.mrf.mxu0
    %v6341 = vadd.f32 %v6327, %v6340
    %6342 = vdwg.mxu0
    %6343 = vmatpush.bf16.msra.mxu0 %v5067
    %6344 = vmatpush.bf16.msra.mxu0 %v5060
    %6345 = vmatpush.bf16.msra.mxu0 %v5053
    %6346 = vmatpush.bf16.msra.mxu0 %v5046
    %6347 = vmatpush.bf16.msra.mxu0 %v5039
    %6348 = vmatpush.bf16.msra.mxu0 %v5032
    %6349 = vmatpush.bf16.msra.mxu0 %v5025
    %6350 = vmatpush.bf16.msra.mxu0 %v5018
    %6351 = vmatmul.bf16.gmra.mxu0 %v2904
    %v6352 = vpop.f32.mrf.mxu0
    %v6353 = vadd.f32 %v6339, %v6352
    %v6354 = vpop.f32.mrf.mxu0
    %v6355 = vadd.f32 %v6341, %v6354
    %6356 = vdwg.mxu0
    %6357 = vmatpush.bf16.msra.mxu0 %v5123
    %6358 = vmatpush.bf16.msra.mxu0 %v5116
    %6359 = vmatpush.bf16.msra.mxu0 %v5109
    %6360 = vmatpush.bf16.msra.mxu0 %v5102
    %6361 = vmatpush.bf16.msra.mxu0 %v5095
    %6362 = vmatpush.bf16.msra.mxu0 %v5088
    %6363 = vmatpush.bf16.msra.mxu0 %v5081
    %6364 = vmatpush.bf16.msra.mxu0 %v5074
    %6365 = vmatmul.bf16.gmra.mxu0 %v2905
    %v6366 = vpop.f32.mrf.mxu0
    %v6367 = vadd.f32 %v6353, %v6366
    %v6368 = vpop.f32.mrf.mxu0
    %v6369 = vadd.f32 %v6355, %v6368
    %6370 = vdwg.mxu0
    %6371 = vmatpush.bf16.msra.mxu0 %v5179
    %6372 = vmatpush.bf16.msra.mxu0 %v5172
    %6373 = vmatpush.bf16.msra.mxu0 %v5165
    %6374 = vmatpush.bf16.msra.mxu0 %v5158
    %6375 = vmatpush.bf16.msra.mxu0 %v5151
    %6376 = vmatpush.bf16.msra.mxu0 %v5144
    %6377 = vmatpush.bf16.msra.mxu0 %v5137
    %6378 = vmatpush.bf16.msra.mxu0 %v5130
    %6379 = vmatmul.bf16.gmra.mxu0 %v2906
    %v6380 = vpop.f32.mrf.mxu0
    %v6381 = vadd.f32 %v6367, %v6380
    %v6382 = vpop.f32.mrf.mxu0
    %v6383 = vadd.f32 %v6369, %v6382
    %6384 = vdwg.mxu0
    %6385 = vmatpush.bf16.msra.mxu0 %v5235
    %6386 = vmatpush.bf16.msra.mxu0 %v5228
    %6387 = vmatpush.bf16.msra.mxu0 %v5221
    %6388 = vmatpush.bf16.msra.mxu0 %v5214
    %6389 = vmatpush.bf16.msra.mxu0 %v5207
    %6390 = vmatpush.bf16.msra.mxu0 %v5200
    %6391 = vmatpush.bf16.msra.mxu0 %v5193
    %6392 = vmatpush.bf16.msra.mxu0 %v5186
    %6393 = vmatmul.bf16.gmra.mxu0 %v2907
    %v6394 = vpop.f32.mrf.mxu0
    %v6395 = vadd.f32 %v6381, %v6394
    %v6396 = vpop.f32.mrf.mxu0
    %v6397 = vadd.f32 %v6383, %v6396
    %6398 = vdwg.mxu0
    %6399 = vmatpush.bf16.msra.mxu0 %v5291
    %6400 = vmatpush.bf16.msra.mxu0 %v5284
    %6401 = vmatpush.bf16.msra.mxu0 %v5277
    %6402 = vmatpush.bf16.msra.mxu0 %v5270
    %6403 = vmatpush.bf16.msra.mxu0 %v5263
    %6404 = vmatpush.bf16.msra.mxu0 %v5256
    %6405 = vmatpush.bf16.msra.mxu0 %v5249
    %6406 = vmatpush.bf16.msra.mxu0 %v5242
    %6407 = vmatmul.bf16.gmra.mxu0 %v2908
    %v6408 = vpop.f32.mrf.mxu0
    %v6409 = vadd.f32 %v6395, %v6408
    %v6410 = vpop.f32.mrf.mxu0
    %v6411 = vadd.f32 %v6397, %v6410
    %6412 = vdwg.mxu0
    %6413 = vmatpush.bf16.msra.mxu0 %v4900
    %6414 = vmatpush.bf16.msra.mxu0 %v4893
    %6415 = vmatpush.bf16.msra.mxu0 %v4886
    %6416 = vmatpush.bf16.msra.mxu0 %v4879
    %6417 = vmatpush.bf16.msra.mxu0 %v4872
    %6418 = vmatpush.bf16.msra.mxu0 %v4865
    %6419 = vmatpush.bf16.msra.mxu0 %v4858
    %6420 = vmatpush.bf16.msra.mxu0 %v4851
    %6421 = vmatmul.bf16.gmra.mxu0 %v2901
    %v6422 = vpop.f32.mrf.mxu0
    %v6423 = vadd.f32 %v3429, %v6422
    %v6424 = vpop.f32.mrf.mxu0
    %v6425 = vadd.f32 %v3429, %v6424
    %6426 = vdwg.mxu0
    %6427 = vmatpush.bf16.msra.mxu0 %v4956
    %6428 = vmatpush.bf16.msra.mxu0 %v4949
    %6429 = vmatpush.bf16.msra.mxu0 %v4942
    %6430 = vmatpush.bf16.msra.mxu0 %v4935
    %6431 = vmatpush.bf16.msra.mxu0 %v4928
    %6432 = vmatpush.bf16.msra.mxu0 %v4921
    %6433 = vmatpush.bf16.msra.mxu0 %v4914
    %6434 = vmatpush.bf16.msra.mxu0 %v4907
    %6435 = vmatmul.bf16.gmra.mxu0 %v2902
    %v6436 = vpop.f32.mrf.mxu0
    %v6437 = vadd.f32 %v6423, %v6436
    %v6438 = vpop.f32.mrf.mxu0
    %v6439 = vadd.f32 %v6425, %v6438
    %6440 = vdwg.mxu0
    %6441 = vmatpush.bf16.msra.mxu0 %v5012
    %6442 = vmatpush.bf16.msra.mxu0 %v5005
    %6443 = vmatpush.bf16.msra.mxu0 %v4998
    %6444 = vmatpush.bf16.msra.mxu0 %v4991
    %6445 = vmatpush.bf16.msra.mxu0 %v4984
    %6446 = vmatpush.bf16.msra.mxu0 %v4977
    %6447 = vmatpush.bf16.msra.mxu0 %v4970
    %6448 = vmatpush.bf16.msra.mxu0 %v4963
    %6449 = vmatmul.bf16.gmra.mxu0 %v2903
    %v6450 = vpop.f32.mrf.mxu0
    %v6451 = vadd.f32 %v6437, %v6450
    %v6452 = vpop.f32.mrf.mxu0
    %v6453 = vadd.f32 %v6439, %v6452
    %6454 = vdwg.mxu0
    %6455 = vmatpush.bf16.msra.mxu0 %v5068
    %6456 = vmatpush.bf16.msra.mxu0 %v5061
    %6457 = vmatpush.bf16.msra.mxu0 %v5054
    %6458 = vmatpush.bf16.msra.mxu0 %v5047
    %6459 = vmatpush.bf16.msra.mxu0 %v5040
    %6460 = vmatpush.bf16.msra.mxu0 %v5033
    %6461 = vmatpush.bf16.msra.mxu0 %v5026
    %6462 = vmatpush.bf16.msra.mxu0 %v5019
    %6463 = vmatmul.bf16.gmra.mxu0 %v2904
    %v6464 = vpop.f32.mrf.mxu0
    %v6465 = vadd.f32 %v6451, %v6464
    %v6466 = vpop.f32.mrf.mxu0
    %v6467 = vadd.f32 %v6453, %v6466
    %6468 = vdwg.mxu0
    %6469 = vmatpush.bf16.msra.mxu0 %v5124
    %6470 = vmatpush.bf16.msra.mxu0 %v5117
    %6471 = vmatpush.bf16.msra.mxu0 %v5110
    %6472 = vmatpush.bf16.msra.mxu0 %v5103
    %6473 = vmatpush.bf16.msra.mxu0 %v5096
    %6474 = vmatpush.bf16.msra.mxu0 %v5089
    %6475 = vmatpush.bf16.msra.mxu0 %v5082
    %6476 = vmatpush.bf16.msra.mxu0 %v5075
    %6477 = vmatmul.bf16.gmra.mxu0 %v2905
    %v6478 = vpop.f32.mrf.mxu0
    %v6479 = vadd.f32 %v6465, %v6478
    %v6480 = vpop.f32.mrf.mxu0
    %v6481 = vadd.f32 %v6467, %v6480
    %6482 = vdwg.mxu0
    %6483 = vmatpush.bf16.msra.mxu0 %v5180
    %6484 = vmatpush.bf16.msra.mxu0 %v5173
    %6485 = vmatpush.bf16.msra.mxu0 %v5166
    %6486 = vmatpush.bf16.msra.mxu0 %v5159
    %6487 = vmatpush.bf16.msra.mxu0 %v5152
    %6488 = vmatpush.bf16.msra.mxu0 %v5145
    %6489 = vmatpush.bf16.msra.mxu0 %v5138
    %6490 = vmatpush.bf16.msra.mxu0 %v5131
    %6491 = vmatmul.bf16.gmra.mxu0 %v2906
    %v6492 = vpop.f32.mrf.mxu0
    %v6493 = vadd.f32 %v6479, %v6492
    %v6494 = vpop.f32.mrf.mxu0
    %v6495 = vadd.f32 %v6481, %v6494
    %6496 = vdwg.mxu0
    %6497 = vmatpush.bf16.msra.mxu0 %v5236
    %6498 = vmatpush.bf16.msra.mxu0 %v5229
    %6499 = vmatpush.bf16.msra.mxu0 %v5222
    %6500 = vmatpush.bf16.msra.mxu0 %v5215
    %6501 = vmatpush.bf16.msra.mxu0 %v5208
    %6502 = vmatpush.bf16.msra.mxu0 %v5201
    %6503 = vmatpush.bf16.msra.mxu0 %v5194
    %6504 = vmatpush.bf16.msra.mxu0 %v5187
    %6505 = vmatmul.bf16.gmra.mxu0 %v2907
    %v6506 = vpop.f32.mrf.mxu0
    %v6507 = vadd.f32 %v6493, %v6506
    %v6508 = vpop.f32.mrf.mxu0
    %v6509 = vadd.f32 %v6495, %v6508
    %6510 = vdwg.mxu0
    %6511 = vmatpush.bf16.msra.mxu0 %v5292
    %6512 = vmatpush.bf16.msra.mxu0 %v5285
    %6513 = vmatpush.bf16.msra.mxu0 %v5278
    %6514 = vmatpush.bf16.msra.mxu0 %v5271
    %6515 = vmatpush.bf16.msra.mxu0 %v5264
    %6516 = vmatpush.bf16.msra.mxu0 %v5257
    %6517 = vmatpush.bf16.msra.mxu0 %v5250
    %6518 = vmatpush.bf16.msra.mxu0 %v5243
    %6519 = vmatmul.bf16.gmra.mxu0 %v2908
    %v6520 = vpop.f32.mrf.mxu0
    %v6521 = vadd.f32 %v6507, %v6520
    %v6522 = vpop.f32.mrf.mxu0
    %v6523 = vadd.f32 %v6509, %v6522
    %6524 = vdwg.mxu0
    %v6525 = vtanh.pop %v5849
    %v6526 = vtanh.pop %v5961
    %v6527 = vtanh.pop %v6073
    %v6528 = vtanh.pop %v6185
    %v6529 = vtanh.pop %v6297
    %v6530 = vtanh.pop %v6409
    %v6531 = vtanh.pop %v6521
    %v6532 = vtanh.pop %v5851
    %v6533 = vtanh.pop %v5963
    %v6534 = vtanh.pop %v6075
    %v6535 = vtanh.pop %v6187
    %v6536 = vtanh.pop %v6299
    %v6537 = vtanh.pop %v6411
    %v6538 = vtanh.pop %v6523
    %6539 = vst [vmem:[#allocation17] sm:$0xff] %v6525
    %6540 = vst [vmem:[#allocation17 + $0x8] sm:$0xff] %v6526
    %6541 = vst [vmem:[#allocation17 + $0x10] sm:$0xff] %v6527
    %6542 = vst [vmem:[#allocation17 + $0x18] sm:$0xff] %v6528
    %6543 = vst [vmem:[#allocation17 + $0x20] sm:$0xff] %v6529
    %6544 = vst [vmem:[#allocation17 + $0x28] sm:$0xff] %v6530
    %6545 = vst [vmem:[#allocation17 + $0x30] sm:$0xff] %v6531
    %6546 = vst [vmem:[#allocation17 + $0x38] sm:$0xff] %v6532
    %6547 = vst [vmem:[#allocation17 + $0x40] sm:$0xff] %v6533
    %6548 = vst [vmem:[#allocation17 + $0x48] sm:$0xff] %v6534
    %6549 = vst [vmem:[#allocation17 + $0x50] sm:$0xff] %v6535
    %6550 = vst [vmem:[#allocation17 + $0x58] sm:$0xff] %v6536
    %6551 = vst [vmem:[#allocation17 + $0x60] sm:$0xff] %v6537
    %6552 = vst [vmem:[#allocation17 + $0x68] sm:$0xff] %v6538
    // Predicated region
    $region74: #{tpu_custom_call.1} parent=1 // pred_check
      _
    $region75: #{tpu_custom_call.1} parent=1 // pred_check_branch
      %6554 = sbr.rel (0) target = $region77
    $region76: #{tpu_custom_call.1} parent=1 // pred_region
      %6556 = vsyncadd [#allocation4], 0
      %s6557 = sshll.u32 [#allocation17], 4
      %s6558 = int_to_ptr.vmem [resolvable:$true] %s6557
      %s6559 = sshll.u32 %s9, 4
      %s6560 = int_to_ptr.hbm [resolvable:$true] %s6559
      %6565 = dma.vmem_to_hbm [thread:$0]  %s6558, 1792, %s6560, [#allocation4], 896, 896, 56
    $region77: #{tpu_custom_call.1} parent=1 // pred_fallthru
      _
    // Predicated region
    $region78: #{tpu_custom_call.1} parent=1 // pred_check
      _
    $region79: #{tpu_custom_call.1} parent=1 // pred_check_branch
      %6567 = sbr.rel (0) target = $region81
    $region80: #{tpu_custom_call.1} parent=1 // pred_region
      %6569 = dma.done [#allocation4], 1792
    $region81: #{tpu_custom_call.1} parent=1 // pred_fallthru
      _
    %6570 = vsyncpa [#allocation3], 1
    %6571 = vsyncpa [#allocation6], 1
    %6572 = vsyncpa [#allocation9], 1
    %6573 = vsyncpa [#allocation12], 1
    %6574 = vsyncpa [#allocation15], 1
    %6575 = vsyncpa [#allocation4], 1

</llo_original>
